<compile_context>
chip_gen: v5e
topology: v5e:2x2
jax: 0.10.0
libtpu: 0.0.40
codegen_flags: <defaults>
</compile_context>

<pallas_src>
import jax
import jax.numpy as jnp
from jax import lax
from jax.experimental import pallas as pl
from jax.experimental.pallas import tpu as pltpu


# --------------------------------------------------------------------------
# Fused Pallas kernel: 3 LSTM layers + linear + softmax
# --------------------------------------------------------------------------
def _fused_lstm_head_kernel(
        len_ref, x_ref,
        wih1_ref, whh1_ref, b1_ref,
        wih2_ref, whh2_ref, b2_ref,
        wih3_ref, whh3_ref, b3_ref,
        wout_ref, bout_ref,
        out_ref,
        gx1_sc, gx2_sc, gx3_sc, y1_sc, y2_sc):
    B = len_ref.shape[0]
    TB = x_ref.shape[0]
    T = TB // B

    lens = len_ref[...]                          # (B, 1) int32, loaded once

    def input_projection(x2d, wih_ref, b_ref, gx_sc):
        """Hoisted X @ W_ih for ALL timesteps: one (T*B, D) @ (D, 4H) matmul.
        Per-gate slices are written once to gx_sc[(4, T*B, H)] so the
        sequential loop never slices on the lane axis."""
        H = gx_sc.shape[-1]
        g = jnp.dot(x2d, wih_ref[...],
                    preferred_element_type=jnp.float32) + b_ref[...]  # (T*B, 4H)
        for k in range(4):                       # PyTorch gate order i, f, g, o
            gx_sc[k] = g[:, k * H:(k + 1) * H]

    def recurrence(whh_ref, gx_sc, y_sc):
        """Sequential part only.  (h, c) are fori_loop carries; per step:
        four per-gate (B,H)@(H,H) matmuls + elementwise gate math."""
        H = gx_sc.shape[-1]
        # hoist recurrent weight loads out of the time loop
        w_i, w_f, w_g, w_o = whh_ref[0], whh_ref[1], whh_ref[2], whh_ref[3]

        def step(t, carry):
            h, c = carry
            row = pl.multiple_of(t * B, B)       # sublane-aligned row offset

            i_g = jax.nn.sigmoid(gx_sc[0, pl.ds(row, B), :]
                                 + jnp.dot(h, w_i, preferred_element_type=jnp.float32))
            f_g = jax.nn.sigmoid(gx_sc[1, pl.ds(row, B), :]
                                 + jnp.dot(h, w_f, preferred_element_type=jnp.float32))
            g_g = jnp.tanh(gx_sc[2, pl.ds(row, B), :]
                           + jnp.dot(h, w_g, preferred_element_type=jnp.float32))
            o_g = jax.nn.sigmoid(gx_sc[3, pl.ds(row, B), :]
                                 + jnp.dot(h, w_o, preferred_element_type=jnp.float32))

            c_new = f_g * c + i_g * g_g
            h_new = o_g * jnp.tanh(c_new)

            # packed-sequence semantics: freeze state for t >= length[b]
            valid = lens > t                     # (B, 1) bool, broadcasts over H
            h = jnp.where(valid, h_new, h)
            c = jnp.where(valid, c_new, c)

            if y_sc is not None:
                # pad_packed_sequence pads past-length outputs with zeros
                y_sc[pl.ds(row, B), :] = jnp.where(valid, h_new, 0.0)
            return h, c

        h0 = jnp.zeros((B, H), jnp.float32)
        c0 = jnp.zeros((B, H), jnp.float32)
        h_last, _ = lax.fori_loop(0, T, step, (h0, c0), unroll=True)
        return h_last

    # ---- layer 1 ----
    input_projection(x_ref[...], wih1_ref, b1_ref, gx1_sc)
    recurrence(whh1_ref, gx1_sc, y1_sc)
    # ---- layer 2 ----
    input_projection(y1_sc[...], wih2_ref, b2_ref, gx2_sc)
    recurrence(whh2_ref, gx2_sc, y2_sc)
    # ---- layer 3 ----
    input_projection(y2_sc[...], wih3_ref, b3_ref, gx3_sc)
    h3 = recurrence(whh3_ref, gx3_sc, None)      # only h_last is needed

    # ---- linear + softmax head (fused; one tiny store) ----
    logits = jnp.dot(h3, wout_ref[...],
                     preferred_element_type=jnp.float32) + bout_ref[...]
    m = jnp.max(logits, axis=-1, keepdims=True)
    e = jnp.exp(logits - m)
    out_ref[...] = (e / jnp.sum(e, axis=-1, keepdims=True)).astype(out_ref.dtype)


def _full_spec(shape):
    nd = len(shape)
    return pl.BlockSpec(tuple(shape), lambda i, nd=nd: (0,) * nd)


def fused_lstm_head(x_flat, lens2d,
                    wih1, whh1g, b1, wih2, whh2g, b2, wih3, whh3g, b3,
                    w_out, b_out):
    """x_flat: (T*B, E) f32 time-major-flattened embeddings; lens2d: (B,1) i32.
    wih_l: (D_l, 4H_l); whh_lg: (4, H_l, H_l); b_l: (1, 4H_l).
    Returns softmax(linear(h_last_layer3)) of shape (B, C)."""
    B = lens2d.shape[0]
    TB = x_flat.shape[0]
    T = TB // B
    H1, H2, H3 = whh1g.shape[-1], whh2g.shape[-1], whh3g.shape[-1]
    C = w_out.shape[-1]

    inputs = (lens2d, x_flat, wih1, whh1g, b1, wih2, whh2g, b2,
              wih3, whh3g, b3, w_out, b_out)

    return pl.pallas_call(
        _fused_lstm_head_kernel,
        out_shape=jax.ShapeDtypeStruct((B, C), jnp.float32),
        grid=(1,),
        in_specs=[_full_spec(a.shape) for a in inputs],
        out_specs=_full_spec((B, C)),
        scratch_shapes=[
            pltpu.VMEM((4, T * B, H1), jnp.float32),   # per-gate input gates, L1
            pltpu.VMEM((4, T * B, H2), jnp.float32),   # per-gate input gates, L2
            pltpu.VMEM((4, T * B, H3), jnp.float32),   # per-gate input gates, L3
            pltpu.VMEM((T * B, H1), jnp.float32),      # layer-1 outputs
            pltpu.VMEM((T * B, H2), jnp.float32),      # layer-2 outputs
        ],
        compiler_params=pltpu.CompilerParams(
            dimension_semantics=("arbitrary",)),
    )(*inputs)


# --------------------------------------------------------------------------
# Model (embedding gather / dropout / layout in XLA, everything else fused)
# --------------------------------------------------------------------------
def _split_hh_gates(w_hh):
    """(H, 4H) packed i|f|g|o -> (4, H, H): each gate's recurrent matmul is an
    independent tile, so the sequential loop never slices on the lane axis."""
    H = w_hh.shape[0]
    return jnp.stack([w_hh[:, k * H:(k + 1) * H] for k in range(4)], axis=0)


@jax.jit
def lstm_current_model_forward(params, token_ids, lengths):
    B, T = token_ids.shape
    # nn.Embedding(padding_idx=0): row 0 of the table is zero. (XLA gather.)
    emb = params["embedding"][token_ids]                       # (B, T, E)
    # nn.Dropout: identity in eval-mode forward.
    x = jnp.transpose(emb, (1, 0, 2)).astype(jnp.float32)      # (T, B, E)
    x_flat = x.reshape(T * B, -1)                              # (T*B, E)
    lens2d = lengths.reshape(-1, 1).astype(jnp.int32)          # (B, 1)

    wih1, whh1, b1 = params["rnn_1"]
    wih2, whh2, b2 = params["rnn_2"]
    wih3, whh3, b3 = params["rnn_3"]

    return fused_lstm_head(
        x_flat, lens2d,
        wih1, _split_hh_gates(whh1), b1,
        wih2, _split_hh_gates(whh2), b2,
        wih3, _split_hh_gates(whh3), b3,
        params["linear_w"], params["linear_b"])


# --------------------------------------------------------------------------
# Pure-JAX reference (for a correctness check)
# --------------------------------------------------------------------------
def reference_forward(params, token_ids, lengths):
    x = params["embedding"][token_ids].astype(jnp.float32)     # (B, T, E)
    lens = lengths.astype(jnp.int32)

    def run_layer(xs, wih, whh, b):
        B, T, _ = xs.shape
        H = whh.shape[0]

        def step(carry, t):
            h, c = carry
            x_t = xs[:, t, :]
            gates = x_t @ wih + h @ whh + b[0]
            i_g = jax.nn.sigmoid(gates[:, 0:H])
            f_g = jax.nn.sigmoid(gates[:, H:2 * H])
            g_g = jnp.tanh(gates[:, 2 * H:3 * H])
            o_g = jax.nn.sigmoid(gates[:, 3 * H:4 * H])
            c_new = f_g * c + i_g * g_g
            h_new = o_g * jnp.tanh(c_new)
            valid = (lens > t)[:, None]
            h = jnp.where(valid, h_new, h)
            c = jnp.where(valid, c_new, c)
            return (h, c), h

        (h, _), ys = lax.scan(step,
                              (jnp.zeros((B, H), jnp.float32),
                               jnp.zeros((B, H), jnp.float32)),
                              jnp.arange(T))
        return jnp.transpose(ys, (1, 0, 2)), h

    y, _ = run_layer(x, *params["rnn_1"])
    y, _ = run_layer(y, *params["rnn_2"])
    _, h3 = run_layer(y, *params["rnn_3"])
    logits = h3 @ params["linear_w"] + params["linear_b"][0]
    return jax.nn.softmax(logits, axis=1)


# --------------------------------------------------------------------------
# Deterministic parameter init
# --------------------------------------------------------------------------
def init_params(key, vocab_size, embedding_dim, hidden_dim, num_classes=3):
    ks = iter(jax.random.split(key, 32))

    def unif(k, shape, scale):
        return jax.random.uniform(k, shape, jnp.float32, -scale, scale)

    emb = jax.random.normal(next(ks), (vocab_size, embedding_dim),
                            jnp.float32) * 0.1
    emb = emb.at[0].set(0.0)                                   # padding_idx=0

    def lstm_params(d_in, h):
        s = 1.0 / jnp.sqrt(h)
        w_ih = unif(next(ks), (d_in, 4 * h), s)                # (D, 4H)
        w_hh = unif(next(ks), (h, 4 * h), s)                   # (H, 4H)
        b = (unif(next(ks), (4 * h,), s)
             + unif(next(ks), (4 * h,), s)).reshape(1, 4 * h)  # b_ih + b_hh
        return (w_ih, w_hh, b)

    params = {
        "embedding": emb,
        "rnn_1": lstm_params(embedding_dim, hidden_dim[0]),
        "rnn_2": lstm_params(hidden_dim[0], hidden_dim[1]),
        "rnn_3": lstm_params(hidden_dim[1], hidden_dim[2]),
        "linear_w": unif(next(ks), (hidden_dim[2], num_classes),
                         1.0 / jnp.sqrt(hidden_dim[2])),
        "linear_b": unif(next(ks), (1, num_classes),
                         1.0 / jnp.sqrt(hidden_dim[2])),
    }
    return params


# --------------------------------------------------------------------------
if __name__ == "__main__":
    VOCAB, EMB, HID = 50, 32, [32, 64, 32]
    B, T = 8, 8

    key = jax.random.PRNGKey(0)
    k_param, k_tok, k_len = jax.random.split(key, 3)

    params = init_params(k_param, VOCAB, EMB, HID)

    token_ids = jax.random.randint(k_tok, (B, T), 1, VOCAB, dtype=jnp.int32)
    lengths = jax.random.randint(k_len, (B,), 1, T + 1, dtype=jnp.int32)
    # zero-pad positions beyond each sequence length (padding token id = 0)
    pos = jnp.arange(T, dtype=jnp.int32)[None, :]
    token_ids = jnp.where(pos < lengths[:, None], token_ids, 0)

    out = jax.block_until_ready(
        lstm_current_model_forward(params, token_ids, lengths))
    ref = jax.block_until_ready(reference_forward(params, token_ids, lengths))

    assert out.shape == (B, 3)
    assert jnp.all(jnp.isfinite(out))
    assert jnp.max(jnp.abs(out - ref)) < 1e-2, float(jnp.max(jnp.abs(out - ref)))

    print("KERNEL_OK")
</pallas_src>

<mosaic_0001>
module attributes {stable_mosaic.version = 11 : i64} {
  func.func @_fused_lstm_head_kernel(%arg0: i32, %arg1: memref<8x1xi32, #tpu.memory_space<vmem>>, %arg2: memref<64x32xf32, #tpu.memory_space<vmem>>, %arg3: memref<32x128xf32, #tpu.memory_space<vmem>>, %arg4: memref<4x32x32xf32, #tpu.memory_space<vmem>>, %arg5: memref<1x128xf32, #tpu.memory_space<vmem>>, %arg6: memref<32x256xf32, #tpu.memory_space<vmem>>, %arg7: memref<4x64x64xf32, #tpu.memory_space<vmem>>, %arg8: memref<1x256xf32, #tpu.memory_space<vmem>>, %arg9: memref<64x128xf32, #tpu.memory_space<vmem>>, %arg10: memref<4x32x32xf32, #tpu.memory_space<vmem>>, %arg11: memref<1x128xf32, #tpu.memory_space<vmem>>, %arg12: memref<32x3xf32, #tpu.memory_space<vmem>>, %arg13: memref<1x3xf32, #tpu.memory_space<vmem>>, %arg14: memref<8x3xf32, #tpu.memory_space<vmem>>, %arg15: memref<4x64x32xf32, #tpu.memory_space<vmem>>, %arg16: memref<4x64x64xf32, #tpu.memory_space<vmem>>, %arg17: memref<4x64x32xf32, #tpu.memory_space<vmem>>, %arg18: memref<64x32xf32, #tpu.memory_space<vmem>>, %arg19: memref<64x64xf32, #tpu.memory_space<vmem>>) attributes {dimension_semantics = [#tpu.dimension_semantics<arbitrary>], iteration_bounds = array<i64: 1>, scalar_prefetch = 0 : i64, scratch_operands = 5 : i64, tpu.core_type = #tpu.core_type<tc>, window_params = [{pipeline_mode = #tpu.pipeline_mode<synchronous>, transform_indices = @transform_0, window_bounds = array<i64: 8, 1>}, {pipeline_mode = #tpu.pipeline_mode<synchronous>, transform_indices = @transform_1, window_bounds = array<i64: 64, 32>}, {pipeline_mode = #tpu.pipeline_mode<synchronous>, transform_indices = @transform_2, window_bounds = array<i64: 32, 128>}, {pipeline_mode = #tpu.pipeline_mode<synchronous>, transform_indices = @transform_3, window_bounds = array<i64: 4, 32, 32>}, {pipeline_mode = #tpu.pipeline_mode<synchronous>, transform_indices = @transform_4, window_bounds = array<i64: 1, 128>}, {pipeline_mode = #tpu.pipeline_mode<synchronous>, transform_indices = @transform_5, window_bounds = array<i64: 32, 256>}, {pipeline_mode = #tpu.pipeline_mode<synchronous>, transform_indices = @transform_6, window_bounds = array<i64: 4, 64, 64>}, {pipeline_mode = #tpu.pipeline_mode<synchronous>, transform_indices = @transform_7, window_bounds = array<i64: 1, 256>}, {pipeline_mode = #tpu.pipeline_mode<synchronous>, transform_indices = @transform_8, window_bounds = array<i64: 64, 128>}, {pipeline_mode = #tpu.pipeline_mode<synchronous>, transform_indices = @transform_9, window_bounds = array<i64: 4, 32, 32>}, {pipeline_mode = #tpu.pipeline_mode<synchronous>, transform_indices = @transform_10, window_bounds = array<i64: 1, 128>}, {pipeline_mode = #tpu.pipeline_mode<synchronous>, transform_indices = @transform_11, window_bounds = array<i64: 32, 3>}, {pipeline_mode = #tpu.pipeline_mode<synchronous>, transform_indices = @transform_12, window_bounds = array<i64: 1, 3>}, {pipeline_mode = #tpu.pipeline_mode<synchronous>, transform_indices = @transform_13, window_bounds = array<i64: 8, 3>}]} {
    %c0 = arith.constant 0 : index
    %c0_0 = arith.constant 0 : index
    %0 = vector.load %arg1[%c0, %c0_0] : memref<8x1xi32, #tpu.memory_space<vmem>>, vector<8x1xi32>
    %c0_1 = arith.constant 0 : index
    %c0_2 = arith.constant 0 : index
    %1 = vector.load %arg2[%c0_1, %c0_2] : memref<64x32xf32, #tpu.memory_space<vmem>>, vector<64x32xf32>
    %c0_3 = arith.constant 0 : index
    %c0_4 = arith.constant 0 : index
    %2 = vector.load %arg3[%c0_3, %c0_4] : memref<32x128xf32, #tpu.memory_space<vmem>>, vector<32x128xf32>
    %cst = arith.constant dense<0.000000e+00> : vector<64x128xf32>
    %3 = tpu.matmul %1, %2, %cst {dimension_numbers = #tpu.dot_dimension_numbers<[1], [0], [0], [1], [0, 0, 1, 1], [], []>} : vector<64x32xf32>, vector<32x128xf32>, vector<64x128xf32> -> vector<64x128xf32>
    %c0_5 = arith.constant 0 : index
    %c0_6 = arith.constant 0 : index
    %4 = vector.load %arg5[%c0_5, %c0_6] : memref<1x128xf32, #tpu.memory_space<vmem>>, vector<1x128xf32>
    %5 = vector.broadcast %4 : vector<1x128xf32> to vector<64x128xf32>
    %6 = arith.addf %3, %5 : vector<64x128xf32>
    %7 = vector.extract_strided_slice %6 {offsets = [0, 0], sizes = [64, 32], strides = [1, 1]} : vector<64x128xf32> to vector<64x32xf32>
    %c0_7 = arith.constant 0 : index
    %c0_8 = arith.constant 0 : index
    %c0_9 = arith.constant 0 : index
    %8 = vector.load %arg15[%c0_7, %c0_8, %c0_9] : memref<4x64x32xf32, #tpu.memory_space<vmem>>, vector<1x64x32xf32>
    %9 = vector.shape_cast %8 : vector<1x64x32xf32> to vector<64x32xf32>
    %10 = vector.shape_cast %7 : vector<64x32xf32> to vector<1x64x32xf32>
    tpu.vector_store %arg15[%c0_7, %c0_8, %c0_9], %10 {strides = array<i32>} : memref<4x64x32xf32, #tpu.memory_space<vmem>>, vector<1x64x32xf32>,
    %11 = vector.extract_strided_slice %6 {offsets = [0, 32], sizes = [64, 32], strides = [1, 1]} : vector<64x128xf32> to vector<64x32xf32>
    %c1 = arith.constant 1 : index
    %c0_10 = arith.constant 0 : index
    %c0_11 = arith.constant 0 : index
    %12 = vector.load %arg15[%c1, %c0_10, %c0_11] : memref<4x64x32xf32, #tpu.memory_space<vmem>>, vector<1x64x32xf32>
    %13 = vector.shape_cast %12 : vector<1x64x32xf32> to vector<64x32xf32>
    %14 = vector.shape_cast %11 : vector<64x32xf32> to vector<1x64x32xf32>
    tpu.vector_store %arg15[%c1, %c0_10, %c0_11], %14 {strides = array<i32>} : memref<4x64x32xf32, #tpu.memory_space<vmem>>, vector<1x64x32xf32>,
    %15 = vector.extract_strided_slice %6 {offsets = [0, 64], sizes = [64, 32], strides = [1, 1]} : vector<64x128xf32> to vector<64x32xf32>
    %c2 = arith.constant 2 : index
    %c0_12 = arith.constant 0 : index
    %c0_13 = arith.constant 0 : index
    %16 = vector.load %arg15[%c2, %c0_12, %c0_13] : memref<4x64x32xf32, #tpu.memory_space<vmem>>, vector<1x64x32xf32>
    %17 = vector.shape_cast %16 : vector<1x64x32xf32> to vector<64x32xf32>
    %18 = vector.shape_cast %15 : vector<64x32xf32> to vector<1x64x32xf32>
    tpu.vector_store %arg15[%c2, %c0_12, %c0_13], %18 {strides = array<i32>} : memref<4x64x32xf32, #tpu.memory_space<vmem>>, vector<1x64x32xf32>,
    %19 = vector.extract_strided_slice %6 {offsets = [0, 96], sizes = [64, 32], strides = [1, 1]} : vector<64x128xf32> to vector<64x32xf32>
    %c3 = arith.constant 3 : index
    %c0_14 = arith.constant 0 : index
    %c0_15 = arith.constant 0 : index
    %20 = vector.load %arg15[%c3, %c0_14, %c0_15] : memref<4x64x32xf32, #tpu.memory_space<vmem>>, vector<1x64x32xf32>
    %21 = vector.shape_cast %20 : vector<1x64x32xf32> to vector<64x32xf32>
    %22 = vector.shape_cast %19 : vector<64x32xf32> to vector<1x64x32xf32>
    tpu.vector_store %arg15[%c3, %c0_14, %c0_15], %22 {strides = array<i32>} : memref<4x64x32xf32, #tpu.memory_space<vmem>>, vector<1x64x32xf32>,
    %c0_16 = arith.constant 0 : index
    %c0_17 = arith.constant 0 : index
    %c0_18 = arith.constant 0 : index
    %23 = vector.load %arg4[%c0_16, %c0_17, %c0_18] : memref<4x32x32xf32, #tpu.memory_space<vmem>>, vector<1x32x32xf32>
    %24 = vector.shape_cast %23 : vector<1x32x32xf32> to vector<32x32xf32>
    %c1_19 = arith.constant 1 : index
    %c0_20 = arith.constant 0 : index
    %c0_21 = arith.constant 0 : index
    %25 = vector.load %arg4[%c1_19, %c0_20, %c0_21] : memref<4x32x32xf32, #tpu.memory_space<vmem>>, vector<1x32x32xf32>
    %26 = vector.shape_cast %25 : vector<1x32x32xf32> to vector<32x32xf32>
    %c2_22 = arith.constant 2 : index
    %c0_23 = arith.constant 0 : index
    %c0_24 = arith.constant 0 : index
    %27 = vector.load %arg4[%c2_22, %c0_23, %c0_24] : memref<4x32x32xf32, #tpu.memory_space<vmem>>, vector<1x32x32xf32>
    %28 = vector.shape_cast %27 : vector<1x32x32xf32> to vector<32x32xf32>
    %c3_25 = arith.constant 3 : index
    %c0_26 = arith.constant 0 : index
    %c0_27 = arith.constant 0 : index
    %29 = vector.load %arg4[%c3_25, %c0_26, %c0_27] : memref<4x32x32xf32, #tpu.memory_space<vmem>>, vector<1x32x32xf32>
    %30 = vector.shape_cast %29 : vector<1x32x32xf32> to vector<32x32xf32>
    %cst_28 = arith.constant 0.000000e+00 : f32
    %31 = vector.broadcast %cst_28 : f32 to vector<8x32xf32>
    %cst_29 = arith.constant 0.000000e+00 : f32
    %32 = vector.broadcast %cst_29 : f32 to vector<8x32xf32>
    %c0_i32 = arith.constant 0 : i32
    %c8_i32 = arith.constant 8 : i32
    %33 = arith.muli %c0_i32, %c8_i32 : i32
    %34 = tpu.assume_multiple %33, 8 : i32
    %c0_30 = arith.constant 0 : index
    %35 = arith.index_cast %34 : i32 to index
    %c0_31 = arith.constant 0 : index
    %36 = vector.load %arg15[%c0_30, %35, %c0_31] : memref<4x64x32xf32, #tpu.memory_space<vmem>>, vector<1x8x32xf32>
    %37 = vector.shape_cast %36 : vector<1x8x32xf32> to vector<8x32xf32>
    %cst_32 = arith.constant dense<0.000000e+00> : vector<8x32xf32>
    %38 = tpu.matmul %31, %24, %cst_32 {dimension_numbers = #tpu.dot_dimension_numbers<[1], [0], [0], [1], [0, 0, 1, 1], [], []>} : vector<8x32xf32>, vector<32x32xf32>, vector<8x32xf32> -> vector<8x32xf32>
    %39 = arith.addf %37, %38 : vector<8x32xf32>
    %40 = arith.negf %39 : vector<8x32xf32>
    %41 = math.exp %40 : vector<8x32xf32>
    %cst_33 = arith.constant 1.000000e+00 : f32
    %42 = vector.broadcast %cst_33 : f32 to vector<8x32xf32>
    %43 = arith.addf %42, %41 : vector<8x32xf32>
    %44 = arith.divf %42, %43 : vector<8x32xf32>
    %c1_34 = arith.constant 1 : index
    %45 = arith.index_cast %34 : i32 to index
    %c0_35 = arith.constant 0 : index
    %46 = vector.load %arg15[%c1_34, %45, %c0_35] : memref<4x64x32xf32, #tpu.memory_space<vmem>>, vector<1x8x32xf32>
    %47 = vector.shape_cast %46 : vector<1x8x32xf32> to vector<8x32xf32>
    %cst_36 = arith.constant dense<0.000000e+00> : vector<8x32xf32>
    %48 = tpu.matmul %31, %26, %cst_36 {dimension_numbers = #tpu.dot_dimension_numbers<[1], [0], [0], [1], [0, 0, 1, 1], [], []>} : vector<8x32xf32>, vector<32x32xf32>, vector<8x32xf32> -> vector<8x32xf32>
    %49 = arith.addf %47, %48 : vector<8x32xf32>
    %50 = arith.negf %49 : vector<8x32xf32>
    %51 = math.exp %50 : vector<8x32xf32>
    %cst_37 = arith.constant 1.000000e+00 : f32
    %52 = vector.broadcast %cst_37 : f32 to vector<8x32xf32>
    %53 = arith.addf %52, %51 : vector<8x32xf32>
    %54 = arith.divf %52, %53 : vector<8x32xf32>
    %c2_38 = arith.constant 2 : index
    %55 = arith.index_cast %34 : i32 to index
    %c0_39 = arith.constant 0 : index
    %56 = vector.load %arg15[%c2_38, %55, %c0_39] : memref<4x64x32xf32, #tpu.memory_space<vmem>>, vector<1x8x32xf32>
    %57 = vector.shape_cast %56 : vector<1x8x32xf32> to vector<8x32xf32>
    %cst_40 = arith.constant dense<0.000000e+00> : vector<8x32xf32>
    %58 = tpu.matmul %31, %28, %cst_40 {dimension_numbers = #tpu.dot_dimension_numbers<[1], [0], [0], [1], [0, 0, 1, 1], [], []>} : vector<8x32xf32>, vector<32x32xf32>, vector<8x32xf32> -> vector<8x32xf32>
    %59 = arith.addf %57, %58 : vector<8x32xf32>
    %60 = math.tanh %59 : vector<8x32xf32>
    %c3_41 = arith.constant 3 : index
    %61 = arith.index_cast %34 : i32 to index
    %c0_42 = arith.constant 0 : index
    %62 = vector.load %arg15[%c3_41, %61, %c0_42] : memref<4x64x32xf32, #tpu.memory_space<vmem>>, vector<1x8x32xf32>
    %63 = vector.shape_cast %62 : vector<1x8x32xf32> to vector<8x32xf32>
    %cst_43 = arith.constant dense<0.000000e+00> : vector<8x32xf32>
    %64 = tpu.matmul %31, %30, %cst_43 {dimension_numbers = #tpu.dot_dimension_numbers<[1], [0], [0], [1], [0, 0, 1, 1], [], []>} : vector<8x32xf32>, vector<32x32xf32>, vector<8x32xf32> -> vector<8x32xf32>
    %65 = arith.addf %63, %64 : vector<8x32xf32>
    %66 = arith.negf %65 : vector<8x32xf32>
    %67 = math.exp %66 : vector<8x32xf32>
    %cst_44 = arith.constant 1.000000e+00 : f32
    %68 = vector.broadcast %cst_44 : f32 to vector<8x32xf32>
    %69 = arith.addf %68, %67 : vector<8x32xf32>
    %70 = arith.divf %68, %69 : vector<8x32xf32>
    %71 = arith.mulf %54, %32 : vector<8x32xf32>
    %72 = arith.mulf %44, %60 : vector<8x32xf32>
    %73 = arith.addf %71, %72 : vector<8x32xf32>
    %74 = math.tanh %73 : vector<8x32xf32>
    %75 = arith.mulf %70, %74 : vector<8x32xf32>
    %76 = vector.broadcast %c0_i32 : i32 to vector<8x1xi32>
    %77 = arith.cmpi sgt, %0, %76 : vector<8x1xi32>
    %78 = vector.shape_cast %77 : vector<8x1xi1> to vector<8x1xi1>
    %79 = vector.broadcast %78 : vector<8x1xi1> to vector<8x32xi1>
    %80 = arith.select %79, %75, %31 : vector<8x32xi1>, vector<8x32xf32>
    %81 = vector.shape_cast %77 : vector<8x1xi1> to vector<8x1xi1>
    %82 = vector.broadcast %81 : vector<8x1xi1> to vector<8x32xi1>
    %83 = arith.select %82, %73, %32 : vector<8x32xi1>, vector<8x32xf32>
    %cst_45 = arith.constant 0.000000e+00 : f32
    %84 = vector.shape_cast %77 : vector<8x1xi1> to vector<8x1xi1>
    %85 = vector.broadcast %84 : vector<8x1xi1> to vector<8x32xi1>
    %86 = vector.broadcast %cst_45 : f32 to vector<8x32xf32>
    %87 = arith.select %85, %75, %86 : vector<8x32xi1>, vector<8x32xf32>
    %88 = arith.index_cast %34 : i32 to index
    %c0_46 = arith.constant 0 : index
    %89 = vector.load %arg18[%88, %c0_46] : memref<64x32xf32, #tpu.memory_space<vmem>>, vector<8x32xf32>
    tpu.vector_store %arg18[%88, %c0_46], %87 {strides = array<i32>} : memref<64x32xf32, #tpu.memory_space<vmem>>, vector<8x32xf32>,
    %c1_i32 = arith.constant 1 : i32
    %c8_i32_47 = arith.constant 8 : i32
    %90 = arith.muli %c1_i32, %c8_i32_47 : i32
    %91 = tpu.assume_multiple %90, 8 : i32
    %c0_48 = arith.constant 0 : index
    %92 = arith.index_cast %91 : i32 to index
    %c0_49 = arith.constant 0 : index
    %93 = vector.load %arg15[%c0_48, %92, %c0_49] : memref<4x64x32xf32, #tpu.memory_space<vmem>>, vector<1x8x32xf32>
    %94 = vector.shape_cast %93 : vector<1x8x32xf32> to vector<8x32xf32>
    %cst_50 = arith.constant dense<0.000000e+00> : vector<8x32xf32>
    %95 = tpu.matmul %80, %24, %cst_50 {dimension_numbers = #tpu.dot_dimension_numbers<[1], [0], [0], [1], [0, 0, 1, 1], [], []>} : vector<8x32xf32>, vector<32x32xf32>, vector<8x32xf32> -> vector<8x32xf32>
    %96 = arith.addf %94, %95 : vector<8x32xf32>
    %97 = arith.negf %96 : vector<8x32xf32>
    %98 = math.exp %97 : vector<8x32xf32>
    %cst_51 = arith.constant 1.000000e+00 : f32
    %99 = vector.broadcast %cst_51 : f32 to vector<8x32xf32>
    %100 = arith.addf %99, %98 : vector<8x32xf32>
    %101 = arith.divf %99, %100 : vector<8x32xf32>
    %c1_52 = arith.constant 1 : index
    %102 = arith.index_cast %91 : i32 to index
    %c0_53 = arith.constant 0 : index
    %103 = vector.load %arg15[%c1_52, %102, %c0_53] : memref<4x64x32xf32, #tpu.memory_space<vmem>>, vector<1x8x32xf32>
    %104 = vector.shape_cast %103 : vector<1x8x32xf32> to vector<8x32xf32>
    %cst_54 = arith.constant dense<0.000000e+00> : vector<8x32xf32>
    %105 = tpu.matmul %80, %26, %cst_54 {dimension_numbers = #tpu.dot_dimension_numbers<[1], [0], [0], [1], [0, 0, 1, 1], [], []>} : vector<8x32xf32>, vector<32x32xf32>, vector<8x32xf32> -> vector<8x32xf32>
    %106 = arith.addf %104, %105 : vector<8x32xf32>
    %107 = arith.negf %106 : vector<8x32xf32>
    %108 = math.exp %107 : vector<8x32xf32>
    %cst_55 = arith.constant 1.000000e+00 : f32
    %109 = vector.broadcast %cst_55 : f32 to vector<8x32xf32>
    %110 = arith.addf %109, %108 : vector<8x32xf32>
    %111 = arith.divf %109, %110 : vector<8x32xf32>
    %c2_56 = arith.constant 2 : index
    %112 = arith.index_cast %91 : i32 to index
    %c0_57 = arith.constant 0 : index
    %113 = vector.load %arg15[%c2_56, %112, %c0_57] : memref<4x64x32xf32, #tpu.memory_space<vmem>>, vector<1x8x32xf32>
    %114 = vector.shape_cast %113 : vector<1x8x32xf32> to vector<8x32xf32>
    %cst_58 = arith.constant dense<0.000000e+00> : vector<8x32xf32>
    %115 = tpu.matmul %80, %28, %cst_58 {dimension_numbers = #tpu.dot_dimension_numbers<[1], [0], [0], [1], [0, 0, 1, 1], [], []>} : vector<8x32xf32>, vector<32x32xf32>, vector<8x32xf32> -> vector<8x32xf32>
    %116 = arith.addf %114, %115 : vector<8x32xf32>
    %117 = math.tanh %116 : vector<8x32xf32>
    %c3_59 = arith.constant 3 : index
    %118 = arith.index_cast %91 : i32 to index
    %c0_60 = arith.constant 0 : index
    %119 = vector.load %arg15[%c3_59, %118, %c0_60] : memref<4x64x32xf32, #tpu.memory_space<vmem>>, vector<1x8x32xf32>
    %120 = vector.shape_cast %119 : vector<1x8x32xf32> to vector<8x32xf32>
    %cst_61 = arith.constant dense<0.000000e+00> : vector<8x32xf32>
    %121 = tpu.matmul %80, %30, %cst_61 {dimension_numbers = #tpu.dot_dimension_numbers<[1], [0], [0], [1], [0, 0, 1, 1], [], []>} : vector<8x32xf32>, vector<32x32xf32>, vector<8x32xf32> -> vector<8x32xf32>
    %122 = arith.addf %120, %121 : vector<8x32xf32>
    %123 = arith.negf %122 : vector<8x32xf32>
    %124 = math.exp %123 : vector<8x32xf32>
    %cst_62 = arith.constant 1.000000e+00 : f32
    %125 = vector.broadcast %cst_62 : f32 to vector<8x32xf32>
    %126 = arith.addf %125, %124 : vector<8x32xf32>
    %127 = arith.divf %125, %126 : vector<8x32xf32>
    %128 = arith.mulf %111, %83 : vector<8x32xf32>
    %129 = arith.mulf %101, %117 : vector<8x32xf32>
    %130 = arith.addf %128, %129 : vector<8x32xf32>
    %131 = math.tanh %130 : vector<8x32xf32>
    %132 = arith.mulf %127, %131 : vector<8x32xf32>
    %133 = vector.broadcast %c1_i32 : i32 to vector<8x1xi32>
    %134 = arith.cmpi sgt, %0, %133 : vector<8x1xi32>
    %135 = vector.shape_cast %134 : vector<8x1xi1> to vector<8x1xi1>
    %136 = vector.broadcast %135 : vector<8x1xi1> to vector<8x32xi1>
    %137 = arith.select %136, %132, %80 : vector<8x32xi1>, vector<8x32xf32>
    %138 = vector.shape_cast %134 : vector<8x1xi1> to vector<8x1xi1>
    %139 = vector.broadcast %138 : vector<8x1xi1> to vector<8x32xi1>
    %140 = arith.select %139, %130, %83 : vector<8x32xi1>, vector<8x32xf32>
    %cst_63 = arith.constant 0.000000e+00 : f32
    %141 = vector.shape_cast %134 : vector<8x1xi1> to vector<8x1xi1>
    %142 = vector.broadcast %141 : vector<8x1xi1> to vector<8x32xi1>
    %143 = vector.broadcast %cst_63 : f32 to vector<8x32xf32>
    %144 = arith.select %142, %132, %143 : vector<8x32xi1>, vector<8x32xf32>
    %145 = arith.index_cast %91 : i32 to index
    %c0_64 = arith.constant 0 : index
    %146 = vector.load %arg18[%145, %c0_64] : memref<64x32xf32, #tpu.memory_space<vmem>>, vector<8x32xf32>
    tpu.vector_store %arg18[%145, %c0_64], %144 {strides = array<i32>} : memref<64x32xf32, #tpu.memory_space<vmem>>, vector<8x32xf32>,
    %c2_i32 = arith.constant 2 : i32
    %c8_i32_65 = arith.constant 8 : i32
    %147 = arith.muli %c2_i32, %c8_i32_65 : i32
    %148 = tpu.assume_multiple %147, 8 : i32
    %c0_66 = arith.constant 0 : index
    %149 = arith.index_cast %148 : i32 to index
    %c0_67 = arith.constant 0 : index
    %150 = vector.load %arg15[%c0_66, %149, %c0_67] : memref<4x64x32xf32, #tpu.memory_space<vmem>>, vector<1x8x32xf32>
    %151 = vector.shape_cast %150 : vector<1x8x32xf32> to vector<8x32xf32>
    %cst_68 = arith.constant dense<0.000000e+00> : vector<8x32xf32>
    %152 = tpu.matmul %137, %24, %cst_68 {dimension_numbers = #tpu.dot_dimension_numbers<[1], [0], [0], [1], [0, 0, 1, 1], [], []>} : vector<8x32xf32>, vector<32x32xf32>, vector<8x32xf32> -> vector<8x32xf32>
    %153 = arith.addf %151, %152 : vector<8x32xf32>
    %154 = arith.negf %153 : vector<8x32xf32>
    %155 = math.exp %154 : vector<8x32xf32>
    %cst_69 = arith.constant 1.000000e+00 : f32
    %156 = vector.broadcast %cst_69 : f32 to vector<8x32xf32>
    %157 = arith.addf %156, %155 : vector<8x32xf32>
    %158 = arith.divf %156, %157 : vector<8x32xf32>
    %c1_70 = arith.constant 1 : index
    %159 = arith.index_cast %148 : i32 to index
    %c0_71 = arith.constant 0 : index
    %160 = vector.load %arg15[%c1_70, %159, %c0_71] : memref<4x64x32xf32, #tpu.memory_space<vmem>>, vector<1x8x32xf32>
    %161 = vector.shape_cast %160 : vector<1x8x32xf32> to vector<8x32xf32>
    %cst_72 = arith.constant dense<0.000000e+00> : vector<8x32xf32>
    %162 = tpu.matmul %137, %26, %cst_72 {dimension_numbers = #tpu.dot_dimension_numbers<[1], [0], [0], [1], [0, 0, 1, 1], [], []>} : vector<8x32xf32>, vector<32x32xf32>, vector<8x32xf32> -> vector<8x32xf32>
    %163 = arith.addf %161, %162 : vector<8x32xf32>
    %164 = arith.negf %163 : vector<8x32xf32>
    %165 = math.exp %164 : vector<8x32xf32>
    %cst_73 = arith.constant 1.000000e+00 : f32
    %166 = vector.broadcast %cst_73 : f32 to vector<8x32xf32>
    %167 = arith.addf %166, %165 : vector<8x32xf32>
    %168 = arith.divf %166, %167 : vector<8x32xf32>
    %c2_74 = arith.constant 2 : index
    %169 = arith.index_cast %148 : i32 to index
    %c0_75 = arith.constant 0 : index
    %170 = vector.load %arg15[%c2_74, %169, %c0_75] : memref<4x64x32xf32, #tpu.memory_space<vmem>>, vector<1x8x32xf32>
    %171 = vector.shape_cast %170 : vector<1x8x32xf32> to vector<8x32xf32>
    %cst_76 = arith.constant dense<0.000000e+00> : vector<8x32xf32>
    %172 = tpu.matmul %137, %28, %cst_76 {dimension_numbers = #tpu.dot_dimension_numbers<[1], [0], [0], [1], [0, 0, 1, 1], [], []>} : vector<8x32xf32>, vector<32x32xf32>, vector<8x32xf32> -> vector<8x32xf32>
    %173 = arith.addf %171, %172 : vector<8x32xf32>
    %174 = math.tanh %173 : vector<8x32xf32>
    %c3_77 = arith.constant 3 : index
    %175 = arith.index_cast %148 : i32 to index
    %c0_78 = arith.constant 0 : index
    %176 = vector.load %arg15[%c3_77, %175, %c0_78] : memref<4x64x32xf32, #tpu.memory_space<vmem>>, vector<1x8x32xf32>
    %177 = vector.shape_cast %176 : vector<1x8x32xf32> to vector<8x32xf32>
    %cst_79 = arith.constant dense<0.000000e+00> : vector<8x32xf32>
    %178 = tpu.matmul %137, %30, %cst_79 {dimension_numbers = #tpu.dot_dimension_numbers<[1], [0], [0], [1], [0, 0, 1, 1], [], []>} : vector<8x32xf32>, vector<32x32xf32>, vector<8x32xf32> -> vector<8x32xf32>
    %179 = arith.addf %177, %178 : vector<8x32xf32>
    %180 = arith.negf %179 : vector<8x32xf32>
    %181 = math.exp %180 : vector<8x32xf32>
    %cst_80 = arith.constant 1.000000e+00 : f32
    %182 = vector.broadcast %cst_80 : f32 to vector<8x32xf32>
    %183 = arith.addf %182, %181 : vector<8x32xf32>
    %184 = arith.divf %182, %183 : vector<8x32xf32>
    %185 = arith.mulf %168, %140 : vector<8x32xf32>
    %186 = arith.mulf %158, %174 : vector<8x32xf32>
    %187 = arith.addf %185, %186 : vector<8x32xf32>
    %188 = math.tanh %187 : vector<8x32xf32>
    %189 = arith.mulf %184, %188 : vector<8x32xf32>
    %190 = vector.broadcast %c2_i32 : i32 to vector<8x1xi32>
    %191 = arith.cmpi sgt, %0, %190 : vector<8x1xi32>
    %192 = vector.shape_cast %191 : vector<8x1xi1> to vector<8x1xi1>
    %193 = vector.broadcast %192 : vector<8x1xi1> to vector<8x32xi1>
    %194 = arith.select %193, %189, %137 : vector<8x32xi1>, vector<8x32xf32>
    %195 = vector.shape_cast %191 : vector<8x1xi1> to vector<8x1xi1>
    %196 = vector.broadcast %195 : vector<8x1xi1> to vector<8x32xi1>
    %197 = arith.select %196, %187, %140 : vector<8x32xi1>, vector<8x32xf32>
    %cst_81 = arith.constant 0.000000e+00 : f32
    %198 = vector.shape_cast %191 : vector<8x1xi1> to vector<8x1xi1>
    %199 = vector.broadcast %198 : vector<8x1xi1> to vector<8x32xi1>
    %200 = vector.broadcast %cst_81 : f32 to vector<8x32xf32>
    %201 = arith.select %199, %189, %200 : vector<8x32xi1>, vector<8x32xf32>
    %202 = arith.index_cast %148 : i32 to index
    %c0_82 = arith.constant 0 : index
    %203 = vector.load %arg18[%202, %c0_82] : memref<64x32xf32, #tpu.memory_space<vmem>>, vector<8x32xf32>
    tpu.vector_store %arg18[%202, %c0_82], %201 {strides = array<i32>} : memref<64x32xf32, #tpu.memory_space<vmem>>, vector<8x32xf32>,
    %c3_i32 = arith.constant 3 : i32
    %c8_i32_83 = arith.constant 8 : i32
    %204 = arith.muli %c3_i32, %c8_i32_83 : i32
    %205 = tpu.assume_multiple %204, 8 : i32
    %c0_84 = arith.constant 0 : index
    %206 = arith.index_cast %205 : i32 to index
    %c0_85 = arith.constant 0 : index
    %207 = vector.load %arg15[%c0_84, %206, %c0_85] : memref<4x64x32xf32, #tpu.memory_space<vmem>>, vector<1x8x32xf32>
    %208 = vector.shape_cast %207 : vector<1x8x32xf32> to vector<8x32xf32>
    %cst_86 = arith.constant dense<0.000000e+00> : vector<8x32xf32>
    %209 = tpu.matmul %194, %24, %cst_86 {dimension_numbers = #tpu.dot_dimension_numbers<[1], [0], [0], [1], [0, 0, 1, 1], [], []>} : vector<8x32xf32>, vector<32x32xf32>, vector<8x32xf32> -> vector<8x32xf32>
    %210 = arith.addf %208, %209 : vector<8x32xf32>
    %211 = arith.negf %210 : vector<8x32xf32>
    %212 = math.exp %211 : vector<8x32xf32>
    %cst_87 = arith.constant 1.000000e+00 : f32
    %213 = vector.broadcast %cst_87 : f32 to vector<8x32xf32>
    %214 = arith.addf %213, %212 : vector<8x32xf32>
    %215 = arith.divf %213, %214 : vector<8x32xf32>
    %c1_88 = arith.constant 1 : index
    %216 = arith.index_cast %205 : i32 to index
    %c0_89 = arith.constant 0 : index
    %217 = vector.load %arg15[%c1_88, %216, %c0_89] : memref<4x64x32xf32, #tpu.memory_space<vmem>>, vector<1x8x32xf32>
    %218 = vector.shape_cast %217 : vector<1x8x32xf32> to vector<8x32xf32>
    %cst_90 = arith.constant dense<0.000000e+00> : vector<8x32xf32>
    %219 = tpu.matmul %194, %26, %cst_90 {dimension_numbers = #tpu.dot_dimension_numbers<[1], [0], [0], [1], [0, 0, 1, 1], [], []>} : vector<8x32xf32>, vector<32x32xf32>, vector<8x32xf32> -> vector<8x32xf32>
    %220 = arith.addf %218, %219 : vector<8x32xf32>
    %221 = arith.negf %220 : vector<8x32xf32>
    %222 = math.exp %221 : vector<8x32xf32>
    %cst_91 = arith.constant 1.000000e+00 : f32
    %223 = vector.broadcast %cst_91 : f32 to vector<8x32xf32>
    %224 = arith.addf %223, %222 : vector<8x32xf32>
    %225 = arith.divf %223, %224 : vector<8x32xf32>
    %c2_92 = arith.constant 2 : index
    %226 = arith.index_cast %205 : i32 to index
    %c0_93 = arith.constant 0 : index
    %227 = vector.load %arg15[%c2_92, %226, %c0_93] : memref<4x64x32xf32, #tpu.memory_space<vmem>>, vector<1x8x32xf32>
    %228 = vector.shape_cast %227 : vector<1x8x32xf32> to vector<8x32xf32>
    %cst_94 = arith.constant dense<0.000000e+00> : vector<8x32xf32>
    %229 = tpu.matmul %194, %28, %cst_94 {dimension_numbers = #tpu.dot_dimension_numbers<[1], [0], [0], [1], [0, 0, 1, 1], [], []>} : vector<8x32xf32>, vector<32x32xf32>, vector<8x32xf32> -> vector<8x32xf32>
    %230 = arith.addf %228, %229 : vector<8x32xf32>
    %231 = math.tanh %230 : vector<8x32xf32>
    %c3_95 = arith.constant 3 : index
    %232 = arith.index_cast %205 : i32 to index
    %c0_96 = arith.constant 0 : index
    %233 = vector.load %arg15[%c3_95, %232, %c0_96] : memref<4x64x32xf32, #tpu.memory_space<vmem>>, vector<1x8x32xf32>
    %234 = vector.shape_cast %233 : vector<1x8x32xf32> to vector<8x32xf32>
    %cst_97 = arith.constant dense<0.000000e+00> : vector<8x32xf32>
    %235 = tpu.matmul %194, %30, %cst_97 {dimension_numbers = #tpu.dot_dimension_numbers<[1], [0], [0], [1], [0, 0, 1, 1], [], []>} : vector<8x32xf32>, vector<32x32xf32>, vector<8x32xf32> -> vector<8x32xf32>
    %236 = arith.addf %234, %235 : vector<8x32xf32>
    %237 = arith.negf %236 : vector<8x32xf32>
    %238 = math.exp %237 : vector<8x32xf32>
    %cst_98 = arith.constant 1.000000e+00 : f32
    %239 = vector.broadcast %cst_98 : f32 to vector<8x32xf32>
    %240 = arith.addf %239, %238 : vector<8x32xf32>
    %241 = arith.divf %239, %240 : vector<8x32xf32>
    %242 = arith.mulf %225, %197 : vector<8x32xf32>
    %243 = arith.mulf %215, %231 : vector<8x32xf32>
    %244 = arith.addf %242, %243 : vector<8x32xf32>
    %245 = math.tanh %244 : vector<8x32xf32>
    %246 = arith.mulf %241, %245 : vector<8x32xf32>
    %247 = vector.broadcast %c3_i32 : i32 to vector<8x1xi32>
    %248 = arith.cmpi sgt, %0, %247 : vector<8x1xi32>
    %249 = vector.shape_cast %248 : vector<8x1xi1> to vector<8x1xi1>
    %250 = vector.broadcast %249 : vector<8x1xi1> to vector<8x32xi1>
    %251 = arith.select %250, %246, %194 : vector<8x32xi1>, vector<8x32xf32>
    %252 = vector.shape_cast %248 : vector<8x1xi1> to vector<8x1xi1>
    %253 = vector.broadcast %252 : vector<8x1xi1> to vector<8x32xi1>
    %254 = arith.select %253, %244, %197 : vector<8x32xi1>, vector<8x32xf32>
    %cst_99 = arith.constant 0.000000e+00 : f32
    %255 = vector.shape_cast %248 : vector<8x1xi1> to vector<8x1xi1>
    %256 = vector.broadcast %255 : vector<8x1xi1> to vector<8x32xi1>
    %257 = vector.broadcast %cst_99 : f32 to vector<8x32xf32>
    %258 = arith.select %256, %246, %257 : vector<8x32xi1>, vector<8x32xf32>
    %259 = arith.index_cast %205 : i32 to index
    %c0_100 = arith.constant 0 : index
    %260 = vector.load %arg18[%259, %c0_100] : memref<64x32xf32, #tpu.memory_space<vmem>>, vector<8x32xf32>
    tpu.vector_store %arg18[%259, %c0_100], %258 {strides = array<i32>} : memref<64x32xf32, #tpu.memory_space<vmem>>, vector<8x32xf32>,
    %c4_i32 = arith.constant 4 : i32
    %c8_i32_101 = arith.constant 8 : i32
    %261 = arith.muli %c4_i32, %c8_i32_101 : i32
    %262 = tpu.assume_multiple %261, 8 : i32
    %c0_102 = arith.constant 0 : index
    %263 = arith.index_cast %262 : i32 to index
    %c0_103 = arith.constant 0 : index
    %264 = vector.load %arg15[%c0_102, %263, %c0_103] : memref<4x64x32xf32, #tpu.memory_space<vmem>>, vector<1x8x32xf32>
    %265 = vector.shape_cast %264 : vector<1x8x32xf32> to vector<8x32xf32>
    %cst_104 = arith.constant dense<0.000000e+00> : vector<8x32xf32>
    %266 = tpu.matmul %251, %24, %cst_104 {dimension_numbers = #tpu.dot_dimension_numbers<[1], [0], [0], [1], [0, 0, 1, 1], [], []>} : vector<8x32xf32>, vector<32x32xf32>, vector<8x32xf32> -> vector<8x32xf32>
    %267 = arith.addf %265, %266 : vector<8x32xf32>
    %268 = arith.negf %267 : vector<8x32xf32>
    %269 = math.exp %268 : vector<8x32xf32>
    %cst_105 = arith.constant 1.000000e+00 : f32
    %270 = vector.broadcast %cst_105 : f32 to vector<8x32xf32>
    %271 = arith.addf %270, %269 : vector<8x32xf32>
    %272 = arith.divf %270, %271 : vector<8x32xf32>
    %c1_106 = arith.constant 1 : index
    %273 = arith.index_cast %262 : i32 to index
    %c0_107 = arith.constant 0 : index
    %274 = vector.load %arg15[%c1_106, %273, %c0_107] : memref<4x64x32xf32, #tpu.memory_space<vmem>>, vector<1x8x32xf32>
    %275 = vector.shape_cast %274 : vector<1x8x32xf32> to vector<8x32xf32>
    %cst_108 = arith.constant dense<0.000000e+00> : vector<8x32xf32>
    %276 = tpu.matmul %251, %26, %cst_108 {dimension_numbers = #tpu.dot_dimension_numbers<[1], [0], [0], [1], [0, 0, 1, 1], [], []>} : vector<8x32xf32>, vector<32x32xf32>, vector<8x32xf32> -> vector<8x32xf32>
    %277 = arith.addf %275, %276 : vector<8x32xf32>
    %278 = arith.negf %277 : vector<8x32xf32>
    %279 = math.exp %278 : vector<8x32xf32>
    %cst_109 = arith.constant 1.000000e+00 : f32
    %280 = vector.broadcast %cst_109 : f32 to vector<8x32xf32>
    %281 = arith.addf %280, %279 : vector<8x32xf32>
    %282 = arith.divf %280, %281 : vector<8x32xf32>
    %c2_110 = arith.constant 2 : index
    %283 = arith.index_cast %262 : i32 to index
    %c0_111 = arith.constant 0 : index
    %284 = vector.load %arg15[%c2_110, %283, %c0_111] : memref<4x64x32xf32, #tpu.memory_space<vmem>>, vector<1x8x32xf32>
    %285 = vector.shape_cast %284 : vector<1x8x32xf32> to vector<8x32xf32>
    %cst_112 = arith.constant dense<0.000000e+00> : vector<8x32xf32>
    %286 = tpu.matmul %251, %28, %cst_112 {dimension_numbers = #tpu.dot_dimension_numbers<[1], [0], [0], [1], [0, 0, 1, 1], [], []>} : vector<8x32xf32>, vector<32x32xf32>, vector<8x32xf32> -> vector<8x32xf32>
    %287 = arith.addf %285, %286 : vector<8x32xf32>
    %288 = math.tanh %287 : vector<8x32xf32>
    %c3_113 = arith.constant 3 : index
    %289 = arith.index_cast %262 : i32 to index
    %c0_114 = arith.constant 0 : index
    %290 = vector.load %arg15[%c3_113, %289, %c0_114] : memref<4x64x32xf32, #tpu.memory_space<vmem>>, vector<1x8x32xf32>
    %291 = vector.shape_cast %290 : vector<1x8x32xf32> to vector<8x32xf32>
    %cst_115 = arith.constant dense<0.000000e+00> : vector<8x32xf32>
    %292 = tpu.matmul %251, %30, %cst_115 {dimension_numbers = #tpu.dot_dimension_numbers<[1], [0], [0], [1], [0, 0, 1, 1], [], []>} : vector<8x32xf32>, vector<32x32xf32>, vector<8x32xf32> -> vector<8x32xf32>
    %293 = arith.addf %291, %292 : vector<8x32xf32>
    %294 = arith.negf %293 : vector<8x32xf32>
    %295 = math.exp %294 : vector<8x32xf32>
    %cst_116 = arith.constant 1.000000e+00 : f32
    %296 = vector.broadcast %cst_116 : f32 to vector<8x32xf32>
    %297 = arith.addf %296, %295 : vector<8x32xf32>
    %298 = arith.divf %296, %297 : vector<8x32xf32>
    %299 = arith.mulf %282, %254 : vector<8x32xf32>
    %300 = arith.mulf %272, %288 : vector<8x32xf32>
    %301 = arith.addf %299, %300 : vector<8x32xf32>
    %302 = math.tanh %301 : vector<8x32xf32>
    %303 = arith.mulf %298, %302 : vector<8x32xf32>
    %304 = vector.broadcast %c4_i32 : i32 to vector<8x1xi32>
    %305 = arith.cmpi sgt, %0, %304 : vector<8x1xi32>
    %306 = vector.shape_cast %305 : vector<8x1xi1> to vector<8x1xi1>
    %307 = vector.broadcast %306 : vector<8x1xi1> to vector<8x32xi1>
    %308 = arith.select %307, %303, %251 : vector<8x32xi1>, vector<8x32xf32>
    %309 = vector.shape_cast %305 : vector<8x1xi1> to vector<8x1xi1>
    %310 = vector.broadcast %309 : vector<8x1xi1> to vector<8x32xi1>
    %311 = arith.select %310, %301, %254 : vector<8x32xi1>, vector<8x32xf32>
    %cst_117 = arith.constant 0.000000e+00 : f32
    %312 = vector.shape_cast %305 : vector<8x1xi1> to vector<8x1xi1>
    %313 = vector.broadcast %312 : vector<8x1xi1> to vector<8x32xi1>
    %314 = vector.broadcast %cst_117 : f32 to vector<8x32xf32>
    %315 = arith.select %313, %303, %314 : vector<8x32xi1>, vector<8x32xf32>
    %316 = arith.index_cast %262 : i32 to index
    %c0_118 = arith.constant 0 : index
    %317 = vector.load %arg18[%316, %c0_118] : memref<64x32xf32, #tpu.memory_space<vmem>>, vector<8x32xf32>
    tpu.vector_store %arg18[%316, %c0_118], %315 {strides = array<i32>} : memref<64x32xf32, #tpu.memory_space<vmem>>, vector<8x32xf32>,
    %c5_i32 = arith.constant 5 : i32
    %c8_i32_119 = arith.constant 8 : i32
    %318 = arith.muli %c5_i32, %c8_i32_119 : i32
    %319 = tpu.assume_multiple %318, 8 : i32
    %c0_120 = arith.constant 0 : index
    %320 = arith.index_cast %319 : i32 to index
    %c0_121 = arith.constant 0 : index
    %321 = vector.load %arg15[%c0_120, %320, %c0_121] : memref<4x64x32xf32, #tpu.memory_space<vmem>>, vector<1x8x32xf32>
    %322 = vector.shape_cast %321 : vector<1x8x32xf32> to vector<8x32xf32>
    %cst_122 = arith.constant dense<0.000000e+00> : vector<8x32xf32>
    %323 = tpu.matmul %308, %24, %cst_122 {dimension_numbers = #tpu.dot_dimension_numbers<[1], [0], [0], [1], [0, 0, 1, 1], [], []>} : vector<8x32xf32>, vector<32x32xf32>, vector<8x32xf32> -> vector<8x32xf32>
    %324 = arith.addf %322, %323 : vector<8x32xf32>
    %325 = arith.negf %324 : vector<8x32xf32>
    %326 = math.exp %325 : vector<8x32xf32>
    %cst_123 = arith.constant 1.000000e+00 : f32
    %327 = vector.broadcast %cst_123 : f32 to vector<8x32xf32>
    %328 = arith.addf %327, %326 : vector<8x32xf32>
    %329 = arith.divf %327, %328 : vector<8x32xf32>
    %c1_124 = arith.constant 1 : index
    %330 = arith.index_cast %319 : i32 to index
    %c0_125 = arith.constant 0 : index
    %331 = vector.load %arg15[%c1_124, %330, %c0_125] : memref<4x64x32xf32, #tpu.memory_space<vmem>>, vector<1x8x32xf32>
    %332 = vector.shape_cast %331 : vector<1x8x32xf32> to vector<8x32xf32>
    %cst_126 = arith.constant dense<0.000000e+00> : vector<8x32xf32>
    %333 = tpu.matmul %308, %26, %cst_126 {dimension_numbers = #tpu.dot_dimension_numbers<[1], [0], [0], [1], [0, 0, 1, 1], [], []>} : vector<8x32xf32>, vector<32x32xf32>, vector<8x32xf32> -> vector<8x32xf32>
    %334 = arith.addf %332, %333 : vector<8x32xf32>
    %335 = arith.negf %334 : vector<8x32xf32>
    %336 = math.exp %335 : vector<8x32xf32>
    %cst_127 = arith.constant 1.000000e+00 : f32
    %337 = vector.broadcast %cst_127 : f32 to vector<8x32xf32>
    %338 = arith.addf %337, %336 : vector<8x32xf32>
    %339 = arith.divf %337, %338 : vector<8x32xf32>
    %c2_128 = arith.constant 2 : index
    %340 = arith.index_cast %319 : i32 to index
    %c0_129 = arith.constant 0 : index
    %341 = vector.load %arg15[%c2_128, %340, %c0_129] : memref<4x64x32xf32, #tpu.memory_space<vmem>>, vector<1x8x32xf32>
    %342 = vector.shape_cast %341 : vector<1x8x32xf32> to vector<8x32xf32>
    %cst_130 = arith.constant dense<0.000000e+00> : vector<8x32xf32>
    %343 = tpu.matmul %308, %28, %cst_130 {dimension_numbers = #tpu.dot_dimension_numbers<[1], [0], [0], [1], [0, 0, 1, 1], [], []>} : vector<8x32xf32>, vector<32x32xf32>, vector<8x32xf32> -> vector<8x32xf32>
    %344 = arith.addf %342, %343 : vector<8x32xf32>
    %345 = math.tanh %344 : vector<8x32xf32>
    %c3_131 = arith.constant 3 : index
    %346 = arith.index_cast %319 : i32 to index
    %c0_132 = arith.constant 0 : index
    %347 = vector.load %arg15[%c3_131, %346, %c0_132] : memref<4x64x32xf32, #tpu.memory_space<vmem>>, vector<1x8x32xf32>
    %348 = vector.shape_cast %347 : vector<1x8x32xf32> to vector<8x32xf32>
    %cst_133 = arith.constant dense<0.000000e+00> : vector<8x32xf32>
    %349 = tpu.matmul %308, %30, %cst_133 {dimension_numbers = #tpu.dot_dimension_numbers<[1], [0], [0], [1], [0, 0, 1, 1], [], []>} : vector<8x32xf32>, vector<32x32xf32>, vector<8x32xf32> -> vector<8x32xf32>
    %350 = arith.addf %348, %349 : vector<8x32xf32>
    %351 = arith.negf %350 : vector<8x32xf32>
    %352 = math.exp %351 : vector<8x32xf32>
    %cst_134 = arith.constant 1.000000e+00 : f32
    %353 = vector.broadcast %cst_134 : f32 to vector<8x32xf32>
    %354 = arith.addf %353, %352 : vector<8x32xf32>
    %355 = arith.divf %353, %354 : vector<8x32xf32>
    %356 = arith.mulf %339, %311 : vector<8x32xf32>
    %357 = arith.mulf %329, %345 : vector<8x32xf32>
    %358 = arith.addf %356, %357 : vector<8x32xf32>
    %359 = math.tanh %358 : vector<8x32xf32>
    %360 = arith.mulf %355, %359 : vector<8x32xf32>
    %361 = vector.broadcast %c5_i32 : i32 to vector<8x1xi32>
    %362 = arith.cmpi sgt, %0, %361 : vector<8x1xi32>
    %363 = vector.shape_cast %362 : vector<8x1xi1> to vector<8x1xi1>
    %364 = vector.broadcast %363 : vector<8x1xi1> to vector<8x32xi1>
    %365 = arith.select %364, %360, %308 : vector<8x32xi1>, vector<8x32xf32>
    %366 = vector.shape_cast %362 : vector<8x1xi1> to vector<8x1xi1>
    %367 = vector.broadcast %366 : vector<8x1xi1> to vector<8x32xi1>
    %368 = arith.select %367, %358, %311 : vector<8x32xi1>, vector<8x32xf32>
    %cst_135 = arith.constant 0.000000e+00 : f32
    %369 = vector.shape_cast %362 : vector<8x1xi1> to vector<8x1xi1>
    %370 = vector.broadcast %369 : vector<8x1xi1> to vector<8x32xi1>
    %371 = vector.broadcast %cst_135 : f32 to vector<8x32xf32>
    %372 = arith.select %370, %360, %371 : vector<8x32xi1>, vector<8x32xf32>
    %373 = arith.index_cast %319 : i32 to index
    %c0_136 = arith.constant 0 : index
    %374 = vector.load %arg18[%373, %c0_136] : memref<64x32xf32, #tpu.memory_space<vmem>>, vector<8x32xf32>
    tpu.vector_store %arg18[%373, %c0_136], %372 {strides = array<i32>} : memref<64x32xf32, #tpu.memory_space<vmem>>, vector<8x32xf32>,
    %c6_i32 = arith.constant 6 : i32
    %c8_i32_137 = arith.constant 8 : i32
    %375 = arith.muli %c6_i32, %c8_i32_137 : i32
    %376 = tpu.assume_multiple %375, 8 : i32
    %c0_138 = arith.constant 0 : index
    %377 = arith.index_cast %376 : i32 to index
    %c0_139 = arith.constant 0 : index
    %378 = vector.load %arg15[%c0_138, %377, %c0_139] : memref<4x64x32xf32, #tpu.memory_space<vmem>>, vector<1x8x32xf32>
    %379 = vector.shape_cast %378 : vector<1x8x32xf32> to vector<8x32xf32>
    %cst_140 = arith.constant dense<0.000000e+00> : vector<8x32xf32>
    %380 = tpu.matmul %365, %24, %cst_140 {dimension_numbers = #tpu.dot_dimension_numbers<[1], [0], [0], [1], [0, 0, 1, 1], [], []>} : vector<8x32xf32>, vector<32x32xf32>, vector<8x32xf32> -> vector<8x32xf32>
    %381 = arith.addf %379, %380 : vector<8x32xf32>
    %382 = arith.negf %381 : vector<8x32xf32>
    %383 = math.exp %382 : vector<8x32xf32>
    %cst_141 = arith.constant 1.000000e+00 : f32
    %384 = vector.broadcast %cst_141 : f32 to vector<8x32xf32>
    %385 = arith.addf %384, %383 : vector<8x32xf32>
    %386 = arith.divf %384, %385 : vector<8x32xf32>
    %c1_142 = arith.constant 1 : index
    %387 = arith.index_cast %376 : i32 to index
    %c0_143 = arith.constant 0 : index
    %388 = vector.load %arg15[%c1_142, %387, %c0_143] : memref<4x64x32xf32, #tpu.memory_space<vmem>>, vector<1x8x32xf32>
    %389 = vector.shape_cast %388 : vector<1x8x32xf32> to vector<8x32xf32>
    %cst_144 = arith.constant dense<0.000000e+00> : vector<8x32xf32>
    %390 = tpu.matmul %365, %26, %cst_144 {dimension_numbers = #tpu.dot_dimension_numbers<[1], [0], [0], [1], [0, 0, 1, 1], [], []>} : vector<8x32xf32>, vector<32x32xf32>, vector<8x32xf32> -> vector<8x32xf32>
    %391 = arith.addf %389, %390 : vector<8x32xf32>
    %392 = arith.negf %391 : vector<8x32xf32>
    %393 = math.exp %392 : vector<8x32xf32>
    %cst_145 = arith.constant 1.000000e+00 : f32
    %394 = vector.broadcast %cst_145 : f32 to vector<8x32xf32>
    %395 = arith.addf %394, %393 : vector<8x32xf32>
    %396 = arith.divf %394, %395 : vector<8x32xf32>
    %c2_146 = arith.constant 2 : index
    %397 = arith.index_cast %376 : i32 to index
    %c0_147 = arith.constant 0 : index
    %398 = vector.load %arg15[%c2_146, %397, %c0_147] : memref<4x64x32xf32, #tpu.memory_space<vmem>>, vector<1x8x32xf32>
    %399 = vector.shape_cast %398 : vector<1x8x32xf32> to vector<8x32xf32>
    %cst_148 = arith.constant dense<0.000000e+00> : vector<8x32xf32>
    %400 = tpu.matmul %365, %28, %cst_148 {dimension_numbers = #tpu.dot_dimension_numbers<[1], [0], [0], [1], [0, 0, 1, 1], [], []>} : vector<8x32xf32>, vector<32x32xf32>, vector<8x32xf32> -> vector<8x32xf32>
    %401 = arith.addf %399, %400 : vector<8x32xf32>
    %402 = math.tanh %401 : vector<8x32xf32>
    %c3_149 = arith.constant 3 : index
    %403 = arith.index_cast %376 : i32 to index
    %c0_150 = arith.constant 0 : index
    %404 = vector.load %arg15[%c3_149, %403, %c0_150] : memref<4x64x32xf32, #tpu.memory_space<vmem>>, vector<1x8x32xf32>
    %405 = vector.shape_cast %404 : vector<1x8x32xf32> to vector<8x32xf32>
    %cst_151 = arith.constant dense<0.000000e+00> : vector<8x32xf32>
    %406 = tpu.matmul %365, %30, %cst_151 {dimension_numbers = #tpu.dot_dimension_numbers<[1], [0], [0], [1], [0, 0, 1, 1], [], []>} : vector<8x32xf32>, vector<32x32xf32>, vector<8x32xf32> -> vector<8x32xf32>
    %407 = arith.addf %405, %406 : vector<8x32xf32>
    %408 = arith.negf %407 : vector<8x32xf32>
    %409 = math.exp %408 : vector<8x32xf32>
    %cst_152 = arith.constant 1.000000e+00 : f32
    %410 = vector.broadcast %cst_152 : f32 to vector<8x32xf32>
    %411 = arith.addf %410, %409 : vector<8x32xf32>
    %412 = arith.divf %410, %411 : vector<8x32xf32>
    %413 = arith.mulf %396, %368 : vector<8x32xf32>
    %414 = arith.mulf %386, %402 : vector<8x32xf32>
    %415 = arith.addf %413, %414 : vector<8x32xf32>
    %416 = math.tanh %415 : vector<8x32xf32>
    %417 = arith.mulf %412, %416 : vector<8x32xf32>
    %418 = vector.broadcast %c6_i32 : i32 to vector<8x1xi32>
    %419 = arith.cmpi sgt, %0, %418 : vector<8x1xi32>
    %420 = vector.shape_cast %419 : vector<8x1xi1> to vector<8x1xi1>
    %421 = vector.broadcast %420 : vector<8x1xi1> to vector<8x32xi1>
    %422 = arith.select %421, %417, %365 : vector<8x32xi1>, vector<8x32xf32>
    %423 = vector.shape_cast %419 : vector<8x1xi1> to vector<8x1xi1>
    %424 = vector.broadcast %423 : vector<8x1xi1> to vector<8x32xi1>
    %425 = arith.select %424, %415, %368 : vector<8x32xi1>, vector<8x32xf32>
    %cst_153 = arith.constant 0.000000e+00 : f32
    %426 = vector.shape_cast %419 : vector<8x1xi1> to vector<8x1xi1>
    %427 = vector.broadcast %426 : vector<8x1xi1> to vector<8x32xi1>
    %428 = vector.broadcast %cst_153 : f32 to vector<8x32xf32>
    %429 = arith.select %427, %417, %428 : vector<8x32xi1>, vector<8x32xf32>
    %430 = arith.index_cast %376 : i32 to index
    %c0_154 = arith.constant 0 : index
    %431 = vector.load %arg18[%430, %c0_154] : memref<64x32xf32, #tpu.memory_space<vmem>>, vector<8x32xf32>
    tpu.vector_store %arg18[%430, %c0_154], %429 {strides = array<i32>} : memref<64x32xf32, #tpu.memory_space<vmem>>, vector<8x32xf32>,
    %c7_i32 = arith.constant 7 : i32
    %c8_i32_155 = arith.constant 8 : i32
    %432 = arith.muli %c7_i32, %c8_i32_155 : i32
    %433 = tpu.assume_multiple %432, 8 : i32
    %c0_156 = arith.constant 0 : index
    %434 = arith.index_cast %433 : i32 to index
    %c0_157 = arith.constant 0 : index
    %435 = vector.load %arg15[%c0_156, %434, %c0_157] : memref<4x64x32xf32, #tpu.memory_space<vmem>>, vector<1x8x32xf32>
    %436 = vector.shape_cast %435 : vector<1x8x32xf32> to vector<8x32xf32>
    %cst_158 = arith.constant dense<0.000000e+00> : vector<8x32xf32>
    %437 = tpu.matmul %422, %24, %cst_158 {dimension_numbers = #tpu.dot_dimension_numbers<[1], [0], [0], [1], [0, 0, 1, 1], [], []>} : vector<8x32xf32>, vector<32x32xf32>, vector<8x32xf32> -> vector<8x32xf32>
    %438 = arith.addf %436, %437 : vector<8x32xf32>
    %439 = arith.negf %438 : vector<8x32xf32>
    %440 = math.exp %439 : vector<8x32xf32>
    %cst_159 = arith.constant 1.000000e+00 : f32
    %441 = vector.broadcast %cst_159 : f32 to vector<8x32xf32>
    %442 = arith.addf %441, %440 : vector<8x32xf32>
    %443 = arith.divf %441, %442 : vector<8x32xf32>
    %c1_160 = arith.constant 1 : index
    %444 = arith.index_cast %433 : i32 to index
    %c0_161 = arith.constant 0 : index
    %445 = vector.load %arg15[%c1_160, %444, %c0_161] : memref<4x64x32xf32, #tpu.memory_space<vmem>>, vector<1x8x32xf32>
    %446 = vector.shape_cast %445 : vector<1x8x32xf32> to vector<8x32xf32>
    %cst_162 = arith.constant dense<0.000000e+00> : vector<8x32xf32>
    %447 = tpu.matmul %422, %26, %cst_162 {dimension_numbers = #tpu.dot_dimension_numbers<[1], [0], [0], [1], [0, 0, 1, 1], [], []>} : vector<8x32xf32>, vector<32x32xf32>, vector<8x32xf32> -> vector<8x32xf32>
    %448 = arith.addf %446, %447 : vector<8x32xf32>
    %449 = arith.negf %448 : vector<8x32xf32>
    %450 = math.exp %449 : vector<8x32xf32>
    %cst_163 = arith.constant 1.000000e+00 : f32
    %451 = vector.broadcast %cst_163 : f32 to vector<8x32xf32>
    %452 = arith.addf %451, %450 : vector<8x32xf32>
    %453 = arith.divf %451, %452 : vector<8x32xf32>
    %c2_164 = arith.constant 2 : index
    %454 = arith.index_cast %433 : i32 to index
    %c0_165 = arith.constant 0 : index
    %455 = vector.load %arg15[%c2_164, %454, %c0_165] : memref<4x64x32xf32, #tpu.memory_space<vmem>>, vector<1x8x32xf32>
    %456 = vector.shape_cast %455 : vector<1x8x32xf32> to vector<8x32xf32>
    %cst_166 = arith.constant dense<0.000000e+00> : vector<8x32xf32>
    %457 = tpu.matmul %422, %28, %cst_166 {dimension_numbers = #tpu.dot_dimension_numbers<[1], [0], [0], [1], [0, 0, 1, 1], [], []>} : vector<8x32xf32>, vector<32x32xf32>, vector<8x32xf32> -> vector<8x32xf32>
    %458 = arith.addf %456, %457 : vector<8x32xf32>
    %459 = math.tanh %458 : vector<8x32xf32>
    %c3_167 = arith.constant 3 : index
    %460 = arith.index_cast %433 : i32 to index
    %c0_168 = arith.constant 0 : index
    %461 = vector.load %arg15[%c3_167, %460, %c0_168] : memref<4x64x32xf32, #tpu.memory_space<vmem>>, vector<1x8x32xf32>
    %462 = vector.shape_cast %461 : vector<1x8x32xf32> to vector<8x32xf32>
    %cst_169 = arith.constant dense<0.000000e+00> : vector<8x32xf32>
    %463 = tpu.matmul %422, %30, %cst_169 {dimension_numbers = #tpu.dot_dimension_numbers<[1], [0], [0], [1], [0, 0, 1, 1], [], []>} : vector<8x32xf32>, vector<32x32xf32>, vector<8x32xf32> -> vector<8x32xf32>
    %464 = arith.addf %462, %463 : vector<8x32xf32>
    %465 = arith.negf %464 : vector<8x32xf32>
    %466 = math.exp %465 : vector<8x32xf32>
    %cst_170 = arith.constant 1.000000e+00 : f32
    %467 = vector.broadcast %cst_170 : f32 to vector<8x32xf32>
    %468 = arith.addf %467, %466 : vector<8x32xf32>
    %469 = arith.divf %467, %468 : vector<8x32xf32>
    %470 = arith.mulf %453, %425 : vector<8x32xf32>
    %471 = arith.mulf %443, %459 : vector<8x32xf32>
    %472 = arith.addf %470, %471 : vector<8x32xf32>
    %473 = math.tanh %472 : vector<8x32xf32>
    %474 = arith.mulf %469, %473 : vector<8x32xf32>
    %475 = vector.broadcast %c7_i32 : i32 to vector<8x1xi32>
    %476 = arith.cmpi sgt, %0, %475 : vector<8x1xi32>
    %477 = vector.shape_cast %476 : vector<8x1xi1> to vector<8x1xi1>
    %478 = vector.broadcast %477 : vector<8x1xi1> to vector<8x32xi1>
    %479 = arith.select %478, %474, %422 : vector<8x32xi1>, vector<8x32xf32>
    %480 = vector.shape_cast %476 : vector<8x1xi1> to vector<8x1xi1>
    %481 = vector.broadcast %480 : vector<8x1xi1> to vector<8x32xi1>
    %482 = arith.select %481, %472, %425 : vector<8x32xi1>, vector<8x32xf32>
    %cst_171 = arith.constant 0.000000e+00 : f32
    %483 = vector.shape_cast %476 : vector<8x1xi1> to vector<8x1xi1>
    %484 = vector.broadcast %483 : vector<8x1xi1> to vector<8x32xi1>
    %485 = vector.broadcast %cst_171 : f32 to vector<8x32xf32>
    %486 = arith.select %484, %474, %485 : vector<8x32xi1>, vector<8x32xf32>
    %487 = arith.index_cast %433 : i32 to index
    %c0_172 = arith.constant 0 : index
    %488 = vector.load %arg18[%487, %c0_172] : memref<64x32xf32, #tpu.memory_space<vmem>>, vector<8x32xf32>
    tpu.vector_store %arg18[%487, %c0_172], %486 {strides = array<i32>} : memref<64x32xf32, #tpu.memory_space<vmem>>, vector<8x32xf32>,
    %c8_i32_173 = arith.constant 8 : i32
    %c0_174 = arith.constant 0 : index
    %c0_175 = arith.constant 0 : index
    %489 = vector.load %arg18[%c0_174, %c0_175] : memref<64x32xf32, #tpu.memory_space<vmem>>, vector<64x32xf32>
    %c0_176 = arith.constant 0 : index
    %c0_177 = arith.constant 0 : index
    %490 = vector.load %arg6[%c0_176, %c0_177] : memref<32x256xf32, #tpu.memory_space<vmem>>, vector<32x256xf32>
    %cst_178 = arith.constant dense<0.000000e+00> : vector<64x256xf32>
    %491 = tpu.matmul %489, %490, %cst_178 {dimension_numbers = #tpu.dot_dimension_numbers<[1], [0], [0], [1], [0, 0, 1, 1], [], []>} : vector<64x32xf32>, vector<32x256xf32>, vector<64x256xf32> -> vector<64x256xf32>
    %c0_179 = arith.constant 0 : index
    %c0_180 = arith.constant 0 : index
    %492 = vector.load %arg8[%c0_179, %c0_180] : memref<1x256xf32, #tpu.memory_space<vmem>>, vector<1x256xf32>
    %493 = vector.broadcast %492 : vector<1x256xf32> to vector<64x256xf32>
    %494 = arith.addf %491, %493 : vector<64x256xf32>
    %495 = vector.extract_strided_slice %494 {offsets = [0, 0], sizes = [64, 64], strides = [1, 1]} : vector<64x256xf32> to vector<64x64xf32>
    %c0_181 = arith.constant 0 : index
    %c0_182 = arith.constant 0 : index
    %c0_183 = arith.constant 0 : index
    %496 = vector.load %arg16[%c0_181, %c0_182, %c0_183] : memref<4x64x64xf32, #tpu.memory_space<vmem>>, vector<1x64x64xf32>
    %497 = vector.shape_cast %496 : vector<1x64x64xf32> to vector<64x64xf32>
    %498 = vector.shape_cast %495 : vector<64x64xf32> to vector<1x64x64xf32>
    tpu.vector_store %arg16[%c0_181, %c0_182, %c0_183], %498 {strides = array<i32>} : memref<4x64x64xf32, #tpu.memory_space<vmem>>, vector<1x64x64xf32>,
    %499 = vector.extract_strided_slice %494 {offsets = [0, 64], sizes = [64, 64], strides = [1, 1]} : vector<64x256xf32> to vector<64x64xf32>
    %c1_184 = arith.constant 1 : index
    %c0_185 = arith.constant 0 : index
    %c0_186 = arith.constant 0 : index
    %500 = vector.load %arg16[%c1_184, %c0_185, %c0_186] : memref<4x64x64xf32, #tpu.memory_space<vmem>>, vector<1x64x64xf32>
    %501 = vector.shape_cast %500 : vector<1x64x64xf32> to vector<64x64xf32>
    %502 = vector.shape_cast %499 : vector<64x64xf32> to vector<1x64x64xf32>
    tpu.vector_store %arg16[%c1_184, %c0_185, %c0_186], %502 {strides = array<i32>} : memref<4x64x64xf32, #tpu.memory_space<vmem>>, vector<1x64x64xf32>,
    %503 = vector.extract_strided_slice %494 {offsets = [0, 128], sizes = [64, 64], strides = [1, 1]} : vector<64x256xf32> to vector<64x64xf32>
    %c2_187 = arith.constant 2 : index
    %c0_188 = arith.constant 0 : index
    %c0_189 = arith.constant 0 : index
    %504 = vector.load %arg16[%c2_187, %c0_188, %c0_189] : memref<4x64x64xf32, #tpu.memory_space<vmem>>, vector<1x64x64xf32>
    %505 = vector.shape_cast %504 : vector<1x64x64xf32> to vector<64x64xf32>
    %506 = vector.shape_cast %503 : vector<64x64xf32> to vector<1x64x64xf32>
    tpu.vector_store %arg16[%c2_187, %c0_188, %c0_189], %506 {strides = array<i32>} : memref<4x64x64xf32, #tpu.memory_space<vmem>>, vector<1x64x64xf32>,
    %507 = vector.extract_strided_slice %494 {offsets = [0, 192], sizes = [64, 64], strides = [1, 1]} : vector<64x256xf32> to vector<64x64xf32>
    %c3_190 = arith.constant 3 : index
    %c0_191 = arith.constant 0 : index
    %c0_192 = arith.constant 0 : index
    %508 = vector.load %arg16[%c3_190, %c0_191, %c0_192] : memref<4x64x64xf32, #tpu.memory_space<vmem>>, vector<1x64x64xf32>
    %509 = vector.shape_cast %508 : vector<1x64x64xf32> to vector<64x64xf32>
    %510 = vector.shape_cast %507 : vector<64x64xf32> to vector<1x64x64xf32>
    tpu.vector_store %arg16[%c3_190, %c0_191, %c0_192], %510 {strides = array<i32>} : memref<4x64x64xf32, #tpu.memory_space<vmem>>, vector<1x64x64xf32>,
    %c0_193 = arith.constant 0 : index
    %c0_194 = arith.constant 0 : index
    %c0_195 = arith.constant 0 : index
    %511 = vector.load %arg7[%c0_193, %c0_194, %c0_195] : memref<4x64x64xf32, #tpu.memory_space<vmem>>, vector<1x64x64xf32>
    %512 = vector.shape_cast %511 : vector<1x64x64xf32> to vector<64x64xf32>
    %c1_196 = arith.constant 1 : index
    %c0_197 = arith.constant 0 : index
    %c0_198 = arith.constant 0 : index
    %513 = vector.load %arg7[%c1_196, %c0_197, %c0_198] : memref<4x64x64xf32, #tpu.memory_space<vmem>>, vector<1x64x64xf32>
    %514 = vector.shape_cast %513 : vector<1x64x64xf32> to vector<64x64xf32>
    %c2_199 = arith.constant 2 : index
    %c0_200 = arith.constant 0 : index
    %c0_201 = arith.constant 0 : index
    %515 = vector.load %arg7[%c2_199, %c0_200, %c0_201] : memref<4x64x64xf32, #tpu.memory_space<vmem>>, vector<1x64x64xf32>
    %516 = vector.shape_cast %515 : vector<1x64x64xf32> to vector<64x64xf32>
    %c3_202 = arith.constant 3 : index
    %c0_203 = arith.constant 0 : index
    %c0_204 = arith.constant 0 : index
    %517 = vector.load %arg7[%c3_202, %c0_203, %c0_204] : memref<4x64x64xf32, #tpu.memory_space<vmem>>, vector<1x64x64xf32>
    %518 = vector.shape_cast %517 : vector<1x64x64xf32> to vector<64x64xf32>
    %cst_205 = arith.constant 0.000000e+00 : f32
    %519 = vector.broadcast %cst_205 : f32 to vector<8x64xf32>
    %cst_206 = arith.constant 0.000000e+00 : f32
    %520 = vector.broadcast %cst_206 : f32 to vector<8x64xf32>
    %c0_i32_207 = arith.constant 0 : i32
    %c8_i32_208 = arith.constant 8 : i32
    %521 = arith.muli %c0_i32_207, %c8_i32_208 : i32
    %522 = tpu.assume_multiple %521, 8 : i32
    %c0_209 = arith.constant 0 : index
    %523 = arith.index_cast %522 : i32 to index
    %c0_210 = arith.constant 0 : index
    %524 = vector.load %arg16[%c0_209, %523, %c0_210] : memref<4x64x64xf32, #tpu.memory_space<vmem>>, vector<1x8x64xf32>
    %525 = vector.shape_cast %524 : vector<1x8x64xf32> to vector<8x64xf32>
    %cst_211 = arith.constant dense<0.000000e+00> : vector<8x64xf32>
    %526 = tpu.matmul %519, %512, %cst_211 {dimension_numbers = #tpu.dot_dimension_numbers<[1], [0], [0], [1], [0, 0, 1, 1], [], []>} : vector<8x64xf32>, vector<64x64xf32>, vector<8x64xf32> -> vector<8x64xf32>
    %527 = arith.addf %525, %526 : vector<8x64xf32>
    %528 = arith.negf %527 : vector<8x64xf32>
    %529 = math.exp %528 : vector<8x64xf32>
    %cst_212 = arith.constant 1.000000e+00 : f32
    %530 = vector.broadcast %cst_212 : f32 to vector<8x64xf32>
    %531 = arith.addf %530, %529 : vector<8x64xf32>
    %532 = arith.divf %530, %531 : vector<8x64xf32>
    %c1_213 = arith.constant 1 : index
    %533 = arith.index_cast %522 : i32 to index
    %c0_214 = arith.constant 0 : index
    %534 = vector.load %arg16[%c1_213, %533, %c0_214] : memref<4x64x64xf32, #tpu.memory_space<vmem>>, vector<1x8x64xf32>
    %535 = vector.shape_cast %534 : vector<1x8x64xf32> to vector<8x64xf32>
    %cst_215 = arith.constant dense<0.000000e+00> : vector<8x64xf32>
    %536 = tpu.matmul %519, %514, %cst_215 {dimension_numbers = #tpu.dot_dimension_numbers<[1], [0], [0], [1], [0, 0, 1, 1], [], []>} : vector<8x64xf32>, vector<64x64xf32>, vector<8x64xf32> -> vector<8x64xf32>
    %537 = arith.addf %535, %536 : vector<8x64xf32>
    %538 = arith.negf %537 : vector<8x64xf32>
    %539 = math.exp %538 : vector<8x64xf32>
    %cst_216 = arith.constant 1.000000e+00 : f32
    %540 = vector.broadcast %cst_216 : f32 to vector<8x64xf32>
    %541 = arith.addf %540, %539 : vector<8x64xf32>
    %542 = arith.divf %540, %541 : vector<8x64xf32>
    %c2_217 = arith.constant 2 : index
    %543 = arith.index_cast %522 : i32 to index
    %c0_218 = arith.constant 0 : index
    %544 = vector.load %arg16[%c2_217, %543, %c0_218] : memref<4x64x64xf32, #tpu.memory_space<vmem>>, vector<1x8x64xf32>
    %545 = vector.shape_cast %544 : vector<1x8x64xf32> to vector<8x64xf32>
    %cst_219 = arith.constant dense<0.000000e+00> : vector<8x64xf32>
    %546 = tpu.matmul %519, %516, %cst_219 {dimension_numbers = #tpu.dot_dimension_numbers<[1], [0], [0], [1], [0, 0, 1, 1], [], []>} : vector<8x64xf32>, vector<64x64xf32>, vector<8x64xf32> -> vector<8x64xf32>
    %547 = arith.addf %545, %546 : vector<8x64xf32>
    %548 = math.tanh %547 : vector<8x64xf32>
    %c3_220 = arith.constant 3 : index
    %549 = arith.index_cast %522 : i32 to index
    %c0_221 = arith.constant 0 : index
    %550 = vector.load %arg16[%c3_220, %549, %c0_221] : memref<4x64x64xf32, #tpu.memory_space<vmem>>, vector<1x8x64xf32>
    %551 = vector.shape_cast %550 : vector<1x8x64xf32> to vector<8x64xf32>
    %cst_222 = arith.constant dense<0.000000e+00> : vector<8x64xf32>
    %552 = tpu.matmul %519, %518, %cst_222 {dimension_numbers = #tpu.dot_dimension_numbers<[1], [0], [0], [1], [0, 0, 1, 1], [], []>} : vector<8x64xf32>, vector<64x64xf32>, vector<8x64xf32> -> vector<8x64xf32>
    %553 = arith.addf %551, %552 : vector<8x64xf32>
    %554 = arith.negf %553 : vector<8x64xf32>
    %555 = math.exp %554 : vector<8x64xf32>
    %cst_223 = arith.constant 1.000000e+00 : f32
    %556 = vector.broadcast %cst_223 : f32 to vector<8x64xf32>
    %557 = arith.addf %556, %555 : vector<8x64xf32>
    %558 = arith.divf %556, %557 : vector<8x64xf32>
    %559 = arith.mulf %542, %520 : vector<8x64xf32>
    %560 = arith.mulf %532, %548 : vector<8x64xf32>
    %561 = arith.addf %559, %560 : vector<8x64xf32>
    %562 = math.tanh %561 : vector<8x64xf32>
    %563 = arith.mulf %558, %562 : vector<8x64xf32>
    %564 = vector.broadcast %c0_i32_207 : i32 to vector<8x1xi32>
    %565 = arith.cmpi sgt, %0, %564 : vector<8x1xi32>
    %566 = vector.shape_cast %565 : vector<8x1xi1> to vector<8x1xi1>
    %567 = vector.broadcast %566 : vector<8x1xi1> to vector<8x64xi1>
    %568 = arith.select %567, %563, %519 : vector<8x64xi1>, vector<8x64xf32>
    %569 = vector.shape_cast %565 : vector<8x1xi1> to vector<8x1xi1>
    %570 = vector.broadcast %569 : vector<8x1xi1> to vector<8x64xi1>
    %571 = arith.select %570, %561, %520 : vector<8x64xi1>, vector<8x64xf32>
    %cst_224 = arith.constant 0.000000e+00 : f32
    %572 = vector.shape_cast %565 : vector<8x1xi1> to vector<8x1xi1>
    %573 = vector.broadcast %572 : vector<8x1xi1> to vector<8x64xi1>
    %574 = vector.broadcast %cst_224 : f32 to vector<8x64xf32>
    %575 = arith.select %573, %563, %574 : vector<8x64xi1>, vector<8x64xf32>
    %576 = arith.index_cast %522 : i32 to index
    %c0_225 = arith.constant 0 : index
    %577 = vector.load %arg19[%576, %c0_225] : memref<64x64xf32, #tpu.memory_space<vmem>>, vector<8x64xf32>
    tpu.vector_store %arg19[%576, %c0_225], %575 {strides = array<i32>} : memref<64x64xf32, #tpu.memory_space<vmem>>, vector<8x64xf32>,
    %c1_i32_226 = arith.constant 1 : i32
    %c8_i32_227 = arith.constant 8 : i32
    %578 = arith.muli %c1_i32_226, %c8_i32_227 : i32
    %579 = tpu.assume_multiple %578, 8 : i32
    %c0_228 = arith.constant 0 : index
    %580 = arith.index_cast %579 : i32 to index
    %c0_229 = arith.constant 0 : index
    %581 = vector.load %arg16[%c0_228, %580, %c0_229] : memref<4x64x64xf32, #tpu.memory_space<vmem>>, vector<1x8x64xf32>
    %582 = vector.shape_cast %581 : vector<1x8x64xf32> to vector<8x64xf32>
    %cst_230 = arith.constant dense<0.000000e+00> : vector<8x64xf32>
    %583 = tpu.matmul %568, %512, %cst_230 {dimension_numbers = #tpu.dot_dimension_numbers<[1], [0], [0], [1], [0, 0, 1, 1], [], []>} : vector<8x64xf32>, vector<64x64xf32>, vector<8x64xf32> -> vector<8x64xf32>
    %584 = arith.addf %582, %583 : vector<8x64xf32>
    %585 = arith.negf %584 : vector<8x64xf32>
    %586 = math.exp %585 : vector<8x64xf32>
    %cst_231 = arith.constant 1.000000e+00 : f32
    %587 = vector.broadcast %cst_231 : f32 to vector<8x64xf32>
    %588 = arith.addf %587, %586 : vector<8x64xf32>
    %589 = arith.divf %587, %588 : vector<8x64xf32>
    %c1_232 = arith.constant 1 : index
    %590 = arith.index_cast %579 : i32 to index
    %c0_233 = arith.constant 0 : index
    %591 = vector.load %arg16[%c1_232, %590, %c0_233] : memref<4x64x64xf32, #tpu.memory_space<vmem>>, vector<1x8x64xf32>
    %592 = vector.shape_cast %591 : vector<1x8x64xf32> to vector<8x64xf32>
    %cst_234 = arith.constant dense<0.000000e+00> : vector<8x64xf32>
    %593 = tpu.matmul %568, %514, %cst_234 {dimension_numbers = #tpu.dot_dimension_numbers<[1], [0], [0], [1], [0, 0, 1, 1], [], []>} : vector<8x64xf32>, vector<64x64xf32>, vector<8x64xf32> -> vector<8x64xf32>
    %594 = arith.addf %592, %593 : vector<8x64xf32>
    %595 = arith.negf %594 : vector<8x64xf32>
    %596 = math.exp %595 : vector<8x64xf32>
    %cst_235 = arith.constant 1.000000e+00 : f32
    %597 = vector.broadcast %cst_235 : f32 to vector<8x64xf32>
    %598 = arith.addf %597, %596 : vector<8x64xf32>
    %599 = arith.divf %597, %598 : vector<8x64xf32>
    %c2_236 = arith.constant 2 : index
    %600 = arith.index_cast %579 : i32 to index
    %c0_237 = arith.constant 0 : index
    %601 = vector.load %arg16[%c2_236, %600, %c0_237] : memref<4x64x64xf32, #tpu.memory_space<vmem>>, vector<1x8x64xf32>
    %602 = vector.shape_cast %601 : vector<1x8x64xf32> to vector<8x64xf32>
    %cst_238 = arith.constant dense<0.000000e+00> : vector<8x64xf32>
    %603 = tpu.matmul %568, %516, %cst_238 {dimension_numbers = #tpu.dot_dimension_numbers<[1], [0], [0], [1], [0, 0, 1, 1], [], []>} : vector<8x64xf32>, vector<64x64xf32>, vector<8x64xf32> -> vector<8x64xf32>
    %604 = arith.addf %602, %603 : vector<8x64xf32>
    %605 = math.tanh %604 : vector<8x64xf32>
    %c3_239 = arith.constant 3 : index
    %606 = arith.index_cast %579 : i32 to index
    %c0_240 = arith.constant 0 : index
    %607 = vector.load %arg16[%c3_239, %606, %c0_240] : memref<4x64x64xf32, #tpu.memory_space<vmem>>, vector<1x8x64xf32>
    %608 = vector.shape_cast %607 : vector<1x8x64xf32> to vector<8x64xf32>
    %cst_241 = arith.constant dense<0.000000e+00> : vector<8x64xf32>
    %609 = tpu.matmul %568, %518, %cst_241 {dimension_numbers = #tpu.dot_dimension_numbers<[1], [0], [0], [1], [0, 0, 1, 1], [], []>} : vector<8x64xf32>, vector<64x64xf32>, vector<8x64xf32> -> vector<8x64xf32>
    %610 = arith.addf %608, %609 : vector<8x64xf32>
    %611 = arith.negf %610 : vector<8x64xf32>
    %612 = math.exp %611 : vector<8x64xf32>
    %cst_242 = arith.constant 1.000000e+00 : f32
    %613 = vector.broadcast %cst_242 : f32 to vector<8x64xf32>
    %614 = arith.addf %613, %612 : vector<8x64xf32>
    %615 = arith.divf %613, %614 : vector<8x64xf32>
    %616 = arith.mulf %599, %571 : vector<8x64xf32>
    %617 = arith.mulf %589, %605 : vector<8x64xf32>
    %618 = arith.addf %616, %617 : vector<8x64xf32>
    %619 = math.tanh %618 : vector<8x64xf32>
    %620 = arith.mulf %615, %619 : vector<8x64xf32>
    %621 = vector.broadcast %c1_i32_226 : i32 to vector<8x1xi32>
    %622 = arith.cmpi sgt, %0, %621 : vector<8x1xi32>
    %623 = vector.shape_cast %622 : vector<8x1xi1> to vector<8x1xi1>
    %624 = vector.broadcast %623 : vector<8x1xi1> to vector<8x64xi1>
    %625 = arith.select %624, %620, %568 : vector<8x64xi1>, vector<8x64xf32>
    %626 = vector.shape_cast %622 : vector<8x1xi1> to vector<8x1xi1>
    %627 = vector.broadcast %626 : vector<8x1xi1> to vector<8x64xi1>
    %628 = arith.select %627, %618, %571 : vector<8x64xi1>, vector<8x64xf32>
    %cst_243 = arith.constant 0.000000e+00 : f32
    %629 = vector.shape_cast %622 : vector<8x1xi1> to vector<8x1xi1>
    %630 = vector.broadcast %629 : vector<8x1xi1> to vector<8x64xi1>
    %631 = vector.broadcast %cst_243 : f32 to vector<8x64xf32>
    %632 = arith.select %630, %620, %631 : vector<8x64xi1>, vector<8x64xf32>
    %633 = arith.index_cast %579 : i32 to index
    %c0_244 = arith.constant 0 : index
    %634 = vector.load %arg19[%633, %c0_244] : memref<64x64xf32, #tpu.memory_space<vmem>>, vector<8x64xf32>
    tpu.vector_store %arg19[%633, %c0_244], %632 {strides = array<i32>} : memref<64x64xf32, #tpu.memory_space<vmem>>, vector<8x64xf32>,
    %c2_i32_245 = arith.constant 2 : i32
    %c8_i32_246 = arith.constant 8 : i32
    %635 = arith.muli %c2_i32_245, %c8_i32_246 : i32
    %636 = tpu.assume_multiple %635, 8 : i32
    %c0_247 = arith.constant 0 : index
    %637 = arith.index_cast %636 : i32 to index
    %c0_248 = arith.constant 0 : index
    %638 = vector.load %arg16[%c0_247, %637, %c0_248] : memref<4x64x64xf32, #tpu.memory_space<vmem>>, vector<1x8x64xf32>
    %639 = vector.shape_cast %638 : vector<1x8x64xf32> to vector<8x64xf32>
    %cst_249 = arith.constant dense<0.000000e+00> : vector<8x64xf32>
    %640 = tpu.matmul %625, %512, %cst_249 {dimension_numbers = #tpu.dot_dimension_numbers<[1], [0], [0], [1], [0, 0, 1, 1], [], []>} : vector<8x64xf32>, vector<64x64xf32>, vector<8x64xf32> -> vector<8x64xf32>
    %641 = arith.addf %639, %640 : vector<8x64xf32>
    %642 = arith.negf %641 : vector<8x64xf32>
    %643 = math.exp %642 : vector<8x64xf32>
    %cst_250 = arith.constant 1.000000e+00 : f32
    %644 = vector.broadcast %cst_250 : f32 to vector<8x64xf32>
    %645 = arith.addf %644, %643 : vector<8x64xf32>
    %646 = arith.divf %644, %645 : vector<8x64xf32>
    %c1_251 = arith.constant 1 : index
    %647 = arith.index_cast %636 : i32 to index
    %c0_252 = arith.constant 0 : index
    %648 = vector.load %arg16[%c1_251, %647, %c0_252] : memref<4x64x64xf32, #tpu.memory_space<vmem>>, vector<1x8x64xf32>
    %649 = vector.shape_cast %648 : vector<1x8x64xf32> to vector<8x64xf32>
    %cst_253 = arith.constant dense<0.000000e+00> : vector<8x64xf32>
    %650 = tpu.matmul %625, %514, %cst_253 {dimension_numbers = #tpu.dot_dimension_numbers<[1], [0], [0], [1], [0, 0, 1, 1], [], []>} : vector<8x64xf32>, vector<64x64xf32>, vector<8x64xf32> -> vector<8x64xf32>
    %651 = arith.addf %649, %650 : vector<8x64xf32>
    %652 = arith.negf %651 : vector<8x64xf32>
    %653 = math.exp %652 : vector<8x64xf32>
    %cst_254 = arith.constant 1.000000e+00 : f32
    %654 = vector.broadcast %cst_254 : f32 to vector<8x64xf32>
    %655 = arith.addf %654, %653 : vector<8x64xf32>
    %656 = arith.divf %654, %655 : vector<8x64xf32>
    %c2_255 = arith.constant 2 : index
    %657 = arith.index_cast %636 : i32 to index
    %c0_256 = arith.constant 0 : index
    %658 = vector.load %arg16[%c2_255, %657, %c0_256] : memref<4x64x64xf32, #tpu.memory_space<vmem>>, vector<1x8x64xf32>
    %659 = vector.shape_cast %658 : vector<1x8x64xf32> to vector<8x64xf32>
    %cst_257 = arith.constant dense<0.000000e+00> : vector<8x64xf32>
    %660 = tpu.matmul %625, %516, %cst_257 {dimension_numbers = #tpu.dot_dimension_numbers<[1], [0], [0], [1], [0, 0, 1, 1], [], []>} : vector<8x64xf32>, vector<64x64xf32>, vector<8x64xf32> -> vector<8x64xf32>
    %661 = arith.addf %659, %660 : vector<8x64xf32>
    %662 = math.tanh %661 : vector<8x64xf32>
    %c3_258 = arith.constant 3 : index
    %663 = arith.index_cast %636 : i32 to index
    %c0_259 = arith.constant 0 : index
    %664 = vector.load %arg16[%c3_258, %663, %c0_259] : memref<4x64x64xf32, #tpu.memory_space<vmem>>, vector<1x8x64xf32>
    %665 = vector.shape_cast %664 : vector<1x8x64xf32> to vector<8x64xf32>
    %cst_260 = arith.constant dense<0.000000e+00> : vector<8x64xf32>
    %666 = tpu.matmul %625, %518, %cst_260 {dimension_numbers = #tpu.dot_dimension_numbers<[1], [0], [0], [1], [0, 0, 1, 1], [], []>} : vector<8x64xf32>, vector<64x64xf32>, vector<8x64xf32> -> vector<8x64xf32>
    %667 = arith.addf %665, %666 : vector<8x64xf32>
    %668 = arith.negf %667 : vector<8x64xf32>
    %669 = math.exp %668 : vector<8x64xf32>
    %cst_261 = arith.constant 1.000000e+00 : f32
    %670 = vector.broadcast %cst_261 : f32 to vector<8x64xf32>
    %671 = arith.addf %670, %669 : vector<8x64xf32>
    %672 = arith.divf %670, %671 : vector<8x64xf32>
    %673 = arith.mulf %656, %628 : vector<8x64xf32>
    %674 = arith.mulf %646, %662 : vector<8x64xf32>
    %675 = arith.addf %673, %674 : vector<8x64xf32>
    %676 = math.tanh %675 : vector<8x64xf32>
    %677 = arith.mulf %672, %676 : vector<8x64xf32>
    %678 = vector.broadcast %c2_i32_245 : i32 to vector<8x1xi32>
    %679 = arith.cmpi sgt, %0, %678 : vector<8x1xi32>
    %680 = vector.shape_cast %679 : vector<8x1xi1> to vector<8x1xi1>
    %681 = vector.broadcast %680 : vector<8x1xi1> to vector<8x64xi1>
    %682 = arith.select %681, %677, %625 : vector<8x64xi1>, vector<8x64xf32>
    %683 = vector.shape_cast %679 : vector<8x1xi1> to vector<8x1xi1>
    %684 = vector.broadcast %683 : vector<8x1xi1> to vector<8x64xi1>
    %685 = arith.select %684, %675, %628 : vector<8x64xi1>, vector<8x64xf32>
    %cst_262 = arith.constant 0.000000e+00 : f32
    %686 = vector.shape_cast %679 : vector<8x1xi1> to vector<8x1xi1>
    %687 = vector.broadcast %686 : vector<8x1xi1> to vector<8x64xi1>
    %688 = vector.broadcast %cst_262 : f32 to vector<8x64xf32>
    %689 = arith.select %687, %677, %688 : vector<8x64xi1>, vector<8x64xf32>
    %690 = arith.index_cast %636 : i32 to index
    %c0_263 = arith.constant 0 : index
    %691 = vector.load %arg19[%690, %c0_263] : memref<64x64xf32, #tpu.memory_space<vmem>>, vector<8x64xf32>
    tpu.vector_store %arg19[%690, %c0_263], %689 {strides = array<i32>} : memref<64x64xf32, #tpu.memory_space<vmem>>, vector<8x64xf32>,
    %c3_i32_264 = arith.constant 3 : i32
    %c8_i32_265 = arith.constant 8 : i32
    %692 = arith.muli %c3_i32_264, %c8_i32_265 : i32
    %693 = tpu.assume_multiple %692, 8 : i32
    %c0_266 = arith.constant 0 : index
    %694 = arith.index_cast %693 : i32 to index
    %c0_267 = arith.constant 0 : index
    %695 = vector.load %arg16[%c0_266, %694, %c0_267] : memref<4x64x64xf32, #tpu.memory_space<vmem>>, vector<1x8x64xf32>
    %696 = vector.shape_cast %695 : vector<1x8x64xf32> to vector<8x64xf32>
    %cst_268 = arith.constant dense<0.000000e+00> : vector<8x64xf32>
    %697 = tpu.matmul %682, %512, %cst_268 {dimension_numbers = #tpu.dot_dimension_numbers<[1], [0], [0], [1], [0, 0, 1, 1], [], []>} : vector<8x64xf32>, vector<64x64xf32>, vector<8x64xf32> -> vector<8x64xf32>
    %698 = arith.addf %696, %697 : vector<8x64xf32>
    %699 = arith.negf %698 : vector<8x64xf32>
    %700 = math.exp %699 : vector<8x64xf32>
    %cst_269 = arith.constant 1.000000e+00 : f32
    %701 = vector.broadcast %cst_269 : f32 to vector<8x64xf32>
    %702 = arith.addf %701, %700 : vector<8x64xf32>
    %703 = arith.divf %701, %702 : vector<8x64xf32>
    %c1_270 = arith.constant 1 : index
    %704 = arith.index_cast %693 : i32 to index
    %c0_271 = arith.constant 0 : index
    %705 = vector.load %arg16[%c1_270, %704, %c0_271] : memref<4x64x64xf32, #tpu.memory_space<vmem>>, vector<1x8x64xf32>
    %706 = vector.shape_cast %705 : vector<1x8x64xf32> to vector<8x64xf32>
    %cst_272 = arith.constant dense<0.000000e+00> : vector<8x64xf32>
    %707 = tpu.matmul %682, %514, %cst_272 {dimension_numbers = #tpu.dot_dimension_numbers<[1], [0], [0], [1], [0, 0, 1, 1], [], []>} : vector<8x64xf32>, vector<64x64xf32>, vector<8x64xf32> -> vector<8x64xf32>
    %708 = arith.addf %706, %707 : vector<8x64xf32>
    %709 = arith.negf %708 : vector<8x64xf32>
    %710 = math.exp %709 : vector<8x64xf32>
    %cst_273 = arith.constant 1.000000e+00 : f32
    %711 = vector.broadcast %cst_273 : f32 to vector<8x64xf32>
    %712 = arith.addf %711, %710 : vector<8x64xf32>
    %713 = arith.divf %711, %712 : vector<8x64xf32>
    %c2_274 = arith.constant 2 : index
    %714 = arith.index_cast %693 : i32 to index
    %c0_275 = arith.constant 0 : index
    %715 = vector.load %arg16[%c2_274, %714, %c0_275] : memref<4x64x64xf32, #tpu.memory_space<vmem>>, vector<1x8x64xf32>
    %716 = vector.shape_cast %715 : vector<1x8x64xf32> to vector<8x64xf32>
    %cst_276 = arith.constant dense<0.000000e+00> : vector<8x64xf32>
    %717 = tpu.matmul %682, %516, %cst_276 {dimension_numbers = #tpu.dot_dimension_numbers<[1], [0], [0], [1], [0, 0, 1, 1], [], []>} : vector<8x64xf32>, vector<64x64xf32>, vector<8x64xf32> -> vector<8x64xf32>
    %718 = arith.addf %716, %717 : vector<8x64xf32>
    %719 = math.tanh %718 : vector<8x64xf32>
    %c3_277 = arith.constant 3 : index
    %720 = arith.index_cast %693 : i32 to index
    %c0_278 = arith.constant 0 : index
    %721 = vector.load %arg16[%c3_277, %720, %c0_278] : memref<4x64x64xf32, #tpu.memory_space<vmem>>, vector<1x8x64xf32>
    %722 = vector.shape_cast %721 : vector<1x8x64xf32> to vector<8x64xf32>
    %cst_279 = arith.constant dense<0.000000e+00> : vector<8x64xf32>
    %723 = tpu.matmul %682, %518, %cst_279 {dimension_numbers = #tpu.dot_dimension_numbers<[1], [0], [0], [1], [0, 0, 1, 1], [], []>} : vector<8x64xf32>, vector<64x64xf32>, vector<8x64xf32> -> vector<8x64xf32>
    %724 = arith.addf %722, %723 : vector<8x64xf32>
    %725 = arith.negf %724 : vector<8x64xf32>
    %726 = math.exp %725 : vector<8x64xf32>
    %cst_280 = arith.constant 1.000000e+00 : f32
    %727 = vector.broadcast %cst_280 : f32 to vector<8x64xf32>
    %728 = arith.addf %727, %726 : vector<8x64xf32>
    %729 = arith.divf %727, %728 : vector<8x64xf32>
    %730 = arith.mulf %713, %685 : vector<8x64xf32>
    %731 = arith.mulf %703, %719 : vector<8x64xf32>
    %732 = arith.addf %730, %731 : vector<8x64xf32>
    %733 = math.tanh %732 : vector<8x64xf32>
    %734 = arith.mulf %729, %733 : vector<8x64xf32>
    %735 = vector.broadcast %c3_i32_264 : i32 to vector<8x1xi32>
    %736 = arith.cmpi sgt, %0, %735 : vector<8x1xi32>
    %737 = vector.shape_cast %736 : vector<8x1xi1> to vector<8x1xi1>
    %738 = vector.broadcast %737 : vector<8x1xi1> to vector<8x64xi1>
    %739 = arith.select %738, %734, %682 : vector<8x64xi1>, vector<8x64xf32>
    %740 = vector.shape_cast %736 : vector<8x1xi1> to vector<8x1xi1>
    %741 = vector.broadcast %740 : vector<8x1xi1> to vector<8x64xi1>
    %742 = arith.select %741, %732, %685 : vector<8x64xi1>, vector<8x64xf32>
    %cst_281 = arith.constant 0.000000e+00 : f32
    %743 = vector.shape_cast %736 : vector<8x1xi1> to vector<8x1xi1>
    %744 = vector.broadcast %743 : vector<8x1xi1> to vector<8x64xi1>
    %745 = vector.broadcast %cst_281 : f32 to vector<8x64xf32>
    %746 = arith.select %744, %734, %745 : vector<8x64xi1>, vector<8x64xf32>
    %747 = arith.index_cast %693 : i32 to index
    %c0_282 = arith.constant 0 : index
    %748 = vector.load %arg19[%747, %c0_282] : memref<64x64xf32, #tpu.memory_space<vmem>>, vector<8x64xf32>
    tpu.vector_store %arg19[%747, %c0_282], %746 {strides = array<i32>} : memref<64x64xf32, #tpu.memory_space<vmem>>, vector<8x64xf32>,
    %c4_i32_283 = arith.constant 4 : i32
    %c8_i32_284 = arith.constant 8 : i32
    %749 = arith.muli %c4_i32_283, %c8_i32_284 : i32
    %750 = tpu.assume_multiple %749, 8 : i32
    %c0_285 = arith.constant 0 : index
    %751 = arith.index_cast %750 : i32 to index
    %c0_286 = arith.constant 0 : index
    %752 = vector.load %arg16[%c0_285, %751, %c0_286] : memref<4x64x64xf32, #tpu.memory_space<vmem>>, vector<1x8x64xf32>
    %753 = vector.shape_cast %752 : vector<1x8x64xf32> to vector<8x64xf32>
    %cst_287 = arith.constant dense<0.000000e+00> : vector<8x64xf32>
    %754 = tpu.matmul %739, %512, %cst_287 {dimension_numbers = #tpu.dot_dimension_numbers<[1], [0], [0], [1], [0, 0, 1, 1], [], []>} : vector<8x64xf32>, vector<64x64xf32>, vector<8x64xf32> -> vector<8x64xf32>
    %755 = arith.addf %753, %754 : vector<8x64xf32>
    %756 = arith.negf %755 : vector<8x64xf32>
    %757 = math.exp %756 : vector<8x64xf32>
    %cst_288 = arith.constant 1.000000e+00 : f32
    %758 = vector.broadcast %cst_288 : f32 to vector<8x64xf32>
    %759 = arith.addf %758, %757 : vector<8x64xf32>
    %760 = arith.divf %758, %759 : vector<8x64xf32>
    %c1_289 = arith.constant 1 : index
    %761 = arith.index_cast %750 : i32 to index
    %c0_290 = arith.constant 0 : index
    %762 = vector.load %arg16[%c1_289, %761, %c0_290] : memref<4x64x64xf32, #tpu.memory_space<vmem>>, vector<1x8x64xf32>
    %763 = vector.shape_cast %762 : vector<1x8x64xf32> to vector<8x64xf32>
    %cst_291 = arith.constant dense<0.000000e+00> : vector<8x64xf32>
    %764 = tpu.matmul %739, %514, %cst_291 {dimension_numbers = #tpu.dot_dimension_numbers<[1], [0], [0], [1], [0, 0, 1, 1], [], []>} : vector<8x64xf32>, vector<64x64xf32>, vector<8x64xf32> -> vector<8x64xf32>
    %765 = arith.addf %763, %764 : vector<8x64xf32>
    %766 = arith.negf %765 : vector<8x64xf32>
    %767 = math.exp %766 : vector<8x64xf32>
    %cst_292 = arith.constant 1.000000e+00 : f32
    %768 = vector.broadcast %cst_292 : f32 to vector<8x64xf32>
    %769 = arith.addf %768, %767 : vector<8x64xf32>
    %770 = arith.divf %768, %769 : vector<8x64xf32>
    %c2_293 = arith.constant 2 : index
    %771 = arith.index_cast %750 : i32 to index
    %c0_294 = arith.constant 0 : index
    %772 = vector.load %arg16[%c2_293, %771, %c0_294] : memref<4x64x64xf32, #tpu.memory_space<vmem>>, vector<1x8x64xf32>
    %773 = vector.shape_cast %772 : vector<1x8x64xf32> to vector<8x64xf32>
    %cst_295 = arith.constant dense<0.000000e+00> : vector<8x64xf32>
    %774 = tpu.matmul %739, %516, %cst_295 {dimension_numbers = #tpu.dot_dimension_numbers<[1], [0], [0], [1], [0, 0, 1, 1], [], []>} : vector<8x64xf32>, vector<64x64xf32>, vector<8x64xf32> -> vector<8x64xf32>
    %775 = arith.addf %773, %774 : vector<8x64xf32>
    %776 = math.tanh %775 : vector<8x64xf32>
    %c3_296 = arith.constant 3 : index
    %777 = arith.index_cast %750 : i32 to index
    %c0_297 = arith.constant 0 : index
    %778 = vector.load %arg16[%c3_296, %777, %c0_297] : memref<4x64x64xf32, #tpu.memory_space<vmem>>, vector<1x8x64xf32>
    %779 = vector.shape_cast %778 : vector<1x8x64xf32> to vector<8x64xf32>
    %cst_298 = arith.constant dense<0.000000e+00> : vector<8x64xf32>
    %780 = tpu.matmul %739, %518, %cst_298 {dimension_numbers = #tpu.dot_dimension_numbers<[1], [0], [0], [1], [0, 0, 1, 1], [], []>} : vector<8x64xf32>, vector<64x64xf32>, vector<8x64xf32> -> vector<8x64xf32>
    %781 = arith.addf %779, %780 : vector<8x64xf32>
    %782 = arith.negf %781 : vector<8x64xf32>
    %783 = math.exp %782 : vector<8x64xf32>
    %cst_299 = arith.constant 1.000000e+00 : f32
    %784 = vector.broadcast %cst_299 : f32 to vector<8x64xf32>
    %785 = arith.addf %784, %783 : vector<8x64xf32>
    %786 = arith.divf %784, %785 : vector<8x64xf32>
    %787 = arith.mulf %770, %742 : vector<8x64xf32>
    %788 = arith.mulf %760, %776 : vector<8x64xf32>
    %789 = arith.addf %787, %788 : vector<8x64xf32>
    %790 = math.tanh %789 : vector<8x64xf32>
    %791 = arith.mulf %786, %790 : vector<8x64xf32>
    %792 = vector.broadcast %c4_i32_283 : i32 to vector<8x1xi32>
    %793 = arith.cmpi sgt, %0, %792 : vector<8x1xi32>
    %794 = vector.shape_cast %793 : vector<8x1xi1> to vector<8x1xi1>
    %795 = vector.broadcast %794 : vector<8x1xi1> to vector<8x64xi1>
    %796 = arith.select %795, %791, %739 : vector<8x64xi1>, vector<8x64xf32>
    %797 = vector.shape_cast %793 : vector<8x1xi1> to vector<8x1xi1>
    %798 = vector.broadcast %797 : vector<8x1xi1> to vector<8x64xi1>
    %799 = arith.select %798, %789, %742 : vector<8x64xi1>, vector<8x64xf32>
    %cst_300 = arith.constant 0.000000e+00 : f32
    %800 = vector.shape_cast %793 : vector<8x1xi1> to vector<8x1xi1>
    %801 = vector.broadcast %800 : vector<8x1xi1> to vector<8x64xi1>
    %802 = vector.broadcast %cst_300 : f32 to vector<8x64xf32>
    %803 = arith.select %801, %791, %802 : vector<8x64xi1>, vector<8x64xf32>
    %804 = arith.index_cast %750 : i32 to index
    %c0_301 = arith.constant 0 : index
    %805 = vector.load %arg19[%804, %c0_301] : memref<64x64xf32, #tpu.memory_space<vmem>>, vector<8x64xf32>
    tpu.vector_store %arg19[%804, %c0_301], %803 {strides = array<i32>} : memref<64x64xf32, #tpu.memory_space<vmem>>, vector<8x64xf32>,
    %c5_i32_302 = arith.constant 5 : i32
    %c8_i32_303 = arith.constant 8 : i32
    %806 = arith.muli %c5_i32_302, %c8_i32_303 : i32
    %807 = tpu.assume_multiple %806, 8 : i32
    %c0_304 = arith.constant 0 : index
    %808 = arith.index_cast %807 : i32 to index
    %c0_305 = arith.constant 0 : index
    %809 = vector.load %arg16[%c0_304, %808, %c0_305] : memref<4x64x64xf32, #tpu.memory_space<vmem>>, vector<1x8x64xf32>
    %810 = vector.shape_cast %809 : vector<1x8x64xf32> to vector<8x64xf32>
    %cst_306 = arith.constant dense<0.000000e+00> : vector<8x64xf32>
    %811 = tpu.matmul %796, %512, %cst_306 {dimension_numbers = #tpu.dot_dimension_numbers<[1], [0], [0], [1], [0, 0, 1, 1], [], []>} : vector<8x64xf32>, vector<64x64xf32>, vector<8x64xf32> -> vector<8x64xf32>
    %812 = arith.addf %810, %811 : vector<8x64xf32>
    %813 = arith.negf %812 : vector<8x64xf32>
    %814 = math.exp %813 : vector<8x64xf32>
    %cst_307 = arith.constant 1.000000e+00 : f32
    %815 = vector.broadcast %cst_307 : f32 to vector<8x64xf32>
    %816 = arith.addf %815, %814 : vector<8x64xf32>
    %817 = arith.divf %815, %816 : vector<8x64xf32>
    %c1_308 = arith.constant 1 : index
    %818 = arith.index_cast %807 : i32 to index
    %c0_309 = arith.constant 0 : index
    %819 = vector.load %arg16[%c1_308, %818, %c0_309] : memref<4x64x64xf32, #tpu.memory_space<vmem>>, vector<1x8x64xf32>
    %820 = vector.shape_cast %819 : vector<1x8x64xf32> to vector<8x64xf32>
    %cst_310 = arith.constant dense<0.000000e+00> : vector<8x64xf32>
    %821 = tpu.matmul %796, %514, %cst_310 {dimension_numbers = #tpu.dot_dimension_numbers<[1], [0], [0], [1], [0, 0, 1, 1], [], []>} : vector<8x64xf32>, vector<64x64xf32>, vector<8x64xf32> -> vector<8x64xf32>
    %822 = arith.addf %820, %821 : vector<8x64xf32>
    %823 = arith.negf %822 : vector<8x64xf32>
    %824 = math.exp %823 : vector<8x64xf32>
    %cst_311 = arith.constant 1.000000e+00 : f32
    %825 = vector.broadcast %cst_311 : f32 to vector<8x64xf32>
    %826 = arith.addf %825, %824 : vector<8x64xf32>
    %827 = arith.divf %825, %826 : vector<8x64xf32>
    %c2_312 = arith.constant 2 : index
    %828 = arith.index_cast %807 : i32 to index
    %c0_313 = arith.constant 0 : index
    %829 = vector.load %arg16[%c2_312, %828, %c0_313] : memref<4x64x64xf32, #tpu.memory_space<vmem>>, vector<1x8x64xf32>
    %830 = vector.shape_cast %829 : vector<1x8x64xf32> to vector<8x64xf32>
    %cst_314 = arith.constant dense<0.000000e+00> : vector<8x64xf32>
    %831 = tpu.matmul %796, %516, %cst_314 {dimension_numbers = #tpu.dot_dimension_numbers<[1], [0], [0], [1], [0, 0, 1, 1], [], []>} : vector<8x64xf32>, vector<64x64xf32>, vector<8x64xf32> -> vector<8x64xf32>
    %832 = arith.addf %830, %831 : vector<8x64xf32>
    %833 = math.tanh %832 : vector<8x64xf32>
    %c3_315 = arith.constant 3 : index
    %834 = arith.index_cast %807 : i32 to index
    %c0_316 = arith.constant 0 : index
    %835 = vector.load %arg16[%c3_315, %834, %c0_316] : memref<4x64x64xf32, #tpu.memory_space<vmem>>, vector<1x8x64xf32>
    %836 = vector.shape_cast %835 : vector<1x8x64xf32> to vector<8x64xf32>
    %cst_317 = arith.constant dense<0.000000e+00> : vector<8x64xf32>
    %837 = tpu.matmul %796, %518, %cst_317 {dimension_numbers = #tpu.dot_dimension_numbers<[1], [0], [0], [1], [0, 0, 1, 1], [], []>} : vector<8x64xf32>, vector<64x64xf32>, vector<8x64xf32> -> vector<8x64xf32>
    %838 = arith.addf %836, %837 : vector<8x64xf32>
    %839 = arith.negf %838 : vector<8x64xf32>
    %840 = math.exp %839 : vector<8x64xf32>
    %cst_318 = arith.constant 1.000000e+00 : f32
    %841 = vector.broadcast %cst_318 : f32 to vector<8x64xf32>
    %842 = arith.addf %841, %840 : vector<8x64xf32>
    %843 = arith.divf %841, %842 : vector<8x64xf32>
    %844 = arith.mulf %827, %799 : vector<8x64xf32>
    %845 = arith.mulf %817, %833 : vector<8x64xf32>
    %846 = arith.addf %844, %845 : vector<8x64xf32>
    %847 = math.tanh %846 : vector<8x64xf32>
    %848 = arith.mulf %843, %847 : vector<8x64xf32>
    %849 = vector.broadcast %c5_i32_302 : i32 to vector<8x1xi32>
    %850 = arith.cmpi sgt, %0, %849 : vector<8x1xi32>
    %851 = vector.shape_cast %850 : vector<8x1xi1> to vector<8x1xi1>
    %852 = vector.broadcast %851 : vector<8x1xi1> to vector<8x64xi1>
    %853 = arith.select %852, %848, %796 : vector<8x64xi1>, vector<8x64xf32>
    %854 = vector.shape_cast %850 : vector<8x1xi1> to vector<8x1xi1>
    %855 = vector.broadcast %854 : vector<8x1xi1> to vector<8x64xi1>
    %856 = arith.select %855, %846, %799 : vector<8x64xi1>, vector<8x64xf32>
    %cst_319 = arith.constant 0.000000e+00 : f32
    %857 = vector.shape_cast %850 : vector<8x1xi1> to vector<8x1xi1>
    %858 = vector.broadcast %857 : vector<8x1xi1> to vector<8x64xi1>
    %859 = vector.broadcast %cst_319 : f32 to vector<8x64xf32>
    %860 = arith.select %858, %848, %859 : vector<8x64xi1>, vector<8x64xf32>
    %861 = arith.index_cast %807 : i32 to index
    %c0_320 = arith.constant 0 : index
    %862 = vector.load %arg19[%861, %c0_320] : memref<64x64xf32, #tpu.memory_space<vmem>>, vector<8x64xf32>
    tpu.vector_store %arg19[%861, %c0_320], %860 {strides = array<i32>} : memref<64x64xf32, #tpu.memory_space<vmem>>, vector<8x64xf32>,
    %c6_i32_321 = arith.constant 6 : i32
    %c8_i32_322 = arith.constant 8 : i32
    %863 = arith.muli %c6_i32_321, %c8_i32_322 : i32
    %864 = tpu.assume_multiple %863, 8 : i32
    %c0_323 = arith.constant 0 : index
    %865 = arith.index_cast %864 : i32 to index
    %c0_324 = arith.constant 0 : index
    %866 = vector.load %arg16[%c0_323, %865, %c0_324] : memref<4x64x64xf32, #tpu.memory_space<vmem>>, vector<1x8x64xf32>
    %867 = vector.shape_cast %866 : vector<1x8x64xf32> to vector<8x64xf32>
    %cst_325 = arith.constant dense<0.000000e+00> : vector<8x64xf32>
    %868 = tpu.matmul %853, %512, %cst_325 {dimension_numbers = #tpu.dot_dimension_numbers<[1], [0], [0], [1], [0, 0, 1, 1], [], []>} : vector<8x64xf32>, vector<64x64xf32>, vector<8x64xf32> -> vector<8x64xf32>
    %869 = arith.addf %867, %868 : vector<8x64xf32>
    %870 = arith.negf %869 : vector<8x64xf32>
    %871 = math.exp %870 : vector<8x64xf32>
    %cst_326 = arith.constant 1.000000e+00 : f32
    %872 = vector.broadcast %cst_326 : f32 to vector<8x64xf32>
    %873 = arith.addf %872, %871 : vector<8x64xf32>
    %874 = arith.divf %872, %873 : vector<8x64xf32>
    %c1_327 = arith.constant 1 : index
    %875 = arith.index_cast %864 : i32 to index
    %c0_328 = arith.constant 0 : index
    %876 = vector.load %arg16[%c1_327, %875, %c0_328] : memref<4x64x64xf32, #tpu.memory_space<vmem>>, vector<1x8x64xf32>
    %877 = vector.shape_cast %876 : vector<1x8x64xf32> to vector<8x64xf32>
    %cst_329 = arith.constant dense<0.000000e+00> : vector<8x64xf32>
    %878 = tpu.matmul %853, %514, %cst_329 {dimension_numbers = #tpu.dot_dimension_numbers<[1], [0], [0], [1], [0, 0, 1, 1], [], []>} : vector<8x64xf32>, vector<64x64xf32>, vector<8x64xf32> -> vector<8x64xf32>
    %879 = arith.addf %877, %878 : vector<8x64xf32>
    %880 = arith.negf %879 : vector<8x64xf32>
    %881 = math.exp %880 : vector<8x64xf32>
    %cst_330 = arith.constant 1.000000e+00 : f32
    %882 = vector.broadcast %cst_330 : f32 to vector<8x64xf32>
    %883 = arith.addf %882, %881 : vector<8x64xf32>
    %884 = arith.divf %882, %883 : vector<8x64xf32>
    %c2_331 = arith.constant 2 : index
    %885 = arith.index_cast %864 : i32 to index
    %c0_332 = arith.constant 0 : index
    %886 = vector.load %arg16[%c2_331, %885, %c0_332] : memref<4x64x64xf32, #tpu.memory_space<vmem>>, vector<1x8x64xf32>
    %887 = vector.shape_cast %886 : vector<1x8x64xf32> to vector<8x64xf32>
    %cst_333 = arith.constant dense<0.000000e+00> : vector<8x64xf32>
    %888 = tpu.matmul %853, %516, %cst_333 {dimension_numbers = #tpu.dot_dimension_numbers<[1], [0], [0], [1], [0, 0, 1, 1], [], []>} : vector<8x64xf32>, vector<64x64xf32>, vector<8x64xf32> -> vector<8x64xf32>
    %889 = arith.addf %887, %888 : vector<8x64xf32>
    %890 = math.tanh %889 : vector<8x64xf32>
    %c3_334 = arith.constant 3 : index
    %891 = arith.index_cast %864 : i32 to index
    %c0_335 = arith.constant 0 : index
    %892 = vector.load %arg16[%c3_334, %891, %c0_335] : memref<4x64x64xf32, #tpu.memory_space<vmem>>, vector<1x8x64xf32>
    %893 = vector.shape_cast %892 : vector<1x8x64xf32> to vector<8x64xf32>
    %cst_336 = arith.constant dense<0.000000e+00> : vector<8x64xf32>
    %894 = tpu.matmul %853, %518, %cst_336 {dimension_numbers = #tpu.dot_dimension_numbers<[1], [0], [0], [1], [0, 0, 1, 1], [], []>} : vector<8x64xf32>, vector<64x64xf32>, vector<8x64xf32> -> vector<8x64xf32>
    %895 = arith.addf %893, %894 : vector<8x64xf32>
    %896 = arith.negf %895 : vector<8x64xf32>
    %897 = math.exp %896 : vector<8x64xf32>
    %cst_337 = arith.constant 1.000000e+00 : f32
    %898 = vector.broadcast %cst_337 : f32 to vector<8x64xf32>
    %899 = arith.addf %898, %897 : vector<8x64xf32>
    %900 = arith.divf %898, %899 : vector<8x64xf32>
    %901 = arith.mulf %884, %856 : vector<8x64xf32>
    %902 = arith.mulf %874, %890 : vector<8x64xf32>
    %903 = arith.addf %901, %902 : vector<8x64xf32>
    %904 = math.tanh %903 : vector<8x64xf32>
    %905 = arith.mulf %900, %904 : vector<8x64xf32>
    %906 = vector.broadcast %c6_i32_321 : i32 to vector<8x1xi32>
    %907 = arith.cmpi sgt, %0, %906 : vector<8x1xi32>
    %908 = vector.shape_cast %907 : vector<8x1xi1> to vector<8x1xi1>
    %909 = vector.broadcast %908 : vector<8x1xi1> to vector<8x64xi1>
    %910 = arith.select %909, %905, %853 : vector<8x64xi1>, vector<8x64xf32>
    %911 = vector.shape_cast %907 : vector<8x1xi1> to vector<8x1xi1>
    %912 = vector.broadcast %911 : vector<8x1xi1> to vector<8x64xi1>
    %913 = arith.select %912, %903, %856 : vector<8x64xi1>, vector<8x64xf32>
    %cst_338 = arith.constant 0.000000e+00 : f32
    %914 = vector.shape_cast %907 : vector<8x1xi1> to vector<8x1xi1>
    %915 = vector.broadcast %914 : vector<8x1xi1> to vector<8x64xi1>
    %916 = vector.broadcast %cst_338 : f32 to vector<8x64xf32>
    %917 = arith.select %915, %905, %916 : vector<8x64xi1>, vector<8x64xf32>
    %918 = arith.index_cast %864 : i32 to index
    %c0_339 = arith.constant 0 : index
    %919 = vector.load %arg19[%918, %c0_339] : memref<64x64xf32, #tpu.memory_space<vmem>>, vector<8x64xf32>
    tpu.vector_store %arg19[%918, %c0_339], %917 {strides = array<i32>} : memref<64x64xf32, #tpu.memory_space<vmem>>, vector<8x64xf32>,
    %c7_i32_340 = arith.constant 7 : i32
    %c8_i32_341 = arith.constant 8 : i32
    %920 = arith.muli %c7_i32_340, %c8_i32_341 : i32
    %921 = tpu.assume_multiple %920, 8 : i32
    %c0_342 = arith.constant 0 : index
    %922 = arith.index_cast %921 : i32 to index
    %c0_343 = arith.constant 0 : index
    %923 = vector.load %arg16[%c0_342, %922, %c0_343] : memref<4x64x64xf32, #tpu.memory_space<vmem>>, vector<1x8x64xf32>
    %924 = vector.shape_cast %923 : vector<1x8x64xf32> to vector<8x64xf32>
    %cst_344 = arith.constant dense<0.000000e+00> : vector<8x64xf32>
    %925 = tpu.matmul %910, %512, %cst_344 {dimension_numbers = #tpu.dot_dimension_numbers<[1], [0], [0], [1], [0, 0, 1, 1], [], []>} : vector<8x64xf32>, vector<64x64xf32>, vector<8x64xf32> -> vector<8x64xf32>
    %926 = arith.addf %924, %925 : vector<8x64xf32>
    %927 = arith.negf %926 : vector<8x64xf32>
    %928 = math.exp %927 : vector<8x64xf32>
    %cst_345 = arith.constant 1.000000e+00 : f32
    %929 = vector.broadcast %cst_345 : f32 to vector<8x64xf32>
    %930 = arith.addf %929, %928 : vector<8x64xf32>
    %931 = arith.divf %929, %930 : vector<8x64xf32>
    %c1_346 = arith.constant 1 : index
    %932 = arith.index_cast %921 : i32 to index
    %c0_347 = arith.constant 0 : index
    %933 = vector.load %arg16[%c1_346, %932, %c0_347] : memref<4x64x64xf32, #tpu.memory_space<vmem>>, vector<1x8x64xf32>
    %934 = vector.shape_cast %933 : vector<1x8x64xf32> to vector<8x64xf32>
    %cst_348 = arith.constant dense<0.000000e+00> : vector<8x64xf32>
    %935 = tpu.matmul %910, %514, %cst_348 {dimension_numbers = #tpu.dot_dimension_numbers<[1], [0], [0], [1], [0, 0, 1, 1], [], []>} : vector<8x64xf32>, vector<64x64xf32>, vector<8x64xf32> -> vector<8x64xf32>
    %936 = arith.addf %934, %935 : vector<8x64xf32>
    %937 = arith.negf %936 : vector<8x64xf32>
    %938 = math.exp %937 : vector<8x64xf32>
    %cst_349 = arith.constant 1.000000e+00 : f32
    %939 = vector.broadcast %cst_349 : f32 to vector<8x64xf32>
    %940 = arith.addf %939, %938 : vector<8x64xf32>
    %941 = arith.divf %939, %940 : vector<8x64xf32>
    %c2_350 = arith.constant 2 : index
    %942 = arith.index_cast %921 : i32 to index
    %c0_351 = arith.constant 0 : index
    %943 = vector.load %arg16[%c2_350, %942, %c0_351] : memref<4x64x64xf32, #tpu.memory_space<vmem>>, vector<1x8x64xf32>
    %944 = vector.shape_cast %943 : vector<1x8x64xf32> to vector<8x64xf32>
    %cst_352 = arith.constant dense<0.000000e+00> : vector<8x64xf32>
    %945 = tpu.matmul %910, %516, %cst_352 {dimension_numbers = #tpu.dot_dimension_numbers<[1], [0], [0], [1], [0, 0, 1, 1], [], []>} : vector<8x64xf32>, vector<64x64xf32>, vector<8x64xf32> -> vector<8x64xf32>
    %946 = arith.addf %944, %945 : vector<8x64xf32>
    %947 = math.tanh %946 : vector<8x64xf32>
    %c3_353 = arith.constant 3 : index
    %948 = arith.index_cast %921 : i32 to index
    %c0_354 = arith.constant 0 : index
    %949 = vector.load %arg16[%c3_353, %948, %c0_354] : memref<4x64x64xf32, #tpu.memory_space<vmem>>, vector<1x8x64xf32>
    %950 = vector.shape_cast %949 : vector<1x8x64xf32> to vector<8x64xf32>
    %cst_355 = arith.constant dense<0.000000e+00> : vector<8x64xf32>
    %951 = tpu.matmul %910, %518, %cst_355 {dimension_numbers = #tpu.dot_dimension_numbers<[1], [0], [0], [1], [0, 0, 1, 1], [], []>} : vector<8x64xf32>, vector<64x64xf32>, vector<8x64xf32> -> vector<8x64xf32>
    %952 = arith.addf %950, %951 : vector<8x64xf32>
    %953 = arith.negf %952 : vector<8x64xf32>
    %954 = math.exp %953 : vector<8x64xf32>
    %cst_356 = arith.constant 1.000000e+00 : f32
    %955 = vector.broadcast %cst_356 : f32 to vector<8x64xf32>
    %956 = arith.addf %955, %954 : vector<8x64xf32>
    %957 = arith.divf %955, %956 : vector<8x64xf32>
    %958 = arith.mulf %941, %913 : vector<8x64xf32>
    %959 = arith.mulf %931, %947 : vector<8x64xf32>
    %960 = arith.addf %958, %959 : vector<8x64xf32>
    %961 = math.tanh %960 : vector<8x64xf32>
    %962 = arith.mulf %957, %961 : vector<8x64xf32>
    %963 = vector.broadcast %c7_i32_340 : i32 to vector<8x1xi32>
    %964 = arith.cmpi sgt, %0, %963 : vector<8x1xi32>
    %965 = vector.shape_cast %964 : vector<8x1xi1> to vector<8x1xi1>
    %966 = vector.broadcast %965 : vector<8x1xi1> to vector<8x64xi1>
    %967 = arith.select %966, %962, %910 : vector<8x64xi1>, vector<8x64xf32>
    %968 = vector.shape_cast %964 : vector<8x1xi1> to vector<8x1xi1>
    %969 = vector.broadcast %968 : vector<8x1xi1> to vector<8x64xi1>
    %970 = arith.select %969, %960, %913 : vector<8x64xi1>, vector<8x64xf32>
    %cst_357 = arith.constant 0.000000e+00 : f32
    %971 = vector.shape_cast %964 : vector<8x1xi1> to vector<8x1xi1>
    %972 = vector.broadcast %971 : vector<8x1xi1> to vector<8x64xi1>
    %973 = vector.broadcast %cst_357 : f32 to vector<8x64xf32>
    %974 = arith.select %972, %962, %973 : vector<8x64xi1>, vector<8x64xf32>
    %975 = arith.index_cast %921 : i32 to index
    %c0_358 = arith.constant 0 : index
    %976 = vector.load %arg19[%975, %c0_358] : memref<64x64xf32, #tpu.memory_space<vmem>>, vector<8x64xf32>
    tpu.vector_store %arg19[%975, %c0_358], %974 {strides = array<i32>} : memref<64x64xf32, #tpu.memory_space<vmem>>, vector<8x64xf32>,
    %c8_i32_359 = arith.constant 8 : i32
    %c0_360 = arith.constant 0 : index
    %c0_361 = arith.constant 0 : index
    %977 = vector.load %arg19[%c0_360, %c0_361] : memref<64x64xf32, #tpu.memory_space<vmem>>, vector<64x64xf32>
    %c0_362 = arith.constant 0 : index
    %c0_363 = arith.constant 0 : index
    %978 = vector.load %arg9[%c0_362, %c0_363] : memref<64x128xf32, #tpu.memory_space<vmem>>, vector<64x128xf32>
    %cst_364 = arith.constant dense<0.000000e+00> : vector<64x128xf32>
    %979 = tpu.matmul %977, %978, %cst_364 {dimension_numbers = #tpu.dot_dimension_numbers<[1], [0], [0], [1], [0, 0, 1, 1], [], []>} : vector<64x64xf32>, vector<64x128xf32>, vector<64x128xf32> -> vector<64x128xf32>
    %c0_365 = arith.constant 0 : index
    %c0_366 = arith.constant 0 : index
    %980 = vector.load %arg11[%c0_365, %c0_366] : memref<1x128xf32, #tpu.memory_space<vmem>>, vector<1x128xf32>
    %981 = vector.broadcast %980 : vector<1x128xf32> to vector<64x128xf32>
    %982 = arith.addf %979, %981 : vector<64x128xf32>
    %983 = vector.extract_strided_slice %982 {offsets = [0, 0], sizes = [64, 32], strides = [1, 1]} : vector<64x128xf32> to vector<64x32xf32>
    %c0_367 = arith.constant 0 : index
    %c0_368 = arith.constant 0 : index
    %c0_369 = arith.constant 0 : index
    %984 = vector.load %arg17[%c0_367, %c0_368, %c0_369] : memref<4x64x32xf32, #tpu.memory_space<vmem>>, vector<1x64x32xf32>
    %985 = vector.shape_cast %984 : vector<1x64x32xf32> to vector<64x32xf32>
    %986 = vector.shape_cast %983 : vector<64x32xf32> to vector<1x64x32xf32>
    tpu.vector_store %arg17[%c0_367, %c0_368, %c0_369], %986 {strides = array<i32>} : memref<4x64x32xf32, #tpu.memory_space<vmem>>, vector<1x64x32xf32>,
    %987 = vector.extract_strided_slice %982 {offsets = [0, 32], sizes = [64, 32], strides = [1, 1]} : vector<64x128xf32> to vector<64x32xf32>
    %c1_370 = arith.constant 1 : index
    %c0_371 = arith.constant 0 : index
    %c0_372 = arith.constant 0 : index
    %988 = vector.load %arg17[%c1_370, %c0_371, %c0_372] : memref<4x64x32xf32, #tpu.memory_space<vmem>>, vector<1x64x32xf32>
    %989 = vector.shape_cast %988 : vector<1x64x32xf32> to vector<64x32xf32>
    %990 = vector.shape_cast %987 : vector<64x32xf32> to vector<1x64x32xf32>
    tpu.vector_store %arg17[%c1_370, %c0_371, %c0_372], %990 {strides = array<i32>} : memref<4x64x32xf32, #tpu.memory_space<vmem>>, vector<1x64x32xf32>,
    %991 = vector.extract_strided_slice %982 {offsets = [0, 64], sizes = [64, 32], strides = [1, 1]} : vector<64x128xf32> to vector<64x32xf32>
    %c2_373 = arith.constant 2 : index
    %c0_374 = arith.constant 0 : index
    %c0_375 = arith.constant 0 : index
    %992 = vector.load %arg17[%c2_373, %c0_374, %c0_375] : memref<4x64x32xf32, #tpu.memory_space<vmem>>, vector<1x64x32xf32>
    %993 = vector.shape_cast %992 : vector<1x64x32xf32> to vector<64x32xf32>
    %994 = vector.shape_cast %991 : vector<64x32xf32> to vector<1x64x32xf32>
    tpu.vector_store %arg17[%c2_373, %c0_374, %c0_375], %994 {strides = array<i32>} : memref<4x64x32xf32, #tpu.memory_space<vmem>>, vector<1x64x32xf32>,
    %995 = vector.extract_strided_slice %982 {offsets = [0, 96], sizes = [64, 32], strides = [1, 1]} : vector<64x128xf32> to vector<64x32xf32>
    %c3_376 = arith.constant 3 : index
    %c0_377 = arith.constant 0 : index
    %c0_378 = arith.constant 0 : index
    %996 = vector.load %arg17[%c3_376, %c0_377, %c0_378] : memref<4x64x32xf32, #tpu.memory_space<vmem>>, vector<1x64x32xf32>
    %997 = vector.shape_cast %996 : vector<1x64x32xf32> to vector<64x32xf32>
    %998 = vector.shape_cast %995 : vector<64x32xf32> to vector<1x64x32xf32>
    tpu.vector_store %arg17[%c3_376, %c0_377, %c0_378], %998 {strides = array<i32>} : memref<4x64x32xf32, #tpu.memory_space<vmem>>, vector<1x64x32xf32>,
    %c0_379 = arith.constant 0 : index
    %c0_380 = arith.constant 0 : index
    %c0_381 = arith.constant 0 : index
    %999 = vector.load %arg10[%c0_379, %c0_380, %c0_381] : memref<4x32x32xf32, #tpu.memory_space<vmem>>, vector<1x32x32xf32>
    %1000 = vector.shape_cast %999 : vector<1x32x32xf32> to vector<32x32xf32>
    %c1_382 = arith.constant 1 : index
    %c0_383 = arith.constant 0 : index
    %c0_384 = arith.constant 0 : index
    %1001 = vector.load %arg10[%c1_382, %c0_383, %c0_384] : memref<4x32x32xf32, #tpu.memory_space<vmem>>, vector<1x32x32xf32>
    %1002 = vector.shape_cast %1001 : vector<1x32x32xf32> to vector<32x32xf32>
    %c2_385 = arith.constant 2 : index
    %c0_386 = arith.constant 0 : index
    %c0_387 = arith.constant 0 : index
    %1003 = vector.load %arg10[%c2_385, %c0_386, %c0_387] : memref<4x32x32xf32, #tpu.memory_space<vmem>>, vector<1x32x32xf32>
    %1004 = vector.shape_cast %1003 : vector<1x32x32xf32> to vector<32x32xf32>
    %c3_388 = arith.constant 3 : index
    %c0_389 = arith.constant 0 : index
    %c0_390 = arith.constant 0 : index
    %1005 = vector.load %arg10[%c3_388, %c0_389, %c0_390] : memref<4x32x32xf32, #tpu.memory_space<vmem>>, vector<1x32x32xf32>
    %1006 = vector.shape_cast %1005 : vector<1x32x32xf32> to vector<32x32xf32>
    %cst_391 = arith.constant 0.000000e+00 : f32
    %1007 = vector.broadcast %cst_391 : f32 to vector<8x32xf32>
    %cst_392 = arith.constant 0.000000e+00 : f32
    %1008 = vector.broadcast %cst_392 : f32 to vector<8x32xf32>
    %c0_i32_393 = arith.constant 0 : i32
    %c8_i32_394 = arith.constant 8 : i32
    %1009 = arith.muli %c0_i32_393, %c8_i32_394 : i32
    %1010 = tpu.assume_multiple %1009, 8 : i32
    %c0_395 = arith.constant 0 : index
    %1011 = arith.index_cast %1010 : i32 to index
    %c0_396 = arith.constant 0 : index
    %1012 = vector.load %arg17[%c0_395, %1011, %c0_396] : memref<4x64x32xf32, #tpu.memory_space<vmem>>, vector<1x8x32xf32>
    %1013 = vector.shape_cast %1012 : vector<1x8x32xf32> to vector<8x32xf32>
    %cst_397 = arith.constant dense<0.000000e+00> : vector<8x32xf32>
    %1014 = tpu.matmul %1007, %1000, %cst_397 {dimension_numbers = #tpu.dot_dimension_numbers<[1], [0], [0], [1], [0, 0, 1, 1], [], []>} : vector<8x32xf32>, vector<32x32xf32>, vector<8x32xf32> -> vector<8x32xf32>
    %1015 = arith.addf %1013, %1014 : vector<8x32xf32>
    %1016 = arith.negf %1015 : vector<8x32xf32>
    %1017 = math.exp %1016 : vector<8x32xf32>
    %cst_398 = arith.constant 1.000000e+00 : f32
    %1018 = vector.broadcast %cst_398 : f32 to vector<8x32xf32>
    %1019 = arith.addf %1018, %1017 : vector<8x32xf32>
    %1020 = arith.divf %1018, %1019 : vector<8x32xf32>
    %c1_399 = arith.constant 1 : index
    %1021 = arith.index_cast %1010 : i32 to index
    %c0_400 = arith.constant 0 : index
    %1022 = vector.load %arg17[%c1_399, %1021, %c0_400] : memref<4x64x32xf32, #tpu.memory_space<vmem>>, vector<1x8x32xf32>
    %1023 = vector.shape_cast %1022 : vector<1x8x32xf32> to vector<8x32xf32>
    %cst_401 = arith.constant dense<0.000000e+00> : vector<8x32xf32>
    %1024 = tpu.matmul %1007, %1002, %cst_401 {dimension_numbers = #tpu.dot_dimension_numbers<[1], [0], [0], [1], [0, 0, 1, 1], [], []>} : vector<8x32xf32>, vector<32x32xf32>, vector<8x32xf32> -> vector<8x32xf32>
    %1025 = arith.addf %1023, %1024 : vector<8x32xf32>
    %1026 = arith.negf %1025 : vector<8x32xf32>
    %1027 = math.exp %1026 : vector<8x32xf32>
    %cst_402 = arith.constant 1.000000e+00 : f32
    %1028 = vector.broadcast %cst_402 : f32 to vector<8x32xf32>
    %1029 = arith.addf %1028, %1027 : vector<8x32xf32>
    %1030 = arith.divf %1028, %1029 : vector<8x32xf32>
    %c2_403 = arith.constant 2 : index
    %1031 = arith.index_cast %1010 : i32 to index
    %c0_404 = arith.constant 0 : index
    %1032 = vector.load %arg17[%c2_403, %1031, %c0_404] : memref<4x64x32xf32, #tpu.memory_space<vmem>>, vector<1x8x32xf32>
    %1033 = vector.shape_cast %1032 : vector<1x8x32xf32> to vector<8x32xf32>
    %cst_405 = arith.constant dense<0.000000e+00> : vector<8x32xf32>
    %1034 = tpu.matmul %1007, %1004, %cst_405 {dimension_numbers = #tpu.dot_dimension_numbers<[1], [0], [0], [1], [0, 0, 1, 1], [], []>} : vector<8x32xf32>, vector<32x32xf32>, vector<8x32xf32> -> vector<8x32xf32>
    %1035 = arith.addf %1033, %1034 : vector<8x32xf32>
    %1036 = math.tanh %1035 : vector<8x32xf32>
    %c3_406 = arith.constant 3 : index
    %1037 = arith.index_cast %1010 : i32 to index
    %c0_407 = arith.constant 0 : index
    %1038 = vector.load %arg17[%c3_406, %1037, %c0_407] : memref<4x64x32xf32, #tpu.memory_space<vmem>>, vector<1x8x32xf32>
    %1039 = vector.shape_cast %1038 : vector<1x8x32xf32> to vector<8x32xf32>
    %cst_408 = arith.constant dense<0.000000e+00> : vector<8x32xf32>
    %1040 = tpu.matmul %1007, %1006, %cst_408 {dimension_numbers = #tpu.dot_dimension_numbers<[1], [0], [0], [1], [0, 0, 1, 1], [], []>} : vector<8x32xf32>, vector<32x32xf32>, vector<8x32xf32> -> vector<8x32xf32>
    %1041 = arith.addf %1039, %1040 : vector<8x32xf32>
    %1042 = arith.negf %1041 : vector<8x32xf32>
    %1043 = math.exp %1042 : vector<8x32xf32>
    %cst_409 = arith.constant 1.000000e+00 : f32
    %1044 = vector.broadcast %cst_409 : f32 to vector<8x32xf32>
    %1045 = arith.addf %1044, %1043 : vector<8x32xf32>
    %1046 = arith.divf %1044, %1045 : vector<8x32xf32>
    %1047 = arith.mulf %1030, %1008 : vector<8x32xf32>
    %1048 = arith.mulf %1020, %1036 : vector<8x32xf32>
    %1049 = arith.addf %1047, %1048 : vector<8x32xf32>
    %1050 = math.tanh %1049 : vector<8x32xf32>
    %1051 = arith.mulf %1046, %1050 : vector<8x32xf32>
    %1052 = vector.broadcast %c0_i32_393 : i32 to vector<8x1xi32>
    %1053 = arith.cmpi sgt, %0, %1052 : vector<8x1xi32>
    %1054 = vector.shape_cast %1053 : vector<8x1xi1> to vector<8x1xi1>
    %1055 = vector.broadcast %1054 : vector<8x1xi1> to vector<8x32xi1>
    %1056 = arith.select %1055, %1051, %1007 : vector<8x32xi1>, vector<8x32xf32>
    %1057 = vector.shape_cast %1053 : vector<8x1xi1> to vector<8x1xi1>
    %1058 = vector.broadcast %1057 : vector<8x1xi1> to vector<8x32xi1>
    %1059 = arith.select %1058, %1049, %1008 : vector<8x32xi1>, vector<8x32xf32>
    %c1_i32_410 = arith.constant 1 : i32
    %c8_i32_411 = arith.constant 8 : i32
    %1060 = arith.muli %c1_i32_410, %c8_i32_411 : i32
    %1061 = tpu.assume_multiple %1060, 8 : i32
    %c0_412 = arith.constant 0 : index
    %1062 = arith.index_cast %1061 : i32 to index
    %c0_413 = arith.constant 0 : index
    %1063 = vector.load %arg17[%c0_412, %1062, %c0_413] : memref<4x64x32xf32, #tpu.memory_space<vmem>>, vector<1x8x32xf32>
    %1064 = vector.shape_cast %1063 : vector<1x8x32xf32> to vector<8x32xf32>
    %cst_414 = arith.constant dense<0.000000e+00> : vector<8x32xf32>
    %1065 = tpu.matmul %1056, %1000, %cst_414 {dimension_numbers = #tpu.dot_dimension_numbers<[1], [0], [0], [1], [0, 0, 1, 1], [], []>} : vector<8x32xf32>, vector<32x32xf32>, vector<8x32xf32> -> vector<8x32xf32>
    %1066 = arith.addf %1064, %1065 : vector<8x32xf32>
    %1067 = arith.negf %1066 : vector<8x32xf32>
    %1068 = math.exp %1067 : vector<8x32xf32>
    %cst_415 = arith.constant 1.000000e+00 : f32
    %1069 = vector.broadcast %cst_415 : f32 to vector<8x32xf32>
    %1070 = arith.addf %1069, %1068 : vector<8x32xf32>
    %1071 = arith.divf %1069, %1070 : vector<8x32xf32>
    %c1_416 = arith.constant 1 : index
    %1072 = arith.index_cast %1061 : i32 to index
    %c0_417 = arith.constant 0 : index
    %1073 = vector.load %arg17[%c1_416, %1072, %c0_417] : memref<4x64x32xf32, #tpu.memory_space<vmem>>, vector<1x8x32xf32>
    %1074 = vector.shape_cast %1073 : vector<1x8x32xf32> to vector<8x32xf32>
    %cst_418 = arith.constant dense<0.000000e+00> : vector<8x32xf32>
    %1075 = tpu.matmul %1056, %1002, %cst_418 {dimension_numbers = #tpu.dot_dimension_numbers<[1], [0], [0], [1], [0, 0, 1, 1], [], []>} : vector<8x32xf32>, vector<32x32xf32>, vector<8x32xf32> -> vector<8x32xf32>
    %1076 = arith.addf %1074, %1075 : vector<8x32xf32>
    %1077 = arith.negf %1076 : vector<8x32xf32>
    %1078 = math.exp %1077 : vector<8x32xf32>
    %cst_419 = arith.constant 1.000000e+00 : f32
    %1079 = vector.broadcast %cst_419 : f32 to vector<8x32xf32>
    %1080 = arith.addf %1079, %1078 : vector<8x32xf32>
    %1081 = arith.divf %1079, %1080 : vector<8x32xf32>
    %c2_420 = arith.constant 2 : index
    %1082 = arith.index_cast %1061 : i32 to index
    %c0_421 = arith.constant 0 : index
    %1083 = vector.load %arg17[%c2_420, %1082, %c0_421] : memref<4x64x32xf32, #tpu.memory_space<vmem>>, vector<1x8x32xf32>
    %1084 = vector.shape_cast %1083 : vector<1x8x32xf32> to vector<8x32xf32>
    %cst_422 = arith.constant dense<0.000000e+00> : vector<8x32xf32>
    %1085 = tpu.matmul %1056, %1004, %cst_422 {dimension_numbers = #tpu.dot_dimension_numbers<[1], [0], [0], [1], [0, 0, 1, 1], [], []>} : vector<8x32xf32>, vector<32x32xf32>, vector<8x32xf32> -> vector<8x32xf32>
    %1086 = arith.addf %1084, %1085 : vector<8x32xf32>
    %1087 = math.tanh %1086 : vector<8x32xf32>
    %c3_423 = arith.constant 3 : index
    %1088 = arith.index_cast %1061 : i32 to index
    %c0_424 = arith.constant 0 : index
    %1089 = vector.load %arg17[%c3_423, %1088, %c0_424] : memref<4x64x32xf32, #tpu.memory_space<vmem>>, vector<1x8x32xf32>
    %1090 = vector.shape_cast %1089 : vector<1x8x32xf32> to vector<8x32xf32>
    %cst_425 = arith.constant dense<0.000000e+00> : vector<8x32xf32>
    %1091 = tpu.matmul %1056, %1006, %cst_425 {dimension_numbers = #tpu.dot_dimension_numbers<[1], [0], [0], [1], [0, 0, 1, 1], [], []>} : vector<8x32xf32>, vector<32x32xf32>, vector<8x32xf32> -> vector<8x32xf32>
    %1092 = arith.addf %1090, %1091 : vector<8x32xf32>
    %1093 = arith.negf %1092 : vector<8x32xf32>
    %1094 = math.exp %1093 : vector<8x32xf32>
    %cst_426 = arith.constant 1.000000e+00 : f32
    %1095 = vector.broadcast %cst_426 : f32 to vector<8x32xf32>
    %1096 = arith.addf %1095, %1094 : vector<8x32xf32>
    %1097 = arith.divf %1095, %1096 : vector<8x32xf32>
    %1098 = arith.mulf %1081, %1059 : vector<8x32xf32>
    %1099 = arith.mulf %1071, %1087 : vector<8x32xf32>
    %1100 = arith.addf %1098, %1099 : vector<8x32xf32>
    %1101 = math.tanh %1100 : vector<8x32xf32>
    %1102 = arith.mulf %1097, %1101 : vector<8x32xf32>
    %1103 = vector.broadcast %c1_i32_410 : i32 to vector<8x1xi32>
    %1104 = arith.cmpi sgt, %0, %1103 : vector<8x1xi32>
    %1105 = vector.shape_cast %1104 : vector<8x1xi1> to vector<8x1xi1>
    %1106 = vector.broadcast %1105 : vector<8x1xi1> to vector<8x32xi1>
    %1107 = arith.select %1106, %1102, %1056 : vector<8x32xi1>, vector<8x32xf32>
    %1108 = vector.shape_cast %1104 : vector<8x1xi1> to vector<8x1xi1>
    %1109 = vector.broadcast %1108 : vector<8x1xi1> to vector<8x32xi1>
    %1110 = arith.select %1109, %1100, %1059 : vector<8x32xi1>, vector<8x32xf32>
    %c2_i32_427 = arith.constant 2 : i32
    %c8_i32_428 = arith.constant 8 : i32
    %1111 = arith.muli %c2_i32_427, %c8_i32_428 : i32
    %1112 = tpu.assume_multiple %1111, 8 : i32
    %c0_429 = arith.constant 0 : index
    %1113 = arith.index_cast %1112 : i32 to index
    %c0_430 = arith.constant 0 : index
    %1114 = vector.load %arg17[%c0_429, %1113, %c0_430] : memref<4x64x32xf32, #tpu.memory_space<vmem>>, vector<1x8x32xf32>
    %1115 = vector.shape_cast %1114 : vector<1x8x32xf32> to vector<8x32xf32>
    %cst_431 = arith.constant dense<0.000000e+00> : vector<8x32xf32>
    %1116 = tpu.matmul %1107, %1000, %cst_431 {dimension_numbers = #tpu.dot_dimension_numbers<[1], [0], [0], [1], [0, 0, 1, 1], [], []>} : vector<8x32xf32>, vector<32x32xf32>, vector<8x32xf32> -> vector<8x32xf32>
    %1117 = arith.addf %1115, %1116 : vector<8x32xf32>
    %1118 = arith.negf %1117 : vector<8x32xf32>
    %1119 = math.exp %1118 : vector<8x32xf32>
    %cst_432 = arith.constant 1.000000e+00 : f32
    %1120 = vector.broadcast %cst_432 : f32 to vector<8x32xf32>
    %1121 = arith.addf %1120, %1119 : vector<8x32xf32>
    %1122 = arith.divf %1120, %1121 : vector<8x32xf32>
    %c1_433 = arith.constant 1 : index
    %1123 = arith.index_cast %1112 : i32 to index
    %c0_434 = arith.constant 0 : index
    %1124 = vector.load %arg17[%c1_433, %1123, %c0_434] : memref<4x64x32xf32, #tpu.memory_space<vmem>>, vector<1x8x32xf32>
    %1125 = vector.shape_cast %1124 : vector<1x8x32xf32> to vector<8x32xf32>
    %cst_435 = arith.constant dense<0.000000e+00> : vector<8x32xf32>
    %1126 = tpu.matmul %1107, %1002, %cst_435 {dimension_numbers = #tpu.dot_dimension_numbers<[1], [0], [0], [1], [0, 0, 1, 1], [], []>} : vector<8x32xf32>, vector<32x32xf32>, vector<8x32xf32> -> vector<8x32xf32>
    %1127 = arith.addf %1125, %1126 : vector<8x32xf32>
    %1128 = arith.negf %1127 : vector<8x32xf32>
    %1129 = math.exp %1128 : vector<8x32xf32>
    %cst_436 = arith.constant 1.000000e+00 : f32
    %1130 = vector.broadcast %cst_436 : f32 to vector<8x32xf32>
    %1131 = arith.addf %1130, %1129 : vector<8x32xf32>
    %1132 = arith.divf %1130, %1131 : vector<8x32xf32>
    %c2_437 = arith.constant 2 : index
    %1133 = arith.index_cast %1112 : i32 to index
    %c0_438 = arith.constant 0 : index
    %1134 = vector.load %arg17[%c2_437, %1133, %c0_438] : memref<4x64x32xf32, #tpu.memory_space<vmem>>, vector<1x8x32xf32>
    %1135 = vector.shape_cast %1134 : vector<1x8x32xf32> to vector<8x32xf32>
    %cst_439 = arith.constant dense<0.000000e+00> : vector<8x32xf32>
    %1136 = tpu.matmul %1107, %1004, %cst_439 {dimension_numbers = #tpu.dot_dimension_numbers<[1], [0], [0], [1], [0, 0, 1, 1], [], []>} : vector<8x32xf32>, vector<32x32xf32>, vector<8x32xf32> -> vector<8x32xf32>
    %1137 = arith.addf %1135, %1136 : vector<8x32xf32>
    %1138 = math.tanh %1137 : vector<8x32xf32>
    %c3_440 = arith.constant 3 : index
    %1139 = arith.index_cast %1112 : i32 to index
    %c0_441 = arith.constant 0 : index
    %1140 = vector.load %arg17[%c3_440, %1139, %c0_441] : memref<4x64x32xf32, #tpu.memory_space<vmem>>, vector<1x8x32xf32>
    %1141 = vector.shape_cast %1140 : vector<1x8x32xf32> to vector<8x32xf32>
    %cst_442 = arith.constant dense<0.000000e+00> : vector<8x32xf32>
    %1142 = tpu.matmul %1107, %1006, %cst_442 {dimension_numbers = #tpu.dot_dimension_numbers<[1], [0], [0], [1], [0, 0, 1, 1], [], []>} : vector<8x32xf32>, vector<32x32xf32>, vector<8x32xf32> -> vector<8x32xf32>
    %1143 = arith.addf %1141, %1142 : vector<8x32xf32>
    %1144 = arith.negf %1143 : vector<8x32xf32>
    %1145 = math.exp %1144 : vector<8x32xf32>
    %cst_443 = arith.constant 1.000000e+00 : f32
    %1146 = vector.broadcast %cst_443 : f32 to vector<8x32xf32>
    %1147 = arith.addf %1146, %1145 : vector<8x32xf32>
    %1148 = arith.divf %1146, %1147 : vector<8x32xf32>
    %1149 = arith.mulf %1132, %1110 : vector<8x32xf32>
    %1150 = arith.mulf %1122, %1138 : vector<8x32xf32>
    %1151 = arith.addf %1149, %1150 : vector<8x32xf32>
    %1152 = math.tanh %1151 : vector<8x32xf32>
    %1153 = arith.mulf %1148, %1152 : vector<8x32xf32>
    %1154 = vector.broadcast %c2_i32_427 : i32 to vector<8x1xi32>
    %1155 = arith.cmpi sgt, %0, %1154 : vector<8x1xi32>
    %1156 = vector.shape_cast %1155 : vector<8x1xi1> to vector<8x1xi1>
    %1157 = vector.broadcast %1156 : vector<8x1xi1> to vector<8x32xi1>
    %1158 = arith.select %1157, %1153, %1107 : vector<8x32xi1>, vector<8x32xf32>
    %1159 = vector.shape_cast %1155 : vector<8x1xi1> to vector<8x1xi1>
    %1160 = vector.broadcast %1159 : vector<8x1xi1> to vector<8x32xi1>
    %1161 = arith.select %1160, %1151, %1110 : vector<8x32xi1>, vector<8x32xf32>
    %c3_i32_444 = arith.constant 3 : i32
    %c8_i32_445 = arith.constant 8 : i32
    %1162 = arith.muli %c3_i32_444, %c8_i32_445 : i32
    %1163 = tpu.assume_multiple %1162, 8 : i32
    %c0_446 = arith.constant 0 : index
    %1164 = arith.index_cast %1163 : i32 to index
    %c0_447 = arith.constant 0 : index
    %1165 = vector.load %arg17[%c0_446, %1164, %c0_447] : memref<4x64x32xf32, #tpu.memory_space<vmem>>, vector<1x8x32xf32>
    %1166 = vector.shape_cast %1165 : vector<1x8x32xf32> to vector<8x32xf32>
    %cst_448 = arith.constant dense<0.000000e+00> : vector<8x32xf32>
    %1167 = tpu.matmul %1158, %1000, %cst_448 {dimension_numbers = #tpu.dot_dimension_numbers<[1], [0], [0], [1], [0, 0, 1, 1], [], []>} : vector<8x32xf32>, vector<32x32xf32>, vector<8x32xf32> -> vector<8x32xf32>
    %1168 = arith.addf %1166, %1167 : vector<8x32xf32>
    %1169 = arith.negf %1168 : vector<8x32xf32>
    %1170 = math.exp %1169 : vector<8x32xf32>
    %cst_449 = arith.constant 1.000000e+00 : f32
    %1171 = vector.broadcast %cst_449 : f32 to vector<8x32xf32>
    %1172 = arith.addf %1171, %1170 : vector<8x32xf32>
    %1173 = arith.divf %1171, %1172 : vector<8x32xf32>
    %c1_450 = arith.constant 1 : index
    %1174 = arith.index_cast %1163 : i32 to index
    %c0_451 = arith.constant 0 : index
    %1175 = vector.load %arg17[%c1_450, %1174, %c0_451] : memref<4x64x32xf32, #tpu.memory_space<vmem>>, vector<1x8x32xf32>
    %1176 = vector.shape_cast %1175 : vector<1x8x32xf32> to vector<8x32xf32>
    %cst_452 = arith.constant dense<0.000000e+00> : vector<8x32xf32>
    %1177 = tpu.matmul %1158, %1002, %cst_452 {dimension_numbers = #tpu.dot_dimension_numbers<[1], [0], [0], [1], [0, 0, 1, 1], [], []>} : vector<8x32xf32>, vector<32x32xf32>, vector<8x32xf32> -> vector<8x32xf32>
    %1178 = arith.addf %1176, %1177 : vector<8x32xf32>
    %1179 = arith.negf %1178 : vector<8x32xf32>
    %1180 = math.exp %1179 : vector<8x32xf32>
    %cst_453 = arith.constant 1.000000e+00 : f32
    %1181 = vector.broadcast %cst_453 : f32 to vector<8x32xf32>
    %1182 = arith.addf %1181, %1180 : vector<8x32xf32>
    %1183 = arith.divf %1181, %1182 : vector<8x32xf32>
    %c2_454 = arith.constant 2 : index
    %1184 = arith.index_cast %1163 : i32 to index
    %c0_455 = arith.constant 0 : index
    %1185 = vector.load %arg17[%c2_454, %1184, %c0_455] : memref<4x64x32xf32, #tpu.memory_space<vmem>>, vector<1x8x32xf32>
    %1186 = vector.shape_cast %1185 : vector<1x8x32xf32> to vector<8x32xf32>
    %cst_456 = arith.constant dense<0.000000e+00> : vector<8x32xf32>
    %1187 = tpu.matmul %1158, %1004, %cst_456 {dimension_numbers = #tpu.dot_dimension_numbers<[1], [0], [0], [1], [0, 0, 1, 1], [], []>} : vector<8x32xf32>, vector<32x32xf32>, vector<8x32xf32> -> vector<8x32xf32>
    %1188 = arith.addf %1186, %1187 : vector<8x32xf32>
    %1189 = math.tanh %1188 : vector<8x32xf32>
    %c3_457 = arith.constant 3 : index
    %1190 = arith.index_cast %1163 : i32 to index
    %c0_458 = arith.constant 0 : index
    %1191 = vector.load %arg17[%c3_457, %1190, %c0_458] : memref<4x64x32xf32, #tpu.memory_space<vmem>>, vector<1x8x32xf32>
    %1192 = vector.shape_cast %1191 : vector<1x8x32xf32> to vector<8x32xf32>
    %cst_459 = arith.constant dense<0.000000e+00> : vector<8x32xf32>
    %1193 = tpu.matmul %1158, %1006, %cst_459 {dimension_numbers = #tpu.dot_dimension_numbers<[1], [0], [0], [1], [0, 0, 1, 1], [], []>} : vector<8x32xf32>, vector<32x32xf32>, vector<8x32xf32> -> vector<8x32xf32>
    %1194 = arith.addf %1192, %1193 : vector<8x32xf32>
    %1195 = arith.negf %1194 : vector<8x32xf32>
    %1196 = math.exp %1195 : vector<8x32xf32>
    %cst_460 = arith.constant 1.000000e+00 : f32
    %1197 = vector.broadcast %cst_460 : f32 to vector<8x32xf32>
    %1198 = arith.addf %1197, %1196 : vector<8x32xf32>
    %1199 = arith.divf %1197, %1198 : vector<8x32xf32>
    %1200 = arith.mulf %1183, %1161 : vector<8x32xf32>
    %1201 = arith.mulf %1173, %1189 : vector<8x32xf32>
    %1202 = arith.addf %1200, %1201 : vector<8x32xf32>
    %1203 = math.tanh %1202 : vector<8x32xf32>
    %1204 = arith.mulf %1199, %1203 : vector<8x32xf32>
    %1205 = vector.broadcast %c3_i32_444 : i32 to vector<8x1xi32>
    %1206 = arith.cmpi sgt, %0, %1205 : vector<8x1xi32>
    %1207 = vector.shape_cast %1206 : vector<8x1xi1> to vector<8x1xi1>
    %1208 = vector.broadcast %1207 : vector<8x1xi1> to vector<8x32xi1>
    %1209 = arith.select %1208, %1204, %1158 : vector<8x32xi1>, vector<8x32xf32>
    %1210 = vector.shape_cast %1206 : vector<8x1xi1> to vector<8x1xi1>
    %1211 = vector.broadcast %1210 : vector<8x1xi1> to vector<8x32xi1>
    %1212 = arith.select %1211, %1202, %1161 : vector<8x32xi1>, vector<8x32xf32>
    %c4_i32_461 = arith.constant 4 : i32
    %c8_i32_462 = arith.constant 8 : i32
    %1213 = arith.muli %c4_i32_461, %c8_i32_462 : i32
    %1214 = tpu.assume_multiple %1213, 8 : i32
    %c0_463 = arith.constant 0 : index
    %1215 = arith.index_cast %1214 : i32 to index
    %c0_464 = arith.constant 0 : index
    %1216 = vector.load %arg17[%c0_463, %1215, %c0_464] : memref<4x64x32xf32, #tpu.memory_space<vmem>>, vector<1x8x32xf32>
    %1217 = vector.shape_cast %1216 : vector<1x8x32xf32> to vector<8x32xf32>
    %cst_465 = arith.constant dense<0.000000e+00> : vector<8x32xf32>
    %1218 = tpu.matmul %1209, %1000, %cst_465 {dimension_numbers = #tpu.dot_dimension_numbers<[1], [0], [0], [1], [0, 0, 1, 1], [], []>} : vector<8x32xf32>, vector<32x32xf32>, vector<8x32xf32> -> vector<8x32xf32>
    %1219 = arith.addf %1217, %1218 : vector<8x32xf32>
    %1220 = arith.negf %1219 : vector<8x32xf32>
    %1221 = math.exp %1220 : vector<8x32xf32>
    %cst_466 = arith.constant 1.000000e+00 : f32
    %1222 = vector.broadcast %cst_466 : f32 to vector<8x32xf32>
    %1223 = arith.addf %1222, %1221 : vector<8x32xf32>
    %1224 = arith.divf %1222, %1223 : vector<8x32xf32>
    %c1_467 = arith.constant 1 : index
    %1225 = arith.index_cast %1214 : i32 to index
    %c0_468 = arith.constant 0 : index
    %1226 = vector.load %arg17[%c1_467, %1225, %c0_468] : memref<4x64x32xf32, #tpu.memory_space<vmem>>, vector<1x8x32xf32>
    %1227 = vector.shape_cast %1226 : vector<1x8x32xf32> to vector<8x32xf32>
    %cst_469 = arith.constant dense<0.000000e+00> : vector<8x32xf32>
    %1228 = tpu.matmul %1209, %1002, %cst_469 {dimension_numbers = #tpu.dot_dimension_numbers<[1], [0], [0], [1], [0, 0, 1, 1], [], []>} : vector<8x32xf32>, vector<32x32xf32>, vector<8x32xf32> -> vector<8x32xf32>
    %1229 = arith.addf %1227, %1228 : vector<8x32xf32>
    %1230 = arith.negf %1229 : vector<8x32xf32>
    %1231 = math.exp %1230 : vector<8x32xf32>
    %cst_470 = arith.constant 1.000000e+00 : f32
    %1232 = vector.broadcast %cst_470 : f32 to vector<8x32xf32>
    %1233 = arith.addf %1232, %1231 : vector<8x32xf32>
    %1234 = arith.divf %1232, %1233 : vector<8x32xf32>
    %c2_471 = arith.constant 2 : index
    %1235 = arith.index_cast %1214 : i32 to index
    %c0_472 = arith.constant 0 : index
    %1236 = vector.load %arg17[%c2_471, %1235, %c0_472] : memref<4x64x32xf32, #tpu.memory_space<vmem>>, vector<1x8x32xf32>
    %1237 = vector.shape_cast %1236 : vector<1x8x32xf32> to vector<8x32xf32>
    %cst_473 = arith.constant dense<0.000000e+00> : vector<8x32xf32>
    %1238 = tpu.matmul %1209, %1004, %cst_473 {dimension_numbers = #tpu.dot_dimension_numbers<[1], [0], [0], [1], [0, 0, 1, 1], [], []>} : vector<8x32xf32>, vector<32x32xf32>, vector<8x32xf32> -> vector<8x32xf32>
    %1239 = arith.addf %1237, %1238 : vector<8x32xf32>
    %1240 = math.tanh %1239 : vector<8x32xf32>
    %c3_474 = arith.constant 3 : index
    %1241 = arith.index_cast %1214 : i32 to index
    %c0_475 = arith.constant 0 : index
    %1242 = vector.load %arg17[%c3_474, %1241, %c0_475] : memref<4x64x32xf32, #tpu.memory_space<vmem>>, vector<1x8x32xf32>
    %1243 = vector.shape_cast %1242 : vector<1x8x32xf32> to vector<8x32xf32>
    %cst_476 = arith.constant dense<0.000000e+00> : vector<8x32xf32>
    %1244 = tpu.matmul %1209, %1006, %cst_476 {dimension_numbers = #tpu.dot_dimension_numbers<[1], [0], [0], [1], [0, 0, 1, 1], [], []>} : vector<8x32xf32>, vector<32x32xf32>, vector<8x32xf32> -> vector<8x32xf32>
    %1245 = arith.addf %1243, %1244 : vector<8x32xf32>
    %1246 = arith.negf %1245 : vector<8x32xf32>
    %1247 = math.exp %1246 : vector<8x32xf32>
    %cst_477 = arith.constant 1.000000e+00 : f32
    %1248 = vector.broadcast %cst_477 : f32 to vector<8x32xf32>
    %1249 = arith.addf %1248, %1247 : vector<8x32xf32>
    %1250 = arith.divf %1248, %1249 : vector<8x32xf32>
    %1251 = arith.mulf %1234, %1212 : vector<8x32xf32>
    %1252 = arith.mulf %1224, %1240 : vector<8x32xf32>
    %1253 = arith.addf %1251, %1252 : vector<8x32xf32>
    %1254 = math.tanh %1253 : vector<8x32xf32>
    %1255 = arith.mulf %1250, %1254 : vector<8x32xf32>
    %1256 = vector.broadcast %c4_i32_461 : i32 to vector<8x1xi32>
    %1257 = arith.cmpi sgt, %0, %1256 : vector<8x1xi32>
    %1258 = vector.shape_cast %1257 : vector<8x1xi1> to vector<8x1xi1>
    %1259 = vector.broadcast %1258 : vector<8x1xi1> to vector<8x32xi1>
    %1260 = arith.select %1259, %1255, %1209 : vector<8x32xi1>, vector<8x32xf32>
    %1261 = vector.shape_cast %1257 : vector<8x1xi1> to vector<8x1xi1>
    %1262 = vector.broadcast %1261 : vector<8x1xi1> to vector<8x32xi1>
    %1263 = arith.select %1262, %1253, %1212 : vector<8x32xi1>, vector<8x32xf32>
    %c5_i32_478 = arith.constant 5 : i32
    %c8_i32_479 = arith.constant 8 : i32
    %1264 = arith.muli %c5_i32_478, %c8_i32_479 : i32
    %1265 = tpu.assume_multiple %1264, 8 : i32
    %c0_480 = arith.constant 0 : index
    %1266 = arith.index_cast %1265 : i32 to index
    %c0_481 = arith.constant 0 : index
    %1267 = vector.load %arg17[%c0_480, %1266, %c0_481] : memref<4x64x32xf32, #tpu.memory_space<vmem>>, vector<1x8x32xf32>
    %1268 = vector.shape_cast %1267 : vector<1x8x32xf32> to vector<8x32xf32>
    %cst_482 = arith.constant dense<0.000000e+00> : vector<8x32xf32>
    %1269 = tpu.matmul %1260, %1000, %cst_482 {dimension_numbers = #tpu.dot_dimension_numbers<[1], [0], [0], [1], [0, 0, 1, 1], [], []>} : vector<8x32xf32>, vector<32x32xf32>, vector<8x32xf32> -> vector<8x32xf32>
    %1270 = arith.addf %1268, %1269 : vector<8x32xf32>
    %1271 = arith.negf %1270 : vector<8x32xf32>
    %1272 = math.exp %1271 : vector<8x32xf32>
    %cst_483 = arith.constant 1.000000e+00 : f32
    %1273 = vector.broadcast %cst_483 : f32 to vector<8x32xf32>
    %1274 = arith.addf %1273, %1272 : vector<8x32xf32>
    %1275 = arith.divf %1273, %1274 : vector<8x32xf32>
    %c1_484 = arith.constant 1 : index
    %1276 = arith.index_cast %1265 : i32 to index
    %c0_485 = arith.constant 0 : index
    %1277 = vector.load %arg17[%c1_484, %1276, %c0_485] : memref<4x64x32xf32, #tpu.memory_space<vmem>>, vector<1x8x32xf32>
    %1278 = vector.shape_cast %1277 : vector<1x8x32xf32> to vector<8x32xf32>
    %cst_486 = arith.constant dense<0.000000e+00> : vector<8x32xf32>
    %1279 = tpu.matmul %1260, %1002, %cst_486 {dimension_numbers = #tpu.dot_dimension_numbers<[1], [0], [0], [1], [0, 0, 1, 1], [], []>} : vector<8x32xf32>, vector<32x32xf32>, vector<8x32xf32> -> vector<8x32xf32>
    %1280 = arith.addf %1278, %1279 : vector<8x32xf32>
    %1281 = arith.negf %1280 : vector<8x32xf32>
    %1282 = math.exp %1281 : vector<8x32xf32>
    %cst_487 = arith.constant 1.000000e+00 : f32
    %1283 = vector.broadcast %cst_487 : f32 to vector<8x32xf32>
    %1284 = arith.addf %1283, %1282 : vector<8x32xf32>
    %1285 = arith.divf %1283, %1284 : vector<8x32xf32>
    %c2_488 = arith.constant 2 : index
    %1286 = arith.index_cast %1265 : i32 to index
    %c0_489 = arith.constant 0 : index
    %1287 = vector.load %arg17[%c2_488, %1286, %c0_489] : memref<4x64x32xf32, #tpu.memory_space<vmem>>, vector<1x8x32xf32>
    %1288 = vector.shape_cast %1287 : vector<1x8x32xf32> to vector<8x32xf32>
    %cst_490 = arith.constant dense<0.000000e+00> : vector<8x32xf32>
    %1289 = tpu.matmul %1260, %1004, %cst_490 {dimension_numbers = #tpu.dot_dimension_numbers<[1], [0], [0], [1], [0, 0, 1, 1], [], []>} : vector<8x32xf32>, vector<32x32xf32>, vector<8x32xf32> -> vector<8x32xf32>
    %1290 = arith.addf %1288, %1289 : vector<8x32xf32>
    %1291 = math.tanh %1290 : vector<8x32xf32>
    %c3_491 = arith.constant 3 : index
    %1292 = arith.index_cast %1265 : i32 to index
    %c0_492 = arith.constant 0 : index
    %1293 = vector.load %arg17[%c3_491, %1292, %c0_492] : memref<4x64x32xf32, #tpu.memory_space<vmem>>, vector<1x8x32xf32>
    %1294 = vector.shape_cast %1293 : vector<1x8x32xf32> to vector<8x32xf32>
    %cst_493 = arith.constant dense<0.000000e+00> : vector<8x32xf32>
    %1295 = tpu.matmul %1260, %1006, %cst_493 {dimension_numbers = #tpu.dot_dimension_numbers<[1], [0], [0], [1], [0, 0, 1, 1], [], []>} : vector<8x32xf32>, vector<32x32xf32>, vector<8x32xf32> -> vector<8x32xf32>
    %1296 = arith.addf %1294, %1295 : vector<8x32xf32>
    %1297 = arith.negf %1296 : vector<8x32xf32>
    %1298 = math.exp %1297 : vector<8x32xf32>
    %cst_494 = arith.constant 1.000000e+00 : f32
    %1299 = vector.broadcast %cst_494 : f32 to vector<8x32xf32>
    %1300 = arith.addf %1299, %1298 : vector<8x32xf32>
    %1301 = arith.divf %1299, %1300 : vector<8x32xf32>
    %1302 = arith.mulf %1285, %1263 : vector<8x32xf32>
    %1303 = arith.mulf %1275, %1291 : vector<8x32xf32>
    %1304 = arith.addf %1302, %1303 : vector<8x32xf32>
    %1305 = math.tanh %1304 : vector<8x32xf32>
    %1306 = arith.mulf %1301, %1305 : vector<8x32xf32>
    %1307 = vector.broadcast %c5_i32_478 : i32 to vector<8x1xi32>
    %1308 = arith.cmpi sgt, %0, %1307 : vector<8x1xi32>
    %1309 = vector.shape_cast %1308 : vector<8x1xi1> to vector<8x1xi1>
    %1310 = vector.broadcast %1309 : vector<8x1xi1> to vector<8x32xi1>
    %1311 = arith.select %1310, %1306, %1260 : vector<8x32xi1>, vector<8x32xf32>
    %1312 = vector.shape_cast %1308 : vector<8x1xi1> to vector<8x1xi1>
    %1313 = vector.broadcast %1312 : vector<8x1xi1> to vector<8x32xi1>
    %1314 = arith.select %1313, %1304, %1263 : vector<8x32xi1>, vector<8x32xf32>
    %c6_i32_495 = arith.constant 6 : i32
    %c8_i32_496 = arith.constant 8 : i32
    %1315 = arith.muli %c6_i32_495, %c8_i32_496 : i32
    %1316 = tpu.assume_multiple %1315, 8 : i32
    %c0_497 = arith.constant 0 : index
    %1317 = arith.index_cast %1316 : i32 to index
    %c0_498 = arith.constant 0 : index
    %1318 = vector.load %arg17[%c0_497, %1317, %c0_498] : memref<4x64x32xf32, #tpu.memory_space<vmem>>, vector<1x8x32xf32>
    %1319 = vector.shape_cast %1318 : vector<1x8x32xf32> to vector<8x32xf32>
    %cst_499 = arith.constant dense<0.000000e+00> : vector<8x32xf32>
    %1320 = tpu.matmul %1311, %1000, %cst_499 {dimension_numbers = #tpu.dot_dimension_numbers<[1], [0], [0], [1], [0, 0, 1, 1], [], []>} : vector<8x32xf32>, vector<32x32xf32>, vector<8x32xf32> -> vector<8x32xf32>
    %1321 = arith.addf %1319, %1320 : vector<8x32xf32>
    %1322 = arith.negf %1321 : vector<8x32xf32>
    %1323 = math.exp %1322 : vector<8x32xf32>
    %cst_500 = arith.constant 1.000000e+00 : f32
    %1324 = vector.broadcast %cst_500 : f32 to vector<8x32xf32>
    %1325 = arith.addf %1324, %1323 : vector<8x32xf32>
    %1326 = arith.divf %1324, %1325 : vector<8x32xf32>
    %c1_501 = arith.constant 1 : index
    %1327 = arith.index_cast %1316 : i32 to index
    %c0_502 = arith.constant 0 : index
    %1328 = vector.load %arg17[%c1_501, %1327, %c0_502] : memref<4x64x32xf32, #tpu.memory_space<vmem>>, vector<1x8x32xf32>
    %1329 = vector.shape_cast %1328 : vector<1x8x32xf32> to vector<8x32xf32>
    %cst_503 = arith.constant dense<0.000000e+00> : vector<8x32xf32>
    %1330 = tpu.matmul %1311, %1002, %cst_503 {dimension_numbers = #tpu.dot_dimension_numbers<[1], [0], [0], [1], [0, 0, 1, 1], [], []>} : vector<8x32xf32>, vector<32x32xf32>, vector<8x32xf32> -> vector<8x32xf32>
    %1331 = arith.addf %1329, %1330 : vector<8x32xf32>
    %1332 = arith.negf %1331 : vector<8x32xf32>
    %1333 = math.exp %1332 : vector<8x32xf32>
    %cst_504 = arith.constant 1.000000e+00 : f32
    %1334 = vector.broadcast %cst_504 : f32 to vector<8x32xf32>
    %1335 = arith.addf %1334, %1333 : vector<8x32xf32>
    %1336 = arith.divf %1334, %1335 : vector<8x32xf32>
    %c2_505 = arith.constant 2 : index
    %1337 = arith.index_cast %1316 : i32 to index
    %c0_506 = arith.constant 0 : index
    %1338 = vector.load %arg17[%c2_505, %1337, %c0_506] : memref<4x64x32xf32, #tpu.memory_space<vmem>>, vector<1x8x32xf32>
    %1339 = vector.shape_cast %1338 : vector<1x8x32xf32> to vector<8x32xf32>
    %cst_507 = arith.constant dense<0.000000e+00> : vector<8x32xf32>
    %1340 = tpu.matmul %1311, %1004, %cst_507 {dimension_numbers = #tpu.dot_dimension_numbers<[1], [0], [0], [1], [0, 0, 1, 1], [], []>} : vector<8x32xf32>, vector<32x32xf32>, vector<8x32xf32> -> vector<8x32xf32>
    %1341 = arith.addf %1339, %1340 : vector<8x32xf32>
    %1342 = math.tanh %1341 : vector<8x32xf32>
    %c3_508 = arith.constant 3 : index
    %1343 = arith.index_cast %1316 : i32 to index
    %c0_509 = arith.constant 0 : index
    %1344 = vector.load %arg17[%c3_508, %1343, %c0_509] : memref<4x64x32xf32, #tpu.memory_space<vmem>>, vector<1x8x32xf32>
    %1345 = vector.shape_cast %1344 : vector<1x8x32xf32> to vector<8x32xf32>
    %cst_510 = arith.constant dense<0.000000e+00> : vector<8x32xf32>
    %1346 = tpu.matmul %1311, %1006, %cst_510 {dimension_numbers = #tpu.dot_dimension_numbers<[1], [0], [0], [1], [0, 0, 1, 1], [], []>} : vector<8x32xf32>, vector<32x32xf32>, vector<8x32xf32> -> vector<8x32xf32>
    %1347 = arith.addf %1345, %1346 : vector<8x32xf32>
    %1348 = arith.negf %1347 : vector<8x32xf32>
    %1349 = math.exp %1348 : vector<8x32xf32>
    %cst_511 = arith.constant 1.000000e+00 : f32
    %1350 = vector.broadcast %cst_511 : f32 to vector<8x32xf32>
    %1351 = arith.addf %1350, %1349 : vector<8x32xf32>
    %1352 = arith.divf %1350, %1351 : vector<8x32xf32>
    %1353 = arith.mulf %1336, %1314 : vector<8x32xf32>
    %1354 = arith.mulf %1326, %1342 : vector<8x32xf32>
    %1355 = arith.addf %1353, %1354 : vector<8x32xf32>
    %1356 = math.tanh %1355 : vector<8x32xf32>
    %1357 = arith.mulf %1352, %1356 : vector<8x32xf32>
    %1358 = vector.broadcast %c6_i32_495 : i32 to vector<8x1xi32>
    %1359 = arith.cmpi sgt, %0, %1358 : vector<8x1xi32>
    %1360 = vector.shape_cast %1359 : vector<8x1xi1> to vector<8x1xi1>
    %1361 = vector.broadcast %1360 : vector<8x1xi1> to vector<8x32xi1>
    %1362 = arith.select %1361, %1357, %1311 : vector<8x32xi1>, vector<8x32xf32>
    %1363 = vector.shape_cast %1359 : vector<8x1xi1> to vector<8x1xi1>
    %1364 = vector.broadcast %1363 : vector<8x1xi1> to vector<8x32xi1>
    %1365 = arith.select %1364, %1355, %1314 : vector<8x32xi1>, vector<8x32xf32>
    %c7_i32_512 = arith.constant 7 : i32
    %c8_i32_513 = arith.constant 8 : i32
    %1366 = arith.muli %c7_i32_512, %c8_i32_513 : i32
    %1367 = tpu.assume_multiple %1366, 8 : i32
    %c0_514 = arith.constant 0 : index
    %1368 = arith.index_cast %1367 : i32 to index
    %c0_515 = arith.constant 0 : index
    %1369 = vector.load %arg17[%c0_514, %1368, %c0_515] : memref<4x64x32xf32, #tpu.memory_space<vmem>>, vector<1x8x32xf32>
    %1370 = vector.shape_cast %1369 : vector<1x8x32xf32> to vector<8x32xf32>
    %cst_516 = arith.constant dense<0.000000e+00> : vector<8x32xf32>
    %1371 = tpu.matmul %1362, %1000, %cst_516 {dimension_numbers = #tpu.dot_dimension_numbers<[1], [0], [0], [1], [0, 0, 1, 1], [], []>} : vector<8x32xf32>, vector<32x32xf32>, vector<8x32xf32> -> vector<8x32xf32>
    %1372 = arith.addf %1370, %1371 : vector<8x32xf32>
    %1373 = arith.negf %1372 : vector<8x32xf32>
    %1374 = math.exp %1373 : vector<8x32xf32>
    %cst_517 = arith.constant 1.000000e+00 : f32
    %1375 = vector.broadcast %cst_517 : f32 to vector<8x32xf32>
    %1376 = arith.addf %1375, %1374 : vector<8x32xf32>
    %1377 = arith.divf %1375, %1376 : vector<8x32xf32>
    %c1_518 = arith.constant 1 : index
    %1378 = arith.index_cast %1367 : i32 to index
    %c0_519 = arith.constant 0 : index
    %1379 = vector.load %arg17[%c1_518, %1378, %c0_519] : memref<4x64x32xf32, #tpu.memory_space<vmem>>, vector<1x8x32xf32>
    %1380 = vector.shape_cast %1379 : vector<1x8x32xf32> to vector<8x32xf32>
    %cst_520 = arith.constant dense<0.000000e+00> : vector<8x32xf32>
    %1381 = tpu.matmul %1362, %1002, %cst_520 {dimension_numbers = #tpu.dot_dimension_numbers<[1], [0], [0], [1], [0, 0, 1, 1], [], []>} : vector<8x32xf32>, vector<32x32xf32>, vector<8x32xf32> -> vector<8x32xf32>
    %1382 = arith.addf %1380, %1381 : vector<8x32xf32>
    %1383 = arith.negf %1382 : vector<8x32xf32>
    %1384 = math.exp %1383 : vector<8x32xf32>
    %cst_521 = arith.constant 1.000000e+00 : f32
    %1385 = vector.broadcast %cst_521 : f32 to vector<8x32xf32>
    %1386 = arith.addf %1385, %1384 : vector<8x32xf32>
    %1387 = arith.divf %1385, %1386 : vector<8x32xf32>
    %c2_522 = arith.constant 2 : index
    %1388 = arith.index_cast %1367 : i32 to index
    %c0_523 = arith.constant 0 : index
    %1389 = vector.load %arg17[%c2_522, %1388, %c0_523] : memref<4x64x32xf32, #tpu.memory_space<vmem>>, vector<1x8x32xf32>
    %1390 = vector.shape_cast %1389 : vector<1x8x32xf32> to vector<8x32xf32>
    %cst_524 = arith.constant dense<0.000000e+00> : vector<8x32xf32>
    %1391 = tpu.matmul %1362, %1004, %cst_524 {dimension_numbers = #tpu.dot_dimension_numbers<[1], [0], [0], [1], [0, 0, 1, 1], [], []>} : vector<8x32xf32>, vector<32x32xf32>, vector<8x32xf32> -> vector<8x32xf32>
    %1392 = arith.addf %1390, %1391 : vector<8x32xf32>
    %1393 = math.tanh %1392 : vector<8x32xf32>
    %c3_525 = arith.constant 3 : index
    %1394 = arith.index_cast %1367 : i32 to index
    %c0_526 = arith.constant 0 : index
    %1395 = vector.load %arg17[%c3_525, %1394, %c0_526] : memref<4x64x32xf32, #tpu.memory_space<vmem>>, vector<1x8x32xf32>
    %1396 = vector.shape_cast %1395 : vector<1x8x32xf32> to vector<8x32xf32>
    %cst_527 = arith.constant dense<0.000000e+00> : vector<8x32xf32>
    %1397 = tpu.matmul %1362, %1006, %cst_527 {dimension_numbers = #tpu.dot_dimension_numbers<[1], [0], [0], [1], [0, 0, 1, 1], [], []>} : vector<8x32xf32>, vector<32x32xf32>, vector<8x32xf32> -> vector<8x32xf32>
    %1398 = arith.addf %1396, %1397 : vector<8x32xf32>
    %1399 = arith.negf %1398 : vector<8x32xf32>
    %1400 = math.exp %1399 : vector<8x32xf32>
    %cst_528 = arith.constant 1.000000e+00 : f32
    %1401 = vector.broadcast %cst_528 : f32 to vector<8x32xf32>
    %1402 = arith.addf %1401, %1400 : vector<8x32xf32>
    %1403 = arith.divf %1401, %1402 : vector<8x32xf32>
    %1404 = arith.mulf %1387, %1365 : vector<8x32xf32>
    %1405 = arith.mulf %1377, %1393 : vector<8x32xf32>
    %1406 = arith.addf %1404, %1405 : vector<8x32xf32>
    %1407 = math.tanh %1406 : vector<8x32xf32>
    %1408 = arith.mulf %1403, %1407 : vector<8x32xf32>
    %1409 = vector.broadcast %c7_i32_512 : i32 to vector<8x1xi32>
    %1410 = arith.cmpi sgt, %0, %1409 : vector<8x1xi32>
    %1411 = vector.shape_cast %1410 : vector<8x1xi1> to vector<8x1xi1>
    %1412 = vector.broadcast %1411 : vector<8x1xi1> to vector<8x32xi1>
    %1413 = arith.select %1412, %1408, %1362 : vector<8x32xi1>, vector<8x32xf32>
    %1414 = vector.shape_cast %1410 : vector<8x1xi1> to vector<8x1xi1>
    %1415 = vector.broadcast %1414 : vector<8x1xi1> to vector<8x32xi1>
    %1416 = arith.select %1415, %1406, %1365 : vector<8x32xi1>, vector<8x32xf32>
    %c8_i32_529 = arith.constant 8 : i32
    %c0_530 = arith.constant 0 : index
    %c0_531 = arith.constant 0 : index
    %1417 = vector.load %arg12[%c0_530, %c0_531] : memref<32x3xf32, #tpu.memory_space<vmem>>, vector<32x3xf32>
    %cst_532 = arith.constant dense<0.000000e+00> : vector<8x3xf32>
    %1418 = tpu.matmul %1413, %1417, %cst_532 {dimension_numbers = #tpu.dot_dimension_numbers<[1], [0], [0], [1], [0, 0, 1, 1], [], []>} : vector<8x32xf32>, vector<32x3xf32>, vector<8x3xf32> -> vector<8x3xf32>
    %c0_533 = arith.constant 0 : index
    %c0_534 = arith.constant 0 : index
    %1419 = vector.load %arg13[%c0_533, %c0_534] : memref<1x3xf32, #tpu.memory_space<vmem>>, vector<1x3xf32>
    %1420 = vector.broadcast %1419 : vector<1x3xf32> to vector<8x3xf32>
    %1421 = arith.addf %1418, %1420 : vector<8x3xf32>
    %cst_535 = arith.constant dense<0xFF800000> : vector<8xf32>
    %1422 = vector.multi_reduction <maximumf>, %1421, %cst_535 [1] : vector<8x3xf32> to vector<8xf32>
    %1423 = vector.shape_cast %1422 : vector<8xf32> to vector<8x1xf32>
    %1424 = vector.broadcast %1423 : vector<8x1xf32> to vector<8x3xf32>
    %1425 = arith.subf %1421, %1424 : vector<8x3xf32>
    %1426 = math.exp %1425 : vector<8x3xf32>
    %cst_536 = arith.constant dense<0.000000e+00> : vector<8xf32>
    %1427 = vector.multi_reduction <add>, %1426, %cst_536 [1] : vector<8x3xf32> to vector<8xf32>
    %1428 = vector.shape_cast %1427 : vector<8xf32> to vector<8x1xf32>
    %1429 = vector.broadcast %1428 : vector<8x1xf32> to vector<8x3xf32>
    %1430 = arith.divf %1426, %1429 : vector<8x3xf32>
    %c0_537 = arith.constant 0 : index
    %c0_538 = arith.constant 0 : index
    %1431 = vector.load %arg14[%c0_537, %c0_538] : memref<8x3xf32, #tpu.memory_space<vmem>>, vector<8x3xf32>
    tpu.vector_store %arg14[%c0_537, %c0_538], %1430 {strides = array<i32>} : memref<8x3xf32, #tpu.memory_space<vmem>>, vector<8x3xf32>,
    return
  }
  func.func @transform_0(%arg0: i32) -> (i32, i32) {
    %c0_i32 = arith.constant 0 : i32
    %c0_i32_0 = arith.constant 0 : i32
    %c0_i32_1 = arith.constant 0 : i32
    return %c0_i32, %c0_i32_0 : i32, i32
  }
  func.func @transform_1(%arg0: i32) -> (i32, i32) {
    %c0_i32 = arith.constant 0 : i32
    %c0_i32_0 = arith.constant 0 : i32
    %c0_i32_1 = arith.constant 0 : i32
    return %c0_i32, %c0_i32_0 : i32, i32
  }
  func.func @transform_2(%arg0: i32) -> (i32, i32) {
    %c0_i32 = arith.constant 0 : i32
    %c0_i32_0 = arith.constant 0 : i32
    %c0_i32_1 = arith.constant 0 : i32
    return %c0_i32, %c0_i32_0 : i32, i32
  }
  func.func @transform_3(%arg0: i32) -> (i32, i32, i32) {
    %c0_i32 = arith.constant 0 : i32
    %c0_i32_0 = arith.constant 0 : i32
    %c0_i32_1 = arith.constant 0 : i32
    %c0_i32_2 = arith.constant 0 : i32
    return %c0_i32, %c0_i32_0, %c0_i32_1 : i32, i32, i32
  }
  func.func @transform_4(%arg0: i32) -> (i32, i32) {
    %c0_i32 = arith.constant 0 : i32
    %c0_i32_0 = arith.constant 0 : i32
    %c0_i32_1 = arith.constant 0 : i32
    return %c0_i32, %c0_i32_0 : i32, i32
  }
  func.func @transform_5(%arg0: i32) -> (i32, i32) {
    %c0_i32 = arith.constant 0 : i32
    %c0_i32_0 = arith.constant 0 : i32
    %c0_i32_1 = arith.constant 0 : i32
    return %c0_i32, %c0_i32_0 : i32, i32
  }
  func.func @transform_6(%arg0: i32) -> (i32, i32, i32) {
    %c0_i32 = arith.constant 0 : i32
    %c0_i32_0 = arith.constant 0 : i32
    %c0_i32_1 = arith.constant 0 : i32
    %c0_i32_2 = arith.constant 0 : i32
    return %c0_i32, %c0_i32_0, %c0_i32_1 : i32, i32, i32
  }
  func.func @transform_7(%arg0: i32) -> (i32, i32) {
    %c0_i32 = arith.constant 0 : i32
    %c0_i32_0 = arith.constant 0 : i32
    %c0_i32_1 = arith.constant 0 : i32
    return %c0_i32, %c0_i32_0 : i32, i32
  }
  func.func @transform_8(%arg0: i32) -> (i32, i32) {
    %c0_i32 = arith.constant 0 : i32
    %c0_i32_0 = arith.constant 0 : i32
    %c0_i32_1 = arith.constant 0 : i32
    return %c0_i32, %c0_i32_0 : i32, i32
  }
  func.func @transform_9(%arg0: i32) -> (i32, i32, i32) {
    %c0_i32 = arith.constant 0 : i32
    %c0_i32_0 = arith.constant 0 : i32
    %c0_i32_1 = arith.constant 0 : i32
    %c0_i32_2 = arith.constant 0 : i32
    return %c0_i32, %c0_i32_0, %c0_i32_1 : i32, i32, i32
  }
  func.func @transform_10(%arg0: i32) -> (i32, i32) {
    %c0_i32 = arith.constant 0 : i32
    %c0_i32_0 = arith.constant 0 : i32
    %c0_i32_1 = arith.constant 0 : i32
    return %c0_i32, %c0_i32_0 : i32, i32
  }
  func.func @transform_11(%arg0: i32) -> (i32, i32) {
    %c0_i32 = arith.constant 0 : i32
    %c0_i32_0 = arith.constant 0 : i32
    %c0_i32_1 = arith.constant 0 : i32
    return %c0_i32, %c0_i32_0 : i32, i32
  }
  func.func @transform_12(%arg0: i32) -> (i32, i32) {
    %c0_i32 = arith.constant 0 : i32
    %c0_i32_0 = arith.constant 0 : i32
    %c0_i32_1 = arith.constant 0 : i32
    return %c0_i32, %c0_i32_0 : i32, i32
  }
  func.func @transform_13(%arg0: i32) -> (i32, i32) {
    %c0_i32 = arith.constant 0 : i32
    %c0_i32_0 = arith.constant 0 : i32
    %c0_i32_1 = arith.constant 0 : i32
    return %c0_i32, %c0_i32_0 : i32, i32
  }
}

</mosaic_0001>

<llo_original>
// kernel: lstm_current_model_forward.1
$region0: #{lstm_current_model_forward.1}
  #allocation0 [shape = 'u32[]', space=smem, size = 0x4, offset = 0x4, fixed_abs, tag = 'smem constant byte address 0x4 - core index']
  #allocation1 [shape = 'u32[72,128]{1,0:T(1,128)}', space=vmem, size = 0x9000, scoped, tag = 'internal scratch']
  #allocation2 [shape = 'f32[4,64,32]{2,1,0:T(8,128)}', space=vmem, size = 0x20000, scoped, tag = 'scratch operand']
  #allocation3 [shape = 'f32[4,64,64]{2,1,0:T(8,128)}', space=vmem, size = 0x20000, scoped, tag = 'scratch operand']
  #allocation4 [shape = 'f32[4,64,32]{2,1,0:T(8,128)}', space=vmem, size = 0x20000, scoped, tag = 'scratch operand']
  #allocation5 [shape = 'f32[64,32]{1,0:T(8,128)}', space=vmem, size = 0x8000, scoped, tag = 'scratch operand']
  #allocation6 [shape = 'f32[64,64]{1,0:T(8,128)}', space=vmem, size = 0x8000, scoped, tag = 'scratch operand']
  %s0 = inlined_call_operand.vmem [shape: s32[8,1], index: 0, kind: input, shape index: {}]
  %s1 = inlined_call_operand.vmem [shape: f32[64,32], index: 1, kind: input, shape index: {}]
  %s2 = inlined_call_operand.vmem [shape: f32[32,128], index: 2, kind: input, shape index: {}]
  %s3 = inlined_call_operand.vmem [shape: f32[4,32,32], index: 3, kind: input, shape index: {}]
  %s4 = inlined_call_operand.vmem [shape: f32[1,128], index: 4, kind: input, shape index: {}]
  %s5 = inlined_call_operand.vmem [shape: f32[32,256], index: 5, kind: input, shape index: {}]
  %s6 = inlined_call_operand.vmem [shape: f32[4,64,64], index: 6, kind: input, shape index: {}]
  %s7 = inlined_call_operand.vmem [shape: f32[1,256], index: 7, kind: input, shape index: {}]
  %s8 = inlined_call_operand.vmem [shape: f32[64,128], index: 8, kind: input, shape index: {}]
  %s9 = inlined_call_operand.vmem [shape: f32[4,32,32], index: 9, kind: input, shape index: {}]
  %s10 = inlined_call_operand.vmem [shape: f32[1,128], index: 10, kind: input, shape index: {}]
  %s11 = inlined_call_operand.vmem [shape: f32[32,3], index: 11, kind: input, shape index: {}]
  %s12 = inlined_call_operand.vmem [shape: f32[1,3], index: 12, kind: input, shape index: {}]
  %s13 = inlined_call_operand.vmem [shape: f32[8,3], index: 13, kind: output, shape index: {}]
  %s14 = sld [smem:[#allocation0]]
  $region62: #{lstm_current_model_forward.1} parent=0
    _
  %s16 = ssub.s32 1, %s14
  %s17 = scalar_select 0, %s16, %s14
  // Predicated region
  $region2: #{lstm_current_model_forward.1} parent=0 // pred_check
    _
  $region3: #{lstm_current_model_forward.1} parent=0 // pred_check_branch
    %19 = sbr.rel (0) target = $region5
  $region4: #{lstm_current_model_forward.1} parent=0 // pred_region
    _
  $region5: #{lstm_current_model_forward.1} parent=0 // pred_fallthru
    _
  // Predicated region
  $region6: #{lstm_current_model_forward.1} parent=0 // pred_check
    _
  $region7: #{lstm_current_model_forward.1} parent=0 // pred_check_branch
    %21 = sbr.rel (0) target = $region9
  $region8: #{lstm_current_model_forward.1} parent=0 // pred_region
    _
  $region9: #{lstm_current_model_forward.1} parent=0 // pred_fallthru
    _
  // Predicated region
  $region10: #{lstm_current_model_forward.1} parent=0 // pred_check
    _
  $region11: #{lstm_current_model_forward.1} parent=0 // pred_check_branch
    %23 = sbr.rel (0) target = $region13
  $region12: #{lstm_current_model_forward.1} parent=0 // pred_region
    _
  $region13: #{lstm_current_model_forward.1} parent=0 // pred_fallthru
    _
  // Predicated region
  $region14: #{lstm_current_model_forward.1} parent=0 // pred_check
    _
  $region15: #{lstm_current_model_forward.1} parent=0 // pred_check_branch
    %25 = sbr.rel (0) target = $region17
  $region16: #{lstm_current_model_forward.1} parent=0 // pred_region
    _
  $region17: #{lstm_current_model_forward.1} parent=0 // pred_fallthru
    _
  // Predicated region
  $region18: #{lstm_current_model_forward.1} parent=0 // pred_check
    _
  $region19: #{lstm_current_model_forward.1} parent=0 // pred_check_branch
    %27 = sbr.rel (0) target = $region21
  $region20: #{lstm_current_model_forward.1} parent=0 // pred_region
    _
  $region21: #{lstm_current_model_forward.1} parent=0 // pred_fallthru
    _
  // Predicated region
  $region22: #{lstm_current_model_forward.1} parent=0 // pred_check
    _
  $region23: #{lstm_current_model_forward.1} parent=0 // pred_check_branch
    %29 = sbr.rel (0) target = $region25
  $region24: #{lstm_current_model_forward.1} parent=0 // pred_region
    _
  $region25: #{lstm_current_model_forward.1} parent=0 // pred_fallthru
    _
  // Predicated region
  $region26: #{lstm_current_model_forward.1} parent=0 // pred_check
    _
  $region27: #{lstm_current_model_forward.1} parent=0 // pred_check_branch
    %31 = sbr.rel (0) target = $region29
  $region28: #{lstm_current_model_forward.1} parent=0 // pred_region
    _
  $region29: #{lstm_current_model_forward.1} parent=0 // pred_fallthru
    _
  // Predicated region
  $region30: #{lstm_current_model_forward.1} parent=0 // pred_check
    _
  $region31: #{lstm_current_model_forward.1} parent=0 // pred_check_branch
    %33 = sbr.rel (0) target = $region33
  $region32: #{lstm_current_model_forward.1} parent=0 // pred_region
    _
  $region33: #{lstm_current_model_forward.1} parent=0 // pred_fallthru
    _
  // Predicated region
  $region34: #{lstm_current_model_forward.1} parent=0 // pred_check
    _
  $region35: #{lstm_current_model_forward.1} parent=0 // pred_check_branch
    %35 = sbr.rel (0) target = $region37
  $region36: #{lstm_current_model_forward.1} parent=0 // pred_region
    _
  $region37: #{lstm_current_model_forward.1} parent=0 // pred_fallthru
    _
  // Predicated region
  $region38: #{lstm_current_model_forward.1} parent=0 // pred_check
    _
  $region39: #{lstm_current_model_forward.1} parent=0 // pred_check_branch
    %37 = sbr.rel (0) target = $region41
  $region40: #{lstm_current_model_forward.1} parent=0 // pred_region
    _
  $region41: #{lstm_current_model_forward.1} parent=0 // pred_fallthru
    _
  // Predicated region
  $region42: #{lstm_current_model_forward.1} parent=0 // pred_check
    _
  $region43: #{lstm_current_model_forward.1} parent=0 // pred_check_branch
    %39 = sbr.rel (0) target = $region45
  $region44: #{lstm_current_model_forward.1} parent=0 // pred_region
    _
  $region45: #{lstm_current_model_forward.1} parent=0 // pred_fallthru
    _
  // Predicated region
  $region46: #{lstm_current_model_forward.1} parent=0 // pred_check
    _
  $region47: #{lstm_current_model_forward.1} parent=0 // pred_check_branch
    %41 = sbr.rel (0) target = $region49
  $region48: #{lstm_current_model_forward.1} parent=0 // pred_region
    _
  $region49: #{lstm_current_model_forward.1} parent=0 // pred_fallthru
    _
  // Predicated region
  $region50: #{lstm_current_model_forward.1} parent=0 // pred_check
    _
  $region51: #{lstm_current_model_forward.1} parent=0 // pred_check_branch
    %43 = sbr.rel (0) target = $region53
  $region52: #{lstm_current_model_forward.1} parent=0 // pred_region
    _
  $region53: #{lstm_current_model_forward.1} parent=0 // pred_fallthru
    _
  %v44 = vld [vmem:[%s0] sm:$0xff]
  %v45 = vld [vmem:[%s1] sm:$0xff]
  %v46 = vld [vmem:[%s1 + $0x8] sm:$0xff]
  %v47 = vld [vmem:[%s1 + $0x10] sm:$0xff]
  %v48 = vld [vmem:[%s1 + $0x18] sm:$0xff]
  %v49 = vld [vmem:[%s1 + $0x20] sm:$0xff]
  %v50 = vld [vmem:[%s1 + $0x28] sm:$0xff]
  %v51 = vld [vmem:[%s1 + $0x30] sm:$0xff]
  %v52 = vld [vmem:[%s1 + $0x38] sm:$0xff]
  %v53 = vld [vmem:[%s2] sm:$0xff]
  %v54 = vld [vmem:[%s2 + $0x8] sm:$0xff]
  %v55 = vld [vmem:[%s2 + $0x10] sm:$0xff]
  %v56 = vld [vmem:[%s2 + $0x18] sm:$0xff]
  %v57 = vld [vmem:[%s4] sm:$0x1]
  %v59 = vperm.slane %v57, 0
  %vm61 = vcmask 261120
  %v63 = vsel %vm61, %v45, 0
  %v66 = vsel %vm61, %v46, 0
  %v69 = vsel %vm61, %v47, 0
  %v72 = vsel %vm61, %v48, 0
  %v75 = vsel %vm61, %v49, 0
  %v78 = vsel %vm61, %v50, 0
  %v81 = vsel %vm61, %v51, 0
  %v84 = vsel %vm61, %v52, 0
  %86 = vmatpush.msra.mxu0 0.0
  %87 = vmatpush.msra.mxu0 0.0
  %88 = vmatpush.msra.mxu0 0.0
  %89 = vmatpush.msra.mxu0 0.0
  %90 = vmatpush.msra.mxu0 0.0
  %91 = vmatpush.msra.mxu0 0.0
  %92 = vmatpush.msra.mxu0 0.0
  %93 = vmatpush.msra.mxu0 0.0
  %94 = vmatpush.msra.mxu0 0.0
  %95 = vmatpush.msra.mxu0 0.0
  %96 = vmatpush.msra.mxu0 0.0
  %97 = vmatpush.msra.mxu0 0.0
  %98 = vmatpush.msra.mxu0 %v56
  %99 = vmatpush.msra.mxu0 %v55
  %100 = vmatpush.msra.mxu0 %v54
  %101 = vmatpush.msra.mxu0 %v53
  %102 = vmatmul.f32.gmra.mxu0 %v63
  %v103 = vpop.f32.mrf.mxu0
  %v104 = vadd.f32 %v59, %v103
  %105 = vmatmul.f32.gmra.mxu0 %v66
  %v106 = vpop.f32.mrf.mxu0
  %v107 = vadd.f32 %v59, %v106
  %108 = vmatmul.f32.gmra.mxu0 %v69
  %v109 = vpop.f32.mrf.mxu0
  %v110 = vadd.f32 %v59, %v109
  %111 = vmatmul.f32.gmra.mxu0 %v72
  %v112 = vpop.f32.mrf.mxu0
  %v113 = vadd.f32 %v59, %v112
  %114 = vmatmul.f32.gmra.mxu0 %v75
  %v115 = vpop.f32.mrf.mxu0
  %v116 = vadd.f32 %v59, %v115
  %117 = vmatmul.f32.gmra.mxu0 %v78
  %v118 = vpop.f32.mrf.mxu0
  %v119 = vadd.f32 %v59, %v118
  %120 = vmatmul.f32.gmra.mxu0 %v81
  %v121 = vpop.f32.mrf.mxu0
  %v122 = vadd.f32 %v59, %v121
  %123 = vmatmul.f32.gmra.mxu0 %v84
  %v124 = vpop.f32.mrf.mxu0
  %v125 = vadd.f32 %v59, %v124
  %126 = vdwg.mxu0
  %127 = vst.msk [vmem:[#allocation2] sm:$0xff] %vm61, %v104
  %128 = vst.msk [vmem:[#allocation2 + $0x8] sm:$0xff] %vm61, %v107
  %129 = vst.msk [vmem:[#allocation2 + $0x10] sm:$0xff] %vm61, %v110
  %130 = vst.msk [vmem:[#allocation2 + $0x18] sm:$0xff] %vm61, %v113
  %131 = vst.msk [vmem:[#allocation2 + $0x20] sm:$0xff] %vm61, %v116
  %132 = vst.msk [vmem:[#allocation2 + $0x28] sm:$0xff] %vm61, %v119
  %133 = vst.msk [vmem:[#allocation2 + $0x30] sm:$0xff] %vm61, %v122
  %134 = vst.msk [vmem:[#allocation2 + $0x38] sm:$0xff] %vm61, %v125
  %143 = vrot.lane.b32.xlu0 %v104, 96
  %v144 = vpop.permute.xlu0 %143
  %145 = vrot.lane.b32.xlu0 %v107, 96
  %v146 = vpop.permute.xlu0 %145
  %147 = vrot.lane.b32.xlu0 %v110, 96
  %v148 = vpop.permute.xlu0 %147
  %149 = vrot.lane.b32.xlu0 %v113, 96
  %v150 = vpop.permute.xlu0 %149
  %151 = vrot.lane.b32.xlu0 %v116, 96
  %v152 = vpop.permute.xlu0 %151
  %153 = vrot.lane.b32.xlu0 %v119, 96
  %v154 = vpop.permute.xlu0 %153
  %155 = vrot.lane.b32.xlu0 %v122, 96
  %v156 = vpop.permute.xlu0 %155
  %157 = vrot.lane.b32.xlu0 %v125, 96
  %v158 = vpop.permute.xlu0 %157
  %s167 = scalar_lea.vmem [#allocation2], 64
  %168 = vst.msk [vmem:[%s167] sm:$0xff] %vm61, %v144
  %169 = vst.msk [vmem:[%s167 + $0x8] sm:$0xff] %vm61, %v146
  %170 = vst.msk [vmem:[%s167 + $0x10] sm:$0xff] %vm61, %v148
  %171 = vst.msk [vmem:[%s167 + $0x18] sm:$0xff] %vm61, %v150
  %172 = vst.msk [vmem:[%s167 + $0x20] sm:$0xff] %vm61, %v152
  %173 = vst.msk [vmem:[%s167 + $0x28] sm:$0xff] %vm61, %v154
  %174 = vst.msk [vmem:[%s167 + $0x30] sm:$0xff] %vm61, %v156
  %175 = vst.msk [vmem:[%s167 + $0x38] sm:$0xff] %vm61, %v158
  %176 = vrot.lane.b32.xlu0 %v104, 64
  %v177 = vpop.permute.xlu0 %176
  %178 = vrot.lane.b32.xlu0 %v107, 64
  %v179 = vpop.permute.xlu0 %178
  %180 = vrot.lane.b32.xlu0 %v110, 64
  %v181 = vpop.permute.xlu0 %180
  %182 = vrot.lane.b32.xlu0 %v113, 64
  %v183 = vpop.permute.xlu0 %182
  %184 = vrot.lane.b32.xlu0 %v116, 64
  %v185 = vpop.permute.xlu0 %184
  %186 = vrot.lane.b32.xlu0 %v119, 64
  %v187 = vpop.permute.xlu0 %186
  %188 = vrot.lane.b32.xlu0 %v122, 64
  %v189 = vpop.permute.xlu0 %188
  %190 = vrot.lane.b32.xlu0 %v125, 64
  %v191 = vpop.permute.xlu0 %190
  %s200 = scalar_lea.vmem [#allocation2], 128
  %201 = vst.msk [vmem:[%s200] sm:$0xff] %vm61, %v177
  %202 = vst.msk [vmem:[%s200 + $0x8] sm:$0xff] %vm61, %v179
  %203 = vst.msk [vmem:[%s200 + $0x10] sm:$0xff] %vm61, %v181
  %204 = vst.msk [vmem:[%s200 + $0x18] sm:$0xff] %vm61, %v183
  %205 = vst.msk [vmem:[%s200 + $0x20] sm:$0xff] %vm61, %v185
  %206 = vst.msk [vmem:[%s200 + $0x28] sm:$0xff] %vm61, %v187
  %207 = vst.msk [vmem:[%s200 + $0x30] sm:$0xff] %vm61, %v189
  %208 = vst.msk [vmem:[%s200 + $0x38] sm:$0xff] %vm61, %v191
  %209 = vrot.lane.b32.xlu0 %v104, 32
  %v210 = vpop.permute.xlu0 %209
  %211 = vrot.lane.b32.xlu0 %v107, 32
  %v212 = vpop.permute.xlu0 %211
  %213 = vrot.lane.b32.xlu0 %v110, 32
  %v214 = vpop.permute.xlu0 %213
  %215 = vrot.lane.b32.xlu0 %v113, 32
  %v216 = vpop.permute.xlu0 %215
  %217 = vrot.lane.b32.xlu0 %v116, 32
  %v218 = vpop.permute.xlu0 %217
  %219 = vrot.lane.b32.xlu0 %v119, 32
  %v220 = vpop.permute.xlu0 %219
  %221 = vrot.lane.b32.xlu0 %v122, 32
  %v222 = vpop.permute.xlu0 %221
  %223 = vrot.lane.b32.xlu0 %v125, 32
  %v224 = vpop.permute.xlu0 %223
  %s233 = scalar_lea.vmem [#allocation2], 192
  %234 = vst.msk [vmem:[%s233] sm:$0xff] %vm61, %v210
  %235 = vst.msk [vmem:[%s233 + $0x8] sm:$0xff] %vm61, %v212
  %236 = vst.msk [vmem:[%s233 + $0x10] sm:$0xff] %vm61, %v214
  %237 = vst.msk [vmem:[%s233 + $0x18] sm:$0xff] %vm61, %v216
  %238 = vst.msk [vmem:[%s233 + $0x20] sm:$0xff] %vm61, %v218
  %239 = vst.msk [vmem:[%s233 + $0x28] sm:$0xff] %vm61, %v220
  %240 = vst.msk [vmem:[%s233 + $0x30] sm:$0xff] %vm61, %v222
  %241 = vst.msk [vmem:[%s233 + $0x38] sm:$0xff] %vm61, %v224
  %v242 = vld [vmem:[%s3] sm:$0xff]
  %v243 = vld [vmem:[%s3 + $0x8] sm:$0xff]
  %v244 = vld [vmem:[%s3 + $0x10] sm:$0xff]
  %v245 = vld [vmem:[%s3 + $0x18] sm:$0xff]
  %s246 = scalar_lea.vmem %s3, 32
  %v247 = vld [vmem:[%s246] sm:$0xff]
  %v248 = vld [vmem:[%s246 + $0x8] sm:$0xff]
  %v249 = vld [vmem:[%s246 + $0x10] sm:$0xff]
  %v250 = vld [vmem:[%s246 + $0x18] sm:$0xff]
  %s251 = scalar_lea.vmem %s3, 64
  %v252 = vld [vmem:[%s251] sm:$0xff]
  %v253 = vld [vmem:[%s251 + $0x8] sm:$0xff]
  %v254 = vld [vmem:[%s251 + $0x10] sm:$0xff]
  %v255 = vld [vmem:[%s251 + $0x18] sm:$0xff]
  %s256 = scalar_lea.vmem %s3, 96
  %v257 = vld [vmem:[%s256] sm:$0xff]
  %v258 = vld [vmem:[%s256 + $0x8] sm:$0xff]
  %v259 = vld [vmem:[%s256 + $0x10] sm:$0xff]
  %v260 = vld [vmem:[%s256 + $0x18] sm:$0xff]
  %v261 = vld [vmem:[#allocation2] sm:$0xff]
  %v263 = vsel %vm61, 0.0, 0
  %265 = vmatpush.msra.mxu0 0.0
  %266 = vmatpush.msra.mxu0 0.0
  %267 = vmatpush.msra.mxu0 0.0
  %268 = vmatpush.msra.mxu0 0.0
  %269 = vmatpush.msra.mxu0 0.0
  %270 = vmatpush.msra.mxu0 0.0
  %271 = vmatpush.msra.mxu0 0.0
  %272 = vmatpush.msra.mxu0 0.0
  %273 = vmatpush.msra.mxu0 0.0
  %274 = vmatpush.msra.mxu0 0.0
  %275 = vmatpush.msra.mxu0 0.0
  %276 = vmatpush.msra.mxu0 0.0
  %277 = vmatpush.msra.mxu0 %v245
  %278 = vmatpush.msra.mxu0 %v244
  %279 = vmatpush.msra.mxu0 %v243
  %280 = vmatpush.msra.mxu0 %v242
  %281 = vmatmul.f32.gmra.mxu0 %v263
  %v282 = vpop.f32.mrf.mxu0
  %v283 = vadd.f32 0.0, %v282
  %284 = vdwg.mxu0
  %v285 = vadd.f32 %v261, %v283
  %v286 = vxor.u32 %v285, 2147483648
  %v287 = vmul.f32 %v286, 1.442695
  %v288 = vpow.pop %v287
  %v289 = vadd.f32 %v288, 1.0
  %v290 = vrcp.pop %v289
  %v291 = vmul.f32 %v289, %v290
  %v292 = vsub.f32 1.0, %v291
  %v293 = vmul.f32 %v290, %v292
  %v294 = vadd.f32 %v290, %v293
  %vm295 = vweird.f32 %v289
  %vm296 = vweird.f32 %v290
  %vm297 = vmor %vm295, %vm296
  %v298 = vsel %vm297, %v290, %v294
  %v299 = vand.u32 2147483647, %v289
  %vm300 = vcmp.eq.f32.partialorder %v299, 8.507059e+37
  %v301 = vand.u32 %v289, 2147483648
  %v302 = vor.u32 1.1754944e-38, %v301
  %v303 = vsel %vm300, %v302, %v298
  %v304 = vmul.f32 1.0, %v303
  %s305 = sadd.s32 0, 64
  %s306 = scalar_lea.vmem [#allocation2], %s305
  %v307 = vld [vmem:[%s306] sm:$0xff]
  %308 = vmatpush.msra.mxu0 0.0
  %309 = vmatpush.msra.mxu0 0.0
  %310 = vmatpush.msra.mxu0 0.0
  %311 = vmatpush.msra.mxu0 0.0
  %312 = vmatpush.msra.mxu0 0.0
  %313 = vmatpush.msra.mxu0 0.0
  %314 = vmatpush.msra.mxu0 0.0
  %315 = vmatpush.msra.mxu0 0.0
  %316 = vmatpush.msra.mxu0 0.0
  %317 = vmatpush.msra.mxu0 0.0
  %318 = vmatpush.msra.mxu0 0.0
  %319 = vmatpush.msra.mxu0 0.0
  %320 = vmatpush.msra.mxu0 %v250
  %321 = vmatpush.msra.mxu0 %v249
  %322 = vmatpush.msra.mxu0 %v248
  %323 = vmatpush.msra.mxu0 %v247
  %324 = vmatmul.f32.gmra.mxu0 %v263
  %v325 = vpop.f32.mrf.mxu0
  %v326 = vadd.f32 0.0, %v325
  %327 = vdwg.mxu0
  %v328 = vadd.f32 %v307, %v326
  %v329 = vxor.u32 %v328, 2147483648
  %v330 = vmul.f32 %v329, 1.442695
  %v331 = vpow.pop %v330
  %v332 = vadd.f32 %v331, 1.0
  %v333 = vrcp.pop %v332
  %v334 = vmul.f32 %v332, %v333
  %v335 = vsub.f32 1.0, %v334
  %v336 = vmul.f32 %v333, %v335
  %v337 = vadd.f32 %v333, %v336
  %vm338 = vweird.f32 %v332
  %vm339 = vweird.f32 %v333
  %vm340 = vmor %vm338, %vm339
  %v341 = vsel %vm340, %v333, %v337
  %v342 = vand.u32 2147483647, %v332
  %vm343 = vcmp.eq.f32.partialorder %v342, 8.507059e+37
  %v344 = vand.u32 %v332, 2147483648
  %v345 = vor.u32 1.1754944e-38, %v344
  %v346 = vsel %vm343, %v345, %v341
  %v347 = vmul.f32 1.0, %v346
  %s348 = sadd.s32 0, 128
  %s349 = scalar_lea.vmem [#allocation2], %s348
  %v350 = vld [vmem:[%s349] sm:$0xff]
  %351 = vmatpush.msra.mxu0 0.0
  %352 = vmatpush.msra.mxu0 0.0
  %353 = vmatpush.msra.mxu0 0.0
  %354 = vmatpush.msra.mxu0 0.0
  %355 = vmatpush.msra.mxu0 0.0
  %356 = vmatpush.msra.mxu0 0.0
  %357 = vmatpush.msra.mxu0 0.0
  %358 = vmatpush.msra.mxu0 0.0
  %359 = vmatpush.msra.mxu0 0.0
  %360 = vmatpush.msra.mxu0 0.0
  %361 = vmatpush.msra.mxu0 0.0
  %362 = vmatpush.msra.mxu0 0.0
  %363 = vmatpush.msra.mxu0 %v255
  %364 = vmatpush.msra.mxu0 %v254
  %365 = vmatpush.msra.mxu0 %v253
  %366 = vmatpush.msra.mxu0 %v252
  %367 = vmatmul.f32.gmra.mxu0 %v263
  %v368 = vpop.f32.mrf.mxu0
  %v369 = vadd.f32 0.0, %v368
  %370 = vdwg.mxu0
  %v371 = vadd.f32 %v350, %v369
  %v372 = vtanh.pop %v371
  %s373 = sadd.s32 0, 192
  %s374 = scalar_lea.vmem [#allocation2], %s373
  %v375 = vld [vmem:[%s374] sm:$0xff]
  %376 = vmatpush.msra.mxu0 0.0
  %377 = vmatpush.msra.mxu0 0.0
  %378 = vmatpush.msra.mxu0 0.0
  %379 = vmatpush.msra.mxu0 0.0
  %380 = vmatpush.msra.mxu0 0.0
  %381 = vmatpush.msra.mxu0 0.0
  %382 = vmatpush.msra.mxu0 0.0
  %383 = vmatpush.msra.mxu0 0.0
  %384 = vmatpush.msra.mxu0 0.0
  %385 = vmatpush.msra.mxu0 0.0
  %386 = vmatpush.msra.mxu0 0.0
  %387 = vmatpush.msra.mxu0 0.0
  %388 = vmatpush.msra.mxu0 %v260
  %389 = vmatpush.msra.mxu0 %v259
  %390 = vmatpush.msra.mxu0 %v258
  %391 = vmatpush.msra.mxu0 %v257
  %392 = vmatmul.f32.gmra.mxu0 %v263
  %v393 = vpop.f32.mrf.mxu0
  %v394 = vadd.f32 0.0, %v393
  %395 = vdwg.mxu0
  %v396 = vadd.f32 %v375, %v394
  %v397 = vxor.u32 %v396, 2147483648
  %v398 = vmul.f32 %v397, 1.442695
  %v399 = vpow.pop %v398
  %v400 = vadd.f32 %v399, 1.0
  %v401 = vrcp.pop %v400
  %v402 = vmul.f32 %v400, %v401
  %v403 = vsub.f32 1.0, %v402
  %v404 = vmul.f32 %v401, %v403
  %v405 = vadd.f32 %v401, %v404
  %vm406 = vweird.f32 %v400
  %vm407 = vweird.f32 %v401
  %vm408 = vmor %vm406, %vm407
  %v409 = vsel %vm408, %v401, %v405
  %v410 = vand.u32 2147483647, %v400
  %vm411 = vcmp.eq.f32.partialorder %v410, 8.507059e+37
  %v412 = vand.u32 %v400, 2147483648
  %v413 = vor.u32 1.1754944e-38, %v412
  %v414 = vsel %vm411, %v413, %v409
  %v415 = vmul.f32 1.0, %v414
  %v416 = vmul.f32 %v347, 0.0
  %v417 = vmul.f32 %v304, %v372
  %v418 = vadd.f32 %v416, %v417
  %v419 = vtanh.pop %v418
  %v420 = vmul.f32 %v415, %v419
  %vm421 = vcmp.gt.s32.totalorder %v44, 0
  %v422 = vsel %vm421, 1, 0
  %423 = vset.pattern.permute.xlu0 0
  %424 = vperm.xlu0 %423, %v422
  %v425 = vpop.permute.xlu0 %424
  %vm426 = vcmp.eq.s32.totalorder %v425, 1
  %v427 = vsel %vm426, %v420, 0.0
  %v428 = vsel %vm426, %v418, 0.0
  %429 = vst.msk [vmem:[#allocation5] sm:$0xff] %vm61, %v427
  %s430 = scalar_lea.vmem [#allocation2], 8
  %v431 = vld [vmem:[%s430] sm:$0xff]
  %v433 = vsel %vm61, %v427, 0
  %435 = vmatpush.msra.mxu0 0.0
  %436 = vmatpush.msra.mxu0 0.0
  %437 = vmatpush.msra.mxu0 0.0
  %438 = vmatpush.msra.mxu0 0.0
  %439 = vmatpush.msra.mxu0 0.0
  %440 = vmatpush.msra.mxu0 0.0
  %441 = vmatpush.msra.mxu0 0.0
  %442 = vmatpush.msra.mxu0 0.0
  %443 = vmatpush.msra.mxu0 0.0
  %444 = vmatpush.msra.mxu0 0.0
  %445 = vmatpush.msra.mxu0 0.0
  %446 = vmatpush.msra.mxu0 0.0
  %447 = vmatpush.msra.mxu0 %v245
  %448 = vmatpush.msra.mxu0 %v244
  %449 = vmatpush.msra.mxu0 %v243
  %450 = vmatpush.msra.mxu0 %v242
  %451 = vmatmul.f32.gmra.mxu0 %v433
  %v452 = vpop.f32.mrf.mxu0
  %v453 = vadd.f32 0.0, %v452
  %454 = vdwg.mxu0
  %v455 = vadd.f32 %v431, %v453
  %v456 = vxor.u32 %v455, 2147483648
  %v457 = vmul.f32 %v456, 1.442695
  %v458 = vpow.pop %v457
  %v459 = vadd.f32 %v458, 1.0
  %v460 = vrcp.pop %v459
  %v461 = vmul.f32 %v459, %v460
  %v462 = vsub.f32 1.0, %v461
  %v463 = vmul.f32 %v460, %v462
  %v464 = vadd.f32 %v460, %v463
  %vm465 = vweird.f32 %v459
  %vm466 = vweird.f32 %v460
  %vm467 = vmor %vm465, %vm466
  %v468 = vsel %vm467, %v460, %v464
  %v469 = vand.u32 2147483647, %v459
  %vm470 = vcmp.eq.f32.partialorder %v469, 8.507059e+37
  %v471 = vand.u32 %v459, 2147483648
  %v472 = vor.u32 1.1754944e-38, %v471
  %v473 = vsel %vm470, %v472, %v468
  %v474 = vmul.f32 1.0, %v473
  %s475 = sadd.s32 8, 64
  %s476 = scalar_lea.vmem [#allocation2], %s475
  %v477 = vld [vmem:[%s476] sm:$0xff]
  %478 = vmatpush.msra.mxu0 0.0
  %479 = vmatpush.msra.mxu0 0.0
  %480 = vmatpush.msra.mxu0 0.0
  %481 = vmatpush.msra.mxu0 0.0
  %482 = vmatpush.msra.mxu0 0.0
  %483 = vmatpush.msra.mxu0 0.0
  %484 = vmatpush.msra.mxu0 0.0
  %485 = vmatpush.msra.mxu0 0.0
  %486 = vmatpush.msra.mxu0 0.0
  %487 = vmatpush.msra.mxu0 0.0
  %488 = vmatpush.msra.mxu0 0.0
  %489 = vmatpush.msra.mxu0 0.0
  %490 = vmatpush.msra.mxu0 %v250
  %491 = vmatpush.msra.mxu0 %v249
  %492 = vmatpush.msra.mxu0 %v248
  %493 = vmatpush.msra.mxu0 %v247
  %494 = vmatmul.f32.gmra.mxu0 %v433
  %v495 = vpop.f32.mrf.mxu0
  %v496 = vadd.f32 0.0, %v495
  %497 = vdwg.mxu0
  %v498 = vadd.f32 %v477, %v496
  %v499 = vxor.u32 %v498, 2147483648
  %v500 = vmul.f32 %v499, 1.442695
  %v501 = vpow.pop %v500
  %v502 = vadd.f32 %v501, 1.0
  %v503 = vrcp.pop %v502
  %v504 = vmul.f32 %v502, %v503
  %v505 = vsub.f32 1.0, %v504
  %v506 = vmul.f32 %v503, %v505
  %v507 = vadd.f32 %v503, %v506
  %vm508 = vweird.f32 %v502
  %vm509 = vweird.f32 %v503
  %vm510 = vmor %vm508, %vm509
  %v511 = vsel %vm510, %v503, %v507
  %v512 = vand.u32 2147483647, %v502
  %vm513 = vcmp.eq.f32.partialorder %v512, 8.507059e+37
  %v514 = vand.u32 %v502, 2147483648
  %v515 = vor.u32 1.1754944e-38, %v514
  %v516 = vsel %vm513, %v515, %v511
  %v517 = vmul.f32 1.0, %v516
  %s518 = sadd.s32 8, 128
  %s519 = scalar_lea.vmem [#allocation2], %s518
  %v520 = vld [vmem:[%s519] sm:$0xff]
  %521 = vmatpush.msra.mxu0 0.0
  %522 = vmatpush.msra.mxu0 0.0
  %523 = vmatpush.msra.mxu0 0.0
  %524 = vmatpush.msra.mxu0 0.0
  %525 = vmatpush.msra.mxu0 0.0
  %526 = vmatpush.msra.mxu0 0.0
  %527 = vmatpush.msra.mxu0 0.0
  %528 = vmatpush.msra.mxu0 0.0
  %529 = vmatpush.msra.mxu0 0.0
  %530 = vmatpush.msra.mxu0 0.0
  %531 = vmatpush.msra.mxu0 0.0
  %532 = vmatpush.msra.mxu0 0.0
  %533 = vmatpush.msra.mxu0 %v255
  %534 = vmatpush.msra.mxu0 %v254
  %535 = vmatpush.msra.mxu0 %v253
  %536 = vmatpush.msra.mxu0 %v252
  %537 = vmatmul.f32.gmra.mxu0 %v433
  %v538 = vpop.f32.mrf.mxu0
  %v539 = vadd.f32 0.0, %v538
  %540 = vdwg.mxu0
  %v541 = vadd.f32 %v520, %v539
  %v542 = vtanh.pop %v541
  %s543 = sadd.s32 8, 192
  %s544 = scalar_lea.vmem [#allocation2], %s543
  %v545 = vld [vmem:[%s544] sm:$0xff]
  %546 = vmatpush.msra.mxu0 0.0
  %547 = vmatpush.msra.mxu0 0.0
  %548 = vmatpush.msra.mxu0 0.0
  %549 = vmatpush.msra.mxu0 0.0
  %550 = vmatpush.msra.mxu0 0.0
  %551 = vmatpush.msra.mxu0 0.0
  %552 = vmatpush.msra.mxu0 0.0
  %553 = vmatpush.msra.mxu0 0.0
  %554 = vmatpush.msra.mxu0 0.0
  %555 = vmatpush.msra.mxu0 0.0
  %556 = vmatpush.msra.mxu0 0.0
  %557 = vmatpush.msra.mxu0 0.0
  %558 = vmatpush.msra.mxu0 %v260
  %559 = vmatpush.msra.mxu0 %v259
  %560 = vmatpush.msra.mxu0 %v258
  %561 = vmatpush.msra.mxu0 %v257
  %562 = vmatmul.f32.gmra.mxu0 %v433
  %v563 = vpop.f32.mrf.mxu0
  %v564 = vadd.f32 0.0, %v563
  %565 = vdwg.mxu0
  %v566 = vadd.f32 %v545, %v564
  %v567 = vxor.u32 %v566, 2147483648
  %v568 = vmul.f32 %v567, 1.442695
  %v569 = vpow.pop %v568
  %v570 = vadd.f32 %v569, 1.0
  %v571 = vrcp.pop %v570
  %v572 = vmul.f32 %v570, %v571
  %v573 = vsub.f32 1.0, %v572
  %v574 = vmul.f32 %v571, %v573
  %v575 = vadd.f32 %v571, %v574
  %vm576 = vweird.f32 %v570
  %vm577 = vweird.f32 %v571
  %vm578 = vmor %vm576, %vm577
  %v579 = vsel %vm578, %v571, %v575
  %v580 = vand.u32 2147483647, %v570
  %vm581 = vcmp.eq.f32.partialorder %v580, 8.507059e+37
  %v582 = vand.u32 %v570, 2147483648
  %v583 = vor.u32 1.1754944e-38, %v582
  %v584 = vsel %vm581, %v583, %v579
  %v585 = vmul.f32 1.0, %v584
  %v586 = vmul.f32 %v517, %v428
  %v587 = vmul.f32 %v474, %v542
  %v588 = vadd.f32 %v586, %v587
  %v589 = vtanh.pop %v588
  %v590 = vmul.f32 %v585, %v589
  %vm591 = vcmp.gt.s32.totalorder %v44, 1
  %v592 = vsel %vm591, 1, 0
  %593 = vset.pattern.permute.xlu0 0
  %594 = vperm.xlu0 %593, %v592
  %v595 = vpop.permute.xlu0 %594
  %vm596 = vcmp.eq.s32.totalorder %v595, 1
  %v597 = vsel %vm596, %v590, %v427
  %v598 = vsel %vm596, %v588, %v428
  %v599 = vsel %vm596, %v590, 0.0
  %s600 = scalar_lea.vmem [#allocation5], 8
  %601 = vst.msk [vmem:[%s600] sm:$0xff] %vm61, %v599
  %s602 = scalar_lea.vmem [#allocation2], 16
  %v603 = vld [vmem:[%s602] sm:$0xff]
  %v605 = vsel %vm61, %v597, 0
  %607 = vmatpush.msra.mxu0 0.0
  %608 = vmatpush.msra.mxu0 0.0
  %609 = vmatpush.msra.mxu0 0.0
  %610 = vmatpush.msra.mxu0 0.0
  %611 = vmatpush.msra.mxu0 0.0
  %612 = vmatpush.msra.mxu0 0.0
  %613 = vmatpush.msra.mxu0 0.0
  %614 = vmatpush.msra.mxu0 0.0
  %615 = vmatpush.msra.mxu0 0.0
  %616 = vmatpush.msra.mxu0 0.0
  %617 = vmatpush.msra.mxu0 0.0
  %618 = vmatpush.msra.mxu0 0.0
  %619 = vmatpush.msra.mxu0 %v245
  %620 = vmatpush.msra.mxu0 %v244
  %621 = vmatpush.msra.mxu0 %v243
  %622 = vmatpush.msra.mxu0 %v242
  %623 = vmatmul.f32.gmra.mxu0 %v605
  %v624 = vpop.f32.mrf.mxu0
  %v625 = vadd.f32 0.0, %v624
  %626 = vdwg.mxu0
  %v627 = vadd.f32 %v603, %v625
  %v628 = vxor.u32 %v627, 2147483648
  %v629 = vmul.f32 %v628, 1.442695
  %v630 = vpow.pop %v629
  %v631 = vadd.f32 %v630, 1.0
  %v632 = vrcp.pop %v631
  %v633 = vmul.f32 %v631, %v632
  %v634 = vsub.f32 1.0, %v633
  %v635 = vmul.f32 %v632, %v634
  %v636 = vadd.f32 %v632, %v635
  %vm637 = vweird.f32 %v631
  %vm638 = vweird.f32 %v632
  %vm639 = vmor %vm637, %vm638
  %v640 = vsel %vm639, %v632, %v636
  %v641 = vand.u32 2147483647, %v631
  %vm642 = vcmp.eq.f32.partialorder %v641, 8.507059e+37
  %v643 = vand.u32 %v631, 2147483648
  %v644 = vor.u32 1.1754944e-38, %v643
  %v645 = vsel %vm642, %v644, %v640
  %v646 = vmul.f32 1.0, %v645
  %s647 = sadd.s32 16, 64
  %s648 = scalar_lea.vmem [#allocation2], %s647
  %v649 = vld [vmem:[%s648] sm:$0xff]
  %650 = vmatpush.msra.mxu0 0.0
  %651 = vmatpush.msra.mxu0 0.0
  %652 = vmatpush.msra.mxu0 0.0
  %653 = vmatpush.msra.mxu0 0.0
  %654 = vmatpush.msra.mxu0 0.0
  %655 = vmatpush.msra.mxu0 0.0
  %656 = vmatpush.msra.mxu0 0.0
  %657 = vmatpush.msra.mxu0 0.0
  %658 = vmatpush.msra.mxu0 0.0
  %659 = vmatpush.msra.mxu0 0.0
  %660 = vmatpush.msra.mxu0 0.0
  %661 = vmatpush.msra.mxu0 0.0
  %662 = vmatpush.msra.mxu0 %v250
  %663 = vmatpush.msra.mxu0 %v249
  %664 = vmatpush.msra.mxu0 %v248
  %665 = vmatpush.msra.mxu0 %v247
  %666 = vmatmul.f32.gmra.mxu0 %v605
  %v667 = vpop.f32.mrf.mxu0
  %v668 = vadd.f32 0.0, %v667
  %669 = vdwg.mxu0
  %v670 = vadd.f32 %v649, %v668
  %v671 = vxor.u32 %v670, 2147483648
  %v672 = vmul.f32 %v671, 1.442695
  %v673 = vpow.pop %v672
  %v674 = vadd.f32 %v673, 1.0
  %v675 = vrcp.pop %v674
  %v676 = vmul.f32 %v674, %v675
  %v677 = vsub.f32 1.0, %v676
  %v678 = vmul.f32 %v675, %v677
  %v679 = vadd.f32 %v675, %v678
  %vm680 = vweird.f32 %v674
  %vm681 = vweird.f32 %v675
  %vm682 = vmor %vm680, %vm681
  %v683 = vsel %vm682, %v675, %v679
  %v684 = vand.u32 2147483647, %v674
  %vm685 = vcmp.eq.f32.partialorder %v684, 8.507059e+37
  %v686 = vand.u32 %v674, 2147483648
  %v687 = vor.u32 1.1754944e-38, %v686
  %v688 = vsel %vm685, %v687, %v683
  %v689 = vmul.f32 1.0, %v688
  %s690 = sadd.s32 16, 128
  %s691 = scalar_lea.vmem [#allocation2], %s690
  %v692 = vld [vmem:[%s691] sm:$0xff]
  %693 = vmatpush.msra.mxu0 0.0
  %694 = vmatpush.msra.mxu0 0.0
  %695 = vmatpush.msra.mxu0 0.0
  %696 = vmatpush.msra.mxu0 0.0
  %697 = vmatpush.msra.mxu0 0.0
  %698 = vmatpush.msra.mxu0 0.0
  %699 = vmatpush.msra.mxu0 0.0
  %700 = vmatpush.msra.mxu0 0.0
  %701 = vmatpush.msra.mxu0 0.0
  %702 = vmatpush.msra.mxu0 0.0
  %703 = vmatpush.msra.mxu0 0.0
  %704 = vmatpush.msra.mxu0 0.0
  %705 = vmatpush.msra.mxu0 %v255
  %706 = vmatpush.msra.mxu0 %v254
  %707 = vmatpush.msra.mxu0 %v253
  %708 = vmatpush.msra.mxu0 %v252
  %709 = vmatmul.f32.gmra.mxu0 %v605
  %v710 = vpop.f32.mrf.mxu0
  %v711 = vadd.f32 0.0, %v710
  %712 = vdwg.mxu0
  %v713 = vadd.f32 %v692, %v711
  %v714 = vtanh.pop %v713
  %s715 = sadd.s32 16, 192
  %s716 = scalar_lea.vmem [#allocation2], %s715
  %v717 = vld [vmem:[%s716] sm:$0xff]
  %718 = vmatpush.msra.mxu0 0.0
  %719 = vmatpush.msra.mxu0 0.0
  %720 = vmatpush.msra.mxu0 0.0
  %721 = vmatpush.msra.mxu0 0.0
  %722 = vmatpush.msra.mxu0 0.0
  %723 = vmatpush.msra.mxu0 0.0
  %724 = vmatpush.msra.mxu0 0.0
  %725 = vmatpush.msra.mxu0 0.0
  %726 = vmatpush.msra.mxu0 0.0
  %727 = vmatpush.msra.mxu0 0.0
  %728 = vmatpush.msra.mxu0 0.0
  %729 = vmatpush.msra.mxu0 0.0
  %730 = vmatpush.msra.mxu0 %v260
  %731 = vmatpush.msra.mxu0 %v259
  %732 = vmatpush.msra.mxu0 %v258
  %733 = vmatpush.msra.mxu0 %v257
  %734 = vmatmul.f32.gmra.mxu0 %v605
  %v735 = vpop.f32.mrf.mxu0
  %v736 = vadd.f32 0.0, %v735
  %737 = vdwg.mxu0
  %v738 = vadd.f32 %v717, %v736
  %v739 = vxor.u32 %v738, 2147483648
  %v740 = vmul.f32 %v739, 1.442695
  %v741 = vpow.pop %v740
  %v742 = vadd.f32 %v741, 1.0
  %v743 = vrcp.pop %v742
  %v744 = vmul.f32 %v742, %v743
  %v745 = vsub.f32 1.0, %v744
  %v746 = vmul.f32 %v743, %v745
  %v747 = vadd.f32 %v743, %v746
  %vm748 = vweird.f32 %v742
  %vm749 = vweird.f32 %v743
  %vm750 = vmor %vm748, %vm749
  %v751 = vsel %vm750, %v743, %v747
  %v752 = vand.u32 2147483647, %v742
  %vm753 = vcmp.eq.f32.partialorder %v752, 8.507059e+37
  %v754 = vand.u32 %v742, 2147483648
  %v755 = vor.u32 1.1754944e-38, %v754
  %v756 = vsel %vm753, %v755, %v751
  %v757 = vmul.f32 1.0, %v756
  %v758 = vmul.f32 %v689, %v598
  %v759 = vmul.f32 %v646, %v714
  %v760 = vadd.f32 %v758, %v759
  %v761 = vtanh.pop %v760
  %v762 = vmul.f32 %v757, %v761
  %vm763 = vcmp.gt.s32.totalorder %v44, 2
  %v764 = vsel %vm763, 1, 0
  %765 = vset.pattern.permute.xlu0 0
  %766 = vperm.xlu0 %765, %v764
  %v767 = vpop.permute.xlu0 %766
  %vm768 = vcmp.eq.s32.totalorder %v767, 1
  %v769 = vsel %vm768, %v762, %v597
  %v770 = vsel %vm768, %v760, %v598
  %v771 = vsel %vm768, %v762, 0.0
  %s772 = scalar_lea.vmem [#allocation5], 16
  %773 = vst.msk [vmem:[%s772] sm:$0xff] %vm61, %v771
  %s774 = scalar_lea.vmem [#allocation2], 24
  %v775 = vld [vmem:[%s774] sm:$0xff]
  %v777 = vsel %vm61, %v769, 0
  %779 = vmatpush.msra.mxu0 0.0
  %780 = vmatpush.msra.mxu0 0.0
  %781 = vmatpush.msra.mxu0 0.0
  %782 = vmatpush.msra.mxu0 0.0
  %783 = vmatpush.msra.mxu0 0.0
  %784 = vmatpush.msra.mxu0 0.0
  %785 = vmatpush.msra.mxu0 0.0
  %786 = vmatpush.msra.mxu0 0.0
  %787 = vmatpush.msra.mxu0 0.0
  %788 = vmatpush.msra.mxu0 0.0
  %789 = vmatpush.msra.mxu0 0.0
  %790 = vmatpush.msra.mxu0 0.0
  %791 = vmatpush.msra.mxu0 %v245
  %792 = vmatpush.msra.mxu0 %v244
  %793 = vmatpush.msra.mxu0 %v243
  %794 = vmatpush.msra.mxu0 %v242
  %795 = vmatmul.f32.gmra.mxu0 %v777
  %v796 = vpop.f32.mrf.mxu0
  %v797 = vadd.f32 0.0, %v796
  %798 = vdwg.mxu0
  %v799 = vadd.f32 %v775, %v797
  %v800 = vxor.u32 %v799, 2147483648
  %v801 = vmul.f32 %v800, 1.442695
  %v802 = vpow.pop %v801
  %v803 = vadd.f32 %v802, 1.0
  %v804 = vrcp.pop %v803
  %v805 = vmul.f32 %v803, %v804
  %v806 = vsub.f32 1.0, %v805
  %v807 = vmul.f32 %v804, %v806
  %v808 = vadd.f32 %v804, %v807
  %vm809 = vweird.f32 %v803
  %vm810 = vweird.f32 %v804
  %vm811 = vmor %vm809, %vm810
  %v812 = vsel %vm811, %v804, %v808
  %v813 = vand.u32 2147483647, %v803
  %vm814 = vcmp.eq.f32.partialorder %v813, 8.507059e+37
  %v815 = vand.u32 %v803, 2147483648
  %v816 = vor.u32 1.1754944e-38, %v815
  %v817 = vsel %vm814, %v816, %v812
  %v818 = vmul.f32 1.0, %v817
  %s819 = sadd.s32 24, 64
  %s820 = scalar_lea.vmem [#allocation2], %s819
  %v821 = vld [vmem:[%s820] sm:$0xff]
  %822 = vmatpush.msra.mxu0 0.0
  %823 = vmatpush.msra.mxu0 0.0
  %824 = vmatpush.msra.mxu0 0.0
  %825 = vmatpush.msra.mxu0 0.0
  %826 = vmatpush.msra.mxu0 0.0
  %827 = vmatpush.msra.mxu0 0.0
  %828 = vmatpush.msra.mxu0 0.0
  %829 = vmatpush.msra.mxu0 0.0
  %830 = vmatpush.msra.mxu0 0.0
  %831 = vmatpush.msra.mxu0 0.0
  %832 = vmatpush.msra.mxu0 0.0
  %833 = vmatpush.msra.mxu0 0.0
  %834 = vmatpush.msra.mxu0 %v250
  %835 = vmatpush.msra.mxu0 %v249
  %836 = vmatpush.msra.mxu0 %v248
  %837 = vmatpush.msra.mxu0 %v247
  %838 = vmatmul.f32.gmra.mxu0 %v777
  %v839 = vpop.f32.mrf.mxu0
  %v840 = vadd.f32 0.0, %v839
  %841 = vdwg.mxu0
  %v842 = vadd.f32 %v821, %v840
  %v843 = vxor.u32 %v842, 2147483648
  %v844 = vmul.f32 %v843, 1.442695
  %v845 = vpow.pop %v844
  %v846 = vadd.f32 %v845, 1.0
  %v847 = vrcp.pop %v846
  %v848 = vmul.f32 %v846, %v847
  %v849 = vsub.f32 1.0, %v848
  %v850 = vmul.f32 %v847, %v849
  %v851 = vadd.f32 %v847, %v850
  %vm852 = vweird.f32 %v846
  %vm853 = vweird.f32 %v847
  %vm854 = vmor %vm852, %vm853
  %v855 = vsel %vm854, %v847, %v851
  %v856 = vand.u32 2147483647, %v846
  %vm857 = vcmp.eq.f32.partialorder %v856, 8.507059e+37
  %v858 = vand.u32 %v846, 2147483648
  %v859 = vor.u32 1.1754944e-38, %v858
  %v860 = vsel %vm857, %v859, %v855
  %v861 = vmul.f32 1.0, %v860
  %s862 = sadd.s32 24, 128
  %s863 = scalar_lea.vmem [#allocation2], %s862
  %v864 = vld [vmem:[%s863] sm:$0xff]
  %865 = vmatpush.msra.mxu0 0.0
  %866 = vmatpush.msra.mxu0 0.0
  %867 = vmatpush.msra.mxu0 0.0
  %868 = vmatpush.msra.mxu0 0.0
  %869 = vmatpush.msra.mxu0 0.0
  %870 = vmatpush.msra.mxu0 0.0
  %871 = vmatpush.msra.mxu0 0.0
  %872 = vmatpush.msra.mxu0 0.0
  %873 = vmatpush.msra.mxu0 0.0
  %874 = vmatpush.msra.mxu0 0.0
  %875 = vmatpush.msra.mxu0 0.0
  %876 = vmatpush.msra.mxu0 0.0
  %877 = vmatpush.msra.mxu0 %v255
  %878 = vmatpush.msra.mxu0 %v254
  %879 = vmatpush.msra.mxu0 %v253
  %880 = vmatpush.msra.mxu0 %v252
  %881 = vmatmul.f32.gmra.mxu0 %v777
  %v882 = vpop.f32.mrf.mxu0
  %v883 = vadd.f32 0.0, %v882
  %884 = vdwg.mxu0
  %v885 = vadd.f32 %v864, %v883
  %v886 = vtanh.pop %v885
  %s887 = sadd.s32 24, 192
  %s888 = scalar_lea.vmem [#allocation2], %s887
  %v889 = vld [vmem:[%s888] sm:$0xff]
  %890 = vmatpush.msra.mxu0 0.0
  %891 = vmatpush.msra.mxu0 0.0
  %892 = vmatpush.msra.mxu0 0.0
  %893 = vmatpush.msra.mxu0 0.0
  %894 = vmatpush.msra.mxu0 0.0
  %895 = vmatpush.msra.mxu0 0.0
  %896 = vmatpush.msra.mxu0 0.0
  %897 = vmatpush.msra.mxu0 0.0
  %898 = vmatpush.msra.mxu0 0.0
  %899 = vmatpush.msra.mxu0 0.0
  %900 = vmatpush.msra.mxu0 0.0
  %901 = vmatpush.msra.mxu0 0.0
  %902 = vmatpush.msra.mxu0 %v260
  %903 = vmatpush.msra.mxu0 %v259
  %904 = vmatpush.msra.mxu0 %v258
  %905 = vmatpush.msra.mxu0 %v257
  %906 = vmatmul.f32.gmra.mxu0 %v777
  %v907 = vpop.f32.mrf.mxu0
  %v908 = vadd.f32 0.0, %v907
  %909 = vdwg.mxu0
  %v910 = vadd.f32 %v889, %v908
  %v911 = vxor.u32 %v910, 2147483648
  %v912 = vmul.f32 %v911, 1.442695
  %v913 = vpow.pop %v912
  %v914 = vadd.f32 %v913, 1.0
  %v915 = vrcp.pop %v914
  %v916 = vmul.f32 %v914, %v915
  %v917 = vsub.f32 1.0, %v916
  %v918 = vmul.f32 %v915, %v917
  %v919 = vadd.f32 %v915, %v918
  %vm920 = vweird.f32 %v914
  %vm921 = vweird.f32 %v915
  %vm922 = vmor %vm920, %vm921
  %v923 = vsel %vm922, %v915, %v919
  %v924 = vand.u32 2147483647, %v914
  %vm925 = vcmp.eq.f32.partialorder %v924, 8.507059e+37
  %v926 = vand.u32 %v914, 2147483648
  %v927 = vor.u32 1.1754944e-38, %v926
  %v928 = vsel %vm925, %v927, %v923
  %v929 = vmul.f32 1.0, %v928
  %v930 = vmul.f32 %v861, %v770
  %v931 = vmul.f32 %v818, %v886
  %v932 = vadd.f32 %v930, %v931
  %v933 = vtanh.pop %v932
  %v934 = vmul.f32 %v929, %v933
  %vm935 = vcmp.gt.s32.totalorder %v44, 3
  %v936 = vsel %vm935, 1, 0
  %937 = vset.pattern.permute.xlu0 0
  %938 = vperm.xlu0 %937, %v936
  %v939 = vpop.permute.xlu0 %938
  %vm940 = vcmp.eq.s32.totalorder %v939, 1
  %v941 = vsel %vm940, %v934, %v769
  %v942 = vsel %vm940, %v932, %v770
  %v943 = vsel %vm940, %v934, 0.0
  %s944 = scalar_lea.vmem [#allocation5], 24
  %945 = vst.msk [vmem:[%s944] sm:$0xff] %vm61, %v943
  %s946 = scalar_lea.vmem [#allocation2], 32
  %v947 = vld [vmem:[%s946] sm:$0xff]
  %v949 = vsel %vm61, %v941, 0
  %951 = vmatpush.msra.mxu0 0.0
  %952 = vmatpush.msra.mxu0 0.0
  %953 = vmatpush.msra.mxu0 0.0
  %954 = vmatpush.msra.mxu0 0.0
  %955 = vmatpush.msra.mxu0 0.0
  %956 = vmatpush.msra.mxu0 0.0
  %957 = vmatpush.msra.mxu0 0.0
  %958 = vmatpush.msra.mxu0 0.0
  %959 = vmatpush.msra.mxu0 0.0
  %960 = vmatpush.msra.mxu0 0.0
  %961 = vmatpush.msra.mxu0 0.0
  %962 = vmatpush.msra.mxu0 0.0
  %963 = vmatpush.msra.mxu0 %v245
  %964 = vmatpush.msra.mxu0 %v244
  %965 = vmatpush.msra.mxu0 %v243
  %966 = vmatpush.msra.mxu0 %v242
  %967 = vmatmul.f32.gmra.mxu0 %v949
  %v968 = vpop.f32.mrf.mxu0
  %v969 = vadd.f32 0.0, %v968
  %970 = vdwg.mxu0
  %v971 = vadd.f32 %v947, %v969
  %v972 = vxor.u32 %v971, 2147483648
  %v973 = vmul.f32 %v972, 1.442695
  %v974 = vpow.pop %v973
  %v975 = vadd.f32 %v974, 1.0
  %v976 = vrcp.pop %v975
  %v977 = vmul.f32 %v975, %v976
  %v978 = vsub.f32 1.0, %v977
  %v979 = vmul.f32 %v976, %v978
  %v980 = vadd.f32 %v976, %v979
  %vm981 = vweird.f32 %v975
  %vm982 = vweird.f32 %v976
  %vm983 = vmor %vm981, %vm982
  %v984 = vsel %vm983, %v976, %v980
  %v985 = vand.u32 2147483647, %v975
  %vm986 = vcmp.eq.f32.partialorder %v985, 8.507059e+37
  %v987 = vand.u32 %v975, 2147483648
  %v988 = vor.u32 1.1754944e-38, %v987
  %v989 = vsel %vm986, %v988, %v984
  %v990 = vmul.f32 1.0, %v989
  %s991 = sadd.s32 32, 64
  %s992 = scalar_lea.vmem [#allocation2], %s991
  %v993 = vld [vmem:[%s992] sm:$0xff]
  %994 = vmatpush.msra.mxu0 0.0
  %995 = vmatpush.msra.mxu0 0.0
  %996 = vmatpush.msra.mxu0 0.0
  %997 = vmatpush.msra.mxu0 0.0
  %998 = vmatpush.msra.mxu0 0.0
  %999 = vmatpush.msra.mxu0 0.0
  %1000 = vmatpush.msra.mxu0 0.0
  %1001 = vmatpush.msra.mxu0 0.0
  %1002 = vmatpush.msra.mxu0 0.0
  %1003 = vmatpush.msra.mxu0 0.0
  %1004 = vmatpush.msra.mxu0 0.0
  %1005 = vmatpush.msra.mxu0 0.0
  %1006 = vmatpush.msra.mxu0 %v250
  %1007 = vmatpush.msra.mxu0 %v249
  %1008 = vmatpush.msra.mxu0 %v248
  %1009 = vmatpush.msra.mxu0 %v247
  %1010 = vmatmul.f32.gmra.mxu0 %v949
  %v1011 = vpop.f32.mrf.mxu0
  %v1012 = vadd.f32 0.0, %v1011
  %1013 = vdwg.mxu0
  %v1014 = vadd.f32 %v993, %v1012
  %v1015 = vxor.u32 %v1014, 2147483648
  %v1016 = vmul.f32 %v1015, 1.442695
  %v1017 = vpow.pop %v1016
  %v1018 = vadd.f32 %v1017, 1.0
  %v1019 = vrcp.pop %v1018
  %v1020 = vmul.f32 %v1018, %v1019
  %v1021 = vsub.f32 1.0, %v1020
  %v1022 = vmul.f32 %v1019, %v1021
  %v1023 = vadd.f32 %v1019, %v1022
  %vm1024 = vweird.f32 %v1018
  %vm1025 = vweird.f32 %v1019
  %vm1026 = vmor %vm1024, %vm1025
  %v1027 = vsel %vm1026, %v1019, %v1023
  %v1028 = vand.u32 2147483647, %v1018
  %vm1029 = vcmp.eq.f32.partialorder %v1028, 8.507059e+37
  %v1030 = vand.u32 %v1018, 2147483648
  %v1031 = vor.u32 1.1754944e-38, %v1030
  %v1032 = vsel %vm1029, %v1031, %v1027
  %v1033 = vmul.f32 1.0, %v1032
  %s1034 = sadd.s32 32, 128
  %s1035 = scalar_lea.vmem [#allocation2], %s1034
  %v1036 = vld [vmem:[%s1035] sm:$0xff]
  %1037 = vmatpush.msra.mxu0 0.0
  %1038 = vmatpush.msra.mxu0 0.0
  %1039 = vmatpush.msra.mxu0 0.0
  %1040 = vmatpush.msra.mxu0 0.0
  %1041 = vmatpush.msra.mxu0 0.0
  %1042 = vmatpush.msra.mxu0 0.0
  %1043 = vmatpush.msra.mxu0 0.0
  %1044 = vmatpush.msra.mxu0 0.0
  %1045 = vmatpush.msra.mxu0 0.0
  %1046 = vmatpush.msra.mxu0 0.0
  %1047 = vmatpush.msra.mxu0 0.0
  %1048 = vmatpush.msra.mxu0 0.0
  %1049 = vmatpush.msra.mxu0 %v255
  %1050 = vmatpush.msra.mxu0 %v254
  %1051 = vmatpush.msra.mxu0 %v253
  %1052 = vmatpush.msra.mxu0 %v252
  %1053 = vmatmul.f32.gmra.mxu0 %v949
  %v1054 = vpop.f32.mrf.mxu0
  %v1055 = vadd.f32 0.0, %v1054
  %1056 = vdwg.mxu0
  %v1057 = vadd.f32 %v1036, %v1055
  %v1058 = vtanh.pop %v1057
  %s1059 = sadd.s32 32, 192
  %s1060 = scalar_lea.vmem [#allocation2], %s1059
  %v1061 = vld [vmem:[%s1060] sm:$0xff]
  %1062 = vmatpush.msra.mxu0 0.0
  %1063 = vmatpush.msra.mxu0 0.0
  %1064 = vmatpush.msra.mxu0 0.0
  %1065 = vmatpush.msra.mxu0 0.0
  %1066 = vmatpush.msra.mxu0 0.0
  %1067 = vmatpush.msra.mxu0 0.0
  %1068 = vmatpush.msra.mxu0 0.0
  %1069 = vmatpush.msra.mxu0 0.0
  %1070 = vmatpush.msra.mxu0 0.0
  %1071 = vmatpush.msra.mxu0 0.0
  %1072 = vmatpush.msra.mxu0 0.0
  %1073 = vmatpush.msra.mxu0 0.0
  %1074 = vmatpush.msra.mxu0 %v260
  %1075 = vmatpush.msra.mxu0 %v259
  %1076 = vmatpush.msra.mxu0 %v258
  %1077 = vmatpush.msra.mxu0 %v257
  %1078 = vmatmul.f32.gmra.mxu0 %v949
  %v1079 = vpop.f32.mrf.mxu0
  %v1080 = vadd.f32 0.0, %v1079
  %1081 = vdwg.mxu0
  %v1082 = vadd.f32 %v1061, %v1080
  %v1083 = vxor.u32 %v1082, 2147483648
  %v1084 = vmul.f32 %v1083, 1.442695
  %v1085 = vpow.pop %v1084
  %v1086 = vadd.f32 %v1085, 1.0
  %v1087 = vrcp.pop %v1086
  %v1088 = vmul.f32 %v1086, %v1087
  %v1089 = vsub.f32 1.0, %v1088
  %v1090 = vmul.f32 %v1087, %v1089
  %v1091 = vadd.f32 %v1087, %v1090
  %vm1092 = vweird.f32 %v1086
  %vm1093 = vweird.f32 %v1087
  %vm1094 = vmor %vm1092, %vm1093
  %v1095 = vsel %vm1094, %v1087, %v1091
  %v1096 = vand.u32 2147483647, %v1086
  %vm1097 = vcmp.eq.f32.partialorder %v1096, 8.507059e+37
  %v1098 = vand.u32 %v1086, 2147483648
  %v1099 = vor.u32 1.1754944e-38, %v1098
  %v1100 = vsel %vm1097, %v1099, %v1095
  %v1101 = vmul.f32 1.0, %v1100
  %v1102 = vmul.f32 %v1033, %v942
  %v1103 = vmul.f32 %v990, %v1058
  %v1104 = vadd.f32 %v1102, %v1103
  %v1105 = vtanh.pop %v1104
  %v1106 = vmul.f32 %v1101, %v1105
  %vm1107 = vcmp.gt.s32.totalorder %v44, 4
  %v1108 = vsel %vm1107, 1, 0
  %1109 = vset.pattern.permute.xlu0 0
  %1110 = vperm.xlu0 %1109, %v1108
  %v1111 = vpop.permute.xlu0 %1110
  %vm1112 = vcmp.eq.s32.totalorder %v1111, 1
  %v1113 = vsel %vm1112, %v1106, %v941
  %v1114 = vsel %vm1112, %v1104, %v942
  %v1115 = vsel %vm1112, %v1106, 0.0
  %s1116 = scalar_lea.vmem [#allocation5], 32
  %1117 = vst.msk [vmem:[%s1116] sm:$0xff] %vm61, %v1115
  %s1118 = scalar_lea.vmem [#allocation2], 40
  %v1119 = vld [vmem:[%s1118] sm:$0xff]
  %v1121 = vsel %vm61, %v1113, 0
  %1123 = vmatpush.msra.mxu0 0.0
  %1124 = vmatpush.msra.mxu0 0.0
  %1125 = vmatpush.msra.mxu0 0.0
  %1126 = vmatpush.msra.mxu0 0.0
  %1127 = vmatpush.msra.mxu0 0.0
  %1128 = vmatpush.msra.mxu0 0.0
  %1129 = vmatpush.msra.mxu0 0.0
  %1130 = vmatpush.msra.mxu0 0.0
  %1131 = vmatpush.msra.mxu0 0.0
  %1132 = vmatpush.msra.mxu0 0.0
  %1133 = vmatpush.msra.mxu0 0.0
  %1134 = vmatpush.msra.mxu0 0.0
  %1135 = vmatpush.msra.mxu0 %v245
  %1136 = vmatpush.msra.mxu0 %v244
  %1137 = vmatpush.msra.mxu0 %v243
  %1138 = vmatpush.msra.mxu0 %v242
  %1139 = vmatmul.f32.gmra.mxu0 %v1121
  %v1140 = vpop.f32.mrf.mxu0
  %v1141 = vadd.f32 0.0, %v1140
  %1142 = vdwg.mxu0
  %v1143 = vadd.f32 %v1119, %v1141
  %v1144 = vxor.u32 %v1143, 2147483648
  %v1145 = vmul.f32 %v1144, 1.442695
  %v1146 = vpow.pop %v1145
  %v1147 = vadd.f32 %v1146, 1.0
  %v1148 = vrcp.pop %v1147
  %v1149 = vmul.f32 %v1147, %v1148
  %v1150 = vsub.f32 1.0, %v1149
  %v1151 = vmul.f32 %v1148, %v1150
  %v1152 = vadd.f32 %v1148, %v1151
  %vm1153 = vweird.f32 %v1147
  %vm1154 = vweird.f32 %v1148
  %vm1155 = vmor %vm1153, %vm1154
  %v1156 = vsel %vm1155, %v1148, %v1152
  %v1157 = vand.u32 2147483647, %v1147
  %vm1158 = vcmp.eq.f32.partialorder %v1157, 8.507059e+37
  %v1159 = vand.u32 %v1147, 2147483648
  %v1160 = vor.u32 1.1754944e-38, %v1159
  %v1161 = vsel %vm1158, %v1160, %v1156
  %v1162 = vmul.f32 1.0, %v1161
  %s1163 = sadd.s32 40, 64
  %s1164 = scalar_lea.vmem [#allocation2], %s1163
  %v1165 = vld [vmem:[%s1164] sm:$0xff]
  %1166 = vmatpush.msra.mxu0 0.0
  %1167 = vmatpush.msra.mxu0 0.0
  %1168 = vmatpush.msra.mxu0 0.0
  %1169 = vmatpush.msra.mxu0 0.0
  %1170 = vmatpush.msra.mxu0 0.0
  %1171 = vmatpush.msra.mxu0 0.0
  %1172 = vmatpush.msra.mxu0 0.0
  %1173 = vmatpush.msra.mxu0 0.0
  %1174 = vmatpush.msra.mxu0 0.0
  %1175 = vmatpush.msra.mxu0 0.0
  %1176 = vmatpush.msra.mxu0 0.0
  %1177 = vmatpush.msra.mxu0 0.0
  %1178 = vmatpush.msra.mxu0 %v250
  %1179 = vmatpush.msra.mxu0 %v249
  %1180 = vmatpush.msra.mxu0 %v248
  %1181 = vmatpush.msra.mxu0 %v247
  %1182 = vmatmul.f32.gmra.mxu0 %v1121
  %v1183 = vpop.f32.mrf.mxu0
  %v1184 = vadd.f32 0.0, %v1183
  %1185 = vdwg.mxu0
  %v1186 = vadd.f32 %v1165, %v1184
  %v1187 = vxor.u32 %v1186, 2147483648
  %v1188 = vmul.f32 %v1187, 1.442695
  %v1189 = vpow.pop %v1188
  %v1190 = vadd.f32 %v1189, 1.0
  %v1191 = vrcp.pop %v1190
  %v1192 = vmul.f32 %v1190, %v1191
  %v1193 = vsub.f32 1.0, %v1192
  %v1194 = vmul.f32 %v1191, %v1193
  %v1195 = vadd.f32 %v1191, %v1194
  %vm1196 = vweird.f32 %v1190
  %vm1197 = vweird.f32 %v1191
  %vm1198 = vmor %vm1196, %vm1197
  %v1199 = vsel %vm1198, %v1191, %v1195
  %v1200 = vand.u32 2147483647, %v1190
  %vm1201 = vcmp.eq.f32.partialorder %v1200, 8.507059e+37
  %v1202 = vand.u32 %v1190, 2147483648
  %v1203 = vor.u32 1.1754944e-38, %v1202
  %v1204 = vsel %vm1201, %v1203, %v1199
  %v1205 = vmul.f32 1.0, %v1204
  %s1206 = sadd.s32 40, 128
  %s1207 = scalar_lea.vmem [#allocation2], %s1206
  %v1208 = vld [vmem:[%s1207] sm:$0xff]
  %1209 = vmatpush.msra.mxu0 0.0
  %1210 = vmatpush.msra.mxu0 0.0
  %1211 = vmatpush.msra.mxu0 0.0
  %1212 = vmatpush.msra.mxu0 0.0
  %1213 = vmatpush.msra.mxu0 0.0
  %1214 = vmatpush.msra.mxu0 0.0
  %1215 = vmatpush.msra.mxu0 0.0
  %1216 = vmatpush.msra.mxu0 0.0
  %1217 = vmatpush.msra.mxu0 0.0
  %1218 = vmatpush.msra.mxu0 0.0
  %1219 = vmatpush.msra.mxu0 0.0
  %1220 = vmatpush.msra.mxu0 0.0
  %1221 = vmatpush.msra.mxu0 %v255
  %1222 = vmatpush.msra.mxu0 %v254
  %1223 = vmatpush.msra.mxu0 %v253
  %1224 = vmatpush.msra.mxu0 %v252
  %1225 = vmatmul.f32.gmra.mxu0 %v1121
  %v1226 = vpop.f32.mrf.mxu0
  %v1227 = vadd.f32 0.0, %v1226
  %1228 = vdwg.mxu0
  %v1229 = vadd.f32 %v1208, %v1227
  %v1230 = vtanh.pop %v1229
  %s1231 = sadd.s32 40, 192
  %s1232 = scalar_lea.vmem [#allocation2], %s1231
  %v1233 = vld [vmem:[%s1232] sm:$0xff]
  %1234 = vmatpush.msra.mxu0 0.0
  %1235 = vmatpush.msra.mxu0 0.0
  %1236 = vmatpush.msra.mxu0 0.0
  %1237 = vmatpush.msra.mxu0 0.0
  %1238 = vmatpush.msra.mxu0 0.0
  %1239 = vmatpush.msra.mxu0 0.0
  %1240 = vmatpush.msra.mxu0 0.0
  %1241 = vmatpush.msra.mxu0 0.0
  %1242 = vmatpush.msra.mxu0 0.0
  %1243 = vmatpush.msra.mxu0 0.0
  %1244 = vmatpush.msra.mxu0 0.0
  %1245 = vmatpush.msra.mxu0 0.0
  %1246 = vmatpush.msra.mxu0 %v260
  %1247 = vmatpush.msra.mxu0 %v259
  %1248 = vmatpush.msra.mxu0 %v258
  %1249 = vmatpush.msra.mxu0 %v257
  %1250 = vmatmul.f32.gmra.mxu0 %v1121
  %v1251 = vpop.f32.mrf.mxu0
  %v1252 = vadd.f32 0.0, %v1251
  %1253 = vdwg.mxu0
  %v1254 = vadd.f32 %v1233, %v1252
  %v1255 = vxor.u32 %v1254, 2147483648
  %v1256 = vmul.f32 %v1255, 1.442695
  %v1257 = vpow.pop %v1256
  %v1258 = vadd.f32 %v1257, 1.0
  %v1259 = vrcp.pop %v1258
  %v1260 = vmul.f32 %v1258, %v1259
  %v1261 = vsub.f32 1.0, %v1260
  %v1262 = vmul.f32 %v1259, %v1261
  %v1263 = vadd.f32 %v1259, %v1262
  %vm1264 = vweird.f32 %v1258
  %vm1265 = vweird.f32 %v1259
  %vm1266 = vmor %vm1264, %vm1265
  %v1267 = vsel %vm1266, %v1259, %v1263
  %v1268 = vand.u32 2147483647, %v1258
  %vm1269 = vcmp.eq.f32.partialorder %v1268, 8.507059e+37
  %v1270 = vand.u32 %v1258, 2147483648
  %v1271 = vor.u32 1.1754944e-38, %v1270
  %v1272 = vsel %vm1269, %v1271, %v1267
  %v1273 = vmul.f32 1.0, %v1272
  %v1274 = vmul.f32 %v1205, %v1114
  %v1275 = vmul.f32 %v1162, %v1230
  %v1276 = vadd.f32 %v1274, %v1275
  %v1277 = vtanh.pop %v1276
  %v1278 = vmul.f32 %v1273, %v1277
  %vm1279 = vcmp.gt.s32.totalorder %v44, 5
  %v1280 = vsel %vm1279, 1, 0
  %1281 = vset.pattern.permute.xlu0 0
  %1282 = vperm.xlu0 %1281, %v1280
  %v1283 = vpop.permute.xlu0 %1282
  %vm1284 = vcmp.eq.s32.totalorder %v1283, 1
  %v1285 = vsel %vm1284, %v1278, %v1113
  %v1286 = vsel %vm1284, %v1276, %v1114
  %v1287 = vsel %vm1284, %v1278, 0.0
  %s1288 = scalar_lea.vmem [#allocation5], 40
  %1289 = vst.msk [vmem:[%s1288] sm:$0xff] %vm61, %v1287
  %s1290 = scalar_lea.vmem [#allocation2], 48
  %v1291 = vld [vmem:[%s1290] sm:$0xff]
  %v1293 = vsel %vm61, %v1285, 0
  %1295 = vmatpush.msra.mxu0 0.0
  %1296 = vmatpush.msra.mxu0 0.0
  %1297 = vmatpush.msra.mxu0 0.0
  %1298 = vmatpush.msra.mxu0 0.0
  %1299 = vmatpush.msra.mxu0 0.0
  %1300 = vmatpush.msra.mxu0 0.0
  %1301 = vmatpush.msra.mxu0 0.0
  %1302 = vmatpush.msra.mxu0 0.0
  %1303 = vmatpush.msra.mxu0 0.0
  %1304 = vmatpush.msra.mxu0 0.0
  %1305 = vmatpush.msra.mxu0 0.0
  %1306 = vmatpush.msra.mxu0 0.0
  %1307 = vmatpush.msra.mxu0 %v245
  %1308 = vmatpush.msra.mxu0 %v244
  %1309 = vmatpush.msra.mxu0 %v243
  %1310 = vmatpush.msra.mxu0 %v242
  %1311 = vmatmul.f32.gmra.mxu0 %v1293
  %v1312 = vpop.f32.mrf.mxu0
  %v1313 = vadd.f32 0.0, %v1312
  %1314 = vdwg.mxu0
  %v1315 = vadd.f32 %v1291, %v1313
  %v1316 = vxor.u32 %v1315, 2147483648
  %v1317 = vmul.f32 %v1316, 1.442695
  %v1318 = vpow.pop %v1317
  %v1319 = vadd.f32 %v1318, 1.0
  %v1320 = vrcp.pop %v1319
  %v1321 = vmul.f32 %v1319, %v1320
  %v1322 = vsub.f32 1.0, %v1321
  %v1323 = vmul.f32 %v1320, %v1322
  %v1324 = vadd.f32 %v1320, %v1323
  %vm1325 = vweird.f32 %v1319
  %vm1326 = vweird.f32 %v1320
  %vm1327 = vmor %vm1325, %vm1326
  %v1328 = vsel %vm1327, %v1320, %v1324
  %v1329 = vand.u32 2147483647, %v1319
  %vm1330 = vcmp.eq.f32.partialorder %v1329, 8.507059e+37
  %v1331 = vand.u32 %v1319, 2147483648
  %v1332 = vor.u32 1.1754944e-38, %v1331
  %v1333 = vsel %vm1330, %v1332, %v1328
  %v1334 = vmul.f32 1.0, %v1333
  %s1335 = sadd.s32 48, 64
  %s1336 = scalar_lea.vmem [#allocation2], %s1335
  %v1337 = vld [vmem:[%s1336] sm:$0xff]
  %1338 = vmatpush.msra.mxu0 0.0
  %1339 = vmatpush.msra.mxu0 0.0
  %1340 = vmatpush.msra.mxu0 0.0
  %1341 = vmatpush.msra.mxu0 0.0
  %1342 = vmatpush.msra.mxu0 0.0
  %1343 = vmatpush.msra.mxu0 0.0
  %1344 = vmatpush.msra.mxu0 0.0
  %1345 = vmatpush.msra.mxu0 0.0
  %1346 = vmatpush.msra.mxu0 0.0
  %1347 = vmatpush.msra.mxu0 0.0
  %1348 = vmatpush.msra.mxu0 0.0
  %1349 = vmatpush.msra.mxu0 0.0
  %1350 = vmatpush.msra.mxu0 %v250
  %1351 = vmatpush.msra.mxu0 %v249
  %1352 = vmatpush.msra.mxu0 %v248
  %1353 = vmatpush.msra.mxu0 %v247
  %1354 = vmatmul.f32.gmra.mxu0 %v1293
  %v1355 = vpop.f32.mrf.mxu0
  %v1356 = vadd.f32 0.0, %v1355
  %1357 = vdwg.mxu0
  %v1358 = vadd.f32 %v1337, %v1356
  %v1359 = vxor.u32 %v1358, 2147483648
  %v1360 = vmul.f32 %v1359, 1.442695
  %v1361 = vpow.pop %v1360
  %v1362 = vadd.f32 %v1361, 1.0
  %v1363 = vrcp.pop %v1362
  %v1364 = vmul.f32 %v1362, %v1363
  %v1365 = vsub.f32 1.0, %v1364
  %v1366 = vmul.f32 %v1363, %v1365
  %v1367 = vadd.f32 %v1363, %v1366
  %vm1368 = vweird.f32 %v1362
  %vm1369 = vweird.f32 %v1363
  %vm1370 = vmor %vm1368, %vm1369
  %v1371 = vsel %vm1370, %v1363, %v1367
  %v1372 = vand.u32 2147483647, %v1362
  %vm1373 = vcmp.eq.f32.partialorder %v1372, 8.507059e+37
  %v1374 = vand.u32 %v1362, 2147483648
  %v1375 = vor.u32 1.1754944e-38, %v1374
  %v1376 = vsel %vm1373, %v1375, %v1371
  %v1377 = vmul.f32 1.0, %v1376
  %s1378 = sadd.s32 48, 128
  %s1379 = scalar_lea.vmem [#allocation2], %s1378
  %v1380 = vld [vmem:[%s1379] sm:$0xff]
  %1381 = vmatpush.msra.mxu0 0.0
  %1382 = vmatpush.msra.mxu0 0.0
  %1383 = vmatpush.msra.mxu0 0.0
  %1384 = vmatpush.msra.mxu0 0.0
  %1385 = vmatpush.msra.mxu0 0.0
  %1386 = vmatpush.msra.mxu0 0.0
  %1387 = vmatpush.msra.mxu0 0.0
  %1388 = vmatpush.msra.mxu0 0.0
  %1389 = vmatpush.msra.mxu0 0.0
  %1390 = vmatpush.msra.mxu0 0.0
  %1391 = vmatpush.msra.mxu0 0.0
  %1392 = vmatpush.msra.mxu0 0.0
  %1393 = vmatpush.msra.mxu0 %v255
  %1394 = vmatpush.msra.mxu0 %v254
  %1395 = vmatpush.msra.mxu0 %v253
  %1396 = vmatpush.msra.mxu0 %v252
  %1397 = vmatmul.f32.gmra.mxu0 %v1293
  %v1398 = vpop.f32.mrf.mxu0
  %v1399 = vadd.f32 0.0, %v1398
  %1400 = vdwg.mxu0
  %v1401 = vadd.f32 %v1380, %v1399
  %v1402 = vtanh.pop %v1401
  %s1403 = sadd.s32 48, 192
  %s1404 = scalar_lea.vmem [#allocation2], %s1403
  %v1405 = vld [vmem:[%s1404] sm:$0xff]
  %1406 = vmatpush.msra.mxu0 0.0
  %1407 = vmatpush.msra.mxu0 0.0
  %1408 = vmatpush.msra.mxu0 0.0
  %1409 = vmatpush.msra.mxu0 0.0
  %1410 = vmatpush.msra.mxu0 0.0
  %1411 = vmatpush.msra.mxu0 0.0
  %1412 = vmatpush.msra.mxu0 0.0
  %1413 = vmatpush.msra.mxu0 0.0
  %1414 = vmatpush.msra.mxu0 0.0
  %1415 = vmatpush.msra.mxu0 0.0
  %1416 = vmatpush.msra.mxu0 0.0
  %1417 = vmatpush.msra.mxu0 0.0
  %1418 = vmatpush.msra.mxu0 %v260
  %1419 = vmatpush.msra.mxu0 %v259
  %1420 = vmatpush.msra.mxu0 %v258
  %1421 = vmatpush.msra.mxu0 %v257
  %1422 = vmatmul.f32.gmra.mxu0 %v1293
  %v1423 = vpop.f32.mrf.mxu0
  %v1424 = vadd.f32 0.0, %v1423
  %1425 = vdwg.mxu0
  %v1426 = vadd.f32 %v1405, %v1424
  %v1427 = vxor.u32 %v1426, 2147483648
  %v1428 = vmul.f32 %v1427, 1.442695
  %v1429 = vpow.pop %v1428
  %v1430 = vadd.f32 %v1429, 1.0
  %v1431 = vrcp.pop %v1430
  %v1432 = vmul.f32 %v1430, %v1431
  %v1433 = vsub.f32 1.0, %v1432
  %v1434 = vmul.f32 %v1431, %v1433
  %v1435 = vadd.f32 %v1431, %v1434
  %vm1436 = vweird.f32 %v1430
  %vm1437 = vweird.f32 %v1431
  %vm1438 = vmor %vm1436, %vm1437
  %v1439 = vsel %vm1438, %v1431, %v1435
  %v1440 = vand.u32 2147483647, %v1430
  %vm1441 = vcmp.eq.f32.partialorder %v1440, 8.507059e+37
  %v1442 = vand.u32 %v1430, 2147483648
  %v1443 = vor.u32 1.1754944e-38, %v1442
  %v1444 = vsel %vm1441, %v1443, %v1439
  %v1445 = vmul.f32 1.0, %v1444
  %v1446 = vmul.f32 %v1377, %v1286
  %v1447 = vmul.f32 %v1334, %v1402
  %v1448 = vadd.f32 %v1446, %v1447
  %v1449 = vtanh.pop %v1448
  %v1450 = vmul.f32 %v1445, %v1449
  %vm1451 = vcmp.gt.s32.totalorder %v44, 6
  %v1452 = vsel %vm1451, 1, 0
  %1453 = vset.pattern.permute.xlu0 0
  %1454 = vperm.xlu0 %1453, %v1452
  %v1455 = vpop.permute.xlu0 %1454
  %vm1456 = vcmp.eq.s32.totalorder %v1455, 1
  %v1457 = vsel %vm1456, %v1450, %v1285
  %v1458 = vsel %vm1456, %v1448, %v1286
  %v1459 = vsel %vm1456, %v1450, 0.0
  %s1460 = scalar_lea.vmem [#allocation5], 48
  %1461 = vst.msk [vmem:[%s1460] sm:$0xff] %vm61, %v1459
  %s1462 = scalar_lea.vmem [#allocation2], 56
  %v1463 = vld [vmem:[%s1462] sm:$0xff]
  %v1465 = vsel %vm61, %v1457, 0
  %1467 = vmatpush.msra.mxu0 0.0
  %1468 = vmatpush.msra.mxu0 0.0
  %1469 = vmatpush.msra.mxu0 0.0
  %1470 = vmatpush.msra.mxu0 0.0
  %1471 = vmatpush.msra.mxu0 0.0
  %1472 = vmatpush.msra.mxu0 0.0
  %1473 = vmatpush.msra.mxu0 0.0
  %1474 = vmatpush.msra.mxu0 0.0
  %1475 = vmatpush.msra.mxu0 0.0
  %1476 = vmatpush.msra.mxu0 0.0
  %1477 = vmatpush.msra.mxu0 0.0
  %1478 = vmatpush.msra.mxu0 0.0
  %1479 = vmatpush.msra.mxu0 %v245
  %1480 = vmatpush.msra.mxu0 %v244
  %1481 = vmatpush.msra.mxu0 %v243
  %1482 = vmatpush.msra.mxu0 %v242
  %1483 = vmatmul.f32.gmra.mxu0 %v1465
  %v1484 = vpop.f32.mrf.mxu0
  %v1485 = vadd.f32 0.0, %v1484
  %1486 = vdwg.mxu0
  %v1487 = vadd.f32 %v1463, %v1485
  %v1488 = vxor.u32 %v1487, 2147483648
  %v1489 = vmul.f32 %v1488, 1.442695
  %v1490 = vpow.pop %v1489
  %v1491 = vadd.f32 %v1490, 1.0
  %v1492 = vrcp.pop %v1491
  %v1493 = vmul.f32 %v1491, %v1492
  %v1494 = vsub.f32 1.0, %v1493
  %v1495 = vmul.f32 %v1492, %v1494
  %v1496 = vadd.f32 %v1492, %v1495
  %vm1497 = vweird.f32 %v1491
  %vm1498 = vweird.f32 %v1492
  %vm1499 = vmor %vm1497, %vm1498
  %v1500 = vsel %vm1499, %v1492, %v1496
  %v1501 = vand.u32 2147483647, %v1491
  %vm1502 = vcmp.eq.f32.partialorder %v1501, 8.507059e+37
  %v1503 = vand.u32 %v1491, 2147483648
  %v1504 = vor.u32 1.1754944e-38, %v1503
  %v1505 = vsel %vm1502, %v1504, %v1500
  %v1506 = vmul.f32 1.0, %v1505
  %s1507 = sadd.s32 56, 64
  %s1508 = scalar_lea.vmem [#allocation2], %s1507
  %v1509 = vld [vmem:[%s1508] sm:$0xff]
  %1510 = vmatpush.msra.mxu0 0.0
  %1511 = vmatpush.msra.mxu0 0.0
  %1512 = vmatpush.msra.mxu0 0.0
  %1513 = vmatpush.msra.mxu0 0.0
  %1514 = vmatpush.msra.mxu0 0.0
  %1515 = vmatpush.msra.mxu0 0.0
  %1516 = vmatpush.msra.mxu0 0.0
  %1517 = vmatpush.msra.mxu0 0.0
  %1518 = vmatpush.msra.mxu0 0.0
  %1519 = vmatpush.msra.mxu0 0.0
  %1520 = vmatpush.msra.mxu0 0.0
  %1521 = vmatpush.msra.mxu0 0.0
  %1522 = vmatpush.msra.mxu0 %v250
  %1523 = vmatpush.msra.mxu0 %v249
  %1524 = vmatpush.msra.mxu0 %v248
  %1525 = vmatpush.msra.mxu0 %v247
  %1526 = vmatmul.f32.gmra.mxu0 %v1465
  %v1527 = vpop.f32.mrf.mxu0
  %v1528 = vadd.f32 0.0, %v1527
  %1529 = vdwg.mxu0
  %v1530 = vadd.f32 %v1509, %v1528
  %v1531 = vxor.u32 %v1530, 2147483648
  %v1532 = vmul.f32 %v1531, 1.442695
  %v1533 = vpow.pop %v1532
  %v1534 = vadd.f32 %v1533, 1.0
  %v1535 = vrcp.pop %v1534
  %v1536 = vmul.f32 %v1534, %v1535
  %v1537 = vsub.f32 1.0, %v1536
  %v1538 = vmul.f32 %v1535, %v1537
  %v1539 = vadd.f32 %v1535, %v1538
  %vm1540 = vweird.f32 %v1534
  %vm1541 = vweird.f32 %v1535
  %vm1542 = vmor %vm1540, %vm1541
  %v1543 = vsel %vm1542, %v1535, %v1539
  %v1544 = vand.u32 2147483647, %v1534
  %vm1545 = vcmp.eq.f32.partialorder %v1544, 8.507059e+37
  %v1546 = vand.u32 %v1534, 2147483648
  %v1547 = vor.u32 1.1754944e-38, %v1546
  %v1548 = vsel %vm1545, %v1547, %v1543
  %v1549 = vmul.f32 1.0, %v1548
  %s1550 = sadd.s32 56, 128
  %s1551 = scalar_lea.vmem [#allocation2], %s1550
  %v1552 = vld [vmem:[%s1551] sm:$0xff]
  %1553 = vmatpush.msra.mxu0 0.0
  %1554 = vmatpush.msra.mxu0 0.0
  %1555 = vmatpush.msra.mxu0 0.0
  %1556 = vmatpush.msra.mxu0 0.0
  %1557 = vmatpush.msra.mxu0 0.0
  %1558 = vmatpush.msra.mxu0 0.0
  %1559 = vmatpush.msra.mxu0 0.0
  %1560 = vmatpush.msra.mxu0 0.0
  %1561 = vmatpush.msra.mxu0 0.0
  %1562 = vmatpush.msra.mxu0 0.0
  %1563 = vmatpush.msra.mxu0 0.0
  %1564 = vmatpush.msra.mxu0 0.0
  %1565 = vmatpush.msra.mxu0 %v255
  %1566 = vmatpush.msra.mxu0 %v254
  %1567 = vmatpush.msra.mxu0 %v253
  %1568 = vmatpush.msra.mxu0 %v252
  %1569 = vmatmul.f32.gmra.mxu0 %v1465
  %v1570 = vpop.f32.mrf.mxu0
  %v1571 = vadd.f32 0.0, %v1570
  %1572 = vdwg.mxu0
  %v1573 = vadd.f32 %v1552, %v1571
  %v1574 = vtanh.pop %v1573
  %s1575 = sadd.s32 56, 192
  %s1576 = scalar_lea.vmem [#allocation2], %s1575
  %v1577 = vld [vmem:[%s1576] sm:$0xff]
  %1578 = vmatpush.msra.mxu0 0.0
  %1579 = vmatpush.msra.mxu0 0.0
  %1580 = vmatpush.msra.mxu0 0.0
  %1581 = vmatpush.msra.mxu0 0.0
  %1582 = vmatpush.msra.mxu0 0.0
  %1583 = vmatpush.msra.mxu0 0.0
  %1584 = vmatpush.msra.mxu0 0.0
  %1585 = vmatpush.msra.mxu0 0.0
  %1586 = vmatpush.msra.mxu0 0.0
  %1587 = vmatpush.msra.mxu0 0.0
  %1588 = vmatpush.msra.mxu0 0.0
  %1589 = vmatpush.msra.mxu0 0.0
  %1590 = vmatpush.msra.mxu0 %v260
  %1591 = vmatpush.msra.mxu0 %v259
  %1592 = vmatpush.msra.mxu0 %v258
  %1593 = vmatpush.msra.mxu0 %v257
  %1594 = vmatmul.f32.gmra.mxu0 %v1465
  %v1595 = vpop.f32.mrf.mxu0
  %v1596 = vadd.f32 0.0, %v1595
  %1597 = vdwg.mxu0
  %v1598 = vadd.f32 %v1577, %v1596
  %v1599 = vxor.u32 %v1598, 2147483648
  %v1600 = vmul.f32 %v1599, 1.442695
  %v1601 = vpow.pop %v1600
  %v1602 = vadd.f32 %v1601, 1.0
  %v1603 = vrcp.pop %v1602
  %v1604 = vmul.f32 %v1602, %v1603
  %v1605 = vsub.f32 1.0, %v1604
  %v1606 = vmul.f32 %v1603, %v1605
  %v1607 = vadd.f32 %v1603, %v1606
  %vm1608 = vweird.f32 %v1602
  %vm1609 = vweird.f32 %v1603
  %vm1610 = vmor %vm1608, %vm1609
  %v1611 = vsel %vm1610, %v1603, %v1607
  %v1612 = vand.u32 2147483647, %v1602
  %vm1613 = vcmp.eq.f32.partialorder %v1612, 8.507059e+37
  %v1614 = vand.u32 %v1602, 2147483648
  %v1615 = vor.u32 1.1754944e-38, %v1614
  %v1616 = vsel %vm1613, %v1615, %v1611
  %v1617 = vmul.f32 1.0, %v1616
  %v1618 = vmul.f32 %v1549, %v1458
  %v1619 = vmul.f32 %v1506, %v1574
  %v1620 = vadd.f32 %v1618, %v1619
  %v1621 = vtanh.pop %v1620
  %v1622 = vmul.f32 %v1617, %v1621
  %vm1623 = vcmp.gt.s32.totalorder %v44, 7
  %v1624 = vsel %vm1623, 1, 0
  %1625 = vset.pattern.permute.xlu0 0
  %1626 = vperm.xlu0 %1625, %v1624
  %v1627 = vpop.permute.xlu0 %1626
  %vm1628 = vcmp.eq.s32.totalorder %v1627, 1
  %v1629 = vsel %vm1628, %v1622, 0.0
  %s1630 = scalar_lea.vmem [#allocation5], 56
  %1631 = vst.msk [vmem:[%s1630] sm:$0xff] %vm61, %v1629
  %v1632 = vld [vmem:[#allocation5] sm:$0xff]
  %v1633 = vld [vmem:[#allocation5 + $0x8] sm:$0xff]
  %v1634 = vld [vmem:[#allocation5 + $0x10] sm:$0xff]
  %v1635 = vld [vmem:[#allocation5 + $0x18] sm:$0xff]
  %v1636 = vld [vmem:[#allocation5 + $0x20] sm:$0xff]
  %v1637 = vld [vmem:[#allocation5 + $0x28] sm:$0xff]
  %v1638 = vld [vmem:[#allocation5 + $0x30] sm:$0xff]
  %v1639 = vld [vmem:[#allocation5 + $0x38] sm:$0xff]
  %v1640 = vld [vmem:[%s5] sm:$0xff]
  %v1641 = vld [vmem:[%s5 + $0x8] sm:$0xff]
  %v1642 = vld [vmem:[%s5 + $0x10] sm:$0xff]
  %v1643 = vld [vmem:[%s5 + $0x18] sm:$0xff]
  %v1644 = vld [vmem:[%s5 + $0x20] sm:$0xff]
  %v1645 = vld [vmem:[%s5 + $0x28] sm:$0xff]
  %v1646 = vld [vmem:[%s5 + $0x30] sm:$0xff]
  %v1647 = vld [vmem:[%s5 + $0x38] sm:$0xff]
  %v1648 = vld [vmem:[%s7] sm:$0x3]
  %v1650 = vperm.slane %v1648, 0
  %v1651 = vperm.slane %v1648, 1
  %v1655 = vsel %vm61, %v1632, 0
  %v1658 = vsel %vm61, %v1633, 0
  %v1661 = vsel %vm61, %v1634, 0
  %v1664 = vsel %vm61, %v1635, 0
  %v1667 = vsel %vm61, %v1636, 0
  %v1670 = vsel %vm61, %v1637, 0
  %v1673 = vsel %vm61, %v1638, 0
  %v1676 = vsel %vm61, %v1639, 0
  %1678 = vmatpush.msra.mxu0 0.0
  %1679 = vmatpush.msra.mxu0 0.0
  %1680 = vmatpush.msra.mxu0 0.0
  %1681 = vmatpush.msra.mxu0 0.0
  %1682 = vmatpush.msra.mxu0 0.0
  %1683 = vmatpush.msra.mxu0 0.0
  %1684 = vmatpush.msra.mxu0 0.0
  %1685 = vmatpush.msra.mxu0 0.0
  %1686 = vmatpush.msra.mxu0 0.0
  %1687 = vmatpush.msra.mxu0 0.0
  %1688 = vmatpush.msra.mxu0 0.0
  %1689 = vmatpush.msra.mxu0 0.0
  %1690 = vmatpush.msra.mxu0 %v1646
  %1691 = vmatpush.msra.mxu0 %v1644
  %1692 = vmatpush.msra.mxu0 %v1642
  %1693 = vmatpush.msra.mxu0 %v1640
  %1694 = vmatmul.f32.gmra.mxu0 %v1655
  %v1695 = vpop.f32.mrf.mxu0
  %v1696 = vadd.f32 %v1650, %v1695
  %1697 = vmatmul.f32.gmra.mxu0 %v1658
  %v1698 = vpop.f32.mrf.mxu0
  %v1699 = vadd.f32 %v1650, %v1698
  %1700 = vmatmul.f32.gmra.mxu0 %v1661
  %v1701 = vpop.f32.mrf.mxu0
  %v1702 = vadd.f32 %v1650, %v1701
  %1703 = vmatmul.f32.gmra.mxu0 %v1664
  %v1704 = vpop.f32.mrf.mxu0
  %v1705 = vadd.f32 %v1650, %v1704
  %1706 = vmatmul.f32.gmra.mxu0 %v1667
  %v1707 = vpop.f32.mrf.mxu0
  %v1708 = vadd.f32 %v1650, %v1707
  %1709 = vmatmul.f32.gmra.mxu0 %v1670
  %v1710 = vpop.f32.mrf.mxu0
  %v1711 = vadd.f32 %v1650, %v1710
  %1712 = vmatmul.f32.gmra.mxu0 %v1673
  %v1713 = vpop.f32.mrf.mxu0
  %v1714 = vadd.f32 %v1650, %v1713
  %1715 = vmatmul.f32.gmra.mxu0 %v1676
  %v1716 = vpop.f32.mrf.mxu0
  %v1717 = vadd.f32 %v1650, %v1716
  %1718 = vdwg.mxu0
  %1719 = vmatpush.msra.mxu0 0.0
  %1720 = vmatpush.msra.mxu0 0.0
  %1721 = vmatpush.msra.mxu0 0.0
  %1722 = vmatpush.msra.mxu0 0.0
  %1723 = vmatpush.msra.mxu0 0.0
  %1724 = vmatpush.msra.mxu0 0.0
  %1725 = vmatpush.msra.mxu0 0.0
  %1726 = vmatpush.msra.mxu0 0.0
  %1727 = vmatpush.msra.mxu0 0.0
  %1728 = vmatpush.msra.mxu0 0.0
  %1729 = vmatpush.msra.mxu0 0.0
  %1730 = vmatpush.msra.mxu0 0.0
  %1731 = vmatpush.msra.mxu0 %v1647
  %1732 = vmatpush.msra.mxu0 %v1645
  %1733 = vmatpush.msra.mxu0 %v1643
  %1734 = vmatpush.msra.mxu0 %v1641
  %1735 = vmatmul.f32.gmra.mxu0 %v1655
  %v1736 = vpop.f32.mrf.mxu0
  %v1737 = vadd.f32 %v1651, %v1736
  %1738 = vmatmul.f32.gmra.mxu0 %v1658
  %v1739 = vpop.f32.mrf.mxu0
  %v1740 = vadd.f32 %v1651, %v1739
  %1741 = vmatmul.f32.gmra.mxu0 %v1661
  %v1742 = vpop.f32.mrf.mxu0
  %v1743 = vadd.f32 %v1651, %v1742
  %1744 = vmatmul.f32.gmra.mxu0 %v1664
  %v1745 = vpop.f32.mrf.mxu0
  %v1746 = vadd.f32 %v1651, %v1745
  %1747 = vmatmul.f32.gmra.mxu0 %v1667
  %v1748 = vpop.f32.mrf.mxu0
  %v1749 = vadd.f32 %v1651, %v1748
  %1750 = vmatmul.f32.gmra.mxu0 %v1670
  %v1751 = vpop.f32.mrf.mxu0
  %v1752 = vadd.f32 %v1651, %v1751
  %1753 = vmatmul.f32.gmra.mxu0 %v1673
  %v1754 = vpop.f32.mrf.mxu0
  %v1755 = vadd.f32 %v1651, %v1754
  %1756 = vmatmul.f32.gmra.mxu0 %v1676
  %v1757 = vpop.f32.mrf.mxu0
  %v1758 = vadd.f32 %v1651, %v1757
  %1759 = vdwg.mxu0
  %vm1760 = vcmask 523264
  %1761 = vst.msk [vmem:[#allocation3] sm:$0xff] %vm1760, %v1696
  %1762 = vst.msk [vmem:[#allocation3 + $0x8] sm:$0xff] %vm1760, %v1699
  %1763 = vst.msk [vmem:[#allocation3 + $0x10] sm:$0xff] %vm1760, %v1702
  %1764 = vst.msk [vmem:[#allocation3 + $0x18] sm:$0xff] %vm1760, %v1705
  %1765 = vst.msk [vmem:[#allocation3 + $0x20] sm:$0xff] %vm1760, %v1708
  %1766 = vst.msk [vmem:[#allocation3 + $0x28] sm:$0xff] %vm1760, %v1711
  %1767 = vst.msk [vmem:[#allocation3 + $0x30] sm:$0xff] %vm1760, %v1714
  %1768 = vst.msk [vmem:[#allocation3 + $0x38] sm:$0xff] %vm1760, %v1717
  %1777 = vrot.lane.b32.xlu0 %v1696, 64
  %v1778 = vpop.permute.xlu0 %1777
  %1779 = vrot.lane.b32.xlu0 %v1699, 64
  %v1780 = vpop.permute.xlu0 %1779
  %1781 = vrot.lane.b32.xlu0 %v1702, 64
  %v1782 = vpop.permute.xlu0 %1781
  %1783 = vrot.lane.b32.xlu0 %v1705, 64
  %v1784 = vpop.permute.xlu0 %1783
  %1785 = vrot.lane.b32.xlu0 %v1708, 64
  %v1786 = vpop.permute.xlu0 %1785
  %1787 = vrot.lane.b32.xlu0 %v1711, 64
  %v1788 = vpop.permute.xlu0 %1787
  %1789 = vrot.lane.b32.xlu0 %v1714, 64
  %v1790 = vpop.permute.xlu0 %1789
  %1791 = vrot.lane.b32.xlu0 %v1717, 64
  %v1792 = vpop.permute.xlu0 %1791
  %s1801 = scalar_lea.vmem [#allocation3], 64
  %1802 = vst.msk [vmem:[%s1801] sm:$0xff] %vm1760, %v1778
  %1803 = vst.msk [vmem:[%s1801 + $0x8] sm:$0xff] %vm1760, %v1780
  %1804 = vst.msk [vmem:[%s1801 + $0x10] sm:$0xff] %vm1760, %v1782
  %1805 = vst.msk [vmem:[%s1801 + $0x18] sm:$0xff] %vm1760, %v1784
  %1806 = vst.msk [vmem:[%s1801 + $0x20] sm:$0xff] %vm1760, %v1786
  %1807 = vst.msk [vmem:[%s1801 + $0x28] sm:$0xff] %vm1760, %v1788
  %1808 = vst.msk [vmem:[%s1801 + $0x30] sm:$0xff] %vm1760, %v1790
  %1809 = vst.msk [vmem:[%s1801 + $0x38] sm:$0xff] %vm1760, %v1792
  %s1810 = scalar_lea.vmem [#allocation3], 128
  %1811 = vst.msk [vmem:[%s1810] sm:$0xff] %vm1760, %v1737
  %1812 = vst.msk [vmem:[%s1810 + $0x8] sm:$0xff] %vm1760, %v1740
  %1813 = vst.msk [vmem:[%s1810 + $0x10] sm:$0xff] %vm1760, %v1743
  %1814 = vst.msk [vmem:[%s1810 + $0x18] sm:$0xff] %vm1760, %v1746
  %1815 = vst.msk [vmem:[%s1810 + $0x20] sm:$0xff] %vm1760, %v1749
  %1816 = vst.msk [vmem:[%s1810 + $0x28] sm:$0xff] %vm1760, %v1752
  %1817 = vst.msk [vmem:[%s1810 + $0x30] sm:$0xff] %vm1760, %v1755
  %1818 = vst.msk [vmem:[%s1810 + $0x38] sm:$0xff] %vm1760, %v1758
  %1827 = vrot.lane.b32.xlu0 %v1737, 64
  %v1828 = vpop.permute.xlu0 %1827
  %1829 = vrot.lane.b32.xlu0 %v1740, 64
  %v1830 = vpop.permute.xlu0 %1829
  %1831 = vrot.lane.b32.xlu0 %v1743, 64
  %v1832 = vpop.permute.xlu0 %1831
  %1833 = vrot.lane.b32.xlu0 %v1746, 64
  %v1834 = vpop.permute.xlu0 %1833
  %1835 = vrot.lane.b32.xlu0 %v1749, 64
  %v1836 = vpop.permute.xlu0 %1835
  %1837 = vrot.lane.b32.xlu0 %v1752, 64
  %v1838 = vpop.permute.xlu0 %1837
  %1839 = vrot.lane.b32.xlu0 %v1755, 64
  %v1840 = vpop.permute.xlu0 %1839
  %1841 = vrot.lane.b32.xlu0 %v1758, 64
  %v1842 = vpop.permute.xlu0 %1841
  %s1851 = scalar_lea.vmem [#allocation3], 192
  %1852 = vst.msk [vmem:[%s1851] sm:$0xff] %vm1760, %v1828
  %1853 = vst.msk [vmem:[%s1851 + $0x8] sm:$0xff] %vm1760, %v1830
  %1854 = vst.msk [vmem:[%s1851 + $0x10] sm:$0xff] %vm1760, %v1832
  %1855 = vst.msk [vmem:[%s1851 + $0x18] sm:$0xff] %vm1760, %v1834
  %1856 = vst.msk [vmem:[%s1851 + $0x20] sm:$0xff] %vm1760, %v1836
  %1857 = vst.msk [vmem:[%s1851 + $0x28] sm:$0xff] %vm1760, %v1838
  %1858 = vst.msk [vmem:[%s1851 + $0x30] sm:$0xff] %vm1760, %v1840
  %1859 = vst.msk [vmem:[%s1851 + $0x38] sm:$0xff] %vm1760, %v1842
  %v1860 = vld [vmem:[%s6] sm:$0xff]
  %v1861 = vld [vmem:[%s6 + $0x8] sm:$0xff]
  %v1862 = vld [vmem:[%s6 + $0x10] sm:$0xff]
  %v1863 = vld [vmem:[%s6 + $0x18] sm:$0xff]
  %v1864 = vld [vmem:[%s6 + $0x20] sm:$0xff]
  %v1865 = vld [vmem:[%s6 + $0x28] sm:$0xff]
  %v1866 = vld [vmem:[%s6 + $0x30] sm:$0xff]
  %v1867 = vld [vmem:[%s6 + $0x38] sm:$0xff]
  %s1868 = scalar_lea.vmem %s6, 64
  %v1869 = vld [vmem:[%s1868] sm:$0xff]
  %v1870 = vld [vmem:[%s1868 + $0x8] sm:$0xff]
  %v1871 = vld [vmem:[%s1868 + $0x10] sm:$0xff]
  %v1872 = vld [vmem:[%s1868 + $0x18] sm:$0xff]
  %v1873 = vld [vmem:[%s1868 + $0x20] sm:$0xff]
  %v1874 = vld [vmem:[%s1868 + $0x28] sm:$0xff]
  %v1875 = vld [vmem:[%s1868 + $0x30] sm:$0xff]
  %v1876 = vld [vmem:[%s1868 + $0x38] sm:$0xff]
  %s1877 = scalar_lea.vmem %s6, 128
  %v1878 = vld [vmem:[%s1877] sm:$0xff]
  %v1879 = vld [vmem:[%s1877 + $0x8] sm:$0xff]
  %v1880 = vld [vmem:[%s1877 + $0x10] sm:$0xff]
  %v1881 = vld [vmem:[%s1877 + $0x18] sm:$0xff]
  %v1882 = vld [vmem:[%s1877 + $0x20] sm:$0xff]
  %v1883 = vld [vmem:[%s1877 + $0x28] sm:$0xff]
  %v1884 = vld [vmem:[%s1877 + $0x30] sm:$0xff]
  %v1885 = vld [vmem:[%s1877 + $0x38] sm:$0xff]
  %s1886 = scalar_lea.vmem %s6, 192
  %v1887 = vld [vmem:[%s1886] sm:$0xff]
  %v1888 = vld [vmem:[%s1886 + $0x8] sm:$0xff]
  %v1889 = vld [vmem:[%s1886 + $0x10] sm:$0xff]
  %v1890 = vld [vmem:[%s1886 + $0x18] sm:$0xff]
  %v1891 = vld [vmem:[%s1886 + $0x20] sm:$0xff]
  %v1892 = vld [vmem:[%s1886 + $0x28] sm:$0xff]
  %v1893 = vld [vmem:[%s1886 + $0x30] sm:$0xff]
  %v1894 = vld [vmem:[%s1886 + $0x38] sm:$0xff]
  %v1895 = vld [vmem:[#allocation3] sm:$0xff]
  %v1896 = vsel %vm1760, 0.0, 0
  %1898 = vmatpush.msra.mxu0 0.0
  %1899 = vmatpush.msra.mxu0 0.0
  %1900 = vmatpush.msra.mxu0 0.0
  %1901 = vmatpush.msra.mxu0 0.0
  %1902 = vmatpush.msra.mxu0 0.0
  %1903 = vmatpush.msra.mxu0 0.0
  %1904 = vmatpush.msra.mxu0 0.0
  %1905 = vmatpush.msra.mxu0 0.0
  %1906 = vmatpush.msra.mxu0 %v1867
  %1907 = vmatpush.msra.mxu0 %v1866
  %1908 = vmatpush.msra.mxu0 %v1865
  %1909 = vmatpush.msra.mxu0 %v1864
  %1910 = vmatpush.msra.mxu0 %v1863
  %1911 = vmatpush.msra.mxu0 %v1862
  %1912 = vmatpush.msra.mxu0 %v1861
  %1913 = vmatpush.msra.mxu0 %v1860
  %1914 = vmatmul.f32.gmra.mxu0 %v1896
  %v1915 = vpop.f32.mrf.mxu0
  %v1916 = vadd.f32 0.0, %v1915
  %1917 = vdwg.mxu0
  %v1918 = vadd.f32 %v1895, %v1916
  %v1919 = vxor.u32 %v1918, 2147483648
  %v1920 = vmul.f32 %v1919, 1.442695
  %v1921 = vpow.pop %v1920
  %v1922 = vadd.f32 %v1921, 1.0
  %v1923 = vrcp.pop %v1922
  %v1924 = vmul.f32 %v1922, %v1923
  %v1925 = vsub.f32 1.0, %v1924
  %v1926 = vmul.f32 %v1923, %v1925
  %v1927 = vadd.f32 %v1923, %v1926
  %vm1928 = vweird.f32 %v1922
  %vm1929 = vweird.f32 %v1923
  %vm1930 = vmor %vm1928, %vm1929
  %v1931 = vsel %vm1930, %v1923, %v1927
  %v1932 = vand.u32 2147483647, %v1922
  %vm1933 = vcmp.eq.f32.partialorder %v1932, 8.507059e+37
  %v1934 = vand.u32 %v1922, 2147483648
  %v1935 = vor.u32 1.1754944e-38, %v1934
  %v1936 = vsel %vm1933, %v1935, %v1931
  %v1937 = vmul.f32 1.0, %v1936
  %s1938 = scalar_lea.vmem [#allocation3], %s305
  %v1939 = vld [vmem:[%s1938] sm:$0xff]
  %1940 = vmatpush.msra.mxu0 0.0
  %1941 = vmatpush.msra.mxu0 0.0
  %1942 = vmatpush.msra.mxu0 0.0
  %1943 = vmatpush.msra.mxu0 0.0
  %1944 = vmatpush.msra.mxu0 0.0
  %1945 = vmatpush.msra.mxu0 0.0
  %1946 = vmatpush.msra.mxu0 0.0
  %1947 = vmatpush.msra.mxu0 0.0
  %1948 = vmatpush.msra.mxu0 %v1876
  %1949 = vmatpush.msra.mxu0 %v1875
  %1950 = vmatpush.msra.mxu0 %v1874
  %1951 = vmatpush.msra.mxu0 %v1873
  %1952 = vmatpush.msra.mxu0 %v1872
  %1953 = vmatpush.msra.mxu0 %v1871
  %1954 = vmatpush.msra.mxu0 %v1870
  %1955 = vmatpush.msra.mxu0 %v1869
  %1956 = vmatmul.f32.gmra.mxu0 %v1896
  %v1957 = vpop.f32.mrf.mxu0
  %v1958 = vadd.f32 0.0, %v1957
  %1959 = vdwg.mxu0
  %v1960 = vadd.f32 %v1939, %v1958
  %v1961 = vxor.u32 %v1960, 2147483648
  %v1962 = vmul.f32 %v1961, 1.442695
  %v1963 = vpow.pop %v1962
  %v1964 = vadd.f32 %v1963, 1.0
  %v1965 = vrcp.pop %v1964
  %v1966 = vmul.f32 %v1964, %v1965
  %v1967 = vsub.f32 1.0, %v1966
  %v1968 = vmul.f32 %v1965, %v1967
  %v1969 = vadd.f32 %v1965, %v1968
  %vm1970 = vweird.f32 %v1964
  %vm1971 = vweird.f32 %v1965
  %vm1972 = vmor %vm1970, %vm1971
  %v1973 = vsel %vm1972, %v1965, %v1969
  %v1974 = vand.u32 2147483647, %v1964
  %vm1975 = vcmp.eq.f32.partialorder %v1974, 8.507059e+37
  %v1976 = vand.u32 %v1964, 2147483648
  %v1977 = vor.u32 1.1754944e-38, %v1976
  %v1978 = vsel %vm1975, %v1977, %v1973
  %v1979 = vmul.f32 1.0, %v1978
  %s1980 = scalar_lea.vmem [#allocation3], %s348
  %v1981 = vld [vmem:[%s1980] sm:$0xff]
  %1982 = vmatpush.msra.mxu0 0.0
  %1983 = vmatpush.msra.mxu0 0.0
  %1984 = vmatpush.msra.mxu0 0.0
  %1985 = vmatpush.msra.mxu0 0.0
  %1986 = vmatpush.msra.mxu0 0.0
  %1987 = vmatpush.msra.mxu0 0.0
  %1988 = vmatpush.msra.mxu0 0.0
  %1989 = vmatpush.msra.mxu0 0.0
  %1990 = vmatpush.msra.mxu0 %v1885
  %1991 = vmatpush.msra.mxu0 %v1884
  %1992 = vmatpush.msra.mxu0 %v1883
  %1993 = vmatpush.msra.mxu0 %v1882
  %1994 = vmatpush.msra.mxu0 %v1881
  %1995 = vmatpush.msra.mxu0 %v1880
  %1996 = vmatpush.msra.mxu0 %v1879
  %1997 = vmatpush.msra.mxu0 %v1878
  %1998 = vmatmul.f32.gmra.mxu0 %v1896
  %v1999 = vpop.f32.mrf.mxu0
  %v2000 = vadd.f32 0.0, %v1999
  %2001 = vdwg.mxu0
  %v2002 = vadd.f32 %v1981, %v2000
  %v2003 = vtanh.pop %v2002
  %s2004 = scalar_lea.vmem [#allocation3], %s373
  %v2005 = vld [vmem:[%s2004] sm:$0xff]
  %2006 = vmatpush.msra.mxu0 0.0
  %2007 = vmatpush.msra.mxu0 0.0
  %2008 = vmatpush.msra.mxu0 0.0
  %2009 = vmatpush.msra.mxu0 0.0
  %2010 = vmatpush.msra.mxu0 0.0
  %2011 = vmatpush.msra.mxu0 0.0
  %2012 = vmatpush.msra.mxu0 0.0
  %2013 = vmatpush.msra.mxu0 0.0
  %2014 = vmatpush.msra.mxu0 %v1894
  %2015 = vmatpush.msra.mxu0 %v1893
  %2016 = vmatpush.msra.mxu0 %v1892
  %2017 = vmatpush.msra.mxu0 %v1891
  %2018 = vmatpush.msra.mxu0 %v1890
  %2019 = vmatpush.msra.mxu0 %v1889
  %2020 = vmatpush.msra.mxu0 %v1888
  %2021 = vmatpush.msra.mxu0 %v1887
  %2022 = vmatmul.f32.gmra.mxu0 %v1896
  %v2023 = vpop.f32.mrf.mxu0
  %v2024 = vadd.f32 0.0, %v2023
  %2025 = vdwg.mxu0
  %v2026 = vadd.f32 %v2005, %v2024
  %v2027 = vxor.u32 %v2026, 2147483648
  %v2028 = vmul.f32 %v2027, 1.442695
  %v2029 = vpow.pop %v2028
  %v2030 = vadd.f32 %v2029, 1.0
  %v2031 = vrcp.pop %v2030
  %v2032 = vmul.f32 %v2030, %v2031
  %v2033 = vsub.f32 1.0, %v2032
  %v2034 = vmul.f32 %v2031, %v2033
  %v2035 = vadd.f32 %v2031, %v2034
  %vm2036 = vweird.f32 %v2030
  %vm2037 = vweird.f32 %v2031
  %vm2038 = vmor %vm2036, %vm2037
  %v2039 = vsel %vm2038, %v2031, %v2035
  %v2040 = vand.u32 2147483647, %v2030
  %vm2041 = vcmp.eq.f32.partialorder %v2040, 8.507059e+37
  %v2042 = vand.u32 %v2030, 2147483648
  %v2043 = vor.u32 1.1754944e-38, %v2042
  %v2044 = vsel %vm2041, %v2043, %v2039
  %v2045 = vmul.f32 1.0, %v2044
  %v2046 = vmul.f32 %v1979, 0.0
  %v2047 = vmul.f32 %v1937, %v2003
  %v2048 = vadd.f32 %v2046, %v2047
  %v2049 = vtanh.pop %v2048
  %v2050 = vmul.f32 %v2045, %v2049
  %v2051 = vsel %vm426, %v2050, 0.0
  %v2052 = vsel %vm426, %v2048, 0.0
  %2053 = vst.msk [vmem:[#allocation6] sm:$0xff] %vm1760, %v2051
  %s2054 = scalar_lea.vmem [#allocation3], 8
  %v2055 = vld [vmem:[%s2054] sm:$0xff]
  %v2057 = vsel %vm1760, %v2051, 0
  %2059 = vmatpush.msra.mxu0 0.0
  %2060 = vmatpush.msra.mxu0 0.0
  %2061 = vmatpush.msra.mxu0 0.0
  %2062 = vmatpush.msra.mxu0 0.0
  %2063 = vmatpush.msra.mxu0 0.0
  %2064 = vmatpush.msra.mxu0 0.0
  %2065 = vmatpush.msra.mxu0 0.0
  %2066 = vmatpush.msra.mxu0 0.0
  %2067 = vmatpush.msra.mxu0 %v1867
  %2068 = vmatpush.msra.mxu0 %v1866
  %2069 = vmatpush.msra.mxu0 %v1865
  %2070 = vmatpush.msra.mxu0 %v1864
  %2071 = vmatpush.msra.mxu0 %v1863
  %2072 = vmatpush.msra.mxu0 %v1862
  %2073 = vmatpush.msra.mxu0 %v1861
  %2074 = vmatpush.msra.mxu0 %v1860
  %2075 = vmatmul.f32.gmra.mxu0 %v2057
  %v2076 = vpop.f32.mrf.mxu0
  %v2077 = vadd.f32 0.0, %v2076
  %2078 = vdwg.mxu0
  %v2079 = vadd.f32 %v2055, %v2077
  %v2080 = vxor.u32 %v2079, 2147483648
  %v2081 = vmul.f32 %v2080, 1.442695
  %v2082 = vpow.pop %v2081
  %v2083 = vadd.f32 %v2082, 1.0
  %v2084 = vrcp.pop %v2083
  %v2085 = vmul.f32 %v2083, %v2084
  %v2086 = vsub.f32 1.0, %v2085
  %v2087 = vmul.f32 %v2084, %v2086
  %v2088 = vadd.f32 %v2084, %v2087
  %vm2089 = vweird.f32 %v2083
  %vm2090 = vweird.f32 %v2084
  %vm2091 = vmor %vm2089, %vm2090
  %v2092 = vsel %vm2091, %v2084, %v2088
  %v2093 = vand.u32 2147483647, %v2083
  %vm2094 = vcmp.eq.f32.partialorder %v2093, 8.507059e+37
  %v2095 = vand.u32 %v2083, 2147483648
  %v2096 = vor.u32 1.1754944e-38, %v2095
  %v2097 = vsel %vm2094, %v2096, %v2092
  %v2098 = vmul.f32 1.0, %v2097
  %s2099 = scalar_lea.vmem [#allocation3], %s475
  %v2100 = vld [vmem:[%s2099] sm:$0xff]
  %2101 = vmatpush.msra.mxu0 0.0
  %2102 = vmatpush.msra.mxu0 0.0
  %2103 = vmatpush.msra.mxu0 0.0
  %2104 = vmatpush.msra.mxu0 0.0
  %2105 = vmatpush.msra.mxu0 0.0
  %2106 = vmatpush.msra.mxu0 0.0
  %2107 = vmatpush.msra.mxu0 0.0
  %2108 = vmatpush.msra.mxu0 0.0
  %2109 = vmatpush.msra.mxu0 %v1876
  %2110 = vmatpush.msra.mxu0 %v1875
  %2111 = vmatpush.msra.mxu0 %v1874
  %2112 = vmatpush.msra.mxu0 %v1873
  %2113 = vmatpush.msra.mxu0 %v1872
  %2114 = vmatpush.msra.mxu0 %v1871
  %2115 = vmatpush.msra.mxu0 %v1870
  %2116 = vmatpush.msra.mxu0 %v1869
  %2117 = vmatmul.f32.gmra.mxu0 %v2057
  %v2118 = vpop.f32.mrf.mxu0
  %v2119 = vadd.f32 0.0, %v2118
  %2120 = vdwg.mxu0
  %v2121 = vadd.f32 %v2100, %v2119
  %v2122 = vxor.u32 %v2121, 2147483648
  %v2123 = vmul.f32 %v2122, 1.442695
  %v2124 = vpow.pop %v2123
  %v2125 = vadd.f32 %v2124, 1.0
  %v2126 = vrcp.pop %v2125
  %v2127 = vmul.f32 %v2125, %v2126
  %v2128 = vsub.f32 1.0, %v2127
  %v2129 = vmul.f32 %v2126, %v2128
  %v2130 = vadd.f32 %v2126, %v2129
  %vm2131 = vweird.f32 %v2125
  %vm2132 = vweird.f32 %v2126
  %vm2133 = vmor %vm2131, %vm2132
  %v2134 = vsel %vm2133, %v2126, %v2130
  %v2135 = vand.u32 2147483647, %v2125
  %vm2136 = vcmp.eq.f32.partialorder %v2135, 8.507059e+37
  %v2137 = vand.u32 %v2125, 2147483648
  %v2138 = vor.u32 1.1754944e-38, %v2137
  %v2139 = vsel %vm2136, %v2138, %v2134
  %v2140 = vmul.f32 1.0, %v2139
  %s2141 = scalar_lea.vmem [#allocation3], %s518
  %v2142 = vld [vmem:[%s2141] sm:$0xff]
  %2143 = vmatpush.msra.mxu0 0.0
  %2144 = vmatpush.msra.mxu0 0.0
  %2145 = vmatpush.msra.mxu0 0.0
  %2146 = vmatpush.msra.mxu0 0.0
  %2147 = vmatpush.msra.mxu0 0.0
  %2148 = vmatpush.msra.mxu0 0.0
  %2149 = vmatpush.msra.mxu0 0.0
  %2150 = vmatpush.msra.mxu0 0.0
  %2151 = vmatpush.msra.mxu0 %v1885
  %2152 = vmatpush.msra.mxu0 %v1884
  %2153 = vmatpush.msra.mxu0 %v1883
  %2154 = vmatpush.msra.mxu0 %v1882
  %2155 = vmatpush.msra.mxu0 %v1881
  %2156 = vmatpush.msra.mxu0 %v1880
  %2157 = vmatpush.msra.mxu0 %v1879
  %2158 = vmatpush.msra.mxu0 %v1878
  %2159 = vmatmul.f32.gmra.mxu0 %v2057
  %v2160 = vpop.f32.mrf.mxu0
  %v2161 = vadd.f32 0.0, %v2160
  %2162 = vdwg.mxu0
  %v2163 = vadd.f32 %v2142, %v2161
  %v2164 = vtanh.pop %v2163
  %s2165 = scalar_lea.vmem [#allocation3], %s543
  %v2166 = vld [vmem:[%s2165] sm:$0xff]
  %2167 = vmatpush.msra.mxu0 0.0
  %2168 = vmatpush.msra.mxu0 0.0
  %2169 = vmatpush.msra.mxu0 0.0
  %2170 = vmatpush.msra.mxu0 0.0
  %2171 = vmatpush.msra.mxu0 0.0
  %2172 = vmatpush.msra.mxu0 0.0
  %2173 = vmatpush.msra.mxu0 0.0
  %2174 = vmatpush.msra.mxu0 0.0
  %2175 = vmatpush.msra.mxu0 %v1894
  %2176 = vmatpush.msra.mxu0 %v1893
  %2177 = vmatpush.msra.mxu0 %v1892
  %2178 = vmatpush.msra.mxu0 %v1891
  %2179 = vmatpush.msra.mxu0 %v1890
  %2180 = vmatpush.msra.mxu0 %v1889
  %2181 = vmatpush.msra.mxu0 %v1888
  %2182 = vmatpush.msra.mxu0 %v1887
  %2183 = vmatmul.f32.gmra.mxu0 %v2057
  %v2184 = vpop.f32.mrf.mxu0
  %v2185 = vadd.f32 0.0, %v2184
  %2186 = vdwg.mxu0
  %v2187 = vadd.f32 %v2166, %v2185
  %v2188 = vxor.u32 %v2187, 2147483648
  %v2189 = vmul.f32 %v2188, 1.442695
  %v2190 = vpow.pop %v2189
  %v2191 = vadd.f32 %v2190, 1.0
  %v2192 = vrcp.pop %v2191
  %v2193 = vmul.f32 %v2191, %v2192
  %v2194 = vsub.f32 1.0, %v2193
  %v2195 = vmul.f32 %v2192, %v2194
  %v2196 = vadd.f32 %v2192, %v2195
  %vm2197 = vweird.f32 %v2191
  %vm2198 = vweird.f32 %v2192
  %vm2199 = vmor %vm2197, %vm2198
  %v2200 = vsel %vm2199, %v2192, %v2196
  %v2201 = vand.u32 2147483647, %v2191
  %vm2202 = vcmp.eq.f32.partialorder %v2201, 8.507059e+37
  %v2203 = vand.u32 %v2191, 2147483648
  %v2204 = vor.u32 1.1754944e-38, %v2203
  %v2205 = vsel %vm2202, %v2204, %v2200
  %v2206 = vmul.f32 1.0, %v2205
  %v2207 = vmul.f32 %v2140, %v2052
  %v2208 = vmul.f32 %v2098, %v2164
  %v2209 = vadd.f32 %v2207, %v2208
  %v2210 = vtanh.pop %v2209
  %v2211 = vmul.f32 %v2206, %v2210
  %v2212 = vsel %vm596, %v2211, %v2051
  %v2213 = vsel %vm596, %v2209, %v2052
  %v2214 = vsel %vm596, %v2211, 0.0
  %s2215 = scalar_lea.vmem [#allocation6], 8
  %2216 = vst.msk [vmem:[%s2215] sm:$0xff] %vm1760, %v2214
  %s2217 = scalar_lea.vmem [#allocation3], 16
  %v2218 = vld [vmem:[%s2217] sm:$0xff]
  %v2220 = vsel %vm1760, %v2212, 0
  %2222 = vmatpush.msra.mxu0 0.0
  %2223 = vmatpush.msra.mxu0 0.0
  %2224 = vmatpush.msra.mxu0 0.0
  %2225 = vmatpush.msra.mxu0 0.0
  %2226 = vmatpush.msra.mxu0 0.0
  %2227 = vmatpush.msra.mxu0 0.0
  %2228 = vmatpush.msra.mxu0 0.0
  %2229 = vmatpush.msra.mxu0 0.0
  %2230 = vmatpush.msra.mxu0 %v1867
  %2231 = vmatpush.msra.mxu0 %v1866
  %2232 = vmatpush.msra.mxu0 %v1865
  %2233 = vmatpush.msra.mxu0 %v1864
  %2234 = vmatpush.msra.mxu0 %v1863
  %2235 = vmatpush.msra.mxu0 %v1862
  %2236 = vmatpush.msra.mxu0 %v1861
  %2237 = vmatpush.msra.mxu0 %v1860
  %2238 = vmatmul.f32.gmra.mxu0 %v2220
  %v2239 = vpop.f32.mrf.mxu0
  %v2240 = vadd.f32 0.0, %v2239
  %2241 = vdwg.mxu0
  %v2242 = vadd.f32 %v2218, %v2240
  %v2243 = vxor.u32 %v2242, 2147483648
  %v2244 = vmul.f32 %v2243, 1.442695
  %v2245 = vpow.pop %v2244
  %v2246 = vadd.f32 %v2245, 1.0
  %v2247 = vrcp.pop %v2246
  %v2248 = vmul.f32 %v2246, %v2247
  %v2249 = vsub.f32 1.0, %v2248
  %v2250 = vmul.f32 %v2247, %v2249
  %v2251 = vadd.f32 %v2247, %v2250
  %vm2252 = vweird.f32 %v2246
  %vm2253 = vweird.f32 %v2247
  %vm2254 = vmor %vm2252, %vm2253
  %v2255 = vsel %vm2254, %v2247, %v2251
  %v2256 = vand.u32 2147483647, %v2246
  %vm2257 = vcmp.eq.f32.partialorder %v2256, 8.507059e+37
  %v2258 = vand.u32 %v2246, 2147483648
  %v2259 = vor.u32 1.1754944e-38, %v2258
  %v2260 = vsel %vm2257, %v2259, %v2255
  %v2261 = vmul.f32 1.0, %v2260
  %s2262 = scalar_lea.vmem [#allocation3], %s647
  %v2263 = vld [vmem:[%s2262] sm:$0xff]
  %2264 = vmatpush.msra.mxu0 0.0
  %2265 = vmatpush.msra.mxu0 0.0
  %2266 = vmatpush.msra.mxu0 0.0
  %2267 = vmatpush.msra.mxu0 0.0
  %2268 = vmatpush.msra.mxu0 0.0
  %2269 = vmatpush.msra.mxu0 0.0
  %2270 = vmatpush.msra.mxu0 0.0
  %2271 = vmatpush.msra.mxu0 0.0
  %2272 = vmatpush.msra.mxu0 %v1876
  %2273 = vmatpush.msra.mxu0 %v1875
  %2274 = vmatpush.msra.mxu0 %v1874
  %2275 = vmatpush.msra.mxu0 %v1873
  %2276 = vmatpush.msra.mxu0 %v1872
  %2277 = vmatpush.msra.mxu0 %v1871
  %2278 = vmatpush.msra.mxu0 %v1870
  %2279 = vmatpush.msra.mxu0 %v1869
  %2280 = vmatmul.f32.gmra.mxu0 %v2220
  %v2281 = vpop.f32.mrf.mxu0
  %v2282 = vadd.f32 0.0, %v2281
  %2283 = vdwg.mxu0
  %v2284 = vadd.f32 %v2263, %v2282
  %v2285 = vxor.u32 %v2284, 2147483648
  %v2286 = vmul.f32 %v2285, 1.442695
  %v2287 = vpow.pop %v2286
  %v2288 = vadd.f32 %v2287, 1.0
  %v2289 = vrcp.pop %v2288
  %v2290 = vmul.f32 %v2288, %v2289
  %v2291 = vsub.f32 1.0, %v2290
  %v2292 = vmul.f32 %v2289, %v2291
  %v2293 = vadd.f32 %v2289, %v2292
  %vm2294 = vweird.f32 %v2288
  %vm2295 = vweird.f32 %v2289
  %vm2296 = vmor %vm2294, %vm2295
  %v2297 = vsel %vm2296, %v2289, %v2293
  %v2298 = vand.u32 2147483647, %v2288
  %vm2299 = vcmp.eq.f32.partialorder %v2298, 8.507059e+37
  %v2300 = vand.u32 %v2288, 2147483648
  %v2301 = vor.u32 1.1754944e-38, %v2300
  %v2302 = vsel %vm2299, %v2301, %v2297
  %v2303 = vmul.f32 1.0, %v2302
  %s2304 = scalar_lea.vmem [#allocation3], %s690
  %v2305 = vld [vmem:[%s2304] sm:$0xff]
  %2306 = vmatpush.msra.mxu0 0.0
  %2307 = vmatpush.msra.mxu0 0.0
  %2308 = vmatpush.msra.mxu0 0.0
  %2309 = vmatpush.msra.mxu0 0.0
  %2310 = vmatpush.msra.mxu0 0.0
  %2311 = vmatpush.msra.mxu0 0.0
  %2312 = vmatpush.msra.mxu0 0.0
  %2313 = vmatpush.msra.mxu0 0.0
  %2314 = vmatpush.msra.mxu0 %v1885
  %2315 = vmatpush.msra.mxu0 %v1884
  %2316 = vmatpush.msra.mxu0 %v1883
  %2317 = vmatpush.msra.mxu0 %v1882
  %2318 = vmatpush.msra.mxu0 %v1881
  %2319 = vmatpush.msra.mxu0 %v1880
  %2320 = vmatpush.msra.mxu0 %v1879
  %2321 = vmatpush.msra.mxu0 %v1878
  %2322 = vmatmul.f32.gmra.mxu0 %v2220
  %v2323 = vpop.f32.mrf.mxu0
  %v2324 = vadd.f32 0.0, %v2323
  %2325 = vdwg.mxu0
  %v2326 = vadd.f32 %v2305, %v2324
  %v2327 = vtanh.pop %v2326
  %s2328 = scalar_lea.vmem [#allocation3], %s715
  %v2329 = vld [vmem:[%s2328] sm:$0xff]
  %2330 = vmatpush.msra.mxu0 0.0
  %2331 = vmatpush.msra.mxu0 0.0
  %2332 = vmatpush.msra.mxu0 0.0
  %2333 = vmatpush.msra.mxu0 0.0
  %2334 = vmatpush.msra.mxu0 0.0
  %2335 = vmatpush.msra.mxu0 0.0
  %2336 = vmatpush.msra.mxu0 0.0
  %2337 = vmatpush.msra.mxu0 0.0
  %2338 = vmatpush.msra.mxu0 %v1894
  %2339 = vmatpush.msra.mxu0 %v1893
  %2340 = vmatpush.msra.mxu0 %v1892
  %2341 = vmatpush.msra.mxu0 %v1891
  %2342 = vmatpush.msra.mxu0 %v1890
  %2343 = vmatpush.msra.mxu0 %v1889
  %2344 = vmatpush.msra.mxu0 %v1888
  %2345 = vmatpush.msra.mxu0 %v1887
  %2346 = vmatmul.f32.gmra.mxu0 %v2220
  %v2347 = vpop.f32.mrf.mxu0
  %v2348 = vadd.f32 0.0, %v2347
  %2349 = vdwg.mxu0
  %v2350 = vadd.f32 %v2329, %v2348
  %v2351 = vxor.u32 %v2350, 2147483648
  %v2352 = vmul.f32 %v2351, 1.442695
  %v2353 = vpow.pop %v2352
  %v2354 = vadd.f32 %v2353, 1.0
  %v2355 = vrcp.pop %v2354
  %v2356 = vmul.f32 %v2354, %v2355
  %v2357 = vsub.f32 1.0, %v2356
  %v2358 = vmul.f32 %v2355, %v2357
  %v2359 = vadd.f32 %v2355, %v2358
  %vm2360 = vweird.f32 %v2354
  %vm2361 = vweird.f32 %v2355
  %vm2362 = vmor %vm2360, %vm2361
  %v2363 = vsel %vm2362, %v2355, %v2359
  %v2364 = vand.u32 2147483647, %v2354
  %vm2365 = vcmp.eq.f32.partialorder %v2364, 8.507059e+37
  %v2366 = vand.u32 %v2354, 2147483648
  %v2367 = vor.u32 1.1754944e-38, %v2366
  %v2368 = vsel %vm2365, %v2367, %v2363
  %v2369 = vmul.f32 1.0, %v2368
  %v2370 = vmul.f32 %v2303, %v2213
  %v2371 = vmul.f32 %v2261, %v2327
  %v2372 = vadd.f32 %v2370, %v2371
  %v2373 = vtanh.pop %v2372
  %v2374 = vmul.f32 %v2369, %v2373
  %v2375 = vsel %vm768, %v2374, %v2212
  %v2376 = vsel %vm768, %v2372, %v2213
  %v2377 = vsel %vm768, %v2374, 0.0
  %s2378 = scalar_lea.vmem [#allocation6], 16
  %2379 = vst.msk [vmem:[%s2378] sm:$0xff] %vm1760, %v2377
  %s2380 = scalar_lea.vmem [#allocation3], 24
  %v2381 = vld [vmem:[%s2380] sm:$0xff]
  %v2383 = vsel %vm1760, %v2375, 0
  %2385 = vmatpush.msra.mxu0 0.0
  %2386 = vmatpush.msra.mxu0 0.0
  %2387 = vmatpush.msra.mxu0 0.0
  %2388 = vmatpush.msra.mxu0 0.0
  %2389 = vmatpush.msra.mxu0 0.0
  %2390 = vmatpush.msra.mxu0 0.0
  %2391 = vmatpush.msra.mxu0 0.0
  %2392 = vmatpush.msra.mxu0 0.0
  %2393 = vmatpush.msra.mxu0 %v1867
  %2394 = vmatpush.msra.mxu0 %v1866
  %2395 = vmatpush.msra.mxu0 %v1865
  %2396 = vmatpush.msra.mxu0 %v1864
  %2397 = vmatpush.msra.mxu0 %v1863
  %2398 = vmatpush.msra.mxu0 %v1862
  %2399 = vmatpush.msra.mxu0 %v1861
  %2400 = vmatpush.msra.mxu0 %v1860
  %2401 = vmatmul.f32.gmra.mxu0 %v2383
  %v2402 = vpop.f32.mrf.mxu0
  %v2403 = vadd.f32 0.0, %v2402
  %2404 = vdwg.mxu0
  %v2405 = vadd.f32 %v2381, %v2403
  %v2406 = vxor.u32 %v2405, 2147483648
  %v2407 = vmul.f32 %v2406, 1.442695
  %v2408 = vpow.pop %v2407
  %v2409 = vadd.f32 %v2408, 1.0
  %v2410 = vrcp.pop %v2409
  %v2411 = vmul.f32 %v2409, %v2410
  %v2412 = vsub.f32 1.0, %v2411
  %v2413 = vmul.f32 %v2410, %v2412
  %v2414 = vadd.f32 %v2410, %v2413
  %vm2415 = vweird.f32 %v2409
  %vm2416 = vweird.f32 %v2410
  %vm2417 = vmor %vm2415, %vm2416
  %v2418 = vsel %vm2417, %v2410, %v2414
  %v2419 = vand.u32 2147483647, %v2409
  %vm2420 = vcmp.eq.f32.partialorder %v2419, 8.507059e+37
  %v2421 = vand.u32 %v2409, 2147483648
  %v2422 = vor.u32 1.1754944e-38, %v2421
  %v2423 = vsel %vm2420, %v2422, %v2418
  %v2424 = vmul.f32 1.0, %v2423
  %s2425 = scalar_lea.vmem [#allocation3], %s819
  %v2426 = vld [vmem:[%s2425] sm:$0xff]
  %2427 = vmatpush.msra.mxu0 0.0
  %2428 = vmatpush.msra.mxu0 0.0
  %2429 = vmatpush.msra.mxu0 0.0
  %2430 = vmatpush.msra.mxu0 0.0
  %2431 = vmatpush.msra.mxu0 0.0
  %2432 = vmatpush.msra.mxu0 0.0
  %2433 = vmatpush.msra.mxu0 0.0
  %2434 = vmatpush.msra.mxu0 0.0
  %2435 = vmatpush.msra.mxu0 %v1876
  %2436 = vmatpush.msra.mxu0 %v1875
  %2437 = vmatpush.msra.mxu0 %v1874
  %2438 = vmatpush.msra.mxu0 %v1873
  %2439 = vmatpush.msra.mxu0 %v1872
  %2440 = vmatpush.msra.mxu0 %v1871
  %2441 = vmatpush.msra.mxu0 %v1870
  %2442 = vmatpush.msra.mxu0 %v1869
  %2443 = vmatmul.f32.gmra.mxu0 %v2383
  %v2444 = vpop.f32.mrf.mxu0
  %v2445 = vadd.f32 0.0, %v2444
  %2446 = vdwg.mxu0
  %v2447 = vadd.f32 %v2426, %v2445
  %v2448 = vxor.u32 %v2447, 2147483648
  %v2449 = vmul.f32 %v2448, 1.442695
  %v2450 = vpow.pop %v2449
  %v2451 = vadd.f32 %v2450, 1.0
  %v2452 = vrcp.pop %v2451
  %v2453 = vmul.f32 %v2451, %v2452
  %v2454 = vsub.f32 1.0, %v2453
  %v2455 = vmul.f32 %v2452, %v2454
  %v2456 = vadd.f32 %v2452, %v2455
  %vm2457 = vweird.f32 %v2451
  %vm2458 = vweird.f32 %v2452
  %vm2459 = vmor %vm2457, %vm2458
  %v2460 = vsel %vm2459, %v2452, %v2456
  %v2461 = vand.u32 2147483647, %v2451
  %vm2462 = vcmp.eq.f32.partialorder %v2461, 8.507059e+37
  %v2463 = vand.u32 %v2451, 2147483648
  %v2464 = vor.u32 1.1754944e-38, %v2463
  %v2465 = vsel %vm2462, %v2464, %v2460
  %v2466 = vmul.f32 1.0, %v2465
  %s2467 = scalar_lea.vmem [#allocation3], %s862
  %v2468 = vld [vmem:[%s2467] sm:$0xff]
  %2469 = vmatpush.msra.mxu0 0.0
  %2470 = vmatpush.msra.mxu0 0.0
  %2471 = vmatpush.msra.mxu0 0.0
  %2472 = vmatpush.msra.mxu0 0.0
  %2473 = vmatpush.msra.mxu0 0.0
  %2474 = vmatpush.msra.mxu0 0.0
  %2475 = vmatpush.msra.mxu0 0.0
  %2476 = vmatpush.msra.mxu0 0.0
  %2477 = vmatpush.msra.mxu0 %v1885
  %2478 = vmatpush.msra.mxu0 %v1884
  %2479 = vmatpush.msra.mxu0 %v1883
  %2480 = vmatpush.msra.mxu0 %v1882
  %2481 = vmatpush.msra.mxu0 %v1881
  %2482 = vmatpush.msra.mxu0 %v1880
  %2483 = vmatpush.msra.mxu0 %v1879
  %2484 = vmatpush.msra.mxu0 %v1878
  %2485 = vmatmul.f32.gmra.mxu0 %v2383
  %v2486 = vpop.f32.mrf.mxu0
  %v2487 = vadd.f32 0.0, %v2486
  %2488 = vdwg.mxu0
  %v2489 = vadd.f32 %v2468, %v2487
  %v2490 = vtanh.pop %v2489
  %s2491 = scalar_lea.vmem [#allocation3], %s887
  %v2492 = vld [vmem:[%s2491] sm:$0xff]
  %2493 = vmatpush.msra.mxu0 0.0
  %2494 = vmatpush.msra.mxu0 0.0
  %2495 = vmatpush.msra.mxu0 0.0
  %2496 = vmatpush.msra.mxu0 0.0
  %2497 = vmatpush.msra.mxu0 0.0
  %2498 = vmatpush.msra.mxu0 0.0
  %2499 = vmatpush.msra.mxu0 0.0
  %2500 = vmatpush.msra.mxu0 0.0
  %2501 = vmatpush.msra.mxu0 %v1894
  %2502 = vmatpush.msra.mxu0 %v1893
  %2503 = vmatpush.msra.mxu0 %v1892
  %2504 = vmatpush.msra.mxu0 %v1891
  %2505 = vmatpush.msra.mxu0 %v1890
  %2506 = vmatpush.msra.mxu0 %v1889
  %2507 = vmatpush.msra.mxu0 %v1888
  %2508 = vmatpush.msra.mxu0 %v1887
  %2509 = vmatmul.f32.gmra.mxu0 %v2383
  %v2510 = vpop.f32.mrf.mxu0
  %v2511 = vadd.f32 0.0, %v2510
  %2512 = vdwg.mxu0
  %v2513 = vadd.f32 %v2492, %v2511
  %v2514 = vxor.u32 %v2513, 2147483648
  %v2515 = vmul.f32 %v2514, 1.442695
  %v2516 = vpow.pop %v2515
  %v2517 = vadd.f32 %v2516, 1.0
  %v2518 = vrcp.pop %v2517
  %v2519 = vmul.f32 %v2517, %v2518
  %v2520 = vsub.f32 1.0, %v2519
  %v2521 = vmul.f32 %v2518, %v2520
  %v2522 = vadd.f32 %v2518, %v2521
  %vm2523 = vweird.f32 %v2517
  %vm2524 = vweird.f32 %v2518
  %vm2525 = vmor %vm2523, %vm2524
  %v2526 = vsel %vm2525, %v2518, %v2522
  %v2527 = vand.u32 2147483647, %v2517
  %vm2528 = vcmp.eq.f32.partialorder %v2527, 8.507059e+37
  %v2529 = vand.u32 %v2517, 2147483648
  %v2530 = vor.u32 1.1754944e-38, %v2529
  %v2531 = vsel %vm2528, %v2530, %v2526
  %v2532 = vmul.f32 1.0, %v2531
  %v2533 = vmul.f32 %v2466, %v2376
  %v2534 = vmul.f32 %v2424, %v2490
  %v2535 = vadd.f32 %v2533, %v2534
  %v2536 = vtanh.pop %v2535
  %v2537 = vmul.f32 %v2532, %v2536
  %v2538 = vsel %vm940, %v2537, %v2375
  %v2539 = vsel %vm940, %v2535, %v2376
  %v2540 = vsel %vm940, %v2537, 0.0
  %s2541 = scalar_lea.vmem [#allocation6], 24
  %2542 = vst.msk [vmem:[%s2541] sm:$0xff] %vm1760, %v2540
  %s2543 = scalar_lea.vmem [#allocation3], 32
  %v2544 = vld [vmem:[%s2543] sm:$0xff]
  %v2546 = vsel %vm1760, %v2538, 0
  %2548 = vmatpush.msra.mxu0 0.0
  %2549 = vmatpush.msra.mxu0 0.0
  %2550 = vmatpush.msra.mxu0 0.0
  %2551 = vmatpush.msra.mxu0 0.0
  %2552 = vmatpush.msra.mxu0 0.0
  %2553 = vmatpush.msra.mxu0 0.0
  %2554 = vmatpush.msra.mxu0 0.0
  %2555 = vmatpush.msra.mxu0 0.0
  %2556 = vmatpush.msra.mxu0 %v1867
  %2557 = vmatpush.msra.mxu0 %v1866
  %2558 = vmatpush.msra.mxu0 %v1865
  %2559 = vmatpush.msra.mxu0 %v1864
  %2560 = vmatpush.msra.mxu0 %v1863
  %2561 = vmatpush.msra.mxu0 %v1862
  %2562 = vmatpush.msra.mxu0 %v1861
  %2563 = vmatpush.msra.mxu0 %v1860
  %2564 = vmatmul.f32.gmra.mxu0 %v2546
  %v2565 = vpop.f32.mrf.mxu0
  %v2566 = vadd.f32 0.0, %v2565
  %2567 = vdwg.mxu0
  %v2568 = vadd.f32 %v2544, %v2566
  %v2569 = vxor.u32 %v2568, 2147483648
  %v2570 = vmul.f32 %v2569, 1.442695
  %v2571 = vpow.pop %v2570
  %v2572 = vadd.f32 %v2571, 1.0
  %v2573 = vrcp.pop %v2572
  %v2574 = vmul.f32 %v2572, %v2573
  %v2575 = vsub.f32 1.0, %v2574
  %v2576 = vmul.f32 %v2573, %v2575
  %v2577 = vadd.f32 %v2573, %v2576
  %vm2578 = vweird.f32 %v2572
  %vm2579 = vweird.f32 %v2573
  %vm2580 = vmor %vm2578, %vm2579
  %v2581 = vsel %vm2580, %v2573, %v2577
  %v2582 = vand.u32 2147483647, %v2572
  %vm2583 = vcmp.eq.f32.partialorder %v2582, 8.507059e+37
  %v2584 = vand.u32 %v2572, 2147483648
  %v2585 = vor.u32 1.1754944e-38, %v2584
  %v2586 = vsel %vm2583, %v2585, %v2581
  %v2587 = vmul.f32 1.0, %v2586
  %s2588 = scalar_lea.vmem [#allocation3], %s991
  %v2589 = vld [vmem:[%s2588] sm:$0xff]
  %2590 = vmatpush.msra.mxu0 0.0
  %2591 = vmatpush.msra.mxu0 0.0
  %2592 = vmatpush.msra.mxu0 0.0
  %2593 = vmatpush.msra.mxu0 0.0
  %2594 = vmatpush.msra.mxu0 0.0
  %2595 = vmatpush.msra.mxu0 0.0
  %2596 = vmatpush.msra.mxu0 0.0
  %2597 = vmatpush.msra.mxu0 0.0
  %2598 = vmatpush.msra.mxu0 %v1876
  %2599 = vmatpush.msra.mxu0 %v1875
  %2600 = vmatpush.msra.mxu0 %v1874
  %2601 = vmatpush.msra.mxu0 %v1873
  %2602 = vmatpush.msra.mxu0 %v1872
  %2603 = vmatpush.msra.mxu0 %v1871
  %2604 = vmatpush.msra.mxu0 %v1870
  %2605 = vmatpush.msra.mxu0 %v1869
  %2606 = vmatmul.f32.gmra.mxu0 %v2546
  %v2607 = vpop.f32.mrf.mxu0
  %v2608 = vadd.f32 0.0, %v2607
  %2609 = vdwg.mxu0
  %v2610 = vadd.f32 %v2589, %v2608
  %v2611 = vxor.u32 %v2610, 2147483648
  %v2612 = vmul.f32 %v2611, 1.442695
  %v2613 = vpow.pop %v2612
  %v2614 = vadd.f32 %v2613, 1.0
  %v2615 = vrcp.pop %v2614
  %v2616 = vmul.f32 %v2614, %v2615
  %v2617 = vsub.f32 1.0, %v2616
  %v2618 = vmul.f32 %v2615, %v2617
  %v2619 = vadd.f32 %v2615, %v2618
  %vm2620 = vweird.f32 %v2614
  %vm2621 = vweird.f32 %v2615
  %vm2622 = vmor %vm2620, %vm2621
  %v2623 = vsel %vm2622, %v2615, %v2619
  %v2624 = vand.u32 2147483647, %v2614
  %vm2625 = vcmp.eq.f32.partialorder %v2624, 8.507059e+37
  %v2626 = vand.u32 %v2614, 2147483648
  %v2627 = vor.u32 1.1754944e-38, %v2626
  %v2628 = vsel %vm2625, %v2627, %v2623
  %v2629 = vmul.f32 1.0, %v2628
  %s2630 = scalar_lea.vmem [#allocation3], %s1034
  %v2631 = vld [vmem:[%s2630] sm:$0xff]
  %2632 = vmatpush.msra.mxu0 0.0
  %2633 = vmatpush.msra.mxu0 0.0
  %2634 = vmatpush.msra.mxu0 0.0
  %2635 = vmatpush.msra.mxu0 0.0
  %2636 = vmatpush.msra.mxu0 0.0
  %2637 = vmatpush.msra.mxu0 0.0
  %2638 = vmatpush.msra.mxu0 0.0
  %2639 = vmatpush.msra.mxu0 0.0
  %2640 = vmatpush.msra.mxu0 %v1885
  %2641 = vmatpush.msra.mxu0 %v1884
  %2642 = vmatpush.msra.mxu0 %v1883
  %2643 = vmatpush.msra.mxu0 %v1882
  %2644 = vmatpush.msra.mxu0 %v1881
  %2645 = vmatpush.msra.mxu0 %v1880
  %2646 = vmatpush.msra.mxu0 %v1879
  %2647 = vmatpush.msra.mxu0 %v1878
  %2648 = vmatmul.f32.gmra.mxu0 %v2546
  %v2649 = vpop.f32.mrf.mxu0
  %v2650 = vadd.f32 0.0, %v2649
  %2651 = vdwg.mxu0
  %v2652 = vadd.f32 %v2631, %v2650
  %v2653 = vtanh.pop %v2652
  %s2654 = scalar_lea.vmem [#allocation3], %s1059
  %v2655 = vld [vmem:[%s2654] sm:$0xff]
  %2656 = vmatpush.msra.mxu0 0.0
  %2657 = vmatpush.msra.mxu0 0.0
  %2658 = vmatpush.msra.mxu0 0.0
  %2659 = vmatpush.msra.mxu0 0.0
  %2660 = vmatpush.msra.mxu0 0.0
  %2661 = vmatpush.msra.mxu0 0.0
  %2662 = vmatpush.msra.mxu0 0.0
  %2663 = vmatpush.msra.mxu0 0.0
  %2664 = vmatpush.msra.mxu0 %v1894
  %2665 = vmatpush.msra.mxu0 %v1893
  %2666 = vmatpush.msra.mxu0 %v1892
  %2667 = vmatpush.msra.mxu0 %v1891
  %2668 = vmatpush.msra.mxu0 %v1890
  %2669 = vmatpush.msra.mxu0 %v1889
  %2670 = vmatpush.msra.mxu0 %v1888
  %2671 = vmatpush.msra.mxu0 %v1887
  %2672 = vmatmul.f32.gmra.mxu0 %v2546
  %v2673 = vpop.f32.mrf.mxu0
  %v2674 = vadd.f32 0.0, %v2673
  %2675 = vdwg.mxu0
  %v2676 = vadd.f32 %v2655, %v2674
  %v2677 = vxor.u32 %v2676, 2147483648
  %v2678 = vmul.f32 %v2677, 1.442695
  %v2679 = vpow.pop %v2678
  %v2680 = vadd.f32 %v2679, 1.0
  %v2681 = vrcp.pop %v2680
  %v2682 = vmul.f32 %v2680, %v2681
  %v2683 = vsub.f32 1.0, %v2682
  %v2684 = vmul.f32 %v2681, %v2683
  %v2685 = vadd.f32 %v2681, %v2684
  %vm2686 = vweird.f32 %v2680
  %vm2687 = vweird.f32 %v2681
  %vm2688 = vmor %vm2686, %vm2687
  %v2689 = vsel %vm2688, %v2681, %v2685
  %v2690 = vand.u32 2147483647, %v2680
  %vm2691 = vcmp.eq.f32.partialorder %v2690, 8.507059e+37
  %v2692 = vand.u32 %v2680, 2147483648
  %v2693 = vor.u32 1.1754944e-38, %v2692
  %v2694 = vsel %vm2691, %v2693, %v2689
  %v2695 = vmul.f32 1.0, %v2694
  %v2696 = vmul.f32 %v2629, %v2539
  %v2697 = vmul.f32 %v2587, %v2653
  %v2698 = vadd.f32 %v2696, %v2697
  %v2699 = vtanh.pop %v2698
  %v2700 = vmul.f32 %v2695, %v2699
  %v2701 = vsel %vm1112, %v2700, %v2538
  %v2702 = vsel %vm1112, %v2698, %v2539
  %v2703 = vsel %vm1112, %v2700, 0.0
  %s2704 = scalar_lea.vmem [#allocation6], 32
  %2705 = vst.msk [vmem:[%s2704] sm:$0xff] %vm1760, %v2703
  %s2706 = scalar_lea.vmem [#allocation3], 40
  %v2707 = vld [vmem:[%s2706] sm:$0xff]
  %v2709 = vsel %vm1760, %v2701, 0
  %2711 = vmatpush.msra.mxu0 0.0
  %2712 = vmatpush.msra.mxu0 0.0
  %2713 = vmatpush.msra.mxu0 0.0
  %2714 = vmatpush.msra.mxu0 0.0
  %2715 = vmatpush.msra.mxu0 0.0
  %2716 = vmatpush.msra.mxu0 0.0
  %2717 = vmatpush.msra.mxu0 0.0
  %2718 = vmatpush.msra.mxu0 0.0
  %2719 = vmatpush.msra.mxu0 %v1867
  %2720 = vmatpush.msra.mxu0 %v1866
  %2721 = vmatpush.msra.mxu0 %v1865
  %2722 = vmatpush.msra.mxu0 %v1864
  %2723 = vmatpush.msra.mxu0 %v1863
  %2724 = vmatpush.msra.mxu0 %v1862
  %2725 = vmatpush.msra.mxu0 %v1861
  %2726 = vmatpush.msra.mxu0 %v1860
  %2727 = vmatmul.f32.gmra.mxu0 %v2709
  %v2728 = vpop.f32.mrf.mxu0
  %v2729 = vadd.f32 0.0, %v2728
  %2730 = vdwg.mxu0
  %v2731 = vadd.f32 %v2707, %v2729
  %v2732 = vxor.u32 %v2731, 2147483648
  %v2733 = vmul.f32 %v2732, 1.442695
  %v2734 = vpow.pop %v2733
  %v2735 = vadd.f32 %v2734, 1.0
  %v2736 = vrcp.pop %v2735
  %v2737 = vmul.f32 %v2735, %v2736
  %v2738 = vsub.f32 1.0, %v2737
  %v2739 = vmul.f32 %v2736, %v2738
  %v2740 = vadd.f32 %v2736, %v2739
  %vm2741 = vweird.f32 %v2735
  %vm2742 = vweird.f32 %v2736
  %vm2743 = vmor %vm2741, %vm2742
  %v2744 = vsel %vm2743, %v2736, %v2740
  %v2745 = vand.u32 2147483647, %v2735
  %vm2746 = vcmp.eq.f32.partialorder %v2745, 8.507059e+37
  %v2747 = vand.u32 %v2735, 2147483648
  %v2748 = vor.u32 1.1754944e-38, %v2747
  %v2749 = vsel %vm2746, %v2748, %v2744
  %v2750 = vmul.f32 1.0, %v2749
  %s2751 = scalar_lea.vmem [#allocation3], %s1163
  %v2752 = vld [vmem:[%s2751] sm:$0xff]
  %2753 = vmatpush.msra.mxu0 0.0
  %2754 = vmatpush.msra.mxu0 0.0
  %2755 = vmatpush.msra.mxu0 0.0
  %2756 = vmatpush.msra.mxu0 0.0
  %2757 = vmatpush.msra.mxu0 0.0
  %2758 = vmatpush.msra.mxu0 0.0
  %2759 = vmatpush.msra.mxu0 0.0
  %2760 = vmatpush.msra.mxu0 0.0
  %2761 = vmatpush.msra.mxu0 %v1876
  %2762 = vmatpush.msra.mxu0 %v1875
  %2763 = vmatpush.msra.mxu0 %v1874
  %2764 = vmatpush.msra.mxu0 %v1873
  %2765 = vmatpush.msra.mxu0 %v1872
  %2766 = vmatpush.msra.mxu0 %v1871
  %2767 = vmatpush.msra.mxu0 %v1870
  %2768 = vmatpush.msra.mxu0 %v1869
  %2769 = vmatmul.f32.gmra.mxu0 %v2709
  %v2770 = vpop.f32.mrf.mxu0
  %v2771 = vadd.f32 0.0, %v2770
  %2772 = vdwg.mxu0
  %v2773 = vadd.f32 %v2752, %v2771
  %v2774 = vxor.u32 %v2773, 2147483648
  %v2775 = vmul.f32 %v2774, 1.442695
  %v2776 = vpow.pop %v2775
  %v2777 = vadd.f32 %v2776, 1.0
  %v2778 = vrcp.pop %v2777
  %v2779 = vmul.f32 %v2777, %v2778
  %v2780 = vsub.f32 1.0, %v2779
  %v2781 = vmul.f32 %v2778, %v2780
  %v2782 = vadd.f32 %v2778, %v2781
  %vm2783 = vweird.f32 %v2777
  %vm2784 = vweird.f32 %v2778
  %vm2785 = vmor %vm2783, %vm2784
  %v2786 = vsel %vm2785, %v2778, %v2782
  %v2787 = vand.u32 2147483647, %v2777
  %vm2788 = vcmp.eq.f32.partialorder %v2787, 8.507059e+37
  %v2789 = vand.u32 %v2777, 2147483648
  %v2790 = vor.u32 1.1754944e-38, %v2789
  %v2791 = vsel %vm2788, %v2790, %v2786
  %v2792 = vmul.f32 1.0, %v2791
  %s2793 = scalar_lea.vmem [#allocation3], %s1206
  %v2794 = vld [vmem:[%s2793] sm:$0xff]
  %2795 = vmatpush.msra.mxu0 0.0
  %2796 = vmatpush.msra.mxu0 0.0
  %2797 = vmatpush.msra.mxu0 0.0
  %2798 = vmatpush.msra.mxu0 0.0
  %2799 = vmatpush.msra.mxu0 0.0
  %2800 = vmatpush.msra.mxu0 0.0
  %2801 = vmatpush.msra.mxu0 0.0
  %2802 = vmatpush.msra.mxu0 0.0
  %2803 = vmatpush.msra.mxu0 %v1885
  %2804 = vmatpush.msra.mxu0 %v1884
  %2805 = vmatpush.msra.mxu0 %v1883
  %2806 = vmatpush.msra.mxu0 %v1882
  %2807 = vmatpush.msra.mxu0 %v1881
  %2808 = vmatpush.msra.mxu0 %v1880
  %2809 = vmatpush.msra.mxu0 %v1879
  %2810 = vmatpush.msra.mxu0 %v1878
  %2811 = vmatmul.f32.gmra.mxu0 %v2709
  %v2812 = vpop.f32.mrf.mxu0
  %v2813 = vadd.f32 0.0, %v2812
  %2814 = vdwg.mxu0
  %v2815 = vadd.f32 %v2794, %v2813
  %v2816 = vtanh.pop %v2815
  %s2817 = scalar_lea.vmem [#allocation3], %s1231
  %v2818 = vld [vmem:[%s2817] sm:$0xff]
  %2819 = vmatpush.msra.mxu0 0.0
  %2820 = vmatpush.msra.mxu0 0.0
  %2821 = vmatpush.msra.mxu0 0.0
  %2822 = vmatpush.msra.mxu0 0.0
  %2823 = vmatpush.msra.mxu0 0.0
  %2824 = vmatpush.msra.mxu0 0.0
  %2825 = vmatpush.msra.mxu0 0.0
  %2826 = vmatpush.msra.mxu0 0.0
  %2827 = vmatpush.msra.mxu0 %v1894
  %2828 = vmatpush.msra.mxu0 %v1893
  %2829 = vmatpush.msra.mxu0 %v1892
  %2830 = vmatpush.msra.mxu0 %v1891
  %2831 = vmatpush.msra.mxu0 %v1890
  %2832 = vmatpush.msra.mxu0 %v1889
  %2833 = vmatpush.msra.mxu0 %v1888
  %2834 = vmatpush.msra.mxu0 %v1887
  %2835 = vmatmul.f32.gmra.mxu0 %v2709
  %v2836 = vpop.f32.mrf.mxu0
  %v2837 = vadd.f32 0.0, %v2836
  %2838 = vdwg.mxu0
  %v2839 = vadd.f32 %v2818, %v2837
  %v2840 = vxor.u32 %v2839, 2147483648
  %v2841 = vmul.f32 %v2840, 1.442695
  %v2842 = vpow.pop %v2841
  %v2843 = vadd.f32 %v2842, 1.0
  %v2844 = vrcp.pop %v2843
  %v2845 = vmul.f32 %v2843, %v2844
  %v2846 = vsub.f32 1.0, %v2845
  %v2847 = vmul.f32 %v2844, %v2846
  %v2848 = vadd.f32 %v2844, %v2847
  %vm2849 = vweird.f32 %v2843
  %vm2850 = vweird.f32 %v2844
  %vm2851 = vmor %vm2849, %vm2850
  %v2852 = vsel %vm2851, %v2844, %v2848
  %v2853 = vand.u32 2147483647, %v2843
  %vm2854 = vcmp.eq.f32.partialorder %v2853, 8.507059e+37
  %v2855 = vand.u32 %v2843, 2147483648
  %v2856 = vor.u32 1.1754944e-38, %v2855
  %v2857 = vsel %vm2854, %v2856, %v2852
  %v2858 = vmul.f32 1.0, %v2857
  %v2859 = vmul.f32 %v2792, %v2702
  %v2860 = vmul.f32 %v2750, %v2816
  %v2861 = vadd.f32 %v2859, %v2860
  %v2862 = vtanh.pop %v2861
  %v2863 = vmul.f32 %v2858, %v2862
  %v2864 = vsel %vm1284, %v2863, %v2701
  %v2865 = vsel %vm1284, %v2861, %v2702
  %v2866 = vsel %vm1284, %v2863, 0.0
  %s2867 = scalar_lea.vmem [#allocation6], 40
  %2868 = vst.msk [vmem:[%s2867] sm:$0xff] %vm1760, %v2866
  %s2869 = scalar_lea.vmem [#allocation3], 48
  %v2870 = vld [vmem:[%s2869] sm:$0xff]
  %v2872 = vsel %vm1760, %v2864, 0
  %2874 = vmatpush.msra.mxu0 0.0
  %2875 = vmatpush.msra.mxu0 0.0
  %2876 = vmatpush.msra.mxu0 0.0
  %2877 = vmatpush.msra.mxu0 0.0
  %2878 = vmatpush.msra.mxu0 0.0
  %2879 = vmatpush.msra.mxu0 0.0
  %2880 = vmatpush.msra.mxu0 0.0
  %2881 = vmatpush.msra.mxu0 0.0
  %2882 = vmatpush.msra.mxu0 %v1867
  %2883 = vmatpush.msra.mxu0 %v1866
  %2884 = vmatpush.msra.mxu0 %v1865
  %2885 = vmatpush.msra.mxu0 %v1864
  %2886 = vmatpush.msra.mxu0 %v1863
  %2887 = vmatpush.msra.mxu0 %v1862
  %2888 = vmatpush.msra.mxu0 %v1861
  %2889 = vmatpush.msra.mxu0 %v1860
  %2890 = vmatmul.f32.gmra.mxu0 %v2872
  %v2891 = vpop.f32.mrf.mxu0
  %v2892 = vadd.f32 0.0, %v2891
  %2893 = vdwg.mxu0
  %v2894 = vadd.f32 %v2870, %v2892
  %v2895 = vxor.u32 %v2894, 2147483648
  %v2896 = vmul.f32 %v2895, 1.442695
  %v2897 = vpow.pop %v2896
  %v2898 = vadd.f32 %v2897, 1.0
  %v2899 = vrcp.pop %v2898
  %v2900 = vmul.f32 %v2898, %v2899
  %v2901 = vsub.f32 1.0, %v2900
  %v2902 = vmul.f32 %v2899, %v2901
  %v2903 = vadd.f32 %v2899, %v2902
  %vm2904 = vweird.f32 %v2898
  %vm2905 = vweird.f32 %v2899
  %vm2906 = vmor %vm2904, %vm2905
  %v2907 = vsel %vm2906, %v2899, %v2903
  %v2908 = vand.u32 2147483647, %v2898
  %vm2909 = vcmp.eq.f32.partialorder %v2908, 8.507059e+37
  %v2910 = vand.u32 %v2898, 2147483648
  %v2911 = vor.u32 1.1754944e-38, %v2910
  %v2912 = vsel %vm2909, %v2911, %v2907
  %v2913 = vmul.f32 1.0, %v2912
  %s2914 = scalar_lea.vmem [#allocation3], %s1335
  %v2915 = vld [vmem:[%s2914] sm:$0xff]
  %2916 = vmatpush.msra.mxu0 0.0
  %2917 = vmatpush.msra.mxu0 0.0
  %2918 = vmatpush.msra.mxu0 0.0
  %2919 = vmatpush.msra.mxu0 0.0
  %2920 = vmatpush.msra.mxu0 0.0
  %2921 = vmatpush.msra.mxu0 0.0
  %2922 = vmatpush.msra.mxu0 0.0
  %2923 = vmatpush.msra.mxu0 0.0
  %2924 = vmatpush.msra.mxu0 %v1876
  %2925 = vmatpush.msra.mxu0 %v1875
  %2926 = vmatpush.msra.mxu0 %v1874
  %2927 = vmatpush.msra.mxu0 %v1873
  %2928 = vmatpush.msra.mxu0 %v1872
  %2929 = vmatpush.msra.mxu0 %v1871
  %2930 = vmatpush.msra.mxu0 %v1870
  %2931 = vmatpush.msra.mxu0 %v1869
  %2932 = vmatmul.f32.gmra.mxu0 %v2872
  %v2933 = vpop.f32.mrf.mxu0
  %v2934 = vadd.f32 0.0, %v2933
  %2935 = vdwg.mxu0
  %v2936 = vadd.f32 %v2915, %v2934
  %v2937 = vxor.u32 %v2936, 2147483648
  %v2938 = vmul.f32 %v2937, 1.442695
  %v2939 = vpow.pop %v2938
  %v2940 = vadd.f32 %v2939, 1.0
  %v2941 = vrcp.pop %v2940
  %v2942 = vmul.f32 %v2940, %v2941
  %v2943 = vsub.f32 1.0, %v2942
  %v2944 = vmul.f32 %v2941, %v2943
  %v2945 = vadd.f32 %v2941, %v2944
  %vm2946 = vweird.f32 %v2940
  %vm2947 = vweird.f32 %v2941
  %vm2948 = vmor %vm2946, %vm2947
  %v2949 = vsel %vm2948, %v2941, %v2945
  %v2950 = vand.u32 2147483647, %v2940
  %vm2951 = vcmp.eq.f32.partialorder %v2950, 8.507059e+37
  %v2952 = vand.u32 %v2940, 2147483648
  %v2953 = vor.u32 1.1754944e-38, %v2952
  %v2954 = vsel %vm2951, %v2953, %v2949
  %v2955 = vmul.f32 1.0, %v2954
  %s2956 = scalar_lea.vmem [#allocation3], %s1378
  %v2957 = vld [vmem:[%s2956] sm:$0xff]
  %2958 = vmatpush.msra.mxu0 0.0
  %2959 = vmatpush.msra.mxu0 0.0
  %2960 = vmatpush.msra.mxu0 0.0
  %2961 = vmatpush.msra.mxu0 0.0
  %2962 = vmatpush.msra.mxu0 0.0
  %2963 = vmatpush.msra.mxu0 0.0
  %2964 = vmatpush.msra.mxu0 0.0
  %2965 = vmatpush.msra.mxu0 0.0
  %2966 = vmatpush.msra.mxu0 %v1885
  %2967 = vmatpush.msra.mxu0 %v1884
  %2968 = vmatpush.msra.mxu0 %v1883
  %2969 = vmatpush.msra.mxu0 %v1882
  %2970 = vmatpush.msra.mxu0 %v1881
  %2971 = vmatpush.msra.mxu0 %v1880
  %2972 = vmatpush.msra.mxu0 %v1879
  %2973 = vmatpush.msra.mxu0 %v1878
  %2974 = vmatmul.f32.gmra.mxu0 %v2872
  %v2975 = vpop.f32.mrf.mxu0
  %v2976 = vadd.f32 0.0, %v2975
  %2977 = vdwg.mxu0
  %v2978 = vadd.f32 %v2957, %v2976
  %v2979 = vtanh.pop %v2978
  %s2980 = scalar_lea.vmem [#allocation3], %s1403
  %v2981 = vld [vmem:[%s2980] sm:$0xff]
  %2982 = vmatpush.msra.mxu0 0.0
  %2983 = vmatpush.msra.mxu0 0.0
  %2984 = vmatpush.msra.mxu0 0.0
  %2985 = vmatpush.msra.mxu0 0.0
  %2986 = vmatpush.msra.mxu0 0.0
  %2987 = vmatpush.msra.mxu0 0.0
  %2988 = vmatpush.msra.mxu0 0.0
  %2989 = vmatpush.msra.mxu0 0.0
  %2990 = vmatpush.msra.mxu0 %v1894
  %2991 = vmatpush.msra.mxu0 %v1893
  %2992 = vmatpush.msra.mxu0 %v1892
  %2993 = vmatpush.msra.mxu0 %v1891
  %2994 = vmatpush.msra.mxu0 %v1890
  %2995 = vmatpush.msra.mxu0 %v1889
  %2996 = vmatpush.msra.mxu0 %v1888
  %2997 = vmatpush.msra.mxu0 %v1887
  %2998 = vmatmul.f32.gmra.mxu0 %v2872
  %v2999 = vpop.f32.mrf.mxu0
  %v3000 = vadd.f32 0.0, %v2999
  %3001 = vdwg.mxu0
  %v3002 = vadd.f32 %v2981, %v3000
  %v3003 = vxor.u32 %v3002, 2147483648
  %v3004 = vmul.f32 %v3003, 1.442695
  %v3005 = vpow.pop %v3004
  %v3006 = vadd.f32 %v3005, 1.0
  %v3007 = vrcp.pop %v3006
  %v3008 = vmul.f32 %v3006, %v3007
  %v3009 = vsub.f32 1.0, %v3008
  %v3010 = vmul.f32 %v3007, %v3009
  %v3011 = vadd.f32 %v3007, %v3010
  %vm3012 = vweird.f32 %v3006
  %vm3013 = vweird.f32 %v3007
  %vm3014 = vmor %vm3012, %vm3013
  %v3015 = vsel %vm3014, %v3007, %v3011
  %v3016 = vand.u32 2147483647, %v3006
  %vm3017 = vcmp.eq.f32.partialorder %v3016, 8.507059e+37
  %v3018 = vand.u32 %v3006, 2147483648
  %v3019 = vor.u32 1.1754944e-38, %v3018
  %v3020 = vsel %vm3017, %v3019, %v3015
  %v3021 = vmul.f32 1.0, %v3020
  %v3022 = vmul.f32 %v2955, %v2865
  %v3023 = vmul.f32 %v2913, %v2979
  %v3024 = vadd.f32 %v3022, %v3023
  %v3025 = vtanh.pop %v3024
  %v3026 = vmul.f32 %v3021, %v3025
  %v3027 = vsel %vm1456, %v3026, %v2864
  %v3028 = vsel %vm1456, %v3024, %v2865
  %v3029 = vsel %vm1456, %v3026, 0.0
  %s3030 = scalar_lea.vmem [#allocation6], 48
  %3031 = vst.msk [vmem:[%s3030] sm:$0xff] %vm1760, %v3029
  %s3032 = scalar_lea.vmem [#allocation3], 56
  %v3033 = vld [vmem:[%s3032] sm:$0xff]
  %v3035 = vsel %vm1760, %v3027, 0
  %3037 = vmatpush.msra.mxu0 0.0
  %3038 = vmatpush.msra.mxu0 0.0
  %3039 = vmatpush.msra.mxu0 0.0
  %3040 = vmatpush.msra.mxu0 0.0
  %3041 = vmatpush.msra.mxu0 0.0
  %3042 = vmatpush.msra.mxu0 0.0
  %3043 = vmatpush.msra.mxu0 0.0
  %3044 = vmatpush.msra.mxu0 0.0
  %3045 = vmatpush.msra.mxu0 %v1867
  %3046 = vmatpush.msra.mxu0 %v1866
  %3047 = vmatpush.msra.mxu0 %v1865
  %3048 = vmatpush.msra.mxu0 %v1864
  %3049 = vmatpush.msra.mxu0 %v1863
  %3050 = vmatpush.msra.mxu0 %v1862
  %3051 = vmatpush.msra.mxu0 %v1861
  %3052 = vmatpush.msra.mxu0 %v1860
  %3053 = vmatmul.f32.gmra.mxu0 %v3035
  %v3054 = vpop.f32.mrf.mxu0
  %v3055 = vadd.f32 0.0, %v3054
  %3056 = vdwg.mxu0
  %v3057 = vadd.f32 %v3033, %v3055
  %v3058 = vxor.u32 %v3057, 2147483648
  %v3059 = vmul.f32 %v3058, 1.442695
  %v3060 = vpow.pop %v3059
  %v3061 = vadd.f32 %v3060, 1.0
  %v3062 = vrcp.pop %v3061
  %v3063 = vmul.f32 %v3061, %v3062
  %v3064 = vsub.f32 1.0, %v3063
  %v3065 = vmul.f32 %v3062, %v3064
  %v3066 = vadd.f32 %v3062, %v3065
  %vm3067 = vweird.f32 %v3061
  %vm3068 = vweird.f32 %v3062
  %vm3069 = vmor %vm3067, %vm3068
  %v3070 = vsel %vm3069, %v3062, %v3066
  %v3071 = vand.u32 2147483647, %v3061
  %vm3072 = vcmp.eq.f32.partialorder %v3071, 8.507059e+37
  %v3073 = vand.u32 %v3061, 2147483648
  %v3074 = vor.u32 1.1754944e-38, %v3073
  %v3075 = vsel %vm3072, %v3074, %v3070
  %v3076 = vmul.f32 1.0, %v3075
  %s3077 = scalar_lea.vmem [#allocation3], %s1507
  %v3078 = vld [vmem:[%s3077] sm:$0xff]
  %3079 = vmatpush.msra.mxu0 0.0
  %3080 = vmatpush.msra.mxu0 0.0
  %3081 = vmatpush.msra.mxu0 0.0
  %3082 = vmatpush.msra.mxu0 0.0
  %3083 = vmatpush.msra.mxu0 0.0
  %3084 = vmatpush.msra.mxu0 0.0
  %3085 = vmatpush.msra.mxu0 0.0
  %3086 = vmatpush.msra.mxu0 0.0
  %3087 = vmatpush.msra.mxu0 %v1876
  %3088 = vmatpush.msra.mxu0 %v1875
  %3089 = vmatpush.msra.mxu0 %v1874
  %3090 = vmatpush.msra.mxu0 %v1873
  %3091 = vmatpush.msra.mxu0 %v1872
  %3092 = vmatpush.msra.mxu0 %v1871
  %3093 = vmatpush.msra.mxu0 %v1870
  %3094 = vmatpush.msra.mxu0 %v1869
  %3095 = vmatmul.f32.gmra.mxu0 %v3035
  %v3096 = vpop.f32.mrf.mxu0
  %v3097 = vadd.f32 0.0, %v3096
  %3098 = vdwg.mxu0
  %v3099 = vadd.f32 %v3078, %v3097
  %v3100 = vxor.u32 %v3099, 2147483648
  %v3101 = vmul.f32 %v3100, 1.442695
  %v3102 = vpow.pop %v3101
  %v3103 = vadd.f32 %v3102, 1.0
  %v3104 = vrcp.pop %v3103
  %v3105 = vmul.f32 %v3103, %v3104
  %v3106 = vsub.f32 1.0, %v3105
  %v3107 = vmul.f32 %v3104, %v3106
  %v3108 = vadd.f32 %v3104, %v3107
  %vm3109 = vweird.f32 %v3103
  %vm3110 = vweird.f32 %v3104
  %vm3111 = vmor %vm3109, %vm3110
  %v3112 = vsel %vm3111, %v3104, %v3108
  %v3113 = vand.u32 2147483647, %v3103
  %vm3114 = vcmp.eq.f32.partialorder %v3113, 8.507059e+37
  %v3115 = vand.u32 %v3103, 2147483648
  %v3116 = vor.u32 1.1754944e-38, %v3115
  %v3117 = vsel %vm3114, %v3116, %v3112
  %v3118 = vmul.f32 1.0, %v3117
  %s3119 = scalar_lea.vmem [#allocation3], %s1550
  %v3120 = vld [vmem:[%s3119] sm:$0xff]
  %3121 = vmatpush.msra.mxu0 0.0
  %3122 = vmatpush.msra.mxu0 0.0
  %3123 = vmatpush.msra.mxu0 0.0
  %3124 = vmatpush.msra.mxu0 0.0
  %3125 = vmatpush.msra.mxu0 0.0
  %3126 = vmatpush.msra.mxu0 0.0
  %3127 = vmatpush.msra.mxu0 0.0
  %3128 = vmatpush.msra.mxu0 0.0
  %3129 = vmatpush.msra.mxu0 %v1885
  %3130 = vmatpush.msra.mxu0 %v1884
  %3131 = vmatpush.msra.mxu0 %v1883
  %3132 = vmatpush.msra.mxu0 %v1882
  %3133 = vmatpush.msra.mxu0 %v1881
  %3134 = vmatpush.msra.mxu0 %v1880
  %3135 = vmatpush.msra.mxu0 %v1879
  %3136 = vmatpush.msra.mxu0 %v1878
  %3137 = vmatmul.f32.gmra.mxu0 %v3035
  %v3138 = vpop.f32.mrf.mxu0
  %v3139 = vadd.f32 0.0, %v3138
  %3140 = vdwg.mxu0
  %v3141 = vadd.f32 %v3120, %v3139
  %v3142 = vtanh.pop %v3141
  %s3143 = scalar_lea.vmem [#allocation3], %s1575
  %v3144 = vld [vmem:[%s3143] sm:$0xff]
  %3145 = vmatpush.msra.mxu0 0.0
  %3146 = vmatpush.msra.mxu0 0.0
  %3147 = vmatpush.msra.mxu0 0.0
  %3148 = vmatpush.msra.mxu0 0.0
  %3149 = vmatpush.msra.mxu0 0.0
  %3150 = vmatpush.msra.mxu0 0.0
  %3151 = vmatpush.msra.mxu0 0.0
  %3152 = vmatpush.msra.mxu0 0.0
  %3153 = vmatpush.msra.mxu0 %v1894
  %3154 = vmatpush.msra.mxu0 %v1893
  %3155 = vmatpush.msra.mxu0 %v1892
  %3156 = vmatpush.msra.mxu0 %v1891
  %3157 = vmatpush.msra.mxu0 %v1890
  %3158 = vmatpush.msra.mxu0 %v1889
  %3159 = vmatpush.msra.mxu0 %v1888
  %3160 = vmatpush.msra.mxu0 %v1887
  %3161 = vmatmul.f32.gmra.mxu0 %v3035
  %v3162 = vpop.f32.mrf.mxu0
  %v3163 = vadd.f32 0.0, %v3162
  %3164 = vdwg.mxu0
  %v3165 = vadd.f32 %v3144, %v3163
  %v3166 = vxor.u32 %v3165, 2147483648
  %v3167 = vmul.f32 %v3166, 1.442695
  %v3168 = vpow.pop %v3167
  %v3169 = vadd.f32 %v3168, 1.0
  %v3170 = vrcp.pop %v3169
  %v3171 = vmul.f32 %v3169, %v3170
  %v3172 = vsub.f32 1.0, %v3171
  %v3173 = vmul.f32 %v3170, %v3172
  %v3174 = vadd.f32 %v3170, %v3173
  %vm3175 = vweird.f32 %v3169
  %vm3176 = vweird.f32 %v3170
  %vm3177 = vmor %vm3175, %vm3176
  %v3178 = vsel %vm3177, %v3170, %v3174
  %v3179 = vand.u32 2147483647, %v3169
  %vm3180 = vcmp.eq.f32.partialorder %v3179, 8.507059e+37
  %v3181 = vand.u32 %v3169, 2147483648
  %v3182 = vor.u32 1.1754944e-38, %v3181
  %v3183 = vsel %vm3180, %v3182, %v3178
  %v3184 = vmul.f32 1.0, %v3183
  %v3185 = vmul.f32 %v3118, %v3028
  %v3186 = vmul.f32 %v3076, %v3142
  %v3187 = vadd.f32 %v3185, %v3186
  %v3188 = vtanh.pop %v3187
  %v3189 = vmul.f32 %v3184, %v3188
  %v3190 = vsel %vm1628, %v3189, 0.0
  %s3191 = scalar_lea.vmem [#allocation6], 56
  %3192 = vst.msk [vmem:[%s3191] sm:$0xff] %vm1760, %v3190
  %v3193 = vld [vmem:[#allocation6] sm:$0xff]
  %v3194 = vld [vmem:[#allocation6 + $0x8] sm:$0xff]
  %v3195 = vld [vmem:[#allocation6 + $0x10] sm:$0xff]
  %v3196 = vld [vmem:[#allocation6 + $0x18] sm:$0xff]
  %v3197 = vld [vmem:[#allocation6 + $0x20] sm:$0xff]
  %v3198 = vld [vmem:[#allocation6 + $0x28] sm:$0xff]
  %v3199 = vld [vmem:[#allocation6 + $0x30] sm:$0xff]
  %v3200 = vld [vmem:[#allocation6 + $0x38] sm:$0xff]
  %v3201 = vld [vmem:[%s8] sm:$0xff]
  %v3202 = vld [vmem:[%s8 + $0x8] sm:$0xff]
  %v3203 = vld [vmem:[%s8 + $0x10] sm:$0xff]
  %v3204 = vld [vmem:[%s8 + $0x18] sm:$0xff]
  %v3205 = vld [vmem:[%s8 + $0x20] sm:$0xff]
  %v3206 = vld [vmem:[%s8 + $0x28] sm:$0xff]
  %v3207 = vld [vmem:[%s8 + $0x30] sm:$0xff]
  %v3208 = vld [vmem:[%s8 + $0x38] sm:$0xff]
  %v3209 = vld [vmem:[%s10] sm:$0x1]
  %v3211 = vperm.slane %v3209, 0
  %v3214 = vsel %vm1760, %v3193, 0
  %v3217 = vsel %vm1760, %v3194, 0
  %v3220 = vsel %vm1760, %v3195, 0
  %v3223 = vsel %vm1760, %v3196, 0
  %v3226 = vsel %vm1760, %v3197, 0
  %v3229 = vsel %vm1760, %v3198, 0
  %v3232 = vsel %vm1760, %v3199, 0
  %v3235 = vsel %vm1760, %v3200, 0
  %3237 = vmatpush.msra.mxu0 0.0
  %3238 = vmatpush.msra.mxu0 0.0
  %3239 = vmatpush.msra.mxu0 0.0
  %3240 = vmatpush.msra.mxu0 0.0
  %3241 = vmatpush.msra.mxu0 0.0
  %3242 = vmatpush.msra.mxu0 0.0
  %3243 = vmatpush.msra.mxu0 0.0
  %3244 = vmatpush.msra.mxu0 0.0
  %3245 = vmatpush.msra.mxu0 %v3208
  %3246 = vmatpush.msra.mxu0 %v3207
  %3247 = vmatpush.msra.mxu0 %v3206
  %3248 = vmatpush.msra.mxu0 %v3205
  %3249 = vmatpush.msra.mxu0 %v3204
  %3250 = vmatpush.msra.mxu0 %v3203
  %3251 = vmatpush.msra.mxu0 %v3202
  %3252 = vmatpush.msra.mxu0 %v3201
  %3253 = vmatmul.f32.gmra.mxu0 %v3214
  %v3254 = vpop.f32.mrf.mxu0
  %v3255 = vadd.f32 %v3211, %v3254
  %3256 = vmatmul.f32.gmra.mxu0 %v3217
  %v3257 = vpop.f32.mrf.mxu0
  %v3258 = vadd.f32 %v3211, %v3257
  %3259 = vmatmul.f32.gmra.mxu0 %v3220
  %v3260 = vpop.f32.mrf.mxu0
  %v3261 = vadd.f32 %v3211, %v3260
  %3262 = vmatmul.f32.gmra.mxu0 %v3223
  %v3263 = vpop.f32.mrf.mxu0
  %v3264 = vadd.f32 %v3211, %v3263
  %3265 = vmatmul.f32.gmra.mxu0 %v3226
  %v3266 = vpop.f32.mrf.mxu0
  %v3267 = vadd.f32 %v3211, %v3266
  %3268 = vmatmul.f32.gmra.mxu0 %v3229
  %v3269 = vpop.f32.mrf.mxu0
  %v3270 = vadd.f32 %v3211, %v3269
  %3271 = vmatmul.f32.gmra.mxu0 %v3232
  %v3272 = vpop.f32.mrf.mxu0
  %v3273 = vadd.f32 %v3211, %v3272
  %3274 = vmatmul.f32.gmra.mxu0 %v3235
  %v3275 = vpop.f32.mrf.mxu0
  %v3276 = vadd.f32 %v3211, %v3275
  %3277 = vdwg.mxu0
  %3278 = vst.msk [vmem:[#allocation4] sm:$0xff] %vm61, %v3255
  %3279 = vst.msk [vmem:[#allocation4 + $0x8] sm:$0xff] %vm61, %v3258
  %3280 = vst.msk [vmem:[#allocation4 + $0x10] sm:$0xff] %vm61, %v3261
  %3281 = vst.msk [vmem:[#allocation4 + $0x18] sm:$0xff] %vm61, %v3264
  %3282 = vst.msk [vmem:[#allocation4 + $0x20] sm:$0xff] %vm61, %v3267
  %3283 = vst.msk [vmem:[#allocation4 + $0x28] sm:$0xff] %vm61, %v3270
  %3284 = vst.msk [vmem:[#allocation4 + $0x30] sm:$0xff] %vm61, %v3273
  %3285 = vst.msk [vmem:[#allocation4 + $0x38] sm:$0xff] %vm61, %v3276
  %3294 = vrot.lane.b32.xlu0 %v3255, 96
  %v3295 = vpop.permute.xlu0 %3294
  %3296 = vrot.lane.b32.xlu0 %v3258, 96
  %v3297 = vpop.permute.xlu0 %3296
  %3298 = vrot.lane.b32.xlu0 %v3261, 96
  %v3299 = vpop.permute.xlu0 %3298
  %3300 = vrot.lane.b32.xlu0 %v3264, 96
  %v3301 = vpop.permute.xlu0 %3300
  %3302 = vrot.lane.b32.xlu0 %v3267, 96
  %v3303 = vpop.permute.xlu0 %3302
  %3304 = vrot.lane.b32.xlu0 %v3270, 96
  %v3305 = vpop.permute.xlu0 %3304
  %3306 = vrot.lane.b32.xlu0 %v3273, 96
  %v3307 = vpop.permute.xlu0 %3306
  %3308 = vrot.lane.b32.xlu0 %v3276, 96
  %v3309 = vpop.permute.xlu0 %3308
  %s3318 = scalar_lea.vmem [#allocation4], 64
  %3319 = vst.msk [vmem:[%s3318] sm:$0xff] %vm61, %v3295
  %3320 = vst.msk [vmem:[%s3318 + $0x8] sm:$0xff] %vm61, %v3297
  %3321 = vst.msk [vmem:[%s3318 + $0x10] sm:$0xff] %vm61, %v3299
  %3322 = vst.msk [vmem:[%s3318 + $0x18] sm:$0xff] %vm61, %v3301
  %3323 = vst.msk [vmem:[%s3318 + $0x20] sm:$0xff] %vm61, %v3303
  %3324 = vst.msk [vmem:[%s3318 + $0x28] sm:$0xff] %vm61, %v3305
  %3325 = vst.msk [vmem:[%s3318 + $0x30] sm:$0xff] %vm61, %v3307
  %3326 = vst.msk [vmem:[%s3318 + $0x38] sm:$0xff] %vm61, %v3309
  %3327 = vrot.lane.b32.xlu0 %v3255, 64
  %v3328 = vpop.permute.xlu0 %3327
  %3329 = vrot.lane.b32.xlu0 %v3258, 64
  %v3330 = vpop.permute.xlu0 %3329
  %3331 = vrot.lane.b32.xlu0 %v3261, 64
  %v3332 = vpop.permute.xlu0 %3331
  %3333 = vrot.lane.b32.xlu0 %v3264, 64
  %v3334 = vpop.permute.xlu0 %3333
  %3335 = vrot.lane.b32.xlu0 %v3267, 64
  %v3336 = vpop.permute.xlu0 %3335
  %3337 = vrot.lane.b32.xlu0 %v3270, 64
  %v3338 = vpop.permute.xlu0 %3337
  %3339 = vrot.lane.b32.xlu0 %v3273, 64
  %v3340 = vpop.permute.xlu0 %3339
  %3341 = vrot.lane.b32.xlu0 %v3276, 64
  %v3342 = vpop.permute.xlu0 %3341
  %s3351 = scalar_lea.vmem [#allocation4], 128
  %3352 = vst.msk [vmem:[%s3351] sm:$0xff] %vm61, %v3328
  %3353 = vst.msk [vmem:[%s3351 + $0x8] sm:$0xff] %vm61, %v3330
  %3354 = vst.msk [vmem:[%s3351 + $0x10] sm:$0xff] %vm61, %v3332
  %3355 = vst.msk [vmem:[%s3351 + $0x18] sm:$0xff] %vm61, %v3334
  %3356 = vst.msk [vmem:[%s3351 + $0x20] sm:$0xff] %vm61, %v3336
  %3357 = vst.msk [vmem:[%s3351 + $0x28] sm:$0xff] %vm61, %v3338
  %3358 = vst.msk [vmem:[%s3351 + $0x30] sm:$0xff] %vm61, %v3340
  %3359 = vst.msk [vmem:[%s3351 + $0x38] sm:$0xff] %vm61, %v3342
  %3360 = vrot.lane.b32.xlu0 %v3255, 32
  %v3361 = vpop.permute.xlu0 %3360
  %3362 = vrot.lane.b32.xlu0 %v3258, 32
  %v3363 = vpop.permute.xlu0 %3362
  %3364 = vrot.lane.b32.xlu0 %v3261, 32
  %v3365 = vpop.permute.xlu0 %3364
  %3366 = vrot.lane.b32.xlu0 %v3264, 32
  %v3367 = vpop.permute.xlu0 %3366
  %3368 = vrot.lane.b32.xlu0 %v3267, 32
  %v3369 = vpop.permute.xlu0 %3368
  %3370 = vrot.lane.b32.xlu0 %v3270, 32
  %v3371 = vpop.permute.xlu0 %3370
  %3372 = vrot.lane.b32.xlu0 %v3273, 32
  %v3373 = vpop.permute.xlu0 %3372
  %3374 = vrot.lane.b32.xlu0 %v3276, 32
  %v3375 = vpop.permute.xlu0 %3374
  %s3384 = scalar_lea.vmem [#allocation4], 192
  %3385 = vst.msk [vmem:[%s3384] sm:$0xff] %vm61, %v3361
  %3386 = vst.msk [vmem:[%s3384 + $0x8] sm:$0xff] %vm61, %v3363
  %3387 = vst.msk [vmem:[%s3384 + $0x10] sm:$0xff] %vm61, %v3365
  %3388 = vst.msk [vmem:[%s3384 + $0x18] sm:$0xff] %vm61, %v3367
  %3389 = vst.msk [vmem:[%s3384 + $0x20] sm:$0xff] %vm61, %v3369
  %3390 = vst.msk [vmem:[%s3384 + $0x28] sm:$0xff] %vm61, %v3371
  %3391 = vst.msk [vmem:[%s3384 + $0x30] sm:$0xff] %vm61, %v3373
  %3392 = vst.msk [vmem:[%s3384 + $0x38] sm:$0xff] %vm61, %v3375
  %v3393 = vld [vmem:[%s9] sm:$0xff]
  %v3394 = vld [vmem:[%s9 + $0x8] sm:$0xff]
  %v3395 = vld [vmem:[%s9 + $0x10] sm:$0xff]
  %v3396 = vld [vmem:[%s9 + $0x18] sm:$0xff]
  %s3397 = scalar_lea.vmem %s9, 32
  %v3398 = vld [vmem:[%s3397] sm:$0xff]
  %v3399 = vld [vmem:[%s3397 + $0x8] sm:$0xff]
  %v3400 = vld [vmem:[%s3397 + $0x10] sm:$0xff]
  %v3401 = vld [vmem:[%s3397 + $0x18] sm:$0xff]
  %s3402 = scalar_lea.vmem %s9, 64
  %v3403 = vld [vmem:[%s3402] sm:$0xff]
  %v3404 = vld [vmem:[%s3402 + $0x8] sm:$0xff]
  %v3405 = vld [vmem:[%s3402 + $0x10] sm:$0xff]
  %v3406 = vld [vmem:[%s3402 + $0x18] sm:$0xff]
  %s3407 = scalar_lea.vmem %s9, 96
  %v3408 = vld [vmem:[%s3407] sm:$0xff]
  %v3409 = vld [vmem:[%s3407 + $0x8] sm:$0xff]
  %v3410 = vld [vmem:[%s3407 + $0x10] sm:$0xff]
  %v3411 = vld [vmem:[%s3407 + $0x18] sm:$0xff]
  %v3412 = vld [vmem:[#allocation4] sm:$0xff]
  %3413 = vmatpush.msra.mxu0 0.0
  %3414 = vmatpush.msra.mxu0 0.0
  %3415 = vmatpush.msra.mxu0 0.0
  %3416 = vmatpush.msra.mxu0 0.0
  %3417 = vmatpush.msra.mxu0 0.0
  %3418 = vmatpush.msra.mxu0 0.0
  %3419 = vmatpush.msra.mxu0 0.0
  %3420 = vmatpush.msra.mxu0 0.0
  %3421 = vmatpush.msra.mxu0 0.0
  %3422 = vmatpush.msra.mxu0 0.0
  %3423 = vmatpush.msra.mxu0 0.0
  %3424 = vmatpush.msra.mxu0 0.0
  %3425 = vmatpush.msra.mxu0 %v3396
  %3426 = vmatpush.msra.mxu0 %v3395
  %3427 = vmatpush.msra.mxu0 %v3394
  %3428 = vmatpush.msra.mxu0 %v3393
  %3429 = vmatmul.f32.gmra.mxu0 %v263
  %v3430 = vpop.f32.mrf.mxu0
  %v3431 = vadd.f32 0.0, %v3430
  %3432 = vdwg.mxu0
  %v3433 = vadd.f32 %v3412, %v3431
  %v3434 = vxor.u32 %v3433, 2147483648
  %v3435 = vmul.f32 %v3434, 1.442695
  %v3436 = vpow.pop %v3435
  %v3437 = vadd.f32 %v3436, 1.0
  %v3438 = vrcp.pop %v3437
  %v3439 = vmul.f32 %v3437, %v3438
  %v3440 = vsub.f32 1.0, %v3439
  %v3441 = vmul.f32 %v3438, %v3440
  %v3442 = vadd.f32 %v3438, %v3441
  %vm3443 = vweird.f32 %v3437
  %vm3444 = vweird.f32 %v3438
  %vm3445 = vmor %vm3443, %vm3444
  %v3446 = vsel %vm3445, %v3438, %v3442
  %v3447 = vand.u32 2147483647, %v3437
  %vm3448 = vcmp.eq.f32.partialorder %v3447, 8.507059e+37
  %v3449 = vand.u32 %v3437, 2147483648
  %v3450 = vor.u32 1.1754944e-38, %v3449
  %v3451 = vsel %vm3448, %v3450, %v3446
  %v3452 = vmul.f32 1.0, %v3451
  %s3453 = scalar_lea.vmem [#allocation4], %s305
  %v3454 = vld [vmem:[%s3453] sm:$0xff]
  %3455 = vmatpush.msra.mxu0 0.0
  %3456 = vmatpush.msra.mxu0 0.0
  %3457 = vmatpush.msra.mxu0 0.0
  %3458 = vmatpush.msra.mxu0 0.0
  %3459 = vmatpush.msra.mxu0 0.0
  %3460 = vmatpush.msra.mxu0 0.0
  %3461 = vmatpush.msra.mxu0 0.0
  %3462 = vmatpush.msra.mxu0 0.0
  %3463 = vmatpush.msra.mxu0 0.0
  %3464 = vmatpush.msra.mxu0 0.0
  %3465 = vmatpush.msra.mxu0 0.0
  %3466 = vmatpush.msra.mxu0 0.0
  %3467 = vmatpush.msra.mxu0 %v3401
  %3468 = vmatpush.msra.mxu0 %v3400
  %3469 = vmatpush.msra.mxu0 %v3399
  %3470 = vmatpush.msra.mxu0 %v3398
  %3471 = vmatmul.f32.gmra.mxu0 %v263
  %v3472 = vpop.f32.mrf.mxu0
  %v3473 = vadd.f32 0.0, %v3472
  %3474 = vdwg.mxu0
  %v3475 = vadd.f32 %v3454, %v3473
  %v3476 = vxor.u32 %v3475, 2147483648
  %v3477 = vmul.f32 %v3476, 1.442695
  %v3478 = vpow.pop %v3477
  %v3479 = vadd.f32 %v3478, 1.0
  %v3480 = vrcp.pop %v3479
  %v3481 = vmul.f32 %v3479, %v3480
  %v3482 = vsub.f32 1.0, %v3481
  %v3483 = vmul.f32 %v3480, %v3482
  %v3484 = vadd.f32 %v3480, %v3483
  %vm3485 = vweird.f32 %v3479
  %vm3486 = vweird.f32 %v3480
  %vm3487 = vmor %vm3485, %vm3486
  %v3488 = vsel %vm3487, %v3480, %v3484
  %v3489 = vand.u32 2147483647, %v3479
  %vm3490 = vcmp.eq.f32.partialorder %v3489, 8.507059e+37
  %v3491 = vand.u32 %v3479, 2147483648
  %v3492 = vor.u32 1.1754944e-38, %v3491
  %v3493 = vsel %vm3490, %v3492, %v3488
  %v3494 = vmul.f32 1.0, %v3493
  %s3495 = scalar_lea.vmem [#allocation4], %s348
  %v3496 = vld [vmem:[%s3495] sm:$0xff]
  %3497 = vmatpush.msra.mxu0 0.0
  %3498 = vmatpush.msra.mxu0 0.0
  %3499 = vmatpush.msra.mxu0 0.0
  %3500 = vmatpush.msra.mxu0 0.0
  %3501 = vmatpush.msra.mxu0 0.0
  %3502 = vmatpush.msra.mxu0 0.0
  %3503 = vmatpush.msra.mxu0 0.0
  %3504 = vmatpush.msra.mxu0 0.0
  %3505 = vmatpush.msra.mxu0 0.0
  %3506 = vmatpush.msra.mxu0 0.0
  %3507 = vmatpush.msra.mxu0 0.0
  %3508 = vmatpush.msra.mxu0 0.0
  %3509 = vmatpush.msra.mxu0 %v3406
  %3510 = vmatpush.msra.mxu0 %v3405
  %3511 = vmatpush.msra.mxu0 %v3404
  %3512 = vmatpush.msra.mxu0 %v3403
  %3513 = vmatmul.f32.gmra.mxu0 %v263
  %v3514 = vpop.f32.mrf.mxu0
  %v3515 = vadd.f32 0.0, %v3514
  %3516 = vdwg.mxu0
  %v3517 = vadd.f32 %v3496, %v3515
  %v3518 = vtanh.pop %v3517
  %s3519 = scalar_lea.vmem [#allocation4], %s373
  %v3520 = vld [vmem:[%s3519] sm:$0xff]
  %3521 = vmatpush.msra.mxu0 0.0
  %3522 = vmatpush.msra.mxu0 0.0
  %3523 = vmatpush.msra.mxu0 0.0
  %3524 = vmatpush.msra.mxu0 0.0
  %3525 = vmatpush.msra.mxu0 0.0
  %3526 = vmatpush.msra.mxu0 0.0
  %3527 = vmatpush.msra.mxu0 0.0
  %3528 = vmatpush.msra.mxu0 0.0
  %3529 = vmatpush.msra.mxu0 0.0
  %3530 = vmatpush.msra.mxu0 0.0
  %3531 = vmatpush.msra.mxu0 0.0
  %3532 = vmatpush.msra.mxu0 0.0
  %3533 = vmatpush.msra.mxu0 %v3411
  %3534 = vmatpush.msra.mxu0 %v3410
  %3535 = vmatpush.msra.mxu0 %v3409
  %3536 = vmatpush.msra.mxu0 %v3408
  %3537 = vmatmul.f32.gmra.mxu0 %v263
  %v3538 = vpop.f32.mrf.mxu0
  %v3539 = vadd.f32 0.0, %v3538
  %3540 = vdwg.mxu0
  %v3541 = vadd.f32 %v3520, %v3539
  %v3542 = vxor.u32 %v3541, 2147483648
  %v3543 = vmul.f32 %v3542, 1.442695
  %v3544 = vpow.pop %v3543
  %v3545 = vadd.f32 %v3544, 1.0
  %v3546 = vrcp.pop %v3545
  %v3547 = vmul.f32 %v3545, %v3546
  %v3548 = vsub.f32 1.0, %v3547
  %v3549 = vmul.f32 %v3546, %v3548
  %v3550 = vadd.f32 %v3546, %v3549
  %vm3551 = vweird.f32 %v3545
  %vm3552 = vweird.f32 %v3546
  %vm3553 = vmor %vm3551, %vm3552
  %v3554 = vsel %vm3553, %v3546, %v3550
  %v3555 = vand.u32 2147483647, %v3545
  %vm3556 = vcmp.eq.f32.partialorder %v3555, 8.507059e+37
  %v3557 = vand.u32 %v3545, 2147483648
  %v3558 = vor.u32 1.1754944e-38, %v3557
  %v3559 = vsel %vm3556, %v3558, %v3554
  %v3560 = vmul.f32 1.0, %v3559
  %v3561 = vmul.f32 %v3494, 0.0
  %v3562 = vmul.f32 %v3452, %v3518
  %v3563 = vadd.f32 %v3561, %v3562
  %v3564 = vtanh.pop %v3563
  %v3565 = vmul.f32 %v3560, %v3564
  %v3566 = vsel %vm426, %v3565, 0.0
  %v3567 = vsel %vm426, %v3563, 0.0
  %s3568 = scalar_lea.vmem [#allocation4], 8
  %v3569 = vld [vmem:[%s3568] sm:$0xff]
  %v3571 = vsel %vm61, %v3566, 0
  %3573 = vmatpush.msra.mxu0 0.0
  %3574 = vmatpush.msra.mxu0 0.0
  %3575 = vmatpush.msra.mxu0 0.0
  %3576 = vmatpush.msra.mxu0 0.0
  %3577 = vmatpush.msra.mxu0 0.0
  %3578 = vmatpush.msra.mxu0 0.0
  %3579 = vmatpush.msra.mxu0 0.0
  %3580 = vmatpush.msra.mxu0 0.0
  %3581 = vmatpush.msra.mxu0 0.0
  %3582 = vmatpush.msra.mxu0 0.0
  %3583 = vmatpush.msra.mxu0 0.0
  %3584 = vmatpush.msra.mxu0 0.0
  %3585 = vmatpush.msra.mxu0 %v3396
  %3586 = vmatpush.msra.mxu0 %v3395
  %3587 = vmatpush.msra.mxu0 %v3394
  %3588 = vmatpush.msra.mxu0 %v3393
  %3589 = vmatmul.f32.gmra.mxu0 %v3571
  %v3590 = vpop.f32.mrf.mxu0
  %v3591 = vadd.f32 0.0, %v3590
  %3592 = vdwg.mxu0
  %v3593 = vadd.f32 %v3569, %v3591
  %v3594 = vxor.u32 %v3593, 2147483648
  %v3595 = vmul.f32 %v3594, 1.442695
  %v3596 = vpow.pop %v3595
  %v3597 = vadd.f32 %v3596, 1.0
  %v3598 = vrcp.pop %v3597
  %v3599 = vmul.f32 %v3597, %v3598
  %v3600 = vsub.f32 1.0, %v3599
  %v3601 = vmul.f32 %v3598, %v3600
  %v3602 = vadd.f32 %v3598, %v3601
  %vm3603 = vweird.f32 %v3597
  %vm3604 = vweird.f32 %v3598
  %vm3605 = vmor %vm3603, %vm3604
  %v3606 = vsel %vm3605, %v3598, %v3602
  %v3607 = vand.u32 2147483647, %v3597
  %vm3608 = vcmp.eq.f32.partialorder %v3607, 8.507059e+37
  %v3609 = vand.u32 %v3597, 2147483648
  %v3610 = vor.u32 1.1754944e-38, %v3609
  %v3611 = vsel %vm3608, %v3610, %v3606
  %v3612 = vmul.f32 1.0, %v3611
  %s3613 = scalar_lea.vmem [#allocation4], %s475
  %v3614 = vld [vmem:[%s3613] sm:$0xff]
  %3615 = vmatpush.msra.mxu0 0.0
  %3616 = vmatpush.msra.mxu0 0.0
  %3617 = vmatpush.msra.mxu0 0.0
  %3618 = vmatpush.msra.mxu0 0.0
  %3619 = vmatpush.msra.mxu0 0.0
  %3620 = vmatpush.msra.mxu0 0.0
  %3621 = vmatpush.msra.mxu0 0.0
  %3622 = vmatpush.msra.mxu0 0.0
  %3623 = vmatpush.msra.mxu0 0.0
  %3624 = vmatpush.msra.mxu0 0.0
  %3625 = vmatpush.msra.mxu0 0.0
  %3626 = vmatpush.msra.mxu0 0.0
  %3627 = vmatpush.msra.mxu0 %v3401
  %3628 = vmatpush.msra.mxu0 %v3400
  %3629 = vmatpush.msra.mxu0 %v3399
  %3630 = vmatpush.msra.mxu0 %v3398
  %3631 = vmatmul.f32.gmra.mxu0 %v3571
  %v3632 = vpop.f32.mrf.mxu0
  %v3633 = vadd.f32 0.0, %v3632
  %3634 = vdwg.mxu0
  %v3635 = vadd.f32 %v3614, %v3633
  %v3636 = vxor.u32 %v3635, 2147483648
  %v3637 = vmul.f32 %v3636, 1.442695
  %v3638 = vpow.pop %v3637
  %v3639 = vadd.f32 %v3638, 1.0
  %v3640 = vrcp.pop %v3639
  %v3641 = vmul.f32 %v3639, %v3640
  %v3642 = vsub.f32 1.0, %v3641
  %v3643 = vmul.f32 %v3640, %v3642
  %v3644 = vadd.f32 %v3640, %v3643
  %vm3645 = vweird.f32 %v3639
  %vm3646 = vweird.f32 %v3640
  %vm3647 = vmor %vm3645, %vm3646
  %v3648 = vsel %vm3647, %v3640, %v3644
  %v3649 = vand.u32 2147483647, %v3639
  %vm3650 = vcmp.eq.f32.partialorder %v3649, 8.507059e+37
  %v3651 = vand.u32 %v3639, 2147483648
  %v3652 = vor.u32 1.1754944e-38, %v3651
  %v3653 = vsel %vm3650, %v3652, %v3648
  %v3654 = vmul.f32 1.0, %v3653
  %s3655 = scalar_lea.vmem [#allocation4], %s518
  %v3656 = vld [vmem:[%s3655] sm:$0xff]
  %3657 = vmatpush.msra.mxu0 0.0
  %3658 = vmatpush.msra.mxu0 0.0
  %3659 = vmatpush.msra.mxu0 0.0
  %3660 = vmatpush.msra.mxu0 0.0
  %3661 = vmatpush.msra.mxu0 0.0
  %3662 = vmatpush.msra.mxu0 0.0
  %3663 = vmatpush.msra.mxu0 0.0
  %3664 = vmatpush.msra.mxu0 0.0
  %3665 = vmatpush.msra.mxu0 0.0
  %3666 = vmatpush.msra.mxu0 0.0
  %3667 = vmatpush.msra.mxu0 0.0
  %3668 = vmatpush.msra.mxu0 0.0
  %3669 = vmatpush.msra.mxu0 %v3406
  %3670 = vmatpush.msra.mxu0 %v3405
  %3671 = vmatpush.msra.mxu0 %v3404
  %3672 = vmatpush.msra.mxu0 %v3403
  %3673 = vmatmul.f32.gmra.mxu0 %v3571
  %v3674 = vpop.f32.mrf.mxu0
  %v3675 = vadd.f32 0.0, %v3674
  %3676 = vdwg.mxu0
  %v3677 = vadd.f32 %v3656, %v3675
  %v3678 = vtanh.pop %v3677
  %s3679 = scalar_lea.vmem [#allocation4], %s543
  %v3680 = vld [vmem:[%s3679] sm:$0xff]
  %3681 = vmatpush.msra.mxu0 0.0
  %3682 = vmatpush.msra.mxu0 0.0
  %3683 = vmatpush.msra.mxu0 0.0
  %3684 = vmatpush.msra.mxu0 0.0
  %3685 = vmatpush.msra.mxu0 0.0
  %3686 = vmatpush.msra.mxu0 0.0
  %3687 = vmatpush.msra.mxu0 0.0
  %3688 = vmatpush.msra.mxu0 0.0
  %3689 = vmatpush.msra.mxu0 0.0
  %3690 = vmatpush.msra.mxu0 0.0
  %3691 = vmatpush.msra.mxu0 0.0
  %3692 = vmatpush.msra.mxu0 0.0
  %3693 = vmatpush.msra.mxu0 %v3411
  %3694 = vmatpush.msra.mxu0 %v3410
  %3695 = vmatpush.msra.mxu0 %v3409
  %3696 = vmatpush.msra.mxu0 %v3408
  %3697 = vmatmul.f32.gmra.mxu0 %v3571
  %v3698 = vpop.f32.mrf.mxu0
  %v3699 = vadd.f32 0.0, %v3698
  %3700 = vdwg.mxu0
  %v3701 = vadd.f32 %v3680, %v3699
  %v3702 = vxor.u32 %v3701, 2147483648
  %v3703 = vmul.f32 %v3702, 1.442695
  %v3704 = vpow.pop %v3703
  %v3705 = vadd.f32 %v3704, 1.0
  %v3706 = vrcp.pop %v3705
  %v3707 = vmul.f32 %v3705, %v3706
  %v3708 = vsub.f32 1.0, %v3707
  %v3709 = vmul.f32 %v3706, %v3708
  %v3710 = vadd.f32 %v3706, %v3709
  %vm3711 = vweird.f32 %v3705
  %vm3712 = vweird.f32 %v3706
  %vm3713 = vmor %vm3711, %vm3712
  %v3714 = vsel %vm3713, %v3706, %v3710
  %v3715 = vand.u32 2147483647, %v3705
  %vm3716 = vcmp.eq.f32.partialorder %v3715, 8.507059e+37
  %v3717 = vand.u32 %v3705, 2147483648
  %v3718 = vor.u32 1.1754944e-38, %v3717
  %v3719 = vsel %vm3716, %v3718, %v3714
  %v3720 = vmul.f32 1.0, %v3719
  %v3721 = vmul.f32 %v3654, %v3567
  %v3722 = vmul.f32 %v3612, %v3678
  %v3723 = vadd.f32 %v3721, %v3722
  %v3724 = vtanh.pop %v3723
  %v3725 = vmul.f32 %v3720, %v3724
  %v3726 = vsel %vm596, %v3725, %v3566
  %v3727 = vsel %vm596, %v3723, %v3567
  %s3728 = scalar_lea.vmem [#allocation4], 16
  %v3729 = vld [vmem:[%s3728] sm:$0xff]
  %v3731 = vsel %vm61, %v3726, 0
  %3733 = vmatpush.msra.mxu0 0.0
  %3734 = vmatpush.msra.mxu0 0.0
  %3735 = vmatpush.msra.mxu0 0.0
  %3736 = vmatpush.msra.mxu0 0.0
  %3737 = vmatpush.msra.mxu0 0.0
  %3738 = vmatpush.msra.mxu0 0.0
  %3739 = vmatpush.msra.mxu0 0.0
  %3740 = vmatpush.msra.mxu0 0.0
  %3741 = vmatpush.msra.mxu0 0.0
  %3742 = vmatpush.msra.mxu0 0.0
  %3743 = vmatpush.msra.mxu0 0.0
  %3744 = vmatpush.msra.mxu0 0.0
  %3745 = vmatpush.msra.mxu0 %v3396
  %3746 = vmatpush.msra.mxu0 %v3395
  %3747 = vmatpush.msra.mxu0 %v3394
  %3748 = vmatpush.msra.mxu0 %v3393
  %3749 = vmatmul.f32.gmra.mxu0 %v3731
  %v3750 = vpop.f32.mrf.mxu0
  %v3751 = vadd.f32 0.0, %v3750
  %3752 = vdwg.mxu0
  %v3753 = vadd.f32 %v3729, %v3751
  %v3754 = vxor.u32 %v3753, 2147483648
  %v3755 = vmul.f32 %v3754, 1.442695
  %v3756 = vpow.pop %v3755
  %v3757 = vadd.f32 %v3756, 1.0
  %v3758 = vrcp.pop %v3757
  %v3759 = vmul.f32 %v3757, %v3758
  %v3760 = vsub.f32 1.0, %v3759
  %v3761 = vmul.f32 %v3758, %v3760
  %v3762 = vadd.f32 %v3758, %v3761
  %vm3763 = vweird.f32 %v3757
  %vm3764 = vweird.f32 %v3758
  %vm3765 = vmor %vm3763, %vm3764
  %v3766 = vsel %vm3765, %v3758, %v3762
  %v3767 = vand.u32 2147483647, %v3757
  %vm3768 = vcmp.eq.f32.partialorder %v3767, 8.507059e+37
  %v3769 = vand.u32 %v3757, 2147483648
  %v3770 = vor.u32 1.1754944e-38, %v3769
  %v3771 = vsel %vm3768, %v3770, %v3766
  %v3772 = vmul.f32 1.0, %v3771
  %s3773 = scalar_lea.vmem [#allocation4], %s647
  %v3774 = vld [vmem:[%s3773] sm:$0xff]
  %3775 = vmatpush.msra.mxu0 0.0
  %3776 = vmatpush.msra.mxu0 0.0
  %3777 = vmatpush.msra.mxu0 0.0
  %3778 = vmatpush.msra.mxu0 0.0
  %3779 = vmatpush.msra.mxu0 0.0
  %3780 = vmatpush.msra.mxu0 0.0
  %3781 = vmatpush.msra.mxu0 0.0
  %3782 = vmatpush.msra.mxu0 0.0
  %3783 = vmatpush.msra.mxu0 0.0
  %3784 = vmatpush.msra.mxu0 0.0
  %3785 = vmatpush.msra.mxu0 0.0
  %3786 = vmatpush.msra.mxu0 0.0
  %3787 = vmatpush.msra.mxu0 %v3401
  %3788 = vmatpush.msra.mxu0 %v3400
  %3789 = vmatpush.msra.mxu0 %v3399
  %3790 = vmatpush.msra.mxu0 %v3398
  %3791 = vmatmul.f32.gmra.mxu0 %v3731
  %v3792 = vpop.f32.mrf.mxu0
  %v3793 = vadd.f32 0.0, %v3792
  %3794 = vdwg.mxu0
  %v3795 = vadd.f32 %v3774, %v3793
  %v3796 = vxor.u32 %v3795, 2147483648
  %v3797 = vmul.f32 %v3796, 1.442695
  %v3798 = vpow.pop %v3797
  %v3799 = vadd.f32 %v3798, 1.0
  %v3800 = vrcp.pop %v3799
  %v3801 = vmul.f32 %v3799, %v3800
  %v3802 = vsub.f32 1.0, %v3801
  %v3803 = vmul.f32 %v3800, %v3802
  %v3804 = vadd.f32 %v3800, %v3803
  %vm3805 = vweird.f32 %v3799
  %vm3806 = vweird.f32 %v3800
  %vm3807 = vmor %vm3805, %vm3806
  %v3808 = vsel %vm3807, %v3800, %v3804
  %v3809 = vand.u32 2147483647, %v3799
  %vm3810 = vcmp.eq.f32.partialorder %v3809, 8.507059e+37
  %v3811 = vand.u32 %v3799, 2147483648
  %v3812 = vor.u32 1.1754944e-38, %v3811
  %v3813 = vsel %vm3810, %v3812, %v3808
  %v3814 = vmul.f32 1.0, %v3813
  %s3815 = scalar_lea.vmem [#allocation4], %s690
  %v3816 = vld [vmem:[%s3815] sm:$0xff]
  %3817 = vmatpush.msra.mxu0 0.0
  %3818 = vmatpush.msra.mxu0 0.0
  %3819 = vmatpush.msra.mxu0 0.0
  %3820 = vmatpush.msra.mxu0 0.0
  %3821 = vmatpush.msra.mxu0 0.0
  %3822 = vmatpush.msra.mxu0 0.0
  %3823 = vmatpush.msra.mxu0 0.0
  %3824 = vmatpush.msra.mxu0 0.0
  %3825 = vmatpush.msra.mxu0 0.0
  %3826 = vmatpush.msra.mxu0 0.0
  %3827 = vmatpush.msra.mxu0 0.0
  %3828 = vmatpush.msra.mxu0 0.0
  %3829 = vmatpush.msra.mxu0 %v3406
  %3830 = vmatpush.msra.mxu0 %v3405
  %3831 = vmatpush.msra.mxu0 %v3404
  %3832 = vmatpush.msra.mxu0 %v3403
  %3833 = vmatmul.f32.gmra.mxu0 %v3731
  %v3834 = vpop.f32.mrf.mxu0
  %v3835 = vadd.f32 0.0, %v3834
  %3836 = vdwg.mxu0
  %v3837 = vadd.f32 %v3816, %v3835
  %v3838 = vtanh.pop %v3837
  %s3839 = scalar_lea.vmem [#allocation4], %s715
  %v3840 = vld [vmem:[%s3839] sm:$0xff]
  %3841 = vmatpush.msra.mxu0 0.0
  %3842 = vmatpush.msra.mxu0 0.0
  %3843 = vmatpush.msra.mxu0 0.0
  %3844 = vmatpush.msra.mxu0 0.0
  %3845 = vmatpush.msra.mxu0 0.0
  %3846 = vmatpush.msra.mxu0 0.0
  %3847 = vmatpush.msra.mxu0 0.0
  %3848 = vmatpush.msra.mxu0 0.0
  %3849 = vmatpush.msra.mxu0 0.0
  %3850 = vmatpush.msra.mxu0 0.0
  %3851 = vmatpush.msra.mxu0 0.0
  %3852 = vmatpush.msra.mxu0 0.0
  %3853 = vmatpush.msra.mxu0 %v3411
  %3854 = vmatpush.msra.mxu0 %v3410
  %3855 = vmatpush.msra.mxu0 %v3409
  %3856 = vmatpush.msra.mxu0 %v3408
  %3857 = vmatmul.f32.gmra.mxu0 %v3731
  %v3858 = vpop.f32.mrf.mxu0
  %v3859 = vadd.f32 0.0, %v3858
  %3860 = vdwg.mxu0
  %v3861 = vadd.f32 %v3840, %v3859
  %v3862 = vxor.u32 %v3861, 2147483648
  %v3863 = vmul.f32 %v3862, 1.442695
  %v3864 = vpow.pop %v3863
  %v3865 = vadd.f32 %v3864, 1.0
  %v3866 = vrcp.pop %v3865
  %v3867 = vmul.f32 %v3865, %v3866
  %v3868 = vsub.f32 1.0, %v3867
  %v3869 = vmul.f32 %v3866, %v3868
  %v3870 = vadd.f32 %v3866, %v3869
  %vm3871 = vweird.f32 %v3865
  %vm3872 = vweird.f32 %v3866
  %vm3873 = vmor %vm3871, %vm3872
  %v3874 = vsel %vm3873, %v3866, %v3870
  %v3875 = vand.u32 2147483647, %v3865
  %vm3876 = vcmp.eq.f32.partialorder %v3875, 8.507059e+37
  %v3877 = vand.u32 %v3865, 2147483648
  %v3878 = vor.u32 1.1754944e-38, %v3877
  %v3879 = vsel %vm3876, %v3878, %v3874
  %v3880 = vmul.f32 1.0, %v3879
  %v3881 = vmul.f32 %v3814, %v3727
  %v3882 = vmul.f32 %v3772, %v3838
  %v3883 = vadd.f32 %v3881, %v3882
  %v3884 = vtanh.pop %v3883
  %v3885 = vmul.f32 %v3880, %v3884
  %v3886 = vsel %vm768, %v3885, %v3726
  %v3887 = vsel %vm768, %v3883, %v3727
  %s3888 = scalar_lea.vmem [#allocation4], 24
  %v3889 = vld [vmem:[%s3888] sm:$0xff]
  %v3891 = vsel %vm61, %v3886, 0
  %3893 = vmatpush.msra.mxu0 0.0
  %3894 = vmatpush.msra.mxu0 0.0
  %3895 = vmatpush.msra.mxu0 0.0
  %3896 = vmatpush.msra.mxu0 0.0
  %3897 = vmatpush.msra.mxu0 0.0
  %3898 = vmatpush.msra.mxu0 0.0
  %3899 = vmatpush.msra.mxu0 0.0
  %3900 = vmatpush.msra.mxu0 0.0
  %3901 = vmatpush.msra.mxu0 0.0
  %3902 = vmatpush.msra.mxu0 0.0
  %3903 = vmatpush.msra.mxu0 0.0
  %3904 = vmatpush.msra.mxu0 0.0
  %3905 = vmatpush.msra.mxu0 %v3396
  %3906 = vmatpush.msra.mxu0 %v3395
  %3907 = vmatpush.msra.mxu0 %v3394
  %3908 = vmatpush.msra.mxu0 %v3393
  %3909 = vmatmul.f32.gmra.mxu0 %v3891
  %v3910 = vpop.f32.mrf.mxu0
  %v3911 = vadd.f32 0.0, %v3910
  %3912 = vdwg.mxu0
  %v3913 = vadd.f32 %v3889, %v3911
  %v3914 = vxor.u32 %v3913, 2147483648
  %v3915 = vmul.f32 %v3914, 1.442695
  %v3916 = vpow.pop %v3915
  %v3917 = vadd.f32 %v3916, 1.0
  %v3918 = vrcp.pop %v3917
  %v3919 = vmul.f32 %v3917, %v3918
  %v3920 = vsub.f32 1.0, %v3919
  %v3921 = vmul.f32 %v3918, %v3920
  %v3922 = vadd.f32 %v3918, %v3921
  %vm3923 = vweird.f32 %v3917
  %vm3924 = vweird.f32 %v3918
  %vm3925 = vmor %vm3923, %vm3924
  %v3926 = vsel %vm3925, %v3918, %v3922
  %v3927 = vand.u32 2147483647, %v3917
  %vm3928 = vcmp.eq.f32.partialorder %v3927, 8.507059e+37
  %v3929 = vand.u32 %v3917, 2147483648
  %v3930 = vor.u32 1.1754944e-38, %v3929
  %v3931 = vsel %vm3928, %v3930, %v3926
  %v3932 = vmul.f32 1.0, %v3931
  %s3933 = scalar_lea.vmem [#allocation4], %s819
  %v3934 = vld [vmem:[%s3933] sm:$0xff]
  %3935 = vmatpush.msra.mxu0 0.0
  %3936 = vmatpush.msra.mxu0 0.0
  %3937 = vmatpush.msra.mxu0 0.0
  %3938 = vmatpush.msra.mxu0 0.0
  %3939 = vmatpush.msra.mxu0 0.0
  %3940 = vmatpush.msra.mxu0 0.0
  %3941 = vmatpush.msra.mxu0 0.0
  %3942 = vmatpush.msra.mxu0 0.0
  %3943 = vmatpush.msra.mxu0 0.0
  %3944 = vmatpush.msra.mxu0 0.0
  %3945 = vmatpush.msra.mxu0 0.0
  %3946 = vmatpush.msra.mxu0 0.0
  %3947 = vmatpush.msra.mxu0 %v3401
  %3948 = vmatpush.msra.mxu0 %v3400
  %3949 = vmatpush.msra.mxu0 %v3399
  %3950 = vmatpush.msra.mxu0 %v3398
  %3951 = vmatmul.f32.gmra.mxu0 %v3891
  %v3952 = vpop.f32.mrf.mxu0
  %v3953 = vadd.f32 0.0, %v3952
  %3954 = vdwg.mxu0
  %v3955 = vadd.f32 %v3934, %v3953
  %v3956 = vxor.u32 %v3955, 2147483648
  %v3957 = vmul.f32 %v3956, 1.442695
  %v3958 = vpow.pop %v3957
  %v3959 = vadd.f32 %v3958, 1.0
  %v3960 = vrcp.pop %v3959
  %v3961 = vmul.f32 %v3959, %v3960
  %v3962 = vsub.f32 1.0, %v3961
  %v3963 = vmul.f32 %v3960, %v3962
  %v3964 = vadd.f32 %v3960, %v3963
  %vm3965 = vweird.f32 %v3959
  %vm3966 = vweird.f32 %v3960
  %vm3967 = vmor %vm3965, %vm3966
  %v3968 = vsel %vm3967, %v3960, %v3964
  %v3969 = vand.u32 2147483647, %v3959
  %vm3970 = vcmp.eq.f32.partialorder %v3969, 8.507059e+37
  %v3971 = vand.u32 %v3959, 2147483648
  %v3972 = vor.u32 1.1754944e-38, %v3971
  %v3973 = vsel %vm3970, %v3972, %v3968
  %v3974 = vmul.f32 1.0, %v3973
  %s3975 = scalar_lea.vmem [#allocation4], %s862
  %v3976 = vld [vmem:[%s3975] sm:$0xff]
  %3977 = vmatpush.msra.mxu0 0.0
  %3978 = vmatpush.msra.mxu0 0.0
  %3979 = vmatpush.msra.mxu0 0.0
  %3980 = vmatpush.msra.mxu0 0.0
  %3981 = vmatpush.msra.mxu0 0.0
  %3982 = vmatpush.msra.mxu0 0.0
  %3983 = vmatpush.msra.mxu0 0.0
  %3984 = vmatpush.msra.mxu0 0.0
  %3985 = vmatpush.msra.mxu0 0.0
  %3986 = vmatpush.msra.mxu0 0.0
  %3987 = vmatpush.msra.mxu0 0.0
  %3988 = vmatpush.msra.mxu0 0.0
  %3989 = vmatpush.msra.mxu0 %v3406
  %3990 = vmatpush.msra.mxu0 %v3405
  %3991 = vmatpush.msra.mxu0 %v3404
  %3992 = vmatpush.msra.mxu0 %v3403
  %3993 = vmatmul.f32.gmra.mxu0 %v3891
  %v3994 = vpop.f32.mrf.mxu0
  %v3995 = vadd.f32 0.0, %v3994
  %3996 = vdwg.mxu0
  %v3997 = vadd.f32 %v3976, %v3995
  %v3998 = vtanh.pop %v3997
  %s3999 = scalar_lea.vmem [#allocation4], %s887
  %v4000 = vld [vmem:[%s3999] sm:$0xff]
  %4001 = vmatpush.msra.mxu0 0.0
  %4002 = vmatpush.msra.mxu0 0.0
  %4003 = vmatpush.msra.mxu0 0.0
  %4004 = vmatpush.msra.mxu0 0.0
  %4005 = vmatpush.msra.mxu0 0.0
  %4006 = vmatpush.msra.mxu0 0.0
  %4007 = vmatpush.msra.mxu0 0.0
  %4008 = vmatpush.msra.mxu0 0.0
  %4009 = vmatpush.msra.mxu0 0.0
  %4010 = vmatpush.msra.mxu0 0.0
  %4011 = vmatpush.msra.mxu0 0.0
  %4012 = vmatpush.msra.mxu0 0.0
  %4013 = vmatpush.msra.mxu0 %v3411
  %4014 = vmatpush.msra.mxu0 %v3410
  %4015 = vmatpush.msra.mxu0 %v3409
  %4016 = vmatpush.msra.mxu0 %v3408
  %4017 = vmatmul.f32.gmra.mxu0 %v3891
  %v4018 = vpop.f32.mrf.mxu0
  %v4019 = vadd.f32 0.0, %v4018
  %4020 = vdwg.mxu0
  %v4021 = vadd.f32 %v4000, %v4019
  %v4022 = vxor.u32 %v4021, 2147483648
  %v4023 = vmul.f32 %v4022, 1.442695
  %v4024 = vpow.pop %v4023
  %v4025 = vadd.f32 %v4024, 1.0
  %v4026 = vrcp.pop %v4025
  %v4027 = vmul.f32 %v4025, %v4026
  %v4028 = vsub.f32 1.0, %v4027
  %v4029 = vmul.f32 %v4026, %v4028
  %v4030 = vadd.f32 %v4026, %v4029
  %vm4031 = vweird.f32 %v4025
  %vm4032 = vweird.f32 %v4026
  %vm4033 = vmor %vm4031, %vm4032
  %v4034 = vsel %vm4033, %v4026, %v4030
  %v4035 = vand.u32 2147483647, %v4025
  %vm4036 = vcmp.eq.f32.partialorder %v4035, 8.507059e+37
  %v4037 = vand.u32 %v4025, 2147483648
  %v4038 = vor.u32 1.1754944e-38, %v4037
  %v4039 = vsel %vm4036, %v4038, %v4034
  %v4040 = vmul.f32 1.0, %v4039
  %v4041 = vmul.f32 %v3974, %v3887
  %v4042 = vmul.f32 %v3932, %v3998
  %v4043 = vadd.f32 %v4041, %v4042
  %v4044 = vtanh.pop %v4043
  %v4045 = vmul.f32 %v4040, %v4044
  %v4046 = vsel %vm940, %v4045, %v3886
  %v4047 = vsel %vm940, %v4043, %v3887
  %s4048 = scalar_lea.vmem [#allocation4], 32
  %v4049 = vld [vmem:[%s4048] sm:$0xff]
  %v4051 = vsel %vm61, %v4046, 0
  %4053 = vmatpush.msra.mxu0 0.0
  %4054 = vmatpush.msra.mxu0 0.0
  %4055 = vmatpush.msra.mxu0 0.0
  %4056 = vmatpush.msra.mxu0 0.0
  %4057 = vmatpush.msra.mxu0 0.0
  %4058 = vmatpush.msra.mxu0 0.0
  %4059 = vmatpush.msra.mxu0 0.0
  %4060 = vmatpush.msra.mxu0 0.0
  %4061 = vmatpush.msra.mxu0 0.0
  %4062 = vmatpush.msra.mxu0 0.0
  %4063 = vmatpush.msra.mxu0 0.0
  %4064 = vmatpush.msra.mxu0 0.0
  %4065 = vmatpush.msra.mxu0 %v3396
  %4066 = vmatpush.msra.mxu0 %v3395
  %4067 = vmatpush.msra.mxu0 %v3394
  %4068 = vmatpush.msra.mxu0 %v3393
  %4069 = vmatmul.f32.gmra.mxu0 %v4051
  %v4070 = vpop.f32.mrf.mxu0
  %v4071 = vadd.f32 0.0, %v4070
  %4072 = vdwg.mxu0
  %v4073 = vadd.f32 %v4049, %v4071
  %v4074 = vxor.u32 %v4073, 2147483648
  %v4075 = vmul.f32 %v4074, 1.442695
  %v4076 = vpow.pop %v4075
  %v4077 = vadd.f32 %v4076, 1.0
  %v4078 = vrcp.pop %v4077
  %v4079 = vmul.f32 %v4077, %v4078
  %v4080 = vsub.f32 1.0, %v4079
  %v4081 = vmul.f32 %v4078, %v4080
  %v4082 = vadd.f32 %v4078, %v4081
  %vm4083 = vweird.f32 %v4077
  %vm4084 = vweird.f32 %v4078
  %vm4085 = vmor %vm4083, %vm4084
  %v4086 = vsel %vm4085, %v4078, %v4082
  %v4087 = vand.u32 2147483647, %v4077
  %vm4088 = vcmp.eq.f32.partialorder %v4087, 8.507059e+37
  %v4089 = vand.u32 %v4077, 2147483648
  %v4090 = vor.u32 1.1754944e-38, %v4089
  %v4091 = vsel %vm4088, %v4090, %v4086
  %v4092 = vmul.f32 1.0, %v4091
  %s4093 = scalar_lea.vmem [#allocation4], %s991
  %v4094 = vld [vmem:[%s4093] sm:$0xff]
  %4095 = vmatpush.msra.mxu0 0.0
  %4096 = vmatpush.msra.mxu0 0.0
  %4097 = vmatpush.msra.mxu0 0.0
  %4098 = vmatpush.msra.mxu0 0.0
  %4099 = vmatpush.msra.mxu0 0.0
  %4100 = vmatpush.msra.mxu0 0.0
  %4101 = vmatpush.msra.mxu0 0.0
  %4102 = vmatpush.msra.mxu0 0.0
  %4103 = vmatpush.msra.mxu0 0.0
  %4104 = vmatpush.msra.mxu0 0.0
  %4105 = vmatpush.msra.mxu0 0.0
  %4106 = vmatpush.msra.mxu0 0.0
  %4107 = vmatpush.msra.mxu0 %v3401
  %4108 = vmatpush.msra.mxu0 %v3400
  %4109 = vmatpush.msra.mxu0 %v3399
  %4110 = vmatpush.msra.mxu0 %v3398
  %4111 = vmatmul.f32.gmra.mxu0 %v4051
  %v4112 = vpop.f32.mrf.mxu0
  %v4113 = vadd.f32 0.0, %v4112
  %4114 = vdwg.mxu0
  %v4115 = vadd.f32 %v4094, %v4113
  %v4116 = vxor.u32 %v4115, 2147483648
  %v4117 = vmul.f32 %v4116, 1.442695
  %v4118 = vpow.pop %v4117
  %v4119 = vadd.f32 %v4118, 1.0
  %v4120 = vrcp.pop %v4119
  %v4121 = vmul.f32 %v4119, %v4120
  %v4122 = vsub.f32 1.0, %v4121
  %v4123 = vmul.f32 %v4120, %v4122
  %v4124 = vadd.f32 %v4120, %v4123
  %vm4125 = vweird.f32 %v4119
  %vm4126 = vweird.f32 %v4120
  %vm4127 = vmor %vm4125, %vm4126
  %v4128 = vsel %vm4127, %v4120, %v4124
  %v4129 = vand.u32 2147483647, %v4119
  %vm4130 = vcmp.eq.f32.partialorder %v4129, 8.507059e+37
  %v4131 = vand.u32 %v4119, 2147483648
  %v4132 = vor.u32 1.1754944e-38, %v4131
  %v4133 = vsel %vm4130, %v4132, %v4128
  %v4134 = vmul.f32 1.0, %v4133
  %s4135 = scalar_lea.vmem [#allocation4], %s1034
  %v4136 = vld [vmem:[%s4135] sm:$0xff]
  %4137 = vmatpush.msra.mxu0 0.0
  %4138 = vmatpush.msra.mxu0 0.0
  %4139 = vmatpush.msra.mxu0 0.0
  %4140 = vmatpush.msra.mxu0 0.0
  %4141 = vmatpush.msra.mxu0 0.0
  %4142 = vmatpush.msra.mxu0 0.0
  %4143 = vmatpush.msra.mxu0 0.0
  %4144 = vmatpush.msra.mxu0 0.0
  %4145 = vmatpush.msra.mxu0 0.0
  %4146 = vmatpush.msra.mxu0 0.0
  %4147 = vmatpush.msra.mxu0 0.0
  %4148 = vmatpush.msra.mxu0 0.0
  %4149 = vmatpush.msra.mxu0 %v3406
  %4150 = vmatpush.msra.mxu0 %v3405
  %4151 = vmatpush.msra.mxu0 %v3404
  %4152 = vmatpush.msra.mxu0 %v3403
  %4153 = vmatmul.f32.gmra.mxu0 %v4051
  %v4154 = vpop.f32.mrf.mxu0
  %v4155 = vadd.f32 0.0, %v4154
  %4156 = vdwg.mxu0
  %v4157 = vadd.f32 %v4136, %v4155
  %v4158 = vtanh.pop %v4157
  %s4159 = scalar_lea.vmem [#allocation4], %s1059
  %v4160 = vld [vmem:[%s4159] sm:$0xff]
  %4161 = vmatpush.msra.mxu0 0.0
  %4162 = vmatpush.msra.mxu0 0.0
  %4163 = vmatpush.msra.mxu0 0.0
  %4164 = vmatpush.msra.mxu0 0.0
  %4165 = vmatpush.msra.mxu0 0.0
  %4166 = vmatpush.msra.mxu0 0.0
  %4167 = vmatpush.msra.mxu0 0.0
  %4168 = vmatpush.msra.mxu0 0.0
  %4169 = vmatpush.msra.mxu0 0.0
  %4170 = vmatpush.msra.mxu0 0.0
  %4171 = vmatpush.msra.mxu0 0.0
  %4172 = vmatpush.msra.mxu0 0.0
  %4173 = vmatpush.msra.mxu0 %v3411
  %4174 = vmatpush.msra.mxu0 %v3410
  %4175 = vmatpush.msra.mxu0 %v3409
  %4176 = vmatpush.msra.mxu0 %v3408
  %4177 = vmatmul.f32.gmra.mxu0 %v4051
  %v4178 = vpop.f32.mrf.mxu0
  %v4179 = vadd.f32 0.0, %v4178
  %4180 = vdwg.mxu0
  %v4181 = vadd.f32 %v4160, %v4179
  %v4182 = vxor.u32 %v4181, 2147483648
  %v4183 = vmul.f32 %v4182, 1.442695
  %v4184 = vpow.pop %v4183
  %v4185 = vadd.f32 %v4184, 1.0
  %v4186 = vrcp.pop %v4185
  %v4187 = vmul.f32 %v4185, %v4186
  %v4188 = vsub.f32 1.0, %v4187
  %v4189 = vmul.f32 %v4186, %v4188
  %v4190 = vadd.f32 %v4186, %v4189
  %vm4191 = vweird.f32 %v4185
  %vm4192 = vweird.f32 %v4186
  %vm4193 = vmor %vm4191, %vm4192
  %v4194 = vsel %vm4193, %v4186, %v4190
  %v4195 = vand.u32 2147483647, %v4185
  %vm4196 = vcmp.eq.f32.partialorder %v4195, 8.507059e+37
  %v4197 = vand.u32 %v4185, 2147483648
  %v4198 = vor.u32 1.1754944e-38, %v4197
  %v4199 = vsel %vm4196, %v4198, %v4194
  %v4200 = vmul.f32 1.0, %v4199
  %v4201 = vmul.f32 %v4134, %v4047
  %v4202 = vmul.f32 %v4092, %v4158
  %v4203 = vadd.f32 %v4201, %v4202
  %v4204 = vtanh.pop %v4203
  %v4205 = vmul.f32 %v4200, %v4204
  %v4206 = vsel %vm1112, %v4205, %v4046
  %v4207 = vsel %vm1112, %v4203, %v4047
  %s4208 = scalar_lea.vmem [#allocation4], 40
  %v4209 = vld [vmem:[%s4208] sm:$0xff]
  %v4211 = vsel %vm61, %v4206, 0
  %4213 = vmatpush.msra.mxu0 0.0
  %4214 = vmatpush.msra.mxu0 0.0
  %4215 = vmatpush.msra.mxu0 0.0
  %4216 = vmatpush.msra.mxu0 0.0
  %4217 = vmatpush.msra.mxu0 0.0
  %4218 = vmatpush.msra.mxu0 0.0
  %4219 = vmatpush.msra.mxu0 0.0
  %4220 = vmatpush.msra.mxu0 0.0
  %4221 = vmatpush.msra.mxu0 0.0
  %4222 = vmatpush.msra.mxu0 0.0
  %4223 = vmatpush.msra.mxu0 0.0
  %4224 = vmatpush.msra.mxu0 0.0
  %4225 = vmatpush.msra.mxu0 %v3396
  %4226 = vmatpush.msra.mxu0 %v3395
  %4227 = vmatpush.msra.mxu0 %v3394
  %4228 = vmatpush.msra.mxu0 %v3393
  %4229 = vmatmul.f32.gmra.mxu0 %v4211
  %v4230 = vpop.f32.mrf.mxu0
  %v4231 = vadd.f32 0.0, %v4230
  %4232 = vdwg.mxu0
  %v4233 = vadd.f32 %v4209, %v4231
  %v4234 = vxor.u32 %v4233, 2147483648
  %v4235 = vmul.f32 %v4234, 1.442695
  %v4236 = vpow.pop %v4235
  %v4237 = vadd.f32 %v4236, 1.0
  %v4238 = vrcp.pop %v4237
  %v4239 = vmul.f32 %v4237, %v4238
  %v4240 = vsub.f32 1.0, %v4239
  %v4241 = vmul.f32 %v4238, %v4240
  %v4242 = vadd.f32 %v4238, %v4241
  %vm4243 = vweird.f32 %v4237
  %vm4244 = vweird.f32 %v4238
  %vm4245 = vmor %vm4243, %vm4244
  %v4246 = vsel %vm4245, %v4238, %v4242
  %v4247 = vand.u32 2147483647, %v4237
  %vm4248 = vcmp.eq.f32.partialorder %v4247, 8.507059e+37
  %v4249 = vand.u32 %v4237, 2147483648
  %v4250 = vor.u32 1.1754944e-38, %v4249
  %v4251 = vsel %vm4248, %v4250, %v4246
  %v4252 = vmul.f32 1.0, %v4251
  %s4253 = scalar_lea.vmem [#allocation4], %s1163
  %v4254 = vld [vmem:[%s4253] sm:$0xff]
  %4255 = vmatpush.msra.mxu0 0.0
  %4256 = vmatpush.msra.mxu0 0.0
  %4257 = vmatpush.msra.mxu0 0.0
  %4258 = vmatpush.msra.mxu0 0.0
  %4259 = vmatpush.msra.mxu0 0.0
  %4260 = vmatpush.msra.mxu0 0.0
  %4261 = vmatpush.msra.mxu0 0.0
  %4262 = vmatpush.msra.mxu0 0.0
  %4263 = vmatpush.msra.mxu0 0.0
  %4264 = vmatpush.msra.mxu0 0.0
  %4265 = vmatpush.msra.mxu0 0.0
  %4266 = vmatpush.msra.mxu0 0.0
  %4267 = vmatpush.msra.mxu0 %v3401
  %4268 = vmatpush.msra.mxu0 %v3400
  %4269 = vmatpush.msra.mxu0 %v3399
  %4270 = vmatpush.msra.mxu0 %v3398
  %4271 = vmatmul.f32.gmra.mxu0 %v4211
  %v4272 = vpop.f32.mrf.mxu0
  %v4273 = vadd.f32 0.0, %v4272
  %4274 = vdwg.mxu0
  %v4275 = vadd.f32 %v4254, %v4273
  %v4276 = vxor.u32 %v4275, 2147483648
  %v4277 = vmul.f32 %v4276, 1.442695
  %v4278 = vpow.pop %v4277
  %v4279 = vadd.f32 %v4278, 1.0
  %v4280 = vrcp.pop %v4279
  %v4281 = vmul.f32 %v4279, %v4280
  %v4282 = vsub.f32 1.0, %v4281
  %v4283 = vmul.f32 %v4280, %v4282
  %v4284 = vadd.f32 %v4280, %v4283
  %vm4285 = vweird.f32 %v4279
  %vm4286 = vweird.f32 %v4280
  %vm4287 = vmor %vm4285, %vm4286
  %v4288 = vsel %vm4287, %v4280, %v4284
  %v4289 = vand.u32 2147483647, %v4279
  %vm4290 = vcmp.eq.f32.partialorder %v4289, 8.507059e+37
  %v4291 = vand.u32 %v4279, 2147483648
  %v4292 = vor.u32 1.1754944e-38, %v4291
  %v4293 = vsel %vm4290, %v4292, %v4288
  %v4294 = vmul.f32 1.0, %v4293
  %s4295 = scalar_lea.vmem [#allocation4], %s1206
  %v4296 = vld [vmem:[%s4295] sm:$0xff]
  %4297 = vmatpush.msra.mxu0 0.0
  %4298 = vmatpush.msra.mxu0 0.0
  %4299 = vmatpush.msra.mxu0 0.0
  %4300 = vmatpush.msra.mxu0 0.0
  %4301 = vmatpush.msra.mxu0 0.0
  %4302 = vmatpush.msra.mxu0 0.0
  %4303 = vmatpush.msra.mxu0 0.0
  %4304 = vmatpush.msra.mxu0 0.0
  %4305 = vmatpush.msra.mxu0 0.0
  %4306 = vmatpush.msra.mxu0 0.0
  %4307 = vmatpush.msra.mxu0 0.0
  %4308 = vmatpush.msra.mxu0 0.0
  %4309 = vmatpush.msra.mxu0 %v3406
  %4310 = vmatpush.msra.mxu0 %v3405
  %4311 = vmatpush.msra.mxu0 %v3404
  %4312 = vmatpush.msra.mxu0 %v3403
  %4313 = vmatmul.f32.gmra.mxu0 %v4211
  %v4314 = vpop.f32.mrf.mxu0
  %v4315 = vadd.f32 0.0, %v4314
  %4316 = vdwg.mxu0
  %v4317 = vadd.f32 %v4296, %v4315
  %v4318 = vtanh.pop %v4317
  %s4319 = scalar_lea.vmem [#allocation4], %s1231
  %v4320 = vld [vmem:[%s4319] sm:$0xff]
  %4321 = vmatpush.msra.mxu0 0.0
  %4322 = vmatpush.msra.mxu0 0.0
  %4323 = vmatpush.msra.mxu0 0.0
  %4324 = vmatpush.msra.mxu0 0.0
  %4325 = vmatpush.msra.mxu0 0.0
  %4326 = vmatpush.msra.mxu0 0.0
  %4327 = vmatpush.msra.mxu0 0.0
  %4328 = vmatpush.msra.mxu0 0.0
  %4329 = vmatpush.msra.mxu0 0.0
  %4330 = vmatpush.msra.mxu0 0.0
  %4331 = vmatpush.msra.mxu0 0.0
  %4332 = vmatpush.msra.mxu0 0.0
  %4333 = vmatpush.msra.mxu0 %v3411
  %4334 = vmatpush.msra.mxu0 %v3410
  %4335 = vmatpush.msra.mxu0 %v3409
  %4336 = vmatpush.msra.mxu0 %v3408
  %4337 = vmatmul.f32.gmra.mxu0 %v4211
  %v4338 = vpop.f32.mrf.mxu0
  %v4339 = vadd.f32 0.0, %v4338
  %4340 = vdwg.mxu0
  %v4341 = vadd.f32 %v4320, %v4339
  %v4342 = vxor.u32 %v4341, 2147483648
  %v4343 = vmul.f32 %v4342, 1.442695
  %v4344 = vpow.pop %v4343
  %v4345 = vadd.f32 %v4344, 1.0
  %v4346 = vrcp.pop %v4345
  %v4347 = vmul.f32 %v4345, %v4346
  %v4348 = vsub.f32 1.0, %v4347
  %v4349 = vmul.f32 %v4346, %v4348
  %v4350 = vadd.f32 %v4346, %v4349
  %vm4351 = vweird.f32 %v4345
  %vm4352 = vweird.f32 %v4346
  %vm4353 = vmor %vm4351, %vm4352
  %v4354 = vsel %vm4353, %v4346, %v4350
  %v4355 = vand.u32 2147483647, %v4345
  %vm4356 = vcmp.eq.f32.partialorder %v4355, 8.507059e+37
  %v4357 = vand.u32 %v4345, 2147483648
  %v4358 = vor.u32 1.1754944e-38, %v4357
  %v4359 = vsel %vm4356, %v4358, %v4354
  %v4360 = vmul.f32 1.0, %v4359
  %v4361 = vmul.f32 %v4294, %v4207
  %v4362 = vmul.f32 %v4252, %v4318
  %v4363 = vadd.f32 %v4361, %v4362
  %v4364 = vtanh.pop %v4363
  %v4365 = vmul.f32 %v4360, %v4364
  %v4366 = vsel %vm1284, %v4365, %v4206
  %v4367 = vsel %vm1284, %v4363, %v4207
  %s4368 = scalar_lea.vmem [#allocation4], 48
  %v4369 = vld [vmem:[%s4368] sm:$0xff]
  %v4371 = vsel %vm61, %v4366, 0
  %4373 = vmatpush.msra.mxu0 0.0
  %4374 = vmatpush.msra.mxu0 0.0
  %4375 = vmatpush.msra.mxu0 0.0
  %4376 = vmatpush.msra.mxu0 0.0
  %4377 = vmatpush.msra.mxu0 0.0
  %4378 = vmatpush.msra.mxu0 0.0
  %4379 = vmatpush.msra.mxu0 0.0
  %4380 = vmatpush.msra.mxu0 0.0
  %4381 = vmatpush.msra.mxu0 0.0
  %4382 = vmatpush.msra.mxu0 0.0
  %4383 = vmatpush.msra.mxu0 0.0
  %4384 = vmatpush.msra.mxu0 0.0
  %4385 = vmatpush.msra.mxu0 %v3396
  %4386 = vmatpush.msra.mxu0 %v3395
  %4387 = vmatpush.msra.mxu0 %v3394
  %4388 = vmatpush.msra.mxu0 %v3393
  %4389 = vmatmul.f32.gmra.mxu0 %v4371
  %v4390 = vpop.f32.mrf.mxu0
  %v4391 = vadd.f32 0.0, %v4390
  %4392 = vdwg.mxu0
  %v4393 = vadd.f32 %v4369, %v4391
  %v4394 = vxor.u32 %v4393, 2147483648
  %v4395 = vmul.f32 %v4394, 1.442695
  %v4396 = vpow.pop %v4395
  %v4397 = vadd.f32 %v4396, 1.0
  %v4398 = vrcp.pop %v4397
  %v4399 = vmul.f32 %v4397, %v4398
  %v4400 = vsub.f32 1.0, %v4399
  %v4401 = vmul.f32 %v4398, %v4400
  %v4402 = vadd.f32 %v4398, %v4401
  %vm4403 = vweird.f32 %v4397
  %vm4404 = vweird.f32 %v4398
  %vm4405 = vmor %vm4403, %vm4404
  %v4406 = vsel %vm4405, %v4398, %v4402
  %v4407 = vand.u32 2147483647, %v4397
  %vm4408 = vcmp.eq.f32.partialorder %v4407, 8.507059e+37
  %v4409 = vand.u32 %v4397, 2147483648
  %v4410 = vor.u32 1.1754944e-38, %v4409
  %v4411 = vsel %vm4408, %v4410, %v4406
  %v4412 = vmul.f32 1.0, %v4411
  %s4413 = scalar_lea.vmem [#allocation4], %s1335
  %v4414 = vld [vmem:[%s4413] sm:$0xff]
  %4415 = vmatpush.msra.mxu0 0.0
  %4416 = vmatpush.msra.mxu0 0.0
  %4417 = vmatpush.msra.mxu0 0.0
  %4418 = vmatpush.msra.mxu0 0.0
  %4419 = vmatpush.msra.mxu0 0.0
  %4420 = vmatpush.msra.mxu0 0.0
  %4421 = vmatpush.msra.mxu0 0.0
  %4422 = vmatpush.msra.mxu0 0.0
  %4423 = vmatpush.msra.mxu0 0.0
  %4424 = vmatpush.msra.mxu0 0.0
  %4425 = vmatpush.msra.mxu0 0.0
  %4426 = vmatpush.msra.mxu0 0.0
  %4427 = vmatpush.msra.mxu0 %v3401
  %4428 = vmatpush.msra.mxu0 %v3400
  %4429 = vmatpush.msra.mxu0 %v3399
  %4430 = vmatpush.msra.mxu0 %v3398
  %4431 = vmatmul.f32.gmra.mxu0 %v4371
  %v4432 = vpop.f32.mrf.mxu0
  %v4433 = vadd.f32 0.0, %v4432
  %4434 = vdwg.mxu0
  %v4435 = vadd.f32 %v4414, %v4433
  %v4436 = vxor.u32 %v4435, 2147483648
  %v4437 = vmul.f32 %v4436, 1.442695
  %v4438 = vpow.pop %v4437
  %v4439 = vadd.f32 %v4438, 1.0
  %v4440 = vrcp.pop %v4439
  %v4441 = vmul.f32 %v4439, %v4440
  %v4442 = vsub.f32 1.0, %v4441
  %v4443 = vmul.f32 %v4440, %v4442
  %v4444 = vadd.f32 %v4440, %v4443
  %vm4445 = vweird.f32 %v4439
  %vm4446 = vweird.f32 %v4440
  %vm4447 = vmor %vm4445, %vm4446
  %v4448 = vsel %vm4447, %v4440, %v4444
  %v4449 = vand.u32 2147483647, %v4439
  %vm4450 = vcmp.eq.f32.partialorder %v4449, 8.507059e+37
  %v4451 = vand.u32 %v4439, 2147483648
  %v4452 = vor.u32 1.1754944e-38, %v4451
  %v4453 = vsel %vm4450, %v4452, %v4448
  %v4454 = vmul.f32 1.0, %v4453
  %s4455 = scalar_lea.vmem [#allocation4], %s1378
  %v4456 = vld [vmem:[%s4455] sm:$0xff]
  %4457 = vmatpush.msra.mxu0 0.0
  %4458 = vmatpush.msra.mxu0 0.0
  %4459 = vmatpush.msra.mxu0 0.0
  %4460 = vmatpush.msra.mxu0 0.0
  %4461 = vmatpush.msra.mxu0 0.0
  %4462 = vmatpush.msra.mxu0 0.0
  %4463 = vmatpush.msra.mxu0 0.0
  %4464 = vmatpush.msra.mxu0 0.0
  %4465 = vmatpush.msra.mxu0 0.0
  %4466 = vmatpush.msra.mxu0 0.0
  %4467 = vmatpush.msra.mxu0 0.0
  %4468 = vmatpush.msra.mxu0 0.0
  %4469 = vmatpush.msra.mxu0 %v3406
  %4470 = vmatpush.msra.mxu0 %v3405
  %4471 = vmatpush.msra.mxu0 %v3404
  %4472 = vmatpush.msra.mxu0 %v3403
  %4473 = vmatmul.f32.gmra.mxu0 %v4371
  %v4474 = vpop.f32.mrf.mxu0
  %v4475 = vadd.f32 0.0, %v4474
  %4476 = vdwg.mxu0
  %v4477 = vadd.f32 %v4456, %v4475
  %v4478 = vtanh.pop %v4477
  %s4479 = scalar_lea.vmem [#allocation4], %s1403
  %v4480 = vld [vmem:[%s4479] sm:$0xff]
  %4481 = vmatpush.msra.mxu0 0.0
  %4482 = vmatpush.msra.mxu0 0.0
  %4483 = vmatpush.msra.mxu0 0.0
  %4484 = vmatpush.msra.mxu0 0.0
  %4485 = vmatpush.msra.mxu0 0.0
  %4486 = vmatpush.msra.mxu0 0.0
  %4487 = vmatpush.msra.mxu0 0.0
  %4488 = vmatpush.msra.mxu0 0.0
  %4489 = vmatpush.msra.mxu0 0.0
  %4490 = vmatpush.msra.mxu0 0.0
  %4491 = vmatpush.msra.mxu0 0.0
  %4492 = vmatpush.msra.mxu0 0.0
  %4493 = vmatpush.msra.mxu0 %v3411
  %4494 = vmatpush.msra.mxu0 %v3410
  %4495 = vmatpush.msra.mxu0 %v3409
  %4496 = vmatpush.msra.mxu0 %v3408
  %4497 = vmatmul.f32.gmra.mxu0 %v4371
  %v4498 = vpop.f32.mrf.mxu0
  %v4499 = vadd.f32 0.0, %v4498
  %4500 = vdwg.mxu0
  %v4501 = vadd.f32 %v4480, %v4499
  %v4502 = vxor.u32 %v4501, 2147483648
  %v4503 = vmul.f32 %v4502, 1.442695
  %v4504 = vpow.pop %v4503
  %v4505 = vadd.f32 %v4504, 1.0
  %v4506 = vrcp.pop %v4505
  %v4507 = vmul.f32 %v4505, %v4506
  %v4508 = vsub.f32 1.0, %v4507
  %v4509 = vmul.f32 %v4506, %v4508
  %v4510 = vadd.f32 %v4506, %v4509
  %vm4511 = vweird.f32 %v4505
  %vm4512 = vweird.f32 %v4506
  %vm4513 = vmor %vm4511, %vm4512
  %v4514 = vsel %vm4513, %v4506, %v4510
  %v4515 = vand.u32 2147483647, %v4505
  %vm4516 = vcmp.eq.f32.partialorder %v4515, 8.507059e+37
  %v4517 = vand.u32 %v4505, 2147483648
  %v4518 = vor.u32 1.1754944e-38, %v4517
  %v4519 = vsel %vm4516, %v4518, %v4514
  %v4520 = vmul.f32 1.0, %v4519
  %v4521 = vmul.f32 %v4454, %v4367
  %v4522 = vmul.f32 %v4412, %v4478
  %v4523 = vadd.f32 %v4521, %v4522
  %v4524 = vtanh.pop %v4523
  %v4525 = vmul.f32 %v4520, %v4524
  %v4526 = vsel %vm1456, %v4525, %v4366
  %v4527 = vsel %vm1456, %v4523, %v4367
  %s4528 = scalar_lea.vmem [#allocation4], 56
  %v4529 = vld [vmem:[%s4528] sm:$0xff]
  %v4531 = vsel %vm61, %v4526, 0
  %4533 = vmatpush.msra.mxu0 0.0
  %4534 = vmatpush.msra.mxu0 0.0
  %4535 = vmatpush.msra.mxu0 0.0
  %4536 = vmatpush.msra.mxu0 0.0
  %4537 = vmatpush.msra.mxu0 0.0
  %4538 = vmatpush.msra.mxu0 0.0
  %4539 = vmatpush.msra.mxu0 0.0
  %4540 = vmatpush.msra.mxu0 0.0
  %4541 = vmatpush.msra.mxu0 0.0
  %4542 = vmatpush.msra.mxu0 0.0
  %4543 = vmatpush.msra.mxu0 0.0
  %4544 = vmatpush.msra.mxu0 0.0
  %4545 = vmatpush.msra.mxu0 %v3396
  %4546 = vmatpush.msra.mxu0 %v3395
  %4547 = vmatpush.msra.mxu0 %v3394
  %4548 = vmatpush.msra.mxu0 %v3393
  %4549 = vmatmul.f32.gmra.mxu0 %v4531
  %v4550 = vpop.f32.mrf.mxu0
  %v4551 = vadd.f32 0.0, %v4550
  %4552 = vdwg.mxu0
  %v4553 = vadd.f32 %v4529, %v4551
  %v4554 = vxor.u32 %v4553, 2147483648
  %v4555 = vmul.f32 %v4554, 1.442695
  %v4556 = vpow.pop %v4555
  %v4557 = vadd.f32 %v4556, 1.0
  %v4558 = vrcp.pop %v4557
  %v4559 = vmul.f32 %v4557, %v4558
  %v4560 = vsub.f32 1.0, %v4559
  %v4561 = vmul.f32 %v4558, %v4560
  %v4562 = vadd.f32 %v4558, %v4561
  %vm4563 = vweird.f32 %v4557
  %vm4564 = vweird.f32 %v4558
  %vm4565 = vmor %vm4563, %vm4564
  %v4566 = vsel %vm4565, %v4558, %v4562
  %v4567 = vand.u32 2147483647, %v4557
  %vm4568 = vcmp.eq.f32.partialorder %v4567, 8.507059e+37
  %v4569 = vand.u32 %v4557, 2147483648
  %v4570 = vor.u32 1.1754944e-38, %v4569
  %v4571 = vsel %vm4568, %v4570, %v4566
  %v4572 = vmul.f32 1.0, %v4571
  %s4573 = scalar_lea.vmem [#allocation4], %s1507
  %v4574 = vld [vmem:[%s4573] sm:$0xff]
  %4575 = vmatpush.msra.mxu0 0.0
  %4576 = vmatpush.msra.mxu0 0.0
  %4577 = vmatpush.msra.mxu0 0.0
  %4578 = vmatpush.msra.mxu0 0.0
  %4579 = vmatpush.msra.mxu0 0.0
  %4580 = vmatpush.msra.mxu0 0.0
  %4581 = vmatpush.msra.mxu0 0.0
  %4582 = vmatpush.msra.mxu0 0.0
  %4583 = vmatpush.msra.mxu0 0.0
  %4584 = vmatpush.msra.mxu0 0.0
  %4585 = vmatpush.msra.mxu0 0.0
  %4586 = vmatpush.msra.mxu0 0.0
  %4587 = vmatpush.msra.mxu0 %v3401
  %4588 = vmatpush.msra.mxu0 %v3400
  %4589 = vmatpush.msra.mxu0 %v3399
  %4590 = vmatpush.msra.mxu0 %v3398
  %4591 = vmatmul.f32.gmra.mxu0 %v4531
  %v4592 = vpop.f32.mrf.mxu0
  %v4593 = vadd.f32 0.0, %v4592
  %4594 = vdwg.mxu0
  %v4595 = vadd.f32 %v4574, %v4593
  %v4596 = vxor.u32 %v4595, 2147483648
  %v4597 = vmul.f32 %v4596, 1.442695
  %v4598 = vpow.pop %v4597
  %v4599 = vadd.f32 %v4598, 1.0
  %v4600 = vrcp.pop %v4599
  %v4601 = vmul.f32 %v4599, %v4600
  %v4602 = vsub.f32 1.0, %v4601
  %v4603 = vmul.f32 %v4600, %v4602
  %v4604 = vadd.f32 %v4600, %v4603
  %vm4605 = vweird.f32 %v4599
  %vm4606 = vweird.f32 %v4600
  %vm4607 = vmor %vm4605, %vm4606
  %v4608 = vsel %vm4607, %v4600, %v4604
  %v4609 = vand.u32 2147483647, %v4599
  %vm4610 = vcmp.eq.f32.partialorder %v4609, 8.507059e+37
  %v4611 = vand.u32 %v4599, 2147483648
  %v4612 = vor.u32 1.1754944e-38, %v4611
  %v4613 = vsel %vm4610, %v4612, %v4608
  %v4614 = vmul.f32 1.0, %v4613
  %s4615 = scalar_lea.vmem [#allocation4], %s1550
  %v4616 = vld [vmem:[%s4615] sm:$0xff]
  %4617 = vmatpush.msra.mxu0 0.0
  %4618 = vmatpush.msra.mxu0 0.0
  %4619 = vmatpush.msra.mxu0 0.0
  %4620 = vmatpush.msra.mxu0 0.0
  %4621 = vmatpush.msra.mxu0 0.0
  %4622 = vmatpush.msra.mxu0 0.0
  %4623 = vmatpush.msra.mxu0 0.0
  %4624 = vmatpush.msra.mxu0 0.0
  %4625 = vmatpush.msra.mxu0 0.0
  %4626 = vmatpush.msra.mxu0 0.0
  %4627 = vmatpush.msra.mxu0 0.0
  %4628 = vmatpush.msra.mxu0 0.0
  %4629 = vmatpush.msra.mxu0 %v3406
  %4630 = vmatpush.msra.mxu0 %v3405
  %4631 = vmatpush.msra.mxu0 %v3404
  %4632 = vmatpush.msra.mxu0 %v3403
  %4633 = vmatmul.f32.gmra.mxu0 %v4531
  %v4634 = vpop.f32.mrf.mxu0
  %v4635 = vadd.f32 0.0, %v4634
  %4636 = vdwg.mxu0
  %v4637 = vadd.f32 %v4616, %v4635
  %v4638 = vtanh.pop %v4637
  %s4639 = scalar_lea.vmem [#allocation4], %s1575
  %v4640 = vld [vmem:[%s4639] sm:$0xff]
  %4641 = vmatpush.msra.mxu0 0.0
  %4642 = vmatpush.msra.mxu0 0.0
  %4643 = vmatpush.msra.mxu0 0.0
  %4644 = vmatpush.msra.mxu0 0.0
  %4645 = vmatpush.msra.mxu0 0.0
  %4646 = vmatpush.msra.mxu0 0.0
  %4647 = vmatpush.msra.mxu0 0.0
  %4648 = vmatpush.msra.mxu0 0.0
  %4649 = vmatpush.msra.mxu0 0.0
  %4650 = vmatpush.msra.mxu0 0.0
  %4651 = vmatpush.msra.mxu0 0.0
  %4652 = vmatpush.msra.mxu0 0.0
  %4653 = vmatpush.msra.mxu0 %v3411
  %4654 = vmatpush.msra.mxu0 %v3410
  %4655 = vmatpush.msra.mxu0 %v3409
  %4656 = vmatpush.msra.mxu0 %v3408
  %4657 = vmatmul.f32.gmra.mxu0 %v4531
  %v4658 = vpop.f32.mrf.mxu0
  %v4659 = vadd.f32 0.0, %v4658
  %4660 = vdwg.mxu0
  %v4661 = vadd.f32 %v4640, %v4659
  %v4662 = vxor.u32 %v4661, 2147483648
  %v4663 = vmul.f32 %v4662, 1.442695
  %v4664 = vpow.pop %v4663
  %v4665 = vadd.f32 %v4664, 1.0
  %v4666 = vrcp.pop %v4665
  %v4667 = vmul.f32 %v4665, %v4666
  %v4668 = vsub.f32 1.0, %v4667
  %v4669 = vmul.f32 %v4666, %v4668
  %v4670 = vadd.f32 %v4666, %v4669
  %vm4671 = vweird.f32 %v4665
  %vm4672 = vweird.f32 %v4666
  %vm4673 = vmor %vm4671, %vm4672
  %v4674 = vsel %vm4673, %v4666, %v4670
  %v4675 = vand.u32 2147483647, %v4665
  %vm4676 = vcmp.eq.f32.partialorder %v4675, 8.507059e+37
  %v4677 = vand.u32 %v4665, 2147483648
  %v4678 = vor.u32 1.1754944e-38, %v4677
  %v4679 = vsel %vm4676, %v4678, %v4674
  %v4680 = vmul.f32 1.0, %v4679
  %v4681 = vmul.f32 %v4614, %v4527
  %v4682 = vmul.f32 %v4572, %v4638
  %v4683 = vadd.f32 %v4681, %v4682
  %v4684 = vtanh.pop %v4683
  %v4685 = vmul.f32 %v4680, %v4684
  %v4686 = vsel %vm1628, %v4685, %v4526
  %v4687 = vld [vmem:[%s11] sm:$0xff]
  %v4688 = vld [vmem:[%s11 + $0x8] sm:$0xff]
  %v4689 = vld [vmem:[%s11 + $0x10] sm:$0xff]
  %v4690 = vld [vmem:[%s11 + $0x18] sm:$0xff]
  %v4691 = vld [vmem:[%s12] sm:$0x1]
  %v4693 = vperm.slane %v4691, 0
  %v4696 = vsel %vm61, %v4686, 0
  %4698 = vmatpush.msra.mxu0 0.0
  %4699 = vmatpush.msra.mxu0 0.0
  %4700 = vmatpush.msra.mxu0 0.0
  %4701 = vmatpush.msra.mxu0 0.0
  %4702 = vmatpush.msra.mxu0 0.0
  %4703 = vmatpush.msra.mxu0 0.0
  %4704 = vmatpush.msra.mxu0 0.0
  %4705 = vmatpush.msra.mxu0 0.0
  %4706 = vmatpush.msra.mxu0 0.0
  %4707 = vmatpush.msra.mxu0 0.0
  %4708 = vmatpush.msra.mxu0 0.0
  %4709 = vmatpush.msra.mxu0 0.0
  %4710 = vmatpush.msra.mxu0 %v4690
  %4711 = vmatpush.msra.mxu0 %v4689
  %4712 = vmatpush.msra.mxu0 %v4688
  %4713 = vmatpush.msra.mxu0 %v4687
  %4714 = vmatmul.f32.gmra.mxu0 %v4696
  %v4715 = vpop.f32.mrf.mxu0
  %v4716 = vadd.f32 %v4693, %v4715
  %4717 = vdwg.mxu0
  %vm4718 = vcmask 23552
  %v4719 = vsel %vm4718, %v4716, -inf
  %4720 = vmax.xlane.f32.xlu0 %v4719
  %v4721 = vpop.xlane.xlu0 %4720
  %v4722 = vsub.f32 %v4716, %v4721
  %v4723 = vmul.f32 %v4722, 1.442695
  %v4724 = vpow.pop %v4723
  %v4725 = vsel %vm4718, %v4724, 0.0
  %4726 = vadd.xlane.f32.xlu0 %v4725
  %v4727 = vpop.xlane.xlu0 %4726
  %v4728 = vrcp.pop %v4727
  %v4729 = vmul.f32 %v4727, %v4728
  %v4730 = vsub.f32 1.0, %v4729
  %v4731 = vmul.f32 %v4728, %v4730
  %v4732 = vadd.f32 %v4728, %v4731
  %vm4733 = vweird.f32 %v4727
  %vm4734 = vweird.f32 %v4728
  %vm4735 = vmor %vm4733, %vm4734
  %v4736 = vsel %vm4735, %v4728, %v4732
  %v4737 = vand.u32 2147483647, %v4727
  %vm4738 = vcmp.eq.f32.partialorder %v4737, 8.507059e+37
  %v4739 = vand.u32 %v4727, 2147483648
  %v4740 = vor.u32 1.1754944e-38, %v4739
  %v4741 = vsel %vm4738, %v4740, %v4736
  %v4742 = vmul.f32 %v4724, %v4741
  %4743 = vst.msk [vmem:[%s13] sm:$0xff] %vm4718, %v4742
  // Predicated region
  $region54: #{lstm_current_model_forward.1} parent=0 // pred_check
    _
  $region55: #{lstm_current_model_forward.1} parent=0 // pred_check_branch
    %4745 = sbr.rel (0) target = $region57
  $region56: #{lstm_current_model_forward.1} parent=0 // pred_region
    _
  $region57: #{lstm_current_model_forward.1} parent=0 // pred_fallthru
    _
  // Predicated region
  $region58: #{lstm_current_model_forward.1} parent=0 // pred_check
    _
  $region59: #{lstm_current_model_forward.1} parent=0 // pred_check_branch
    %4747 = sbr.rel (0) target = $region61
  $region60: #{lstm_current_model_forward.1} parent=0 // pred_region
    _
  $region61: #{lstm_current_model_forward.1} parent=0 // pred_fallthru
    _

</llo_original>
